<compile_context>
chip_gen: v7x
topology: tpu7x:2x2x1
jax: 0.10.0
libtpu: 0.0.40
codegen_flags: <defaults>
</compile_context>

<pallas_src>
import math
import functools

import jax
import jax.numpy as jnp
from jax.experimental import pallas as pl
from jax.experimental.pallas import tpu as pltpu

F32 = jnp.float32
BF16 = jnp.bfloat16

# Explicit scoped-VMEM limit (review: don't rely on the 16/32 MiB defaults).
# Our working sets are a few MiB; 64 MiB is within physical VMEM on all of
# v5e / v6e / v7x.
_VMEM_LIMIT = 64 * 1024 * 1024


# ----------------------------------------------------------------------------
# elementwise helpers (kernel-side only)
# ----------------------------------------------------------------------------
def _erf(x):
    # Abramowitz & Stegun 7.1.26 polynomial, |err| < 1.5e-7.
    a1, a2, a3, a4, a5 = 0.254829592, -0.284496736, 1.421413741, -1.453152027, 1.061405429
    p = 0.3275911
    s = jnp.where(x >= 0.0, 1.0, -1.0)
    z = jnp.abs(x)
    t = 1.0 / (1.0 + p * z)                      # exact divide (review correctness note)
    poly = ((((a5 * t + a4) * t + a3) * t + a2) * t + a1) * t
    return s * (1.0 - poly * jnp.exp(-z * z))


def _gelu(x):
    # erf-based GELU, matching torch.nn.GELU() default.
    # TODO(synk): on v5e (no bf16 VPU/EUP) the tanh-approx GELU is cheaper if
    # the approximation is acceptable.
    return 0.5 * x * (1.0 + _erf(x * (1.0 / math.sqrt(2.0))))


def _layernorm(x, w, b, eps=1e-5):
    mu = jnp.mean(x, axis=-1, keepdims=True)
    var = jnp.mean((x - mu) ** 2, axis=-1, keepdims=True)
    return (x - mu) * jax.lax.rsqrt(var + eps) * w + b


# ----------------------------------------------------------------------------
# Kernel 1: generic fused 3-layer MLP stack (used for the block-diagonally
#           fused bd/obs/act embeddings AND the fused cluster+offset heads)
# ----------------------------------------------------------------------------
def _mlp3_kernel(x_ref, w1, b1, w2, b2, w3, b3, o_ref):
    h = _gelu(jnp.dot(x_ref[...].astype(BF16), w1[...],
                      preferred_element_type=F32) + b1[...])
    h = _gelu(jnp.dot(h.astype(BF16), w2[...],
                      preferred_element_type=F32) + b2[...])
    # single dense slab store (output width zero-padded to a 128 multiple)
    o_ref[...] = jnp.dot(h.astype(BF16), w3[...],
                         preferred_element_type=F32) + b3[...]


def mlp3_forward(x2d, fused):
    """Row-gridded call of the fused 3-layer MLP.  Pads rows to a tile multiple
    and input features to the (already padded) fused W1 row count."""
    n = x2d.shape[0]
    kin = fused[0].shape[0]
    if x2d.shape[1] != kin:
        x2d = jnp.pad(x2d, ((0, 0), (0, kin - x2d.shape[1])))
    row_tile = 256
    if n <= row_tile:
        rows = max(8, ((n + 7) // 8) * 8)
        row_tile = rows
    else:
        rows = ((n + row_tile - 1) // row_tile) * row_tile
    if rows != n:
        x2d = jnp.pad(x2d, ((0, rows - n), (0, 0)))
    w_out = fused[5].shape[1]
    out = pl.pallas_call(
        _mlp3_kernel,
        grid=(rows // row_tile,),
        in_specs=[pl.BlockSpec((row_tile, kin), lambda i: (i, 0))]
                + [pl.BlockSpec(w.shape, lambda i: (0, 0)) for w in fused],
        out_specs=pl.BlockSpec((row_tile, w_out), lambda i: (i, 0)),
        out_shape=jax.ShapeDtypeStruct((rows, w_out), F32),
        compiler_params=pltpu.CompilerParams(
            dimension_semantics=("parallel",),
            vmem_limit_bytes=_VMEM_LIMIT),
    )(x2d, *fused)
    return out[:n]


def embed_rl_forward(bd, obs, act, emb_fused, C):
    B, LL = bd.shape[:2]
    n = B * LL
    x = jnp.concatenate([bd.reshape(n, -1), obs.reshape(n, -1),
                         act.reshape(n, -1)], axis=1).astype(F32)
    out = mlp3_forward(x, emb_fused)[:, :3 * C]
    # (N, 3C) -> (B, LL, 3C) -> (B, 3LL, C) reproduces the bd/obs/act interleave.
    return out.reshape(B, LL, 3 * C).reshape(B, 3 * LL, C)


# ----------------------------------------------------------------------------
# Kernel 2: transformer trunk, grid = (batch, layer), weights pipelined per
#           layer, activation carried in the output block across layers.
# ----------------------------------------------------------------------------
def _trunk_kernel(x_ref,
                  ln1w, ln1b, wqkv, bqkv, wpr, bpr,
                  ln2w, ln2b, wfc, bfc, wp2, bp2,
                  lnfw, lnfb, o_ref, *, n_layer, n_head, seq):
    li = pl.program_id(1)

    @pl.when(li == 0)
    def _init():
        o_ref[...] = x_ref[...]               # seed the resident activation

    x = o_ref[...]                            # (S, C) f32 carry
    C = x.shape[-1]
    hd = C // n_head
    scale = 1.0 / math.sqrt(hd)

    row = jax.lax.broadcasted_iota(jnp.int32, (seq, seq), 0)
    col = jax.lax.broadcasted_iota(jnp.int32, (seq, seq), 1)
    causal = col <= row

    # ---------------- causal self-attention ----------------
    h = _layernorm(x, ln1w[...], ln1b[...])
    qkv = jnp.dot(h.astype(BF16), wqkv[...],
                  preferred_element_type=F32) + bqkv[...]      # (S, 3C) f32
    w_proj = wpr[...]                                          # (C, C) bf16
    y = jnp.zeros((seq, C), F32)
    # TODO(synk): for non-toy head_dim / n_head, replace this static head loop
    # with a flash-style batched-head layout (the per-batch unroll is already
    # gone: batch is a parallel grid axis).
    for hi in range(n_head):
        q = qkv[:, hi * hd:(hi + 1) * hd].astype(BF16)
        k = qkv[:, C + hi * hd:C + (hi + 1) * hd].astype(BF16)
        v = qkv[:, 2 * C + hi * hd:2 * C + (hi + 1) * hd].astype(BF16)
        att = jax.lax.dot_general(q, k, (((1,), (1,)), ((), ())),
                                  preferred_element_type=F32) * scale
        att = jnp.where(causal, att, -1e30)     # large-finite, not -inf
        m = jnp.max(att, axis=-1, keepdims=True)
        e = jnp.exp(att - m)
        p = e / jnp.sum(e, axis=-1, keepdims=True)
        oh = jnp.dot(p.astype(BF16), v, preferred_element_type=F32)
        # fold head-concat into the output projection (exact):
        y = y + jnp.dot(oh.astype(BF16), w_proj[hi * hd:(hi + 1) * hd, :],
                        preferred_element_type=F32)
    x = x + y + bpr[...]

    # ---------------- MLP ----------------
    h2 = _layernorm(x, ln2w[...], ln2b[...])
    m2 = _gelu(jnp.dot(h2.astype(BF16), wfc[...],
                       preferred_element_type=F32) + bfc[...])
    x = x + jnp.dot(m2.astype(BF16), wp2[...],
                    preferred_element_type=F32) + bp2[...]

    o_ref[...] = x

    @pl.when(li == n_layer - 1)
    def _final():
        o_ref[...] = _layernorm(x, lnfw[...], lnfb[...])


def trunk_forward(xx, stacked, lnf_w, lnf_b, n_head):
    B, S, C = xx.shape
    n_layer = stacked[2].shape[0]
    # TODO(synk): for non-toy C, carry the activation zero-padded to a
    # 128-lane multiple (lane-dense stores / VPU occupancy) and add a row-tile
    # grid axis; at C=32 / S=24 everything is sub-tile anyway.
    w_specs = [pl.BlockSpec((None,) + tuple(t.shape[1:]),
                            lambda b, li: (li, 0, 0)) for t in stacked]
    out = pl.pallas_call(
        functools.partial(_trunk_kernel, n_layer=n_layer, n_head=n_head, seq=S),
        grid=(B, n_layer),
        in_specs=[pl.BlockSpec((None, S, C), lambda b, li: (b, 0, 0))]
                + w_specs
                + [pl.BlockSpec((1, C), lambda b, li: (0, 0)),
                   pl.BlockSpec((1, C), lambda b, li: (0, 0))],
        out_specs=pl.BlockSpec((None, S, C), lambda b, li: (b, 0, 0)),
        out_shape=jax.ShapeDtypeStruct((B, S, C), F32),
        compiler_params=pltpu.CompilerParams(
            dimension_semantics=("parallel", "arbitrary"),
            vmem_limit_bytes=_VMEM_LIMIT),
    )(xx, *stacked, lnf_w, lnf_b)
    return out


# ----------------------------------------------------------------------------
# parameter construction (mirrors GPT_QDRL.__init__ shapes)
# ----------------------------------------------------------------------------
def init_rlmlp(key, in_sz, h_sz, out_sz, std=0.02):
    k1, k2, k3 = jax.random.split(key, 3)
    return (jax.random.normal(k1, (in_sz, 2 * h_sz), F32) * std,
            jnp.zeros((1, 2 * h_sz), F32),
            jax.random.normal(k2, (2 * h_sz, 2 * h_sz), F32) * std,
            jnp.zeros((1, 2 * h_sz), F32),
            jax.random.normal(k3, (2 * h_sz, out_sz), F32) * std,
            jnp.zeros((1, out_sz), F32))


def init_block(key, C, n_layer):
    ks = jax.random.split(key, 4)
    proj_std = 0.02 / math.sqrt(2 * n_layer)
    return (jnp.ones((1, C), F32), jnp.zeros((1, C), F32),              # ln1
            jax.random.normal(ks[0], (C, 3 * C), F32) * 0.02,           # c_attn
            jnp.zeros((1, 3 * C), F32),
            jax.random.normal(ks[1], (C, C), F32) * proj_std,           # attn c_proj
            jnp.zeros((1, C), F32),
            jnp.ones((1, C), F32), jnp.zeros((1, C), F32),              # ln2
            jax.random.normal(ks[2], (C, 4 * C), F32) * 0.02,           # mlp c_fc
            jnp.zeros((1, 4 * C), F32),
            jax.random.normal(ks[3], (4 * C, C), F32) * proj_std,       # mlp c_proj
            jnp.zeros((1, C), F32))


def _block_diag(mats):
    r = sum(m.shape[0] for m in mats)
    c = sum(m.shape[1] for m in mats)
    out = jnp.zeros((r, c), F32)
    i = j = 0
    for m in mats:
        out = out.at[i:i + m.shape[0], j:j + m.shape[1]].set(m)
        i += m.shape[0]
        j += m.shape[1]
    return out


def _fuse_mlps(mlps, pad_out_to=None):
    """Fuse several 3-layer MLPs sharing the same input into one block-diagonal
    3-matmul MLP (layer-1 column-concat, layers 2/3 block-diagonal; exact)."""
    w1 = jnp.concatenate([m[0] for m in mlps], axis=1) if all(
        m[0].shape[0] == mlps[0][0].shape[0] for m in mlps) else _block_diag(
        [m[0] for m in mlps])
    b1 = jnp.concatenate([m[1] for m in mlps], axis=1)
    w2 = _block_diag([m[2] for m in mlps])
    b2 = jnp.concatenate([m[3] for m in mlps], axis=1)
    w3 = _block_diag([m[4] for m in mlps])
    b3 = jnp.concatenate([m[5] for m in mlps], axis=1)
    if pad_out_to:
        pad = (-w3.shape[1]) % pad_out_to
        if pad:                                   # zero columns: exact
            w3 = jnp.pad(w3, ((0, 0), (0, pad)))
            b3 = jnp.pad(b3, ((0, 0), (0, pad)))
    kp = (-w1.shape[0]) % 8                       # pad tiny contraction dims
    if kp:
        w1 = jnp.pad(w1, ((0, kp), (0, 0)))
    return (w1.astype(BF16), b1, w2.astype(BF16), b2, w3.astype(BF16), b3)


def build_fused_emb(bd_p, obs_p, act_p):
    # different input sizes -> block-diagonal W1 over the concatenated inputs
    mlps = [bd_p, obs_p, act_p]
    w1 = _block_diag([m[0] for m in mlps])
    b1 = jnp.concatenate([m[1] for m in mlps], axis=1)
    w2 = _block_diag([m[2] for m in mlps])
    b2 = jnp.concatenate([m[3] for m in mlps], axis=1)
    w3 = _block_diag([m[4] for m in mlps])
    b3 = jnp.concatenate([m[5] for m in mlps], axis=1)
    pad = (-w3.shape[1]) % 128                    # lane-dense output slab
    if pad:
        w3 = jnp.pad(w3, ((0, 0), (0, pad)))
        b3 = jnp.pad(b3, ((0, 0), (0, pad)))
    kp = (-w1.shape[0]) % 8
    if kp:
        w1 = jnp.pad(w1, ((0, kp), (0, 0)))
    return (w1.astype(BF16), b1, w2.astype(BF16), b2, w3.astype(BF16), b3)


def build_fused_heads(cluster_heads, offsets_head):
    # all A cluster heads + the offsets head share the same input -> concat W1
    return _fuse_mlps(list(cluster_heads) + [offsets_head], pad_out_to=128)


def init_gpt_qdrl(key, cfg):
    C = cfg["n_embd"]
    A = cfg["n_action_dims"]
    L = cfg["n_layer"]
    keys = jax.random.split(key, 16 + L + 2 * A)
    ki = iter(keys)

    blocks = [init_block(next(ki), C, L) for _ in range(L)]
    stacked = []
    for i in range(12):
        t = jnp.stack([blk[i] for blk in blocks])
        if i in (2, 4, 8, 10):                    # matmul weights -> bf16
            t = t.astype(BF16)
        stacked.append(t)

    cluster_heads = [init_rlmlp(next(ki), C, 32, k_i)
                     for k_i in cfg["n_clusters_per_dim"]]
    num_clusters = 1
    for k_i in cfg["n_clusters_per_dim"]:
        num_clusters *= k_i
    offsets_head = init_rlmlp(next(ki), C, 512, num_clusters * A)

    params = {
        "wte": jax.random.normal(next(ki), (cfg["vocab_size"], C), F32) * 0.02,
        "wpe": jax.random.normal(next(ki), (cfg["block_size"], C), F32) * 0.02,
        "tse": jax.random.normal(next(ki), (1000, C), F32) * 0.02,
        "emb_fused": build_fused_emb(
            init_rlmlp(next(ki), cfg["n_bd_dims"], C, C),
            init_rlmlp(next(ki), cfg["n_obs_dims"], C, C),
            init_rlmlp(next(ki), cfg["n_action_dims"], C, C)),
        "blocks_stacked": stacked,
        "lnf_w": jnp.ones((1, C), F32),
        "lnf_b": jnp.zeros((1, C), F32),
        "heads_fused": build_fused_heads(cluster_heads, offsets_head),
        "cluster_centers": [jax.random.normal(next(ki), (k_i, 1), F32)
                            for k_i in cfg["n_clusters_per_dim"]],
    }
    return params, num_clusters


# ----------------------------------------------------------------------------
# GPT_QDRL.forward
# ----------------------------------------------------------------------------
def gpt_qdrl_forward(params, word_idx, word_pos, bd_tensor, obs_tensor, act_tensor,
                     cluster_centers_ids, cluster_center_coords, timestamp_tensor,
                     *, cfg, num_clusters, generation_mode=False,
                     generation_strategy="argmax"):
    C = cfg["n_embd"]
    A = cfg["n_action_dims"]
    n_k = list(cfg["n_clusters_per_dim"])
    sumK = sum(n_k)
    offw = num_clusters * A
    BB, T_text = word_idx.shape
    LL = bd_tensor.shape[1]
    block_size = cfg["block_size"]

    # ---------------- embeddings ----------------
    word_token_emb = params["wte"][word_idx]                 # (B, T, C)
    word_pos_emb = params["wpe"][word_pos]                   # (T, C)
    RL_emb = embed_rl_forward(bd_tensor, obs_tensor, act_tensor,
                              params["emb_fused"], C)
    ts_rep = jnp.repeat(timestamp_tensor, 3, axis=1)         # each t repeated 3x
    timestamp_emb = params["tse"][ts_rep]                    # (B, 3LL, C)

    x1 = word_token_emb + word_pos_emb[None, :, :]
    x2 = RL_emb + timestamp_emb
    xx = jnp.concatenate([x1, x2], axis=1)
    num_pad = block_size - (T_text + 3 * LL)                 # static python int
    if num_pad:
        xx = jnp.concatenate([xx, jnp.zeros((BB, num_pad, C), F32)], axis=1)
    xx = xx.astype(F32)
    # dropout p=0.0 -> identity

    # ------------- transformer trunk (layer-gridded, pipelined weights) ------
    xx = trunk_forward(xx, params["blocks_stacked"], params["lnf_w"],
                       params["lnf_b"], cfg["n_head"])

    obs_start = T_text + 1
    obs_stop = block_size - num_pad
    obs_inds = list(range(obs_start, obs_stop, 3))           # static, len == LL
    # TODO(synk): the obs-row gather + head MLPs could be fused into the trunk
    # kernel (gather the LL obs rows in-VMEM) to save one launch + HBM trip.

    if not generation_mode:
        zz = xx[:, obs_start:obs_stop:3, :]                  # (B, LL, C)
        zz_flat = zz.reshape(BB * LL, C)
        head_out = mlp3_forward(zz_flat, params["heads_fused"])
        scores_all = head_out[:, :sumK].reshape(BB, LL, sumK)
        offsets = head_out[:, sumK:sumK + offw]

        gamma = 2.0
        term_1 = 0.0
        argmax_actions = []
        off = 0
        for a_i in range(A):
            scores_i = scores_all[:, :, off:off + n_k[a_i]]
            off += n_k[a_i]
            proba_i = jax.nn.softmax(scores_i, axis=-1)
            p_t_i = jnp.take_along_axis(
                proba_i, cluster_centers_ids[:, :, a_i:a_i + 1], axis=2)
            focal_i = -(1.0 - p_t_i) ** gamma * jnp.log(p_t_i + 1e-8)
            term_1 = term_1 + focal_i.mean()
            argmax_actions.append(jnp.argmax(scores_i, axis=-1).reshape(BB, LL, 1))
        term_1 = term_1 / float(A)

        UU = offsets.reshape(BB, LL, num_clusters, A)
        VV = cluster_centers_ids[:, :, None, :]              # (B, LL, 1, A)
        WW = jnp.take_along_axis(UU, VV, axis=2)
        hat_act = cluster_center_coords + WW[:, :, 0, :]
        act_round = jnp.round(act_tensor, 1)
        term_2 = ((hat_act - act_round) ** 2).mean()
        loss = term_1 + 1.0 * term_2

        argmax_actions = jnp.concatenate(argmax_actions, axis=2)   # (B, LL, A)
        WW_acc = jnp.take_along_axis(UU, argmax_actions[:, :, None, :], axis=2)
        centers_pred = jnp.concatenate(
            [params["cluster_centers"][a_i][argmax_actions[:, :, a_i]]
             for a_i in range(A)], axis=-1)
        action_pred = centers_pred + WW_acc[:, :, 0, :]
        accuracy = ((action_pred - act_round) ** 2).mean()
        return None, loss, term_1, term_2, accuracy

    # ---------------- generation mode ----------------
    last = obs_inds[-1]
    zz = xx[:, last, :]                                      # (B, C), static slice
    head_out = mlp3_forward(zz, params["heads_fused"])
    temperature = 1.0
    sampled_acts = []
    off = 0
    for a_i in range(A):
        scores_i = head_out[:, off:off + n_k[a_i]].reshape(BB, 1, n_k[a_i])
        off += n_k[a_i]
        proba_i = jax.nn.softmax(scores_i / temperature, axis=-1)
        if generation_strategy == "argmax":
            sampled = jnp.argmax(proba_i, axis=-1).reshape(BB, 1, 1)
        else:
            # TODO(synk): 'sample' / 'nucleus' strategies use torch.multinomial /
            # host-side python loops; only the deterministic 'argmax' path is ported.
            raise NotImplementedError(generation_strategy)
        sampled_acts.append(sampled)
    sampled_acts = jnp.concatenate(sampled_acts, axis=-1)    # (B, 1, A)
    UU = head_out[:, sumK:sumK + offw].reshape(BB, 1, num_clusters, A)
    WW = jnp.take_along_axis(UU, sampled_acts[:, :, None, :], axis=2)
    centers_pred = jnp.concatenate(
        [params["cluster_centers"][a_i][sampled_acts[:, :, a_i]]
         for a_i in range(A)], axis=-1)
    predicted_actions = centers_pred + WW[:, :, 0, :]
    return predicted_actions, None, None, None, None


# ----------------------------------------------------------------------------
if __name__ == "__main__":
    cfg = dict(block_size=24, vocab_size=50, n_layer=2, n_head=4, n_embd=32,
               dropout=0.0, bias=True, n_action_dims=2, n_obs_dims=3,
               n_bd_dims=2, n_clusters_per_dim=[5, 5])
    BB, T_text, LL = 2, 6, 4
    assert T_text + 3 * LL <= cfg["block_size"]

    key = jax.random.PRNGKey(0)
    kp, k1, k2, k3, k4, k5, k6, k7 = jax.random.split(key, 8)
    params, num_clusters = init_gpt_qdrl(kp, cfg)

    word_idx = jax.random.randint(k1, (BB, T_text), 0, cfg["vocab_size"], jnp.int32)
    word_pos = jnp.arange(T_text, dtype=jnp.int32)
    bd_tensor = jax.random.normal(k2, (BB, LL, cfg["n_bd_dims"]), F32)
    obs_tensor = jax.random.normal(k3, (BB, LL, cfg["n_obs_dims"]), F32)
    act_tensor = jax.random.normal(k4, (BB, LL, cfg["n_action_dims"]), F32)
    cluster_centers_ids = jax.random.randint(
        k5, (BB, LL, cfg["n_action_dims"]), 0, cfg["n_clusters_per_dim"][0], jnp.int32)
    cluster_center_coords = jax.random.normal(k6, (BB, LL, cfg["n_action_dims"]), F32)
    timestamp_tensor = jax.random.randint(k7, (BB, LL), 0, 1000, jnp.int32)

    train_fn = jax.jit(functools.partial(
        gpt_qdrl_forward, cfg=cfg, num_clusters=num_clusters, generation_mode=False))
    gen_fn = jax.jit(functools.partial(
        gpt_qdrl_forward, cfg=cfg, num_clusters=num_clusters,
        generation_mode=True, generation_strategy="argmax"))

    # training/eval path (loss computation)
    _, loss, t1, t2, acc = train_fn(params, word_idx, word_pos, bd_tensor,
                                    obs_tensor, act_tensor, cluster_centers_ids,
                                    cluster_center_coords, timestamp_tensor)
    jax.block_until_ready((loss, t1, t2, acc))

    # generation path (argmax strategy)
    pred, *_ = gen_fn(params, word_idx, word_pos, bd_tensor, obs_tensor,
                      act_tensor, cluster_centers_ids, cluster_center_coords,
                      timestamp_tensor)
    jax.block_until_ready(pred)
    print("KERNEL_OK")
</pallas_src>

<mosaic_0001>
module attributes {stable_mosaic.version = 11 : i64} {
  func.func @_mlp3_kernel(%arg0: i32, %arg1: memref<8x8xf32, #tpu.memory_space<vmem>>, %arg2: memref<8x192xbf16, #tpu.memory_space<vmem>>, %arg3: memref<1x192xf32, #tpu.memory_space<vmem>>, %arg4: memref<192x192xbf16, #tpu.memory_space<vmem>>, %arg5: memref<1x192xf32, #tpu.memory_space<vmem>>, %arg6: memref<192x128xbf16, #tpu.memory_space<vmem>>, %arg7: memref<1x128xf32, #tpu.memory_space<vmem>>, %arg8: memref<8x128xf32, #tpu.memory_space<vmem>>) attributes {dimension_semantics = [#tpu.dimension_semantics<parallel>], iteration_bounds = array<i64: 1>, scalar_prefetch = 0 : i64, scratch_operands = 0 : i64, tpu.core_type = #tpu.core_type<tc>, window_params = [{transform_indices = @transform_0, window_bounds = array<i64: 8, 8>}, {pipeline_mode = #tpu.pipeline_mode<synchronous>, transform_indices = @transform_1, window_bounds = array<i64: 8, 192>}, {pipeline_mode = #tpu.pipeline_mode<synchronous>, transform_indices = @transform_2, window_bounds = array<i64: 1, 192>}, {pipeline_mode = #tpu.pipeline_mode<synchronous>, transform_indices = @transform_3, window_bounds = array<i64: 192, 192>}, {pipeline_mode = #tpu.pipeline_mode<synchronous>, transform_indices = @transform_4, window_bounds = array<i64: 1, 192>}, {pipeline_mode = #tpu.pipeline_mode<synchronous>, transform_indices = @transform_5, window_bounds = array<i64: 192, 128>}, {pipeline_mode = #tpu.pipeline_mode<synchronous>, transform_indices = @transform_6, window_bounds = array<i64: 1, 128>}, {transform_indices = @transform_7, window_bounds = array<i64: 8, 128>}]} {
    %c0 = arith.constant 0 : index
    %c0_0 = arith.constant 0 : index
    %0 = vector.load %arg1[%c0, %c0_0] : memref<8x8xf32, #tpu.memory_space<vmem>>, vector<8x8xf32>
    %1 = arith.truncf %0 : vector<8x8xf32> to vector<8x8xbf16>
    %c0_1 = arith.constant 0 : index
    %c0_2 = arith.constant 0 : index
    %2 = vector.load %arg2[%c0_1, %c0_2] : memref<8x192xbf16, #tpu.memory_space<vmem>>, vector<8x192xbf16>
    %cst = arith.constant dense<0.000000e+00> : vector<8x192xf32>
    %3 = tpu.matmul %1, %2, %cst {dimension_numbers = #tpu.dot_dimension_numbers<[1], [0], [0], [1], [0, 0, 1, 1], [], []>} : vector<8x8xbf16>, vector<8x192xbf16>, vector<8x192xf32> -> vector<8x192xf32>
    %c0_3 = arith.constant 0 : index
    %c0_4 = arith.constant 0 : index
    %4 = vector.load %arg3[%c0_3, %c0_4] : memref<1x192xf32, #tpu.memory_space<vmem>>, vector<1x192xf32>
    %5 = vector.broadcast %4 : vector<1x192xf32> to vector<8x192xf32>
    %6 = arith.addf %3, %5 : vector<8x192xf32>
    %cst_5 = arith.constant 5.000000e-01 : f32
    %7 = vector.broadcast %cst_5 : f32 to vector<8x192xf32>
    %8 = arith.mulf %7, %6 : vector<8x192xf32>
    %cst_6 = arith.constant 0.707106769 : f32
    %9 = vector.broadcast %cst_6 : f32 to vector<8x192xf32>
    %10 = arith.mulf %6, %9 : vector<8x192xf32>
    %cst_7 = arith.constant 0.000000e+00 : f32
    %11 = vector.broadcast %cst_7 : f32 to vector<8x192xf32>
    %12 = arith.cmpf oge, %10, %11 : vector<8x192xf32>
    %cst_8 = arith.constant 1.000000e+00 : f32
    %cst_9 = arith.constant -1.000000e+00 : f32
    %13 = vector.broadcast %cst_8 : f32 to vector<8x192xf32>
    %14 = vector.broadcast %cst_9 : f32 to vector<8x192xf32>
    %15 = arith.select %12, %13, %14 : vector<8x192xi1>, vector<8x192xf32>
    %16 = math.absf %10 : vector<8x192xf32>
    %cst_10 = arith.constant 0.327591091 : f32
    %17 = vector.broadcast %cst_10 : f32 to vector<8x192xf32>
    %18 = arith.mulf %17, %16 : vector<8x192xf32>
    %cst_11 = arith.constant 1.000000e+00 : f32
    %19 = vector.broadcast %cst_11 : f32 to vector<8x192xf32>
    %20 = arith.addf %19, %18 : vector<8x192xf32>
    %cst_12 = arith.constant 1.000000e+00 : f32
    %21 = vector.broadcast %cst_12 : f32 to vector<8x192xf32>
    %22 = arith.divf %21, %20 : vector<8x192xf32>
    %cst_13 = arith.constant 1.06140542 : f32
    %23 = vector.broadcast %cst_13 : f32 to vector<8x192xf32>
    %24 = arith.mulf %23, %22 : vector<8x192xf32>
    %cst_14 = arith.constant -1.45315206 : f32
    %25 = vector.broadcast %cst_14 : f32 to vector<8x192xf32>
    %26 = arith.addf %24, %25 : vector<8x192xf32>
    %27 = arith.mulf %26, %22 : vector<8x192xf32>
    %cst_15 = arith.constant 1.42141378 : f32
    %28 = vector.broadcast %cst_15 : f32 to vector<8x192xf32>
    %29 = arith.addf %27, %28 : vector<8x192xf32>
    %30 = arith.mulf %29, %22 : vector<8x192xf32>
    %cst_16 = arith.constant -0.284496725 : f32
    %31 = vector.broadcast %cst_16 : f32 to vector<8x192xf32>
    %32 = arith.addf %30, %31 : vector<8x192xf32>
    %33 = arith.mulf %32, %22 : vector<8x192xf32>
    %cst_17 = arith.constant 0.254829586 : f32
    %34 = vector.broadcast %cst_17 : f32 to vector<8x192xf32>
    %35 = arith.addf %33, %34 : vector<8x192xf32>
    %36 = arith.mulf %35, %22 : vector<8x192xf32>
    %cst_18 = arith.constant 0.000000e+00 : f32
    %37 = vector.broadcast %cst_18 : f32 to vector<8x192xf32>
    %38 = arith.subf %37, %16 : vector<8x192xf32>
    %39 = arith.mulf %38, %16 : vector<8x192xf32>
    %40 = math.exp %39 : vector<8x192xf32>
    %41 = arith.mulf %36, %40 : vector<8x192xf32>
    %cst_19 = arith.constant 1.000000e+00 : f32
    %42 = vector.broadcast %cst_19 : f32 to vector<8x192xf32>
    %43 = arith.subf %42, %41 : vector<8x192xf32>
    %44 = arith.mulf %15, %43 : vector<8x192xf32>
    %cst_20 = arith.constant 1.000000e+00 : f32
    %45 = vector.broadcast %cst_20 : f32 to vector<8x192xf32>
    %46 = arith.addf %45, %44 : vector<8x192xf32>
    %47 = arith.mulf %8, %46 : vector<8x192xf32>
    %48 = arith.truncf %47 : vector<8x192xf32> to vector<8x192xbf16>
    %c0_21 = arith.constant 0 : index
    %c0_22 = arith.constant 0 : index
    %49 = vector.load %arg4[%c0_21, %c0_22] : memref<192x192xbf16, #tpu.memory_space<vmem>>, vector<192x192xbf16>
    %cst_23 = arith.constant dense<0.000000e+00> : vector<8x192xf32>
    %50 = tpu.matmul %48, %49, %cst_23 {dimension_numbers = #tpu.dot_dimension_numbers<[1], [0], [0], [1], [0, 0, 1, 1], [], []>} : vector<8x192xbf16>, vector<192x192xbf16>, vector<8x192xf32> -> vector<8x192xf32>
    %c0_24 = arith.constant 0 : index
    %c0_25 = arith.constant 0 : index
    %51 = vector.load %arg5[%c0_24, %c0_25] : memref<1x192xf32, #tpu.memory_space<vmem>>, vector<1x192xf32>
    %52 = vector.broadcast %51 : vector<1x192xf32> to vector<8x192xf32>
    %53 = arith.addf %50, %52 : vector<8x192xf32>
    %cst_26 = arith.constant 5.000000e-01 : f32
    %54 = vector.broadcast %cst_26 : f32 to vector<8x192xf32>
    %55 = arith.mulf %54, %53 : vector<8x192xf32>
    %cst_27 = arith.constant 0.707106769 : f32
    %56 = vector.broadcast %cst_27 : f32 to vector<8x192xf32>
    %57 = arith.mulf %53, %56 : vector<8x192xf32>
    %cst_28 = arith.constant 0.000000e+00 : f32
    %58 = vector.broadcast %cst_28 : f32 to vector<8x192xf32>
    %59 = arith.cmpf oge, %57, %58 : vector<8x192xf32>
    %cst_29 = arith.constant 1.000000e+00 : f32
    %cst_30 = arith.constant -1.000000e+00 : f32
    %60 = vector.broadcast %cst_29 : f32 to vector<8x192xf32>
    %61 = vector.broadcast %cst_30 : f32 to vector<8x192xf32>
    %62 = arith.select %59, %60, %61 : vector<8x192xi1>, vector<8x192xf32>
    %63 = math.absf %57 : vector<8x192xf32>
    %cst_31 = arith.constant 0.327591091 : f32
    %64 = vector.broadcast %cst_31 : f32 to vector<8x192xf32>
    %65 = arith.mulf %64, %63 : vector<8x192xf32>
    %cst_32 = arith.constant 1.000000e+00 : f32
    %66 = vector.broadcast %cst_32 : f32 to vector<8x192xf32>
    %67 = arith.addf %66, %65 : vector<8x192xf32>
    %cst_33 = arith.constant 1.000000e+00 : f32
    %68 = vector.broadcast %cst_33 : f32 to vector<8x192xf32>
    %69 = arith.divf %68, %67 : vector<8x192xf32>
    %cst_34 = arith.constant 1.06140542 : f32
    %70 = vector.broadcast %cst_34 : f32 to vector<8x192xf32>
    %71 = arith.mulf %70, %69 : vector<8x192xf32>
    %cst_35 = arith.constant -1.45315206 : f32
    %72 = vector.broadcast %cst_35 : f32 to vector<8x192xf32>
    %73 = arith.addf %71, %72 : vector<8x192xf32>
    %74 = arith.mulf %73, %69 : vector<8x192xf32>
    %cst_36 = arith.constant 1.42141378 : f32
    %75 = vector.broadcast %cst_36 : f32 to vector<8x192xf32>
    %76 = arith.addf %74, %75 : vector<8x192xf32>
    %77 = arith.mulf %76, %69 : vector<8x192xf32>
    %cst_37 = arith.constant -0.284496725 : f32
    %78 = vector.broadcast %cst_37 : f32 to vector<8x192xf32>
    %79 = arith.addf %77, %78 : vector<8x192xf32>
    %80 = arith.mulf %79, %69 : vector<8x192xf32>
    %cst_38 = arith.constant 0.254829586 : f32
    %81 = vector.broadcast %cst_38 : f32 to vector<8x192xf32>
    %82 = arith.addf %80, %81 : vector<8x192xf32>
    %83 = arith.mulf %82, %69 : vector<8x192xf32>
    %cst_39 = arith.constant 0.000000e+00 : f32
    %84 = vector.broadcast %cst_39 : f32 to vector<8x192xf32>
    %85 = arith.subf %84, %63 : vector<8x192xf32>
    %86 = arith.mulf %85, %63 : vector<8x192xf32>
    %87 = math.exp %86 : vector<8x192xf32>
    %88 = arith.mulf %83, %87 : vector<8x192xf32>
    %cst_40 = arith.constant 1.000000e+00 : f32
    %89 = vector.broadcast %cst_40 : f32 to vector<8x192xf32>
    %90 = arith.subf %89, %88 : vector<8x192xf32>
    %91 = arith.mulf %62, %90 : vector<8x192xf32>
    %cst_41 = arith.constant 1.000000e+00 : f32
    %92 = vector.broadcast %cst_41 : f32 to vector<8x192xf32>
    %93 = arith.addf %92, %91 : vector<8x192xf32>
    %94 = arith.mulf %55, %93 : vector<8x192xf32>
    %95 = arith.truncf %94 : vector<8x192xf32> to vector<8x192xbf16>
    %c0_42 = arith.constant 0 : index
    %c0_43 = arith.constant 0 : index
    %96 = vector.load %arg6[%c0_42, %c0_43] : memref<192x128xbf16, #tpu.memory_space<vmem>>, vector<192x128xbf16>
    %cst_44 = arith.constant dense<0.000000e+00> : vector<8x128xf32>
    %97 = tpu.matmul %95, %96, %cst_44 {dimension_numbers = #tpu.dot_dimension_numbers<[1], [0], [0], [1], [0, 0, 1, 1], [], []>} : vector<8x192xbf16>, vector<192x128xbf16>, vector<8x128xf32> -> vector<8x128xf32>
    %c0_45 = arith.constant 0 : index
    %c0_46 = arith.constant 0 : index
    %98 = vector.load %arg7[%c0_45, %c0_46] : memref<1x128xf32, #tpu.memory_space<vmem>>, vector<1x128xf32>
    %99 = vector.broadcast %98 : vector<1x128xf32> to vector<8x128xf32>
    %100 = arith.addf %97, %99 : vector<8x128xf32>
    %c0_47 = arith.constant 0 : index
    %c0_48 = arith.constant 0 : index
    %101 = vector.load %arg8[%c0_47, %c0_48] : memref<8x128xf32, #tpu.memory_space<vmem>>, vector<8x128xf32>
    tpu.vector_store %arg8[%c0_47, %c0_48], %100 {strides = array<i32>} : memref<8x128xf32, #tpu.memory_space<vmem>>, vector<8x128xf32>,
    return
  }
  func.func @transform_0(%arg0: i32) -> (i32, i32) {
    %c0_i32 = arith.constant 0 : i32
    %c0_i32_0 = arith.constant 0 : i32
    return %arg0, %c0_i32 : i32, i32
  }
  func.func @transform_1(%arg0: i32) -> (i32, i32) {
    %c0_i32 = arith.constant 0 : i32
    %c0_i32_0 = arith.constant 0 : i32
    %c0_i32_1 = arith.constant 0 : i32
    return %c0_i32, %c0_i32_0 : i32, i32
  }
  func.func @transform_2(%arg0: i32) -> (i32, i32) {
    %c0_i32 = arith.constant 0 : i32
    %c0_i32_0 = arith.constant 0 : i32
    %c0_i32_1 = arith.constant 0 : i32
    return %c0_i32, %c0_i32_0 : i32, i32
  }
  func.func @transform_3(%arg0: i32) -> (i32, i32) {
    %c0_i32 = arith.constant 0 : i32
    %c0_i32_0 = arith.constant 0 : i32
    %c0_i32_1 = arith.constant 0 : i32
    return %c0_i32, %c0_i32_0 : i32, i32
  }
  func.func @transform_4(%arg0: i32) -> (i32, i32) {
    %c0_i32 = arith.constant 0 : i32
    %c0_i32_0 = arith.constant 0 : i32
    %c0_i32_1 = arith.constant 0 : i32
    return %c0_i32, %c0_i32_0 : i32, i32
  }
  func.func @transform_5(%arg0: i32) -> (i32, i32) {
    %c0_i32 = arith.constant 0 : i32
    %c0_i32_0 = arith.constant 0 : i32
    %c0_i32_1 = arith.constant 0 : i32
    return %c0_i32, %c0_i32_0 : i32, i32
  }
  func.func @transform_6(%arg0: i32) -> (i32, i32) {
    %c0_i32 = arith.constant 0 : i32
    %c0_i32_0 = arith.constant 0 : i32
    %c0_i32_1 = arith.constant 0 : i32
    return %c0_i32, %c0_i32_0 : i32, i32
  }
  func.func @transform_7(%arg0: i32) -> (i32, i32) {
    %c0_i32 = arith.constant 0 : i32
    %c0_i32_0 = arith.constant 0 : i32
    return %arg0, %c0_i32 : i32, i32
  }
}

module attributes {stable_mosaic.version = 11 : i64} {
  func.func @_trunk_kernel(%arg0: i32, %arg1: i32, %arg2: memref<1x24x32xf32, #tpu.memory_space<vmem>>, %arg3: memref<1x1x32xf32, #tpu.memory_space<vmem>>, %arg4: memref<1x1x32xf32, #tpu.memory_space<vmem>>, %arg5: memref<1x32x96xbf16, #tpu.memory_space<vmem>>, %arg6: memref<1x1x96xf32, #tpu.memory_space<vmem>>, %arg7: memref<1x32x32xbf16, #tpu.memory_space<vmem>>, %arg8: memref<1x1x32xf32, #tpu.memory_space<vmem>>, %arg9: memref<1x1x32xf32, #tpu.memory_space<vmem>>, %arg10: memref<1x1x32xf32, #tpu.memory_space<vmem>>, %arg11: memref<1x32x128xbf16, #tpu.memory_space<vmem>>, %arg12: memref<1x1x128xf32, #tpu.memory_space<vmem>>, %arg13: memref<1x128x32xbf16, #tpu.memory_space<vmem>>, %arg14: memref<1x1x32xf32, #tpu.memory_space<vmem>>, %arg15: memref<1x32xf32, #tpu.memory_space<vmem>>, %arg16: memref<1x32xf32, #tpu.memory_space<vmem>>, %arg17: memref<1x24x32xf32, #tpu.memory_space<vmem>>) attributes {dimension_semantics = [#tpu.dimension_semantics<parallel>, #tpu.dimension_semantics<arbitrary>], iteration_bounds = array<i64: 2, 2>, scalar_prefetch = 0 : i64, scratch_operands = 0 : i64, tpu.core_type = #tpu.core_type<tc>, window_params = [{transform_indices = @transform_0, window_bounds = array<i64: 1, 24, 32>}, {transform_indices = @transform_1, window_bounds = array<i64: 1, 1, 32>}, {transform_indices = @transform_2, window_bounds = array<i64: 1, 1, 32>}, {transform_indices = @transform_3, window_bounds = array<i64: 1, 32, 96>}, {transform_indices = @transform_4, window_bounds = array<i64: 1, 1, 96>}, {transform_indices = @transform_5, window_bounds = array<i64: 1, 32, 32>}, {transform_indices = @transform_6, window_bounds = array<i64: 1, 1, 32>}, {transform_indices = @transform_7, window_bounds = array<i64: 1, 1, 32>}, {transform_indices = @transform_8, window_bounds = array<i64: 1, 1, 32>}, {transform_indices = @transform_9, window_bounds = array<i64: 1, 32, 128>}, {transform_indices = @transform_10, window_bounds = array<i64: 1, 1, 128>}, {transform_indices = @transform_11, window_bounds = array<i64: 1, 128, 32>}, {transform_indices = @transform_12, window_bounds = array<i64: 1, 1, 32>}, {pipeline_mode = #tpu.pipeline_mode<synchronous>, transform_indices = @transform_13, window_bounds = array<i64: 1, 32>}, {pipeline_mode = #tpu.pipeline_mode<synchronous>, transform_indices = @transform_14, window_bounds = array<i64: 1, 32>}, {transform_indices = @transform_15, window_bounds = array<i64: 1, 24, 32>}]} {
    %c0_i32 = arith.constant 0 : i32
    %0 = arith.cmpi eq, %arg1, %c0_i32 : i32
    %1 = arith.extui %0 : i1 to i32
    %c0_i32_0 = arith.constant 0 : i32
    %2 = arith.cmpi ne, %1, %c0_i32_0 : i32
    scf.if %2 {
      %c0_100 = arith.constant 0 : index
      %c0_101 = arith.constant 0 : index
      %c0_102 = arith.constant 0 : index
      %244 = vector.load %arg2[%c0_100, %c0_101, %c0_102] : memref<1x24x32xf32, #tpu.memory_space<vmem>>, vector<1x24x32xf32>
      %245 = vector.shape_cast %244 : vector<1x24x32xf32> to vector<24x32xf32>
      %c0_103 = arith.constant 0 : index
      %c0_104 = arith.constant 0 : index
      %c0_105 = arith.constant 0 : index
      %246 = vector.load %arg17[%c0_103, %c0_104, %c0_105] : memref<1x24x32xf32, #tpu.memory_space<vmem>>, vector<1x24x32xf32>
      %247 = vector.shape_cast %246 : vector<1x24x32xf32> to vector<24x32xf32>
      %248 = vector.shape_cast %245 : vector<24x32xf32> to vector<1x24x32xf32>
      tpu.vector_store %arg17[%c0_103, %c0_104, %c0_105], %248 {strides = array<i32>} : memref<1x24x32xf32, #tpu.memory_space<vmem>>, vector<1x24x32xf32>,
    } else {
    }
    %c0 = arith.constant 0 : index
    %c0_1 = arith.constant 0 : index
    %c0_2 = arith.constant 0 : index
    %3 = vector.load %arg17[%c0, %c0_1, %c0_2] : memref<1x24x32xf32, #tpu.memory_space<vmem>>, vector<1x24x32xf32>
    %4 = vector.shape_cast %3 : vector<1x24x32xf32> to vector<24x32xf32>
    %5 = tpu.iota {dimensions = array<i32: 0>} : vector<24x24xi32>
    %6 = tpu.iota {dimensions = array<i32: 1>} : vector<24x24xi32>
    %7 = arith.cmpi sle, %6, %5 : vector<24x24xi32>
    %c0_3 = arith.constant 0 : index
    %c0_4 = arith.constant 0 : index
    %c0_5 = arith.constant 0 : index
    %8 = vector.load %arg3[%c0_3, %c0_4, %c0_5] : memref<1x1x32xf32, #tpu.memory_space<vmem>>, vector<1x1x32xf32>
    %9 = vector.shape_cast %8 : vector<1x1x32xf32> to vector<1x32xf32>
    %c0_6 = arith.constant 0 : index
    %c0_7 = arith.constant 0 : index
    %c0_8 = arith.constant 0 : index
    %10 = vector.load %arg4[%c0_6, %c0_7, %c0_8] : memref<1x1x32xf32, #tpu.memory_space<vmem>>, vector<1x1x32xf32>
    %11 = vector.shape_cast %10 : vector<1x1x32xf32> to vector<1x32xf32>
    %cst = arith.constant dense<0.000000e+00> : vector<24xf32>
    %12 = vector.multi_reduction <add>, %4, %cst [1] : vector<24x32xf32> to vector<24xf32>
    %13 = vector.shape_cast %12 : vector<24xf32> to vector<24x1xf32>
    %cst_9 = arith.constant 3.200000e+01 : f32
    %14 = vector.broadcast %cst_9 : f32 to vector<24x1xf32>
    %15 = arith.divf %13, %14 : vector<24x1xf32>
    %16 = vector.broadcast %15 : vector<24x1xf32> to vector<24x32xf32>
    %17 = arith.subf %4, %16 : vector<24x32xf32>
    %18 = arith.mulf %17, %17 : vector<24x32xf32>
    %cst_10 = arith.constant dense<0.000000e+00> : vector<24xf32>
    %19 = vector.multi_reduction <add>, %18, %cst_10 [1] : vector<24x32xf32> to vector<24xf32>
    %20 = vector.shape_cast %19 : vector<24xf32> to vector<24x1xf32>
    %cst_11 = arith.constant 3.200000e+01 : f32
    %21 = vector.broadcast %cst_11 : f32 to vector<24x1xf32>
    %22 = arith.divf %20, %21 : vector<24x1xf32>
    %23 = vector.broadcast %15 : vector<24x1xf32> to vector<24x32xf32>
    %24 = arith.subf %4, %23 : vector<24x32xf32>
    %cst_12 = arith.constant 9.99999974E-6 : f32
    %25 = vector.broadcast %cst_12 : f32 to vector<24x1xf32>
    %26 = arith.addf %22, %25 : vector<24x1xf32>
    %27 = math.rsqrt %26 : vector<24x1xf32>
    %28 = vector.broadcast %27 : vector<24x1xf32> to vector<24x32xf32>
    %29 = arith.mulf %24, %28 : vector<24x32xf32>
    %30 = vector.broadcast %9 : vector<1x32xf32> to vector<24x32xf32>
    %31 = arith.mulf %29, %30 : vector<24x32xf32>
    %32 = vector.broadcast %11 : vector<1x32xf32> to vector<24x32xf32>
    %33 = arith.addf %31, %32 : vector<24x32xf32>
    %34 = arith.truncf %33 : vector<24x32xf32> to vector<24x32xbf16>
    %c0_13 = arith.constant 0 : index
    %c0_14 = arith.constant 0 : index
    %c0_15 = arith.constant 0 : index
    %35 = vector.load %arg5[%c0_13, %c0_14, %c0_15] : memref<1x32x96xbf16, #tpu.memory_space<vmem>>, vector<1x32x96xbf16>
    %36 = vector.shape_cast %35 : vector<1x32x96xbf16> to vector<32x96xbf16>
    %cst_16 = arith.constant dense<0.000000e+00> : vector<24x96xf32>
    %37 = tpu.matmul %34, %36, %cst_16 {dimension_numbers = #tpu.dot_dimension_numbers<[1], [0], [0], [1], [0, 0, 1, 1], [], []>} : vector<24x32xbf16>, vector<32x96xbf16>, vector<24x96xf32> -> vector<24x96xf32>
    %c0_17 = arith.constant 0 : index
    %c0_18 = arith.constant 0 : index
    %c0_19 = arith.constant 0 : index
    %38 = vector.load %arg6[%c0_17, %c0_18, %c0_19] : memref<1x1x96xf32, #tpu.memory_space<vmem>>, vector<1x1x96xf32>
    %39 = vector.shape_cast %38 : vector<1x1x96xf32> to vector<1x96xf32>
    %40 = vector.broadcast %39 : vector<1x96xf32> to vector<24x96xf32>
    %41 = arith.addf %37, %40 : vector<24x96xf32>
    %c0_20 = arith.constant 0 : index
    %c0_21 = arith.constant 0 : index
    %c0_22 = arith.constant 0 : index
    %42 = vector.load %arg7[%c0_20, %c0_21, %c0_22] : memref<1x32x32xbf16, #tpu.memory_space<vmem>>, vector<1x32x32xbf16>
    %43 = vector.shape_cast %42 : vector<1x32x32xbf16> to vector<32x32xbf16>
    %cst_23 = arith.constant 0.000000e+00 : f32
    %44 = vector.broadcast %cst_23 : f32 to vector<24x32xf32>
    %45 = vector.extract_strided_slice %41 {offsets = [0, 0], sizes = [24, 8], strides = [1, 1]} : vector<24x96xf32> to vector<24x8xf32>
    %46 = arith.truncf %45 : vector<24x8xf32> to vector<24x8xbf16>
    %47 = vector.extract_strided_slice %41 {offsets = [0, 32], sizes = [24, 8], strides = [1, 1]} : vector<24x96xf32> to vector<24x8xf32>
    %48 = arith.truncf %47 : vector<24x8xf32> to vector<24x8xbf16>
    %49 = vector.extract_strided_slice %41 {offsets = [0, 64], sizes = [24, 8], strides = [1, 1]} : vector<24x96xf32> to vector<24x8xf32>
    %50 = arith.truncf %49 : vector<24x8xf32> to vector<24x8xbf16>
    %cst_24 = arith.constant dense<0.000000e+00> : vector<24x24xf32>
    %51 = tpu.matmul %46, %48, %cst_24 {dimension_numbers = #tpu.dot_dimension_numbers<[1], [1], [0], [0], [0, 0, 1, 0], [], []>} : vector<24x8xbf16>, vector<24x8xbf16>, vector<24x24xf32> -> vector<24x24xf32>
    %cst_25 = arith.constant 0.353553385 : f32
    %52 = vector.broadcast %cst_25 : f32 to vector<24x24xf32>
    %53 = arith.mulf %51, %52 : vector<24x24xf32>
    %cst_26 = arith.constant -1.000000e+30 : f32
    %54 = vector.broadcast %cst_26 : f32 to vector<24x24xf32>
    %55 = arith.select %7, %53, %54 : vector<24x24xi1>, vector<24x24xf32>
    %cst_27 = arith.constant dense<0xFF800000> : vector<24xf32>
    %56 = vector.multi_reduction <maximumf>, %55, %cst_27 [1] : vector<24x24xf32> to vector<24xf32>
    %57 = vector.shape_cast %56 : vector<24xf32> to vector<24x1xf32>
    %58 = vector.broadcast %57 : vector<24x1xf32> to vector<24x24xf32>
    %59 = arith.subf %55, %58 : vector<24x24xf32>
    %60 = math.exp %59 : vector<24x24xf32>
    %cst_28 = arith.constant dense<0.000000e+00> : vector<24xf32>
    %61 = vector.multi_reduction <add>, %60, %cst_28 [1] : vector<24x24xf32> to vector<24xf32>
    %62 = vector.shape_cast %61 : vector<24xf32> to vector<24x1xf32>
    %63 = vector.broadcast %62 : vector<24x1xf32> to vector<24x24xf32>
    %64 = arith.divf %60, %63 : vector<24x24xf32>
    %65 = arith.truncf %64 : vector<24x24xf32> to vector<24x24xbf16>
    %cst_29 = arith.constant dense<0.000000e+00> : vector<24x8xf32>
    %66 = tpu.matmul %65, %50, %cst_29 {dimension_numbers = #tpu.dot_dimension_numbers<[1], [0], [0], [1], [0, 0, 1, 1], [], []>} : vector<24x24xbf16>, vector<24x8xbf16>, vector<24x8xf32> -> vector<24x8xf32>
    %67 = arith.truncf %66 : vector<24x8xf32> to vector<24x8xbf16>
    %68 = vector.extract_strided_slice %43 {offsets = [0, 0], sizes = [8, 32], strides = [1, 1]} : vector<32x32xbf16> to vector<8x32xbf16>
    %cst_30 = arith.constant dense<0.000000e+00> : vector<24x32xf32>
    %69 = tpu.matmul %67, %68, %cst_30 {dimension_numbers = #tpu.dot_dimension_numbers<[1], [0], [0], [1], [0, 0, 1, 1], [], []>} : vector<24x8xbf16>, vector<8x32xbf16>, vector<24x32xf32> -> vector<24x32xf32>
    %70 = arith.addf %44, %69 : vector<24x32xf32>
    %71 = vector.extract_strided_slice %41 {offsets = [0, 8], sizes = [24, 8], strides = [1, 1]} : vector<24x96xf32> to vector<24x8xf32>
    %72 = arith.truncf %71 : vector<24x8xf32> to vector<24x8xbf16>
    %73 = vector.extract_strided_slice %41 {offsets = [0, 40], sizes = [24, 8], strides = [1, 1]} : vector<24x96xf32> to vector<24x8xf32>
    %74 = arith.truncf %73 : vector<24x8xf32> to vector<24x8xbf16>
    %75 = vector.extract_strided_slice %41 {offsets = [0, 72], sizes = [24, 8], strides = [1, 1]} : vector<24x96xf32> to vector<24x8xf32>
    %76 = arith.truncf %75 : vector<24x8xf32> to vector<24x8xbf16>
    %cst_31 = arith.constant dense<0.000000e+00> : vector<24x24xf32>
    %77 = tpu.matmul %72, %74, %cst_31 {dimension_numbers = #tpu.dot_dimension_numbers<[1], [1], [0], [0], [0, 0, 1, 0], [], []>} : vector<24x8xbf16>, vector<24x8xbf16>, vector<24x24xf32> -> vector<24x24xf32>
    %cst_32 = arith.constant 0.353553385 : f32
    %78 = vector.broadcast %cst_32 : f32 to vector<24x24xf32>
    %79 = arith.mulf %77, %78 : vector<24x24xf32>
    %cst_33 = arith.constant -1.000000e+30 : f32
    %80 = vector.broadcast %cst_33 : f32 to vector<24x24xf32>
    %81 = arith.select %7, %79, %80 : vector<24x24xi1>, vector<24x24xf32>
    %cst_34 = arith.constant dense<0xFF800000> : vector<24xf32>
    %82 = vector.multi_reduction <maximumf>, %81, %cst_34 [1] : vector<24x24xf32> to vector<24xf32>
    %83 = vector.shape_cast %82 : vector<24xf32> to vector<24x1xf32>
    %84 = vector.broadcast %83 : vector<24x1xf32> to vector<24x24xf32>
    %85 = arith.subf %81, %84 : vector<24x24xf32>
    %86 = math.exp %85 : vector<24x24xf32>
    %cst_35 = arith.constant dense<0.000000e+00> : vector<24xf32>
    %87 = vector.multi_reduction <add>, %86, %cst_35 [1] : vector<24x24xf32> to vector<24xf32>
    %88 = vector.shape_cast %87 : vector<24xf32> to vector<24x1xf32>
    %89 = vector.broadcast %88 : vector<24x1xf32> to vector<24x24xf32>
    %90 = arith.divf %86, %89 : vector<24x24xf32>
    %91 = arith.truncf %90 : vector<24x24xf32> to vector<24x24xbf16>
    %cst_36 = arith.constant dense<0.000000e+00> : vector<24x8xf32>
    %92 = tpu.matmul %91, %76, %cst_36 {dimension_numbers = #tpu.dot_dimension_numbers<[1], [0], [0], [1], [0, 0, 1, 1], [], []>} : vector<24x24xbf16>, vector<24x8xbf16>, vector<24x8xf32> -> vector<24x8xf32>
    %93 = arith.truncf %92 : vector<24x8xf32> to vector<24x8xbf16>
    %94 = vector.extract_strided_slice %43 {offsets = [8, 0], sizes = [8, 32], strides = [1, 1]} : vector<32x32xbf16> to vector<8x32xbf16>
    %cst_37 = arith.constant dense<0.000000e+00> : vector<24x32xf32>
    %95 = tpu.matmul %93, %94, %cst_37 {dimension_numbers = #tpu.dot_dimension_numbers<[1], [0], [0], [1], [0, 0, 1, 1], [], []>} : vector<24x8xbf16>, vector<8x32xbf16>, vector<24x32xf32> -> vector<24x32xf32>
    %96 = arith.addf %70, %95 : vector<24x32xf32>
    %97 = vector.extract_strided_slice %41 {offsets = [0, 16], sizes = [24, 8], strides = [1, 1]} : vector<24x96xf32> to vector<24x8xf32>
    %98 = arith.truncf %97 : vector<24x8xf32> to vector<24x8xbf16>
    %99 = vector.extract_strided_slice %41 {offsets = [0, 48], sizes = [24, 8], strides = [1, 1]} : vector<24x96xf32> to vector<24x8xf32>
    %100 = arith.truncf %99 : vector<24x8xf32> to vector<24x8xbf16>
    %101 = vector.extract_strided_slice %41 {offsets = [0, 80], sizes = [24, 8], strides = [1, 1]} : vector<24x96xf32> to vector<24x8xf32>
    %102 = arith.truncf %101 : vector<24x8xf32> to vector<24x8xbf16>
    %cst_38 = arith.constant dense<0.000000e+00> : vector<24x24xf32>
    %103 = tpu.matmul %98, %100, %cst_38 {dimension_numbers = #tpu.dot_dimension_numbers<[1], [1], [0], [0], [0, 0, 1, 0], [], []>} : vector<24x8xbf16>, vector<24x8xbf16>, vector<24x24xf32> -> vector<24x24xf32>
    %cst_39 = arith.constant 0.353553385 : f32
    %104 = vector.broadcast %cst_39 : f32 to vector<24x24xf32>
    %105 = arith.mulf %103, %104 : vector<24x24xf32>
    %cst_40 = arith.constant -1.000000e+30 : f32
    %106 = vector.broadcast %cst_40 : f32 to vector<24x24xf32>
    %107 = arith.select %7, %105, %106 : vector<24x24xi1>, vector<24x24xf32>
    %cst_41 = arith.constant dense<0xFF800000> : vector<24xf32>
    %108 = vector.multi_reduction <maximumf>, %107, %cst_41 [1] : vector<24x24xf32> to vector<24xf32>
    %109 = vector.shape_cast %108 : vector<24xf32> to vector<24x1xf32>
    %110 = vector.broadcast %109 : vector<24x1xf32> to vector<24x24xf32>
    %111 = arith.subf %107, %110 : vector<24x24xf32>
    %112 = math.exp %111 : vector<24x24xf32>
    %cst_42 = arith.constant dense<0.000000e+00> : vector<24xf32>
    %113 = vector.multi_reduction <add>, %112, %cst_42 [1] : vector<24x24xf32> to vector<24xf32>
    %114 = vector.shape_cast %113 : vector<24xf32> to vector<24x1xf32>
    %115 = vector.broadcast %114 : vector<24x1xf32> to vector<24x24xf32>
    %116 = arith.divf %112, %115 : vector<24x24xf32>
    %117 = arith.truncf %116 : vector<24x24xf32> to vector<24x24xbf16>
    %cst_43 = arith.constant dense<0.000000e+00> : vector<24x8xf32>
    %118 = tpu.matmul %117, %102, %cst_43 {dimension_numbers = #tpu.dot_dimension_numbers<[1], [0], [0], [1], [0, 0, 1, 1], [], []>} : vector<24x24xbf16>, vector<24x8xbf16>, vector<24x8xf32> -> vector<24x8xf32>
    %119 = arith.truncf %118 : vector<24x8xf32> to vector<24x8xbf16>
    %120 = vector.extract_strided_slice %43 {offsets = [16, 0], sizes = [8, 32], strides = [1, 1]} : vector<32x32xbf16> to vector<8x32xbf16>
    %cst_44 = arith.constant dense<0.000000e+00> : vector<24x32xf32>
    %121 = tpu.matmul %119, %120, %cst_44 {dimension_numbers = #tpu.dot_dimension_numbers<[1], [0], [0], [1], [0, 0, 1, 1], [], []>} : vector<24x8xbf16>, vector<8x32xbf16>, vector<24x32xf32> -> vector<24x32xf32>
    %122 = arith.addf %96, %121 : vector<24x32xf32>
    %123 = vector.extract_strided_slice %41 {offsets = [0, 24], sizes = [24, 8], strides = [1, 1]} : vector<24x96xf32> to vector<24x8xf32>
    %124 = arith.truncf %123 : vector<24x8xf32> to vector<24x8xbf16>
    %125 = vector.extract_strided_slice %41 {offsets = [0, 56], sizes = [24, 8], strides = [1, 1]} : vector<24x96xf32> to vector<24x8xf32>
    %126 = arith.truncf %125 : vector<24x8xf32> to vector<24x8xbf16>
    %127 = vector.extract_strided_slice %41 {offsets = [0, 88], sizes = [24, 8], strides = [1, 1]} : vector<24x96xf32> to vector<24x8xf32>
    %128 = arith.truncf %127 : vector<24x8xf32> to vector<24x8xbf16>
    %cst_45 = arith.constant dense<0.000000e+00> : vector<24x24xf32>
    %129 = tpu.matmul %124, %126, %cst_45 {dimension_numbers = #tpu.dot_dimension_numbers<[1], [1], [0], [0], [0, 0, 1, 0], [], []>} : vector<24x8xbf16>, vector<24x8xbf16>, vector<24x24xf32> -> vector<24x24xf32>
    %cst_46 = arith.constant 0.353553385 : f32
    %130 = vector.broadcast %cst_46 : f32 to vector<24x24xf32>
    %131 = arith.mulf %129, %130 : vector<24x24xf32>
    %cst_47 = arith.constant -1.000000e+30 : f32
    %132 = vector.broadcast %cst_47 : f32 to vector<24x24xf32>
    %133 = arith.select %7, %131, %132 : vector<24x24xi1>, vector<24x24xf32>
    %cst_48 = arith.constant dense<0xFF800000> : vector<24xf32>
    %134 = vector.multi_reduction <maximumf>, %133, %cst_48 [1] : vector<24x24xf32> to vector<24xf32>
    %135 = vector.shape_cast %134 : vector<24xf32> to vector<24x1xf32>
    %136 = vector.broadcast %135 : vector<24x1xf32> to vector<24x24xf32>
    %137 = arith.subf %133, %136 : vector<24x24xf32>
    %138 = math.exp %137 : vector<24x24xf32>
    %cst_49 = arith.constant dense<0.000000e+00> : vector<24xf32>
    %139 = vector.multi_reduction <add>, %138, %cst_49 [1] : vector<24x24xf32> to vector<24xf32>
    %140 = vector.shape_cast %139 : vector<24xf32> to vector<24x1xf32>
    %141 = vector.broadcast %140 : vector<24x1xf32> to vector<24x24xf32>
    %142 = arith.divf %138, %141 : vector<24x24xf32>
    %143 = arith.truncf %142 : vector<24x24xf32> to vector<24x24xbf16>
    %cst_50 = arith.constant dense<0.000000e+00> : vector<24x8xf32>
    %144 = tpu.matmul %143, %128, %cst_50 {dimension_numbers = #tpu.dot_dimension_numbers<[1], [0], [0], [1], [0, 0, 1, 1], [], []>} : vector<24x24xbf16>, vector<24x8xbf16>, vector<24x8xf32> -> vector<24x8xf32>
    %145 = arith.truncf %144 : vector<24x8xf32> to vector<24x8xbf16>
    %146 = vector.extract_strided_slice %43 {offsets = [24, 0], sizes = [8, 32], strides = [1, 1]} : vector<32x32xbf16> to vector<8x32xbf16>
    %cst_51 = arith.constant dense<0.000000e+00> : vector<24x32xf32>
    %147 = tpu.matmul %145, %146, %cst_51 {dimension_numbers = #tpu.dot_dimension_numbers<[1], [0], [0], [1], [0, 0, 1, 1], [], []>} : vector<24x8xbf16>, vector<8x32xbf16>, vector<24x32xf32> -> vector<24x32xf32>
    %148 = arith.addf %122, %147 : vector<24x32xf32>
    %149 = arith.addf %4, %148 : vector<24x32xf32>
    %c0_52 = arith.constant 0 : index
    %c0_53 = arith.constant 0 : index
    %c0_54 = arith.constant 0 : index
    %150 = vector.load %arg8[%c0_52, %c0_53, %c0_54] : memref<1x1x32xf32, #tpu.memory_space<vmem>>, vector<1x1x32xf32>
    %151 = vector.shape_cast %150 : vector<1x1x32xf32> to vector<1x32xf32>
    %152 = vector.broadcast %151 : vector<1x32xf32> to vector<24x32xf32>
    %153 = arith.addf %149, %152 : vector<24x32xf32>
    %c0_55 = arith.constant 0 : index
    %c0_56 = arith.constant 0 : index
    %c0_57 = arith.constant 0 : index
    %154 = vector.load %arg9[%c0_55, %c0_56, %c0_57] : memref<1x1x32xf32, #tpu.memory_space<vmem>>, vector<1x1x32xf32>
    %155 = vector.shape_cast %154 : vector<1x1x32xf32> to vector<1x32xf32>
    %c0_58 = arith.constant 0 : index
    %c0_59 = arith.constant 0 : index
    %c0_60 = arith.constant 0 : index
    %156 = vector.load %arg10[%c0_58, %c0_59, %c0_60] : memref<1x1x32xf32, #tpu.memory_space<vmem>>, vector<1x1x32xf32>
    %157 = vector.shape_cast %156 : vector<1x1x32xf32> to vector<1x32xf32>
    %cst_61 = arith.constant dense<0.000000e+00> : vector<24xf32>
    %158 = vector.multi_reduction <add>, %153, %cst_61 [1] : vector<24x32xf32> to vector<24xf32>
    %159 = vector.shape_cast %158 : vector<24xf32> to vector<24x1xf32>
    %cst_62 = arith.constant 3.200000e+01 : f32
    %160 = vector.broadcast %cst_62 : f32 to vector<24x1xf32>
    %161 = arith.divf %159, %160 : vector<24x1xf32>
    %162 = vector.broadcast %161 : vector<24x1xf32> to vector<24x32xf32>
    %163 = arith.subf %153, %162 : vector<24x32xf32>
    %164 = arith.mulf %163, %163 : vector<24x32xf32>
    %cst_63 = arith.constant dense<0.000000e+00> : vector<24xf32>
    %165 = vector.multi_reduction <add>, %164, %cst_63 [1] : vector<24x32xf32> to vector<24xf32>
    %166 = vector.shape_cast %165 : vector<24xf32> to vector<24x1xf32>
    %cst_64 = arith.constant 3.200000e+01 : f32
    %167 = vector.broadcast %cst_64 : f32 to vector<24x1xf32>
    %168 = arith.divf %166, %167 : vector<24x1xf32>
    %169 = vector.broadcast %161 : vector<24x1xf32> to vector<24x32xf32>
    %170 = arith.subf %153, %169 : vector<24x32xf32>
    %cst_65 = arith.constant 9.99999974E-6 : f32
    %171 = vector.broadcast %cst_65 : f32 to vector<24x1xf32>
    %172 = arith.addf %168, %171 : vector<24x1xf32>
    %173 = math.rsqrt %172 : vector<24x1xf32>
    %174 = vector.broadcast %173 : vector<24x1xf32> to vector<24x32xf32>
    %175 = arith.mulf %170, %174 : vector<24x32xf32>
    %176 = vector.broadcast %155 : vector<1x32xf32> to vector<24x32xf32>
    %177 = arith.mulf %175, %176 : vector<24x32xf32>
    %178 = vector.broadcast %157 : vector<1x32xf32> to vector<24x32xf32>
    %179 = arith.addf %177, %178 : vector<24x32xf32>
    %180 = arith.truncf %179 : vector<24x32xf32> to vector<24x32xbf16>
    %c0_66 = arith.constant 0 : index
    %c0_67 = arith.constant 0 : index
    %c0_68 = arith.constant 0 : index
    %181 = vector.load %arg11[%c0_66, %c0_67, %c0_68] : memref<1x32x128xbf16, #tpu.memory_space<vmem>>, vector<1x32x128xbf16>
    %182 = vector.shape_cast %181 : vector<1x32x128xbf16> to vector<32x128xbf16>
    %cst_69 = arith.constant dense<0.000000e+00> : vector<24x128xf32>
    %183 = tpu.matmul %180, %182, %cst_69 {dimension_numbers = #tpu.dot_dimension_numbers<[1], [0], [0], [1], [0, 0, 1, 1], [], []>} : vector<24x32xbf16>, vector<32x128xbf16>, vector<24x128xf32> -> vector<24x128xf32>
    %c0_70 = arith.constant 0 : index
    %c0_71 = arith.constant 0 : index
    %c0_72 = arith.constant 0 : index
    %184 = vector.load %arg12[%c0_70, %c0_71, %c0_72] : memref<1x1x128xf32, #tpu.memory_space<vmem>>, vector<1x1x128xf32>
    %185 = vector.shape_cast %184 : vector<1x1x128xf32> to vector<1x128xf32>
    %186 = vector.broadcast %185 : vector<1x128xf32> to vector<24x128xf32>
    %187 = arith.addf %183, %186 : vector<24x128xf32>
    %cst_73 = arith.constant 5.000000e-01 : f32
    %188 = vector.broadcast %cst_73 : f32 to vector<24x128xf32>
    %189 = arith.mulf %188, %187 : vector<24x128xf32>
    %cst_74 = arith.constant 0.707106769 : f32
    %190 = vector.broadcast %cst_74 : f32 to vector<24x128xf32>
    %191 = arith.mulf %187, %190 : vector<24x128xf32>
    %cst_75 = arith.constant 0.000000e+00 : f32
    %192 = vector.broadcast %cst_75 : f32 to vector<24x128xf32>
    %193 = arith.cmpf oge, %191, %192 : vector<24x128xf32>
    %cst_76 = arith.constant 1.000000e+00 : f32
    %cst_77 = arith.constant -1.000000e+00 : f32
    %194 = vector.broadcast %cst_76 : f32 to vector<24x128xf32>
    %195 = vector.broadcast %cst_77 : f32 to vector<24x128xf32>
    %196 = arith.select %193, %194, %195 : vector<24x128xi1>, vector<24x128xf32>
    %197 = math.absf %191 : vector<24x128xf32>
    %cst_78 = arith.constant 0.327591091 : f32
    %198 = vector.broadcast %cst_78 : f32 to vector<24x128xf32>
    %199 = arith.mulf %198, %197 : vector<24x128xf32>
    %cst_79 = arith.constant 1.000000e+00 : f32
    %200 = vector.broadcast %cst_79 : f32 to vector<24x128xf32>
    %201 = arith.addf %200, %199 : vector<24x128xf32>
    %cst_80 = arith.constant 1.000000e+00 : f32
    %202 = vector.broadcast %cst_80 : f32 to vector<24x128xf32>
    %203 = arith.divf %202, %201 : vector<24x128xf32>
    %cst_81 = arith.constant 1.06140542 : f32
    %204 = vector.broadcast %cst_81 : f32 to vector<24x128xf32>
    %205 = arith.mulf %204, %203 : vector<24x128xf32>
    %cst_82 = arith.constant -1.45315206 : f32
    %206 = vector.broadcast %cst_82 : f32 to vector<24x128xf32>
    %207 = arith.addf %205, %206 : vector<24x128xf32>
    %208 = arith.mulf %207, %203 : vector<24x128xf32>
    %cst_83 = arith.constant 1.42141378 : f32
    %209 = vector.broadcast %cst_83 : f32 to vector<24x128xf32>
    %210 = arith.addf %208, %209 : vector<24x128xf32>
    %211 = arith.mulf %210, %203 : vector<24x128xf32>
    %cst_84 = arith.constant -0.284496725 : f32
    %212 = vector.broadcast %cst_84 : f32 to vector<24x128xf32>
    %213 = arith.addf %211, %212 : vector<24x128xf32>
    %214 = arith.mulf %213, %203 : vector<24x128xf32>
    %cst_85 = arith.constant 0.254829586 : f32
    %215 = vector.broadcast %cst_85 : f32 to vector<24x128xf32>
    %216 = arith.addf %214, %215 : vector<24x128xf32>
    %217 = arith.mulf %216, %203 : vector<24x128xf32>
    %cst_86 = arith.constant 0.000000e+00 : f32
    %218 = vector.broadcast %cst_86 : f32 to vector<24x128xf32>
    %219 = arith.subf %218, %197 : vector<24x128xf32>
    %220 = arith.mulf %219, %197 : vector<24x128xf32>
    %221 = math.exp %220 : vector<24x128xf32>
    %222 = arith.mulf %217, %221 : vector<24x128xf32>
    %cst_87 = arith.constant 1.000000e+00 : f32
    %223 = vector.broadcast %cst_87 : f32 to vector<24x128xf32>
    %224 = arith.subf %223, %222 : vector<24x128xf32>
    %225 = arith.mulf %196, %224 : vector<24x128xf32>
    %cst_88 = arith.constant 1.000000e+00 : f32
    %226 = vector.broadcast %cst_88 : f32 to vector<24x128xf32>
    %227 = arith.addf %226, %225 : vector<24x128xf32>
    %228 = arith.mulf %189, %227 : vector<24x128xf32>
    %229 = arith.truncf %228 : vector<24x128xf32> to vector<24x128xbf16>
    %c0_89 = arith.constant 0 : index
    %c0_90 = arith.constant 0 : index
    %c0_91 = arith.constant 0 : index
    %230 = vector.load %arg13[%c0_89, %c0_90, %c0_91] : memref<1x128x32xbf16, #tpu.memory_space<vmem>>, vector<1x128x32xbf16>
    %231 = vector.shape_cast %230 : vector<1x128x32xbf16> to vector<128x32xbf16>
    %cst_92 = arith.constant dense<0.000000e+00> : vector<24x32xf32>
    %232 = tpu.matmul %229, %231, %cst_92 {dimension_numbers = #tpu.dot_dimension_numbers<[1], [0], [0], [1], [0, 0, 1, 1], [], []>} : vector<24x128xbf16>, vector<128x32xbf16>, vector<24x32xf32> -> vector<24x32xf32>
    %233 = arith.addf %153, %232 : vector<24x32xf32>
    %c0_93 = arith.constant 0 : index
    %c0_94 = arith.constant 0 : index
    %c0_95 = arith.constant 0 : index
    %234 = vector.load %arg14[%c0_93, %c0_94, %c0_95] : memref<1x1x32xf32, #tpu.memory_space<vmem>>, vector<1x1x32xf32>
    %235 = vector.shape_cast %234 : vector<1x1x32xf32> to vector<1x32xf32>
    %236 = vector.broadcast %235 : vector<1x32xf32> to vector<24x32xf32>
    %237 = arith.addf %233, %236 : vector<24x32xf32>
    %c0_96 = arith.constant 0 : index
    %c0_97 = arith.constant 0 : index
    %c0_98 = arith.constant 0 : index
    %238 = vector.load %arg17[%c0_96, %c0_97, %c0_98] : memref<1x24x32xf32, #tpu.memory_space<vmem>>, vector<1x24x32xf32>
    %239 = vector.shape_cast %238 : vector<1x24x32xf32> to vector<24x32xf32>
    %240 = vector.shape_cast %237 : vector<24x32xf32> to vector<1x24x32xf32>
    tpu.vector_store %arg17[%c0_96, %c0_97, %c0_98], %240 {strides = array<i32>} : memref<1x24x32xf32, #tpu.memory_space<vmem>>, vector<1x24x32xf32>,
    %c1_i32 = arith.constant 1 : i32
    %241 = arith.cmpi eq, %arg1, %c1_i32 : i32
    %242 = arith.extui %241 : i1 to i32
    %c0_i32_99 = arith.constant 0 : i32
    %243 = arith.cmpi ne, %242, %c0_i32_99 : i32
    scf.if %243 {
      %c0_100 = arith.constant 0 : index
      %c0_101 = arith.constant 0 : index
      %244 = vector.load %arg15[%c0_100, %c0_101] : memref<1x32xf32, #tpu.memory_space<vmem>>, vector<1x32xf32>
      %c0_102 = arith.constant 0 : index
      %c0_103 = arith.constant 0 : index
      %245 = vector.load %arg16[%c0_102, %c0_103] : memref<1x32xf32, #tpu.memory_space<vmem>>, vector<1x32xf32>
      %cst_104 = arith.constant dense<0.000000e+00> : vector<24xf32>
      %246 = vector.multi_reduction <add>, %237, %cst_104 [1] : vector<24x32xf32> to vector<24xf32>
      %247 = vector.shape_cast %246 : vector<24xf32> to vector<24x1xf32>
      %cst_105 = arith.constant 3.200000e+01 : f32
      %248 = vector.broadcast %cst_105 : f32 to vector<24x1xf32>
      %249 = arith.divf %247, %248 : vector<24x1xf32>
      %250 = vector.broadcast %249 : vector<24x1xf32> to vector<24x32xf32>
      %251 = arith.subf %237, %250 : vector<24x32xf32>
      %252 = arith.mulf %251, %251 : vector<24x32xf32>
      %cst_106 = arith.constant dense<0.000000e+00> : vector<24xf32>
      %253 = vector.multi_reduction <add>, %252, %cst_106 [1] : vector<24x32xf32> to vector<24xf32>
      %254 = vector.shape_cast %253 : vector<24xf32> to vector<24x1xf32>
      %cst_107 = arith.constant 3.200000e+01 : f32
      %255 = vector.broadcast %cst_107 : f32 to vector<24x1xf32>
      %256 = arith.divf %254, %255 : vector<24x1xf32>
      %257 = vector.broadcast %249 : vector<24x1xf32> to vector<24x32xf32>
      %258 = arith.subf %237, %257 : vector<24x32xf32>
      %cst_108 = arith.constant 9.99999974E-6 : f32
      %259 = vector.broadcast %cst_108 : f32 to vector<24x1xf32>
      %260 = arith.addf %256, %259 : vector<24x1xf32>
      %261 = math.rsqrt %260 : vector<24x1xf32>
      %262 = vector.broadcast %261 : vector<24x1xf32> to vector<24x32xf32>
      %263 = arith.mulf %258, %262 : vector<24x32xf32>
      %264 = vector.broadcast %244 : vector<1x32xf32> to vector<24x32xf32>
      %265 = arith.mulf %263, %264 : vector<24x32xf32>
      %266 = vector.broadcast %245 : vector<1x32xf32> to vector<24x32xf32>
      %267 = arith.addf %265, %266 : vector<24x32xf32>
      %c0_109 = arith.constant 0 : index
      %c0_110 = arith.constant 0 : index
      %c0_111 = arith.constant 0 : index
      %268 = vector.load %arg17[%c0_109, %c0_110, %c0_111] : memref<1x24x32xf32, #tpu.memory_space<vmem>>, vector<1x24x32xf32>
      %269 = vector.shape_cast %268 : vector<1x24x32xf32> to vector<24x32xf32>
      %270 = vector.shape_cast %267 : vector<24x32xf32> to vector<1x24x32xf32>
      tpu.vector_store %arg17[%c0_109, %c0_110, %c0_111], %270 {strides = array<i32>} : memref<1x24x32xf32, #tpu.memory_space<vmem>>, vector<1x24x32xf32>,
    } else {
    }
    return
  }
  func.func @transform_0(%arg0: i32, %arg1: i32) -> (i32, i32, i32) {
    %c0_i32 = arith.constant 0 : i32
    %c0_i32_0 = arith.constant 0 : i32
    %c0_i32_1 = arith.constant 0 : i32
    return %arg0, %c0_i32, %c0_i32_0 : i32, i32, i32
  }
  func.func @transform_1(%arg0: i32, %arg1: i32) -> (i32, i32, i32) {
    %c0_i32 = arith.constant 0 : i32
    %c0_i32_0 = arith.constant 0 : i32
    %c0_i32_1 = arith.constant 0 : i32
    return %arg1, %c0_i32, %c0_i32_0 : i32, i32, i32
  }
  func.func @transform_2(%arg0: i32, %arg1: i32) -> (i32, i32, i32) {
    %c0_i32 = arith.constant 0 : i32
    %c0_i32_0 = arith.constant 0 : i32
    %c0_i32_1 = arith.constant 0 : i32
    return %arg1, %c0_i32, %c0_i32_0 : i32, i32, i32
  }
  func.func @transform_3(%arg0: i32, %arg1: i32) -> (i32, i32, i32) {
    %c0_i32 = arith.constant 0 : i32
    %c0_i32_0 = arith.constant 0 : i32
    %c0_i32_1 = arith.constant 0 : i32
    return %arg1, %c0_i32, %c0_i32_0 : i32, i32, i32
  }
  func.func @transform_4(%arg0: i32, %arg1: i32) -> (i32, i32, i32) {
    %c0_i32 = arith.constant 0 : i32
    %c0_i32_0 = arith.constant 0 : i32
    %c0_i32_1 = arith.constant 0 : i32
    return %arg1, %c0_i32, %c0_i32_0 : i32, i32, i32
  }
  func.func @transform_5(%arg0: i32, %arg1: i32) -> (i32, i32, i32) {
    %c0_i32 = arith.constant 0 : i32
    %c0_i32_0 = arith.constant 0 : i32
    %c0_i32_1 = arith.constant 0 : i32
    return %arg1, %c0_i32, %c0_i32_0 : i32, i32, i32
  }
  func.func @transform_6(%arg0: i32, %arg1: i32) -> (i32, i32, i32) {
    %c0_i32 = arith.constant 0 : i32
    %c0_i32_0 = arith.constant 0 : i32
    %c0_i32_1 = arith.constant 0 : i32
    return %arg1, %c0_i32, %c0_i32_0 : i32, i32, i32
  }
  func.func @transform_7(%arg0: i32, %arg1: i32) -> (i32, i32, i32) {
    %c0_i32 = arith.constant 0 : i32
    %c0_i32_0 = arith.constant 0 : i32
    %c0_i32_1 = arith.constant 0 : i32
    return %arg1, %c0_i32, %c0_i32_0 : i32, i32, i32
  }
  func.func @transform_8(%arg0: i32, %arg1: i32) -> (i32, i32, i32) {
    %c0_i32 = arith.constant 0 : i32
    %c0_i32_0 = arith.constant 0 : i32
    %c0_i32_1 = arith.constant 0 : i32
    return %arg1, %c0_i32, %c0_i32_0 : i32, i32, i32
  }
  func.func @transform_9(%arg0: i32, %arg1: i32) -> (i32, i32, i32) {
    %c0_i32 = arith.constant 0 : i32
    %c0_i32_0 = arith.constant 0 : i32
    %c0_i32_1 = arith.constant 0 : i32
    return %arg1, %c0_i32, %c0_i32_0 : i32, i32, i32
  }
  func.func @transform_10(%arg0: i32, %arg1: i32) -> (i32, i32, i32) {
    %c0_i32 = arith.constant 0 : i32
    %c0_i32_0 = arith.constant 0 : i32
    %c0_i32_1 = arith.constant 0 : i32
    return %arg1, %c0_i32, %c0_i32_0 : i32, i32, i32
  }
  func.func @transform_11(%arg0: i32, %arg1: i32) -> (i32, i32, i32) {
    %c0_i32 = arith.constant 0 : i32
    %c0_i32_0 = arith.constant 0 : i32
    %c0_i32_1 = arith.constant 0 : i32
    return %arg1, %c0_i32, %c0_i32_0 : i32, i32, i32
  }
  func.func @transform_12(%arg0: i32, %arg1: i32) -> (i32, i32, i32) {
    %c0_i32 = arith.constant 0 : i32
    %c0_i32_0 = arith.constant 0 : i32
    %c0_i32_1 = arith.constant 0 : i32
    return %arg1, %c0_i32, %c0_i32_0 : i32, i32, i32
  }
  func.func @transform_13(%arg0: i32, %arg1: i32) -> (i32, i32) {
    %c0_i32 = arith.constant 0 : i32
    %c0_i32_0 = arith.constant 0 : i32
    %c0_i32_1 = arith.constant 0 : i32
    return %c0_i32, %c0_i32_0 : i32, i32
  }
  func.func @transform_14(%arg0: i32, %arg1: i32) -> (i32, i32) {
    %c0_i32 = arith.constant 0 : i32
    %c0_i32_0 = arith.constant 0 : i32
    %c0_i32_1 = arith.constant 0 : i32
    return %c0_i32, %c0_i32_0 : i32, i32
  }
  func.func @transform_15(%arg0: i32, %arg1: i32) -> (i32, i32, i32) {
    %c0_i32 = arith.constant 0 : i32
    %c0_i32_0 = arith.constant 0 : i32
    %c0_i32_1 = arith.constant 0 : i32
    return %arg0, %c0_i32, %c0_i32_0 : i32, i32, i32
  }
}

module attributes {stable_mosaic.version = 11 : i64} {
  func.func @_mlp3_kernel(%arg0: i32, %arg1: memref<8x32xf32, #tpu.memory_space<vmem>>, %arg2: memref<32x1152xbf16, #tpu.memory_space<vmem>>, %arg3: memref<1x1152xf32, #tpu.memory_space<vmem>>, %arg4: memref<1152x1152xbf16, #tpu.memory_space<vmem>>, %arg5: memref<1x1152xf32, #tpu.memory_space<vmem>>, %arg6: memref<1152x128xbf16, #tpu.memory_space<vmem>>, %arg7: memref<1x128xf32, #tpu.memory_space<vmem>>, %arg8: memref<8x128xf32, #tpu.memory_space<vmem>>) attributes {dimension_semantics = [#tpu.dimension_semantics<parallel>], iteration_bounds = array<i64: 1>, scalar_prefetch = 0 : i64, scratch_operands = 0 : i64, tpu.core_type = #tpu.core_type<tc>, window_params = [{transform_indices = @transform_0, window_bounds = array<i64: 8, 32>}, {pipeline_mode = #tpu.pipeline_mode<synchronous>, transform_indices = @transform_1, window_bounds = array<i64: 32, 1152>}, {pipeline_mode = #tpu.pipeline_mode<synchronous>, transform_indices = @transform_2, window_bounds = array<i64: 1, 1152>}, {pipeline_mode = #tpu.pipeline_mode<synchronous>, transform_indices = @transform_3, window_bounds = array<i64: 1152, 1152>}, {pipeline_mode = #tpu.pipeline_mode<synchronous>, transform_indices = @transform_4, window_bounds = array<i64: 1, 1152>}, {pipeline_mode = #tpu.pipeline_mode<synchronous>, transform_indices = @transform_5, window_bounds = array<i64: 1152, 128>}, {pipeline_mode = #tpu.pipeline_mode<synchronous>, transform_indices = @transform_6, window_bounds = array<i64: 1, 128>}, {transform_indices = @transform_7, window_bounds = array<i64: 8, 128>}]} {
    %c0 = arith.constant 0 : index
    %c0_0 = arith.constant 0 : index
    %0 = vector.load %arg1[%c0, %c0_0] : memref<8x32xf32, #tpu.memory_space<vmem>>, vector<8x32xf32>
    %1 = arith.truncf %0 : vector<8x32xf32> to vector<8x32xbf16>
    %c0_1 = arith.constant 0 : index
    %c0_2 = arith.constant 0 : index
    %2 = vector.load %arg2[%c0_1, %c0_2] : memref<32x1152xbf16, #tpu.memory_space<vmem>>, vector<32x1152xbf16>
    %cst = arith.constant dense<0.000000e+00> : vector<8x1152xf32>
    %3 = tpu.matmul %1, %2, %cst {dimension_numbers = #tpu.dot_dimension_numbers<[1], [0], [0], [1], [0, 0, 1, 1], [], []>} : vector<8x32xbf16>, vector<32x1152xbf16>, vector<8x1152xf32> -> vector<8x1152xf32>
    %c0_3 = arith.constant 0 : index
    %c0_4 = arith.constant 0 : index
    %4 = vector.load %arg3[%c0_3, %c0_4] : memref<1x1152xf32, #tpu.memory_space<vmem>>, vector<1x1152xf32>
    %5 = vector.broadcast %4 : vector<1x1152xf32> to vector<8x1152xf32>
    %6 = arith.addf %3, %5 : vector<8x1152xf32>
    %cst_5 = arith.constant 5.000000e-01 : f32
    %7 = vector.broadcast %cst_5 : f32 to vector<8x1152xf32>
    %8 = arith.mulf %7, %6 : vector<8x1152xf32>
    %cst_6 = arith.constant 0.707106769 : f32
    %9 = vector.broadcast %cst_6 : f32 to vector<8x1152xf32>
    %10 = arith.mulf %6, %9 : vector<8x1152xf32>
    %cst_7 = arith.constant 0.000000e+00 : f32
    %11 = vector.broadcast %cst_7 : f32 to vector<8x1152xf32>
    %12 = arith.cmpf oge, %10, %11 : vector<8x1152xf32>
    %cst_8 = arith.constant 1.000000e+00 : f32
    %cst_9 = arith.constant -1.000000e+00 : f32
    %13 = vector.broadcast %cst_8 : f32 to vector<8x1152xf32>
    %14 = vector.broadcast %cst_9 : f32 to vector<8x1152xf32>
    %15 = arith.select %12, %13, %14 : vector<8x1152xi1>, vector<8x1152xf32>
    %16 = math.absf %10 : vector<8x1152xf32>
    %cst_10 = arith.constant 0.327591091 : f32
    %17 = vector.broadcast %cst_10 : f32 to vector<8x1152xf32>
    %18 = arith.mulf %17, %16 : vector<8x1152xf32>
    %cst_11 = arith.constant 1.000000e+00 : f32
    %19 = vector.broadcast %cst_11 : f32 to vector<8x1152xf32>
    %20 = arith.addf %19, %18 : vector<8x1152xf32>
    %cst_12 = arith.constant 1.000000e+00 : f32
    %21 = vector.broadcast %cst_12 : f32 to vector<8x1152xf32>
    %22 = arith.divf %21, %20 : vector<8x1152xf32>
    %cst_13 = arith.constant 1.06140542 : f32
    %23 = vector.broadcast %cst_13 : f32 to vector<8x1152xf32>
    %24 = arith.mulf %23, %22 : vector<8x1152xf32>
    %cst_14 = arith.constant -1.45315206 : f32
    %25 = vector.broadcast %cst_14 : f32 to vector<8x1152xf32>
    %26 = arith.addf %24, %25 : vector<8x1152xf32>
    %27 = arith.mulf %26, %22 : vector<8x1152xf32>
    %cst_15 = arith.constant 1.42141378 : f32
    %28 = vector.broadcast %cst_15 : f32 to vector<8x1152xf32>
    %29 = arith.addf %27, %28 : vector<8x1152xf32>
    %30 = arith.mulf %29, %22 : vector<8x1152xf32>
    %cst_16 = arith.constant -0.284496725 : f32
    %31 = vector.broadcast %cst_16 : f32 to vector<8x1152xf32>
    %32 = arith.addf %30, %31 : vector<8x1152xf32>
    %33 = arith.mulf %32, %22 : vector<8x1152xf32>
    %cst_17 = arith.constant 0.254829586 : f32
    %34 = vector.broadcast %cst_17 : f32 to vector<8x1152xf32>
    %35 = arith.addf %33, %34 : vector<8x1152xf32>
    %36 = arith.mulf %35, %22 : vector<8x1152xf32>
    %cst_18 = arith.constant 0.000000e+00 : f32
    %37 = vector.broadcast %cst_18 : f32 to vector<8x1152xf32>
    %38 = arith.subf %37, %16 : vector<8x1152xf32>
    %39 = arith.mulf %38, %16 : vector<8x1152xf32>
    %40 = math.exp %39 : vector<8x1152xf32>
    %41 = arith.mulf %36, %40 : vector<8x1152xf32>
    %cst_19 = arith.constant 1.000000e+00 : f32
    %42 = vector.broadcast %cst_19 : f32 to vector<8x1152xf32>
    %43 = arith.subf %42, %41 : vector<8x1152xf32>
    %44 = arith.mulf %15, %43 : vector<8x1152xf32>
    %cst_20 = arith.constant 1.000000e+00 : f32
    %45 = vector.broadcast %cst_20 : f32 to vector<8x1152xf32>
    %46 = arith.addf %45, %44 : vector<8x1152xf32>
    %47 = arith.mulf %8, %46 : vector<8x1152xf32>
    %48 = arith.truncf %47 : vector<8x1152xf32> to vector<8x1152xbf16>
    %c0_21 = arith.constant 0 : index
    %c0_22 = arith.constant 0 : index
    %49 = vector.load %arg4[%c0_21, %c0_22] : memref<1152x1152xbf16, #tpu.memory_space<vmem>>, vector<1152x1152xbf16>
    %cst_23 = arith.constant dense<0.000000e+00> : vector<8x1152xf32>
    %50 = tpu.matmul %48, %49, %cst_23 {dimension_numbers = #tpu.dot_dimension_numbers<[1], [0], [0], [1], [0, 0, 1, 1], [], []>} : vector<8x1152xbf16>, vector<1152x1152xbf16>, vector<8x1152xf32> -> vector<8x1152xf32>
    %c0_24 = arith.constant 0 : index
    %c0_25 = arith.constant 0 : index
    %51 = vector.load %arg5[%c0_24, %c0_25] : memref<1x1152xf32, #tpu.memory_space<vmem>>, vector<1x1152xf32>
    %52 = vector.broadcast %51 : vector<1x1152xf32> to vector<8x1152xf32>
    %53 = arith.addf %50, %52 : vector<8x1152xf32>
    %cst_26 = arith.constant 5.000000e-01 : f32
    %54 = vector.broadcast %cst_26 : f32 to vector<8x1152xf32>
    %55 = arith.mulf %54, %53 : vector<8x1152xf32>
    %cst_27 = arith.constant 0.707106769 : f32
    %56 = vector.broadcast %cst_27 : f32 to vector<8x1152xf32>
    %57 = arith.mulf %53, %56 : vector<8x1152xf32>
    %cst_28 = arith.constant 0.000000e+00 : f32
    %58 = vector.broadcast %cst_28 : f32 to vector<8x1152xf32>
    %59 = arith.cmpf oge, %57, %58 : vector<8x1152xf32>
    %cst_29 = arith.constant 1.000000e+00 : f32
    %cst_30 = arith.constant -1.000000e+00 : f32
    %60 = vector.broadcast %cst_29 : f32 to vector<8x1152xf32>
    %61 = vector.broadcast %cst_30 : f32 to vector<8x1152xf32>
    %62 = arith.select %59, %60, %61 : vector<8x1152xi1>, vector<8x1152xf32>
    %63 = math.absf %57 : vector<8x1152xf32>
    %cst_31 = arith.constant 0.327591091 : f32
    %64 = vector.broadcast %cst_31 : f32 to vector<8x1152xf32>
    %65 = arith.mulf %64, %63 : vector<8x1152xf32>
    %cst_32 = arith.constant 1.000000e+00 : f32
    %66 = vector.broadcast %cst_32 : f32 to vector<8x1152xf32>
    %67 = arith.addf %66, %65 : vector<8x1152xf32>
    %cst_33 = arith.constant 1.000000e+00 : f32
    %68 = vector.broadcast %cst_33 : f32 to vector<8x1152xf32>
    %69 = arith.divf %68, %67 : vector<8x1152xf32>
    %cst_34 = arith.constant 1.06140542 : f32
    %70 = vector.broadcast %cst_34 : f32 to vector<8x1152xf32>
    %71 = arith.mulf %70, %69 : vector<8x1152xf32>
    %cst_35 = arith.constant -1.45315206 : f32
    %72 = vector.broadcast %cst_35 : f32 to vector<8x1152xf32>
    %73 = arith.addf %71, %72 : vector<8x1152xf32>
    %74 = arith.mulf %73, %69 : vector<8x1152xf32>
    %cst_36 = arith.constant 1.42141378 : f32
    %75 = vector.broadcast %cst_36 : f32 to vector<8x1152xf32>
    %76 = arith.addf %74, %75 : vector<8x1152xf32>
    %77 = arith.mulf %76, %69 : vector<8x1152xf32>
    %cst_37 = arith.constant -0.284496725 : f32
    %78 = vector.broadcast %cst_37 : f32 to vector<8x1152xf32>
    %79 = arith.addf %77, %78 : vector<8x1152xf32>
    %80 = arith.mulf %79, %69 : vector<8x1152xf32>
    %cst_38 = arith.constant 0.254829586 : f32
    %81 = vector.broadcast %cst_38 : f32 to vector<8x1152xf32>
    %82 = arith.addf %80, %81 : vector<8x1152xf32>
    %83 = arith.mulf %82, %69 : vector<8x1152xf32>
    %cst_39 = arith.constant 0.000000e+00 : f32
    %84 = vector.broadcast %cst_39 : f32 to vector<8x1152xf32>
    %85 = arith.subf %84, %63 : vector<8x1152xf32>
    %86 = arith.mulf %85, %63 : vector<8x1152xf32>
    %87 = math.exp %86 : vector<8x1152xf32>
    %88 = arith.mulf %83, %87 : vector<8x1152xf32>
    %cst_40 = arith.constant 1.000000e+00 : f32
    %89 = vector.broadcast %cst_40 : f32 to vector<8x1152xf32>
    %90 = arith.subf %89, %88 : vector<8x1152xf32>
    %91 = arith.mulf %62, %90 : vector<8x1152xf32>
    %cst_41 = arith.constant 1.000000e+00 : f32
    %92 = vector.broadcast %cst_41 : f32 to vector<8x1152xf32>
    %93 = arith.addf %92, %91 : vector<8x1152xf32>
    %94 = arith.mulf %55, %93 : vector<8x1152xf32>
    %95 = arith.truncf %94 : vector<8x1152xf32> to vector<8x1152xbf16>
    %c0_42 = arith.constant 0 : index
    %c0_43 = arith.constant 0 : index
    %96 = vector.load %arg6[%c0_42, %c0_43] : memref<1152x128xbf16, #tpu.memory_space<vmem>>, vector<1152x128xbf16>
    %cst_44 = arith.constant dense<0.000000e+00> : vector<8x128xf32>
    %97 = tpu.matmul %95, %96, %cst_44 {dimension_numbers = #tpu.dot_dimension_numbers<[1], [0], [0], [1], [0, 0, 1, 1], [], []>} : vector<8x1152xbf16>, vector<1152x128xbf16>, vector<8x128xf32> -> vector<8x128xf32>
    %c0_45 = arith.constant 0 : index
    %c0_46 = arith.constant 0 : index
    %98 = vector.load %arg7[%c0_45, %c0_46] : memref<1x128xf32, #tpu.memory_space<vmem>>, vector<1x128xf32>
    %99 = vector.broadcast %98 : vector<1x128xf32> to vector<8x128xf32>
    %100 = arith.addf %97, %99 : vector<8x128xf32>
    %c0_47 = arith.constant 0 : index
    %c0_48 = arith.constant 0 : index
    %101 = vector.load %arg8[%c0_47, %c0_48] : memref<8x128xf32, #tpu.memory_space<vmem>>, vector<8x128xf32>
    tpu.vector_store %arg8[%c0_47, %c0_48], %100 {strides = array<i32>} : memref<8x128xf32, #tpu.memory_space<vmem>>, vector<8x128xf32>,
    return
  }
  func.func @transform_0(%arg0: i32) -> (i32, i32) {
    %c0_i32 = arith.constant 0 : i32
    %c0_i32_0 = arith.constant 0 : i32
    return %arg0, %c0_i32 : i32, i32
  }
  func.func @transform_1(%arg0: i32) -> (i32, i32) {
    %c0_i32 = arith.constant 0 : i32
    %c0_i32_0 = arith.constant 0 : i32
    %c0_i32_1 = arith.constant 0 : i32
    return %c0_i32, %c0_i32_0 : i32, i32
  }
  func.func @transform_2(%arg0: i32) -> (i32, i32) {
    %c0_i32 = arith.constant 0 : i32
    %c0_i32_0 = arith.constant 0 : i32
    %c0_i32_1 = arith.constant 0 : i32
    return %c0_i32, %c0_i32_0 : i32, i32
  }
  func.func @transform_3(%arg0: i32) -> (i32, i32) {
    %c0_i32 = arith.constant 0 : i32
    %c0_i32_0 = arith.constant 0 : i32
    %c0_i32_1 = arith.constant 0 : i32
    return %c0_i32, %c0_i32_0 : i32, i32
  }
  func.func @transform_4(%arg0: i32) -> (i32, i32) {
    %c0_i32 = arith.constant 0 : i32
    %c0_i32_0 = arith.constant 0 : i32
    %c0_i32_1 = arith.constant 0 : i32
    return %c0_i32, %c0_i32_0 : i32, i32
  }
  func.func @transform_5(%arg0: i32) -> (i32, i32) {
    %c0_i32 = arith.constant 0 : i32
    %c0_i32_0 = arith.constant 0 : i32
    %c0_i32_1 = arith.constant 0 : i32
    return %c0_i32, %c0_i32_0 : i32, i32
  }
  func.func @transform_6(%arg0: i32) -> (i32, i32) {
    %c0_i32 = arith.constant 0 : i32
    %c0_i32_0 = arith.constant 0 : i32
    %c0_i32_1 = arith.constant 0 : i32
    return %c0_i32, %c0_i32_0 : i32, i32
  }
  func.func @transform_7(%arg0: i32) -> (i32, i32) {
    %c0_i32 = arith.constant 0 : i32
    %c0_i32_0 = arith.constant 0 : i32
    return %arg0, %c0_i32 : i32, i32
  }
}

</mosaic_0001>

<llo_original>
// kernel: gpt_qdrl_forward.3
$region0: #{gpt_qdrl_forward.3}
  #allocation0 [shape = 'u32[]', space=smem, size = 0x4, offset = 0x4, fixed_abs, tag = 'smem constant byte address 0x4 - core index']
  #allocation1 [shape = 'u32[144,128]{1,0:T(1,128)}', space=vmem, size = 0x12000, scoped, tag = 'internal scratch']
  %s0 = inlined_call_operand.hbm [shape: f32[8,8], index: 0, kind: input, shape index: {}]
  %s1 = inlined_call_operand.hbm [shape: bf16[8,192], index: 1, kind: input, shape index: {}]
  %s2 = inlined_call_operand.hbm [shape: f32[1,192], index: 2, kind: input, shape index: {}]
  %s3 = inlined_call_operand.hbm [shape: bf16[192,192], index: 3, kind: input, shape index: {}]
  %s4 = inlined_call_operand.hbm [shape: f32[1,192], index: 4, kind: input, shape index: {}]
  %s5 = inlined_call_operand.hbm [shape: bf16[192,128], index: 5, kind: input, shape index: {}]
  %s6 = inlined_call_operand.hbm [shape: f32[1,128], index: 6, kind: input, shape index: {}]
  %s7 = inlined_call_operand.hbm [shape: f32[8,128], index: 7, kind: output, shape index: {}]
  %s8 = sld [smem:[#allocation0]]
  $region66: #{gpt_qdrl_forward.3} parent=0
    _
  %s10 = ssub.s32 1, %s8
  %s11 = scalar_select 0, %s10, %s8
  $region1: #{gpt_qdrl_forward.3} parent=0
    #allocation2 [shape = 'u8[4096]{0}', space=vmem, size = 0x1000, scoped, tag = 'input window, operand 0, single buffered']
    #allocation3 [shape = 's32[1]{0}', space=sflag, size = 0x4, scoped, tag = 'scoped memory for gpt_qdrl_forward.3']
    #allocation4 [shape = 's32[1]{0}', space=sflag, size = 0x4, scoped, tag = 'scoped memory for gpt_qdrl_forward.3']
    #allocation5 [shape = 'u8[4096]{0}', space=vmem, size = 0x1000, scoped, tag = 'input window, operand 1, single buffered']
    #allocation6 [shape = 's32[1]{0}', space=sflag, size = 0x4, scoped, tag = 'scoped memory for gpt_qdrl_forward.3']
    #allocation7 [shape = 'u8[1024]{0}', space=vmem, size = 0x400, scoped, tag = 'input window, operand 2, single buffered']
    #allocation8 [shape = 'u8[98304]{0}', space=vmem, size = 0x18000, scoped, tag = 'input window, operand 3, single buffered']
    #allocation9 [shape = 's32[1]{0}', space=sflag, size = 0x4, scoped, tag = 'scoped memory for gpt_qdrl_forward.3']
    #allocation10 [shape = 'u8[1024]{0}', space=vmem, size = 0x400, scoped, tag = 'input window, operand 4, single buffered']
    #allocation11 [shape = 'u8[49152]{0}', space=vmem, size = 0xc000, scoped, tag = 'input window, operand 5, single buffered']
    #allocation12 [shape = 's32[1]{0}', space=sflag, size = 0x4, scoped, tag = 'scoped memory for gpt_qdrl_forward.3']
    #allocation13 [shape = 'u8[512]{0}', space=vmem, size = 0x400, scoped, tag = 'input window, operand 6, single buffered']
    #allocation14 [shape = 'u8[4096]{0}', space=vmem, size = 0x1000, scoped, tag = 'output window, operand 0, single buffered']
    %12 = vsyncpa [#allocation3], 0
    %13 = vsyncpa [#allocation6], 0
    %14 = vsyncpa [#allocation9], 0
    %15 = vsyncpa [#allocation12], 0
    %16 = vsyncpa [#allocation4], 0
    // Predicated region
    $region2: #{gpt_qdrl_forward.3} parent=1 // pred_check
      _
    $region3: #{gpt_qdrl_forward.3} parent=1 // pred_check_branch
      %18 = sbr.rel (0) target = $region5
    $region4: #{gpt_qdrl_forward.3} parent=1 // pred_region
      %s20 = ssub.s32 128, 128
      %21 = vsyncadd [#allocation3], %s20
      %s23 = sshll.u32 [#allocation2], 4
      %s24 = int_to_ptr.vmem [resolvable:$true] %s23
      %26 = dma.hbm_to_vmem [thread:$0]  %s0, 128, %s24, [#allocation3]
    $region5: #{gpt_qdrl_forward.3} parent=1 // pred_fallthru
      _
    // Predicated region
    $region6: #{gpt_qdrl_forward.3} parent=1 // pred_check
      _
    $region7: #{gpt_qdrl_forward.3} parent=1 // pred_check_branch
      %28 = sbr.rel (0) target = $region9
    $region8: #{gpt_qdrl_forward.3} parent=1 // pred_region
      %s30 = ssub.s32 128, 128
      %31 = vsyncadd [#allocation6], %s30
      %s33 = sshll.u32 [#allocation5], 4
      %s34 = int_to_ptr.vmem [resolvable:$true] %s33
      %36 = dma.hbm_to_vmem [thread:$0]  %s1, 128, %s34, [#allocation6]
    $region9: #{gpt_qdrl_forward.3} parent=1 // pred_fallthru
      _
    // Predicated region
    $region10: #{gpt_qdrl_forward.3} parent=1 // pred_check
      _
    $region11: #{gpt_qdrl_forward.3} parent=1 // pred_check_branch
      %38 = sbr.rel (0) target = $region13
    $region12: #{gpt_qdrl_forward.3} parent=1 // pred_region
      %s40 = ssub.s32 32, 32
      %41 = vsyncadd [#allocation6], %s40
      %s43 = sshll.u32 [#allocation7], 4
      %s44 = int_to_ptr.vmem [resolvable:$true] %s43
      %46 = dma.hbm_to_vmem [thread:$0]  %s2, 32, %s44, [#allocation6]
    $region13: #{gpt_qdrl_forward.3} parent=1 // pred_fallthru
      _
    // Predicated region
    $region14: #{gpt_qdrl_forward.3} parent=1 // pred_check
      _
    $region15: #{gpt_qdrl_forward.3} parent=1 // pred_check_branch
      %48 = sbr.rel (0) target = $region17
    $region16: #{gpt_qdrl_forward.3} parent=1 // pred_region
      %s50 = ssub.s32 3072, 3072
      %51 = vsyncadd [#allocation9], %s50
      %s52 = sshll.u32 [#allocation8], 4
      %s53 = int_to_ptr.vmem [resolvable:$true] %s52
      %58 = dma.hbm_to_vmem [thread:$0]  %s3, 3072, %s53, [#allocation9], 128, 128, 8
    $region17: #{gpt_qdrl_forward.3} parent=1 // pred_fallthru
      _
    // Predicated region
    $region18: #{gpt_qdrl_forward.3} parent=1 // pred_check
      _
    $region19: #{gpt_qdrl_forward.3} parent=1 // pred_check_branch
      %60 = sbr.rel (0) target = $region21
    $region20: #{gpt_qdrl_forward.3} parent=1 // pred_region
      %s62 = ssub.s32 32, 32
      %63 = vsyncadd [#allocation9], %s62
      %s65 = sshll.u32 [#allocation10], 4
      %s66 = int_to_ptr.vmem [resolvable:$true] %s65
      %68 = dma.hbm_to_vmem [thread:$0]  %s4, 32, %s66, [#allocation9]
    $region21: #{gpt_qdrl_forward.3} parent=1 // pred_fallthru
      _
    // Predicated region
    $region22: #{gpt_qdrl_forward.3} parent=1 // pred_check
      _
    $region23: #{gpt_qdrl_forward.3} parent=1 // pred_check_branch
      %70 = sbr.rel (0) target = $region25
    $region24: #{gpt_qdrl_forward.3} parent=1 // pred_region
      %s72 = ssub.s32 1536, 1536
      %73 = vsyncadd [#allocation12], %s72
      %s74 = sshll.u32 [#allocation11], 4
      %s75 = int_to_ptr.vmem [resolvable:$true] %s74
      %80 = dma.hbm_to_vmem [thread:$0]  %s5, 1536, %s75, [#allocation12], 64, 64, 4
    $region25: #{gpt_qdrl_forward.3} parent=1 // pred_fallthru
      _
    // Predicated region
    $region26: #{gpt_qdrl_forward.3} parent=1 // pred_check
      _
    $region27: #{gpt_qdrl_forward.3} parent=1 // pred_check_branch
      %82 = sbr.rel (0) target = $region29
    $region28: #{gpt_qdrl_forward.3} parent=1 // pred_region
      %s84 = ssub.s32 16, 16
      %85 = vsyncadd [#allocation12], %s84
      %s87 = sshll.u32 [#allocation13], 4
      %s88 = int_to_ptr.vmem [resolvable:$true] %s87
      %90 = dma.hbm_to_vmem [thread:$0]  %s6, 16, %s88, [#allocation12]
    $region29: #{gpt_qdrl_forward.3} parent=1 // pred_fallthru
      _
    // Predicated region
    $region30: #{gpt_qdrl_forward.3} parent=1 // pred_check
      _
    $region31: #{gpt_qdrl_forward.3} parent=1 // pred_check_branch
      %92 = sbr.rel (0) target = $region33
    $region32: #{gpt_qdrl_forward.3} parent=1 // pred_region
      %93 = dma.done [#allocation3], 128
    $region33: #{gpt_qdrl_forward.3} parent=1 // pred_fallthru
      _
    // Predicated region
    $region34: #{gpt_qdrl_forward.3} parent=1 // pred_check
      _
    $region35: #{gpt_qdrl_forward.3} parent=1 // pred_check_branch
      %95 = sbr.rel (0) target = $region37
    $region36: #{gpt_qdrl_forward.3} parent=1 // pred_region
      %96 = dma.done [#allocation6], 128
    $region37: #{gpt_qdrl_forward.3} parent=1 // pred_fallthru
      _
    // Predicated region
    $region38: #{gpt_qdrl_forward.3} parent=1 // pred_check
      _
    $region39: #{gpt_qdrl_forward.3} parent=1 // pred_check_branch
      %98 = sbr.rel (0) target = $region41
    $region40: #{gpt_qdrl_forward.3} parent=1 // pred_region
      %99 = dma.done [#allocation6], 32
    $region41: #{gpt_qdrl_forward.3} parent=1 // pred_fallthru
      _
    // Predicated region
    $region42: #{gpt_qdrl_forward.3} parent=1 // pred_check
      _
    $region43: #{gpt_qdrl_forward.3} parent=1 // pred_check_branch
      %101 = sbr.rel (0) target = $region45
    $region44: #{gpt_qdrl_forward.3} parent=1 // pred_region
      %102 = dma.done [#allocation9], 3072
    $region45: #{gpt_qdrl_forward.3} parent=1 // pred_fallthru
      _
    // Predicated region
    $region46: #{gpt_qdrl_forward.3} parent=1 // pred_check
      _
    $region47: #{gpt_qdrl_forward.3} parent=1 // pred_check_branch
      %104 = sbr.rel (0) target = $region49
    $region48: #{gpt_qdrl_forward.3} parent=1 // pred_region
      %105 = dma.done [#allocation9], 32
    $region49: #{gpt_qdrl_forward.3} parent=1 // pred_fallthru
      _
    // Predicated region
    $region50: #{gpt_qdrl_forward.3} parent=1 // pred_check
      _
    $region51: #{gpt_qdrl_forward.3} parent=1 // pred_check_branch
      %107 = sbr.rel (0) target = $region53
    $region52: #{gpt_qdrl_forward.3} parent=1 // pred_region
      %108 = dma.done [#allocation12], 1536
    $region53: #{gpt_qdrl_forward.3} parent=1 // pred_fallthru
      _
    // Predicated region
    $region54: #{gpt_qdrl_forward.3} parent=1 // pred_check
      _
    $region55: #{gpt_qdrl_forward.3} parent=1 // pred_check_branch
      %110 = sbr.rel (0) target = $region57
    $region56: #{gpt_qdrl_forward.3} parent=1 // pred_region
      %111 = dma.done [#allocation12], 16
    $region57: #{gpt_qdrl_forward.3} parent=1 // pred_fallthru
      _
    %v113 = vld [vmem:[#allocation2] sm:$0xff]
    %v114 = vpack.c.bf16 %v113, %v113
    %v115 = vld [vmem:[#allocation5] sm:$0xff]
    %v116 = vld [vmem:[#allocation7] sm:$0x3]
    %v118 = vlaneseq
    %v119 = vshrl.u32 %v118, 7
    %v120 = vsub.s32 0, %v119
    %v121 = vrot.slane %v116, %v120
    %v122 = vlaneseq
    %v123 = vshrl.u32 %v122, 7
    %v124 = vsub.s32 1, %v123
    %v125 = vrot.slane %v116, %v124
    %v129 = vunpack.c.l.b16 %v115
    %v130 = vunpack.c.h.b16 %v115
    %v131 = vpack.c.b16 %v129, %v129
    %v132 = vpack.c.b16 %v130, %v130
    %vm133 = vcmask 64512
    %v135 = vsel %vm133, %v114, 0
    %vm137 = vcmask 1043456
    %v139 = vsel %vm137, %v131, 0
    %v142 = vsel %vm137, %v132, 0
    %144 = vmatprep.subr.bf16.mxu0 %v142
    %145 = vmatpush1.bf16.msra.mxu0 %v139
    %146 = vmatprep.subr.bf16.mxu0 0
    %147 = vmatpush1.bf16.msra.mxu0 0
    %148 = vmatprep.subr.bf16.mxu0 0
    %149 = vmatpush1.bf16.msra.mxu0 0
    %150 = vmatprep.subr.bf16.mxu0 0
    %151 = vmatpush1.bf16.msra.mxu0 0
    %152 = vmatprep.subr.bf16.mxu0 0
    %153 = vmatpush1.bf16.msra.mxu0 0
    %154 = vmatprep.subr.bf16.mxu0 0
    %155 = vmatpush1.bf16.msra.mxu0 0
    %156 = vmatprep.subr.bf16.mxu0 0
    %157 = vmatpush1.bf16.msra.mxu0 0
    %158 = vmatprep.subr.bf16.mxu0 0
    %159 = vmatpush1.bf16.msra.mxu0 0
    %160 = vmatprep.subr.bf16.mxu0 0
    %161 = vmatpush1.bf16.msra.mxu0 0
    %162 = vmatprep.subr.bf16.mxu0 0
    %163 = vmatpush1.bf16.msra.mxu0 0
    %164 = vmatprep.subr.bf16.mxu0 0
    %165 = vmatpush1.bf16.msra.mxu0 0
    %166 = vmatprep.subr.bf16.mxu0 0
    %167 = vmatpush1.bf16.msra.mxu0 0
    %168 = vmatprep.subr.bf16.mxu0 0
    %169 = vmatpush1.bf16.msra.mxu0 0
    %170 = vmatprep.subr.bf16.mxu0 0
    %171 = vmatpush1.bf16.msra.mxu0 0
    %172 = vmatprep.subr.bf16.mxu0 0
    %173 = vmatpush1.bf16.msra.mxu0 0
    %174 = vmatprep.subr.bf16.mxu0 0
    %175 = vmatpush1.bf16.msra.mxu0 0
    %176 = vmatprep.mubr.bf16.mxu0 0
    %177 = vmatmul.mubr.bf16.gmra.mrb[0].mxu0 %v135
    %v178 = vpop.f32.mrb[0].mxu0
    %v179 = vadd.f32 %v121, %v178
    %v180 = vpop.f32.mrb[0].mxu0
    %v181 = vadd.f32 %v125, %v180
    %v182 = vpop.f32.mrb[0].mxu0
    %v183 = vpop.f32.mrb[0].mxu0
    %184 = vdwg.mxu0
    %v185 = vmul.f32 %v179, 0.5
    %v186 = vmul.f32 %v181, 0.5
    %v187 = vmul.f32 %v179, 0.70710677
    %v188 = vmul.f32 %v181, 0.70710677
    %vm189 = vcmp.ge.f32.partialorder %v187, 0.0
    %vm190 = vcmp.ge.f32.partialorder %v188, 0.0
    %v191 = vsel %vm189, 1.0, -1.0
    %v192 = vsel %vm190, 1.0, -1.0
    %v193 = vand.u32 2147483647, %v187
    %v194 = vand.u32 2147483647, %v188
    %v195 = vmul.f32 %v193, 0.3275911
    %v196 = vmul.f32 %v194, 0.3275911
    %v197 = vadd.f32 %v195, 1.0
    %v198 = vadd.f32 %v196, 1.0
    %v199 = vrcp.pop %v197
    %v200 = vmul.f32 1.0, %v199
    %v201 = vrcp.pop %v198
    %v202 = vmul.f32 1.0, %v201
    %v203 = vmul.f32 %v200, 1.0614054
    %v204 = vmul.f32 %v202, 1.0614054
    %v205 = vadd.f32 %v203, -1.4531521
    %v206 = vadd.f32 %v204, -1.4531521
    %v207 = vmul.f32 %v205, %v200
    %v208 = vmul.f32 %v206, %v202
    %v209 = vadd.f32 %v207, 1.4214138
    %v210 = vadd.f32 %v208, 1.4214138
    %v211 = vmul.f32 %v209, %v200
    %v212 = vmul.f32 %v210, %v202
    %v213 = vadd.f32 %v211, -0.28449672
    %v214 = vadd.f32 %v212, -0.28449672
    %v215 = vmul.f32 %v213, %v200
    %v216 = vmul.f32 %v214, %v202
    %v217 = vadd.f32 %v215, 0.2548296
    %v218 = vadd.f32 %v216, 0.2548296
    %v219 = vmul.f32 %v217, %v200
    %v220 = vmul.f32 %v218, %v202
    %v221 = vsub.f32 0.0, %v193
    %v222 = vsub.f32 0.0, %v194
    %v223 = vmul.f32 %v221, %v193
    %v224 = vmul.f32 %v222, %v194
    %v225 = vmul.f32 %v223, 1.442695
    %v226 = vpow.pop %v225
    %v227 = vmul.f32 %v224, 1.442695
    %v228 = vpow.pop %v227
    %v229 = vmul.f32 %v219, %v226
    %v230 = vmul.f32 %v220, %v228
    %v231 = vsub.f32 1.0, %v229
    %v232 = vsub.f32 1.0, %v230
    %v233 = vmul.f32 %v191, %v231
    %v234 = vmul.f32 %v192, %v232
    %v235 = vadd.f32 %v233, 1.0
    %v236 = vadd.f32 %v234, 1.0
    %v237 = vmul.f32 %v185, %v235
    %v238 = vmul.f32 %v186, %v236
    %v239 = vpack.c.bf16 %v237, %v237
    %v240 = vpack.c.bf16 %v238, %v238
    %v241 = vld [vmem:[#allocation8] sm:$0xff]
    %v242 = vld [vmem:[#allocation8 + $0x8] sm:$0xff]
    %v243 = vld [vmem:[#allocation8 + $0x10] sm:$0xff]
    %v244 = vld [vmem:[#allocation8 + $0x18] sm:$0xff]
    %v245 = vld [vmem:[#allocation8 + $0x20] sm:$0xff]
    %v246 = vld [vmem:[#allocation8 + $0x28] sm:$0xff]
    %v247 = vld [vmem:[#allocation8 + $0x30] sm:$0xff]
    %v248 = vld [vmem:[#allocation8 + $0x38] sm:$0xff]
    %v249 = vld [vmem:[#allocation8 + $0x40] sm:$0xff]
    %v250 = vld [vmem:[#allocation8 + $0x48] sm:$0xff]
    %v251 = vld [vmem:[#allocation8 + $0x50] sm:$0xff]
    %v252 = vld [vmem:[#allocation8 + $0x58] sm:$0xff]
    %v253 = vld [vmem:[#allocation8 + $0x60] sm:$0xff]
    %v254 = vld [vmem:[#allocation8 + $0x68] sm:$0xff]
    %v255 = vld [vmem:[#allocation8 + $0x70] sm:$0xff]
    %v256 = vld [vmem:[#allocation8 + $0x78] sm:$0xff]
    %v257 = vld [vmem:[#allocation8 + $0x80] sm:$0xff]
    %v258 = vld [vmem:[#allocation8 + $0x88] sm:$0xff]
    %v259 = vld [vmem:[#allocation8 + $0x90] sm:$0xff]
    %v260 = vld [vmem:[#allocation8 + $0x98] sm:$0xff]
    %v261 = vld [vmem:[#allocation8 + $0xa0] sm:$0xff]
    %v262 = vld [vmem:[#allocation8 + $0xa8] sm:$0xff]
    %v263 = vld [vmem:[#allocation8 + $0xb0] sm:$0xff]
    %v264 = vld [vmem:[#allocation8 + $0xb8] sm:$0xff]
    %v265 = vld [vmem:[#allocation10] sm:$0x3]
    %v267 = vlaneseq
    %v268 = vshrl.u32 %v267, 7
    %v269 = vsub.s32 0, %v268
    %v270 = vrot.slane %v265, %v269
    %v271 = vlaneseq
    %v272 = vshrl.u32 %v271, 7
    %v273 = vsub.s32 1, %v272
    %v274 = vrot.slane %v265, %v273
    %v301 = vunpack.c.l.b16 %v241
    %v302 = vunpack.c.h.b16 %v241
    %v303 = vunpack.c.l.b16 %v242
    %v304 = vunpack.c.h.b16 %v242
    %v305 = vunpack.c.l.b16 %v243
    %v306 = vunpack.c.h.b16 %v243
    %v307 = vunpack.c.l.b16 %v244
    %v308 = vunpack.c.h.b16 %v244
    %v309 = vunpack.c.l.b16 %v245
    %v310 = vunpack.c.h.b16 %v245
    %v311 = vunpack.c.l.b16 %v246
    %v312 = vunpack.c.h.b16 %v246
    %v313 = vunpack.c.l.b16 %v247
    %v314 = vunpack.c.h.b16 %v247
    %v315 = vunpack.c.l.b16 %v248
    %v316 = vunpack.c.h.b16 %v248
    %v317 = vunpack.c.l.b16 %v249
    %v318 = vunpack.c.h.b16 %v249
    %v319 = vunpack.c.l.b16 %v250
    %v320 = vunpack.c.h.b16 %v250
    %v321 = vunpack.c.l.b16 %v251
    %v322 = vunpack.c.h.b16 %v251
    %v323 = vunpack.c.l.b16 %v252
    %v324 = vunpack.c.h.b16 %v252
    %v325 = vunpack.c.l.b16 %v253
    %v326 = vunpack.c.h.b16 %v253
    %v327 = vunpack.c.l.b16 %v254
    %v328 = vunpack.c.h.b16 %v254
    %v329 = vunpack.c.l.b16 %v255
    %v330 = vunpack.c.h.b16 %v255
    %v331 = vunpack.c.l.b16 %v256
    %v332 = vunpack.c.h.b16 %v256
    %v333 = vunpack.c.l.b16 %v257
    %v334 = vunpack.c.h.b16 %v257
    %v335 = vunpack.c.l.b16 %v258
    %v336 = vunpack.c.h.b16 %v258
    %v337 = vunpack.c.l.b16 %v259
    %v338 = vunpack.c.h.b16 %v259
    %v339 = vunpack.c.l.b16 %v260
    %v340 = vunpack.c.h.b16 %v260
    %v341 = vunpack.c.l.b16 %v261
    %v342 = vunpack.c.h.b16 %v261
    %v343 = vunpack.c.l.b16 %v262
    %v344 = vunpack.c.h.b16 %v262
    %v345 = vunpack.c.l.b16 %v263
    %v346 = vunpack.c.h.b16 %v263
    %v347 = vunpack.c.l.b16 %v264
    %v348 = vunpack.c.h.b16 %v264
    %v349 = vpack.c.b16 %v303, %v301
    %v350 = vpack.c.b16 %v304, %v302
    %v351 = vpack.c.b16 %v307, %v305
    %v352 = vpack.c.b16 %v308, %v306
    %v353 = vpack.c.b16 %v311, %v309
    %v354 = vpack.c.b16 %v312, %v310
    %v355 = vpack.c.b16 %v315, %v313
    %v356 = vpack.c.b16 %v316, %v314
    %v357 = vpack.c.b16 %v319, %v317
    %v358 = vpack.c.b16 %v320, %v318
    %v359 = vpack.c.b16 %v323, %v321
    %v360 = vpack.c.b16 %v324, %v322
    %v361 = vpack.c.b16 %v327, %v325
    %v362 = vpack.c.b16 %v328, %v326
    %v363 = vpack.c.b16 %v331, %v329
    %v364 = vpack.c.b16 %v332, %v330
    %v365 = vpack.c.b16 %v335, %v333
    %v366 = vpack.c.b16 %v336, %v334
    %v367 = vpack.c.b16 %v339, %v337
    %v368 = vpack.c.b16 %v340, %v338
    %v369 = vpack.c.b16 %v343, %v341
    %v370 = vpack.c.b16 %v344, %v342
    %v371 = vpack.c.b16 %v347, %v345
    %v372 = vpack.c.b16 %v348, %v346
    %vm397 = vcmask 523264
    %v399 = vsel %vm397, %v240, 0
    %401 = vmatprep.subr.bf16.mxu0 %v350
    %402 = vmatpush1.bf16.msra.mxu0 %v349
    %403 = vmatprep.subr.bf16.mxu0 %v352
    %404 = vmatpush1.bf16.msra.mxu0 %v351
    %405 = vmatprep.subr.bf16.mxu0 %v354
    %406 = vmatpush1.bf16.msra.mxu0 %v353
    %407 = vmatprep.subr.bf16.mxu0 %v356
    %408 = vmatpush1.bf16.msra.mxu0 %v355
    %409 = vmatprep.subr.bf16.mxu0 %v358
    %410 = vmatpush1.bf16.msra.mxu0 %v357
    %411 = vmatprep.subr.bf16.mxu0 %v360
    %412 = vmatpush1.bf16.msra.mxu0 %v359
    %413 = vmatprep.subr.bf16.mxu0 %v362
    %414 = vmatpush1.bf16.msra.mxu0 %v361
    %415 = vmatprep.subr.bf16.mxu0 %v364
    %416 = vmatpush1.bf16.msra.mxu0 %v363
    %417 = vmatprep.subr.bf16.mxu0 %v366
    %418 = vmatpush1.bf16.msra.mxu0 %v365
    %419 = vmatprep.subr.bf16.mxu0 %v368
    %420 = vmatpush1.bf16.msra.mxu0 %v367
    %421 = vmatprep.subr.bf16.mxu0 %v370
    %422 = vmatpush1.bf16.msra.mxu0 %v369
    %423 = vmatprep.subr.bf16.mxu0 %v372
    %424 = vmatpush1.bf16.msra.mxu0 %v371
    %425 = vmatprep.subr.bf16.mxu0 0
    %426 = vmatpush1.bf16.msra.mxu0 0
    %427 = vmatprep.subr.bf16.mxu0 0
    %428 = vmatpush1.bf16.msra.mxu0 0
    %429 = vmatprep.subr.bf16.mxu0 0
    %430 = vmatpush1.bf16.msra.mxu0 0
    %431 = vmatprep.subr.bf16.mxu0 0
    %432 = vmatpush1.bf16.msra.mxu0 0
    %433 = vmatprep.mubr.bf16.mxu0 %v399
    %434 = vmatmul.mubr.bf16.gmra.mrb[0].mxu0 %v239
    %v435 = vpop.f32.mrb[0].mxu0
    %v436 = vadd.f32 %v270, %v435
    %v437 = vpop.f32.mrb[0].mxu0
    %v438 = vadd.f32 %v274, %v437
    %v439 = vpop.f32.mrb[0].mxu0
    %v440 = vpop.f32.mrb[0].mxu0
    %441 = vdwg.mxu0
    %v442 = vmul.f32 %v436, 0.5
    %v443 = vmul.f32 %v438, 0.5
    %v444 = vmul.f32 %v436, 0.70710677
    %v445 = vmul.f32 %v438, 0.70710677
    %vm446 = vcmp.ge.f32.partialorder %v444, 0.0
    %vm447 = vcmp.ge.f32.partialorder %v445, 0.0
    %v448 = vsel %vm446, 1.0, -1.0
    %v449 = vsel %vm447, 1.0, -1.0
    %v450 = vand.u32 2147483647, %v444
    %v451 = vand.u32 2147483647, %v445
    %v452 = vmul.f32 %v450, 0.3275911
    %v453 = vmul.f32 %v451, 0.3275911
    %v454 = vadd.f32 %v452, 1.0
    %v455 = vadd.f32 %v453, 1.0
    %v456 = vrcp.pop %v454
    %v457 = vmul.f32 1.0, %v456
    %v458 = vrcp.pop %v455
    %v459 = vmul.f32 1.0, %v458
    %v460 = vmul.f32 %v457, 1.0614054
    %v461 = vmul.f32 %v459, 1.0614054
    %v462 = vadd.f32 %v460, -1.4531521
    %v463 = vadd.f32 %v461, -1.4531521
    %v464 = vmul.f32 %v462, %v457
    %v465 = vmul.f32 %v463, %v459
    %v466 = vadd.f32 %v464, 1.4214138
    %v467 = vadd.f32 %v465, 1.4214138
    %v468 = vmul.f32 %v466, %v457
    %v469 = vmul.f32 %v467, %v459
    %v470 = vadd.f32 %v468, -0.28449672
    %v471 = vadd.f32 %v469, -0.28449672
    %v472 = vmul.f32 %v470, %v457
    %v473 = vmul.f32 %v471, %v459
    %v474 = vadd.f32 %v472, 0.2548296
    %v475 = vadd.f32 %v473, 0.2548296
    %v476 = vmul.f32 %v474, %v457
    %v477 = vmul.f32 %v475, %v459
    %v478 = vsub.f32 0.0, %v450
    %v479 = vsub.f32 0.0, %v451
    %v480 = vmul.f32 %v478, %v450
    %v481 = vmul.f32 %v479, %v451
    %v482 = vmul.f32 %v480, 1.442695
    %v483 = vpow.pop %v482
    %v484 = vmul.f32 %v481, 1.442695
    %v485 = vpow.pop %v484
    %v486 = vmul.f32 %v476, %v483
    %v487 = vmul.f32 %v477, %v485
    %v488 = vsub.f32 1.0, %v486
    %v489 = vsub.f32 1.0, %v487
    %v490 = vmul.f32 %v448, %v488
    %v491 = vmul.f32 %v449, %v489
    %v492 = vadd.f32 %v490, 1.0
    %v493 = vadd.f32 %v491, 1.0
    %v494 = vmul.f32 %v442, %v492
    %v495 = vmul.f32 %v443, %v493
    %v496 = vpack.c.bf16 %v494, %v494
    %v497 = vpack.c.bf16 %v495, %v495
    %v498 = vld [vmem:[#allocation11] sm:$0xf]
    %v499 = vld [vmem:[#allocation11 + $0x4] sm:$0xf]
    %v500 = vld [vmem:[#allocation11 + $0x8] sm:$0xf]
    %v501 = vld [vmem:[#allocation11 + $0xc] sm:$0xf]
    %v502 = vld [vmem:[#allocation11 + $0x10] sm:$0xf]
    %v503 = vld [vmem:[#allocation11 + $0x14] sm:$0xf]
    %v504 = vld [vmem:[#allocation11 + $0x18] sm:$0xf]
    %v505 = vld [vmem:[#allocation11 + $0x1c] sm:$0xf]
    %v506 = vld [vmem:[#allocation11 + $0x20] sm:$0xf]
    %v507 = vld [vmem:[#allocation11 + $0x24] sm:$0xf]
    %v508 = vld [vmem:[#allocation11 + $0x28] sm:$0xf]
    %v509 = vld [vmem:[#allocation11 + $0x2c] sm:$0xf]
    %v510 = vld [vmem:[#allocation11 + $0x30] sm:$0xf]
    %v511 = vld [vmem:[#allocation11 + $0x34] sm:$0xf]
    %v512 = vld [vmem:[#allocation11 + $0x38] sm:$0xf]
    %v513 = vld [vmem:[#allocation11 + $0x3c] sm:$0xf]
    %v514 = vld [vmem:[#allocation11 + $0x40] sm:$0xf]
    %v515 = vld [vmem:[#allocation11 + $0x44] sm:$0xf]
    %v516 = vld [vmem:[#allocation11 + $0x48] sm:$0xf]
    %v517 = vld [vmem:[#allocation11 + $0x4c] sm:$0xf]
    %v518 = vld [vmem:[#allocation11 + $0x50] sm:$0xf]
    %v519 = vld [vmem:[#allocation11 + $0x54] sm:$0xf]
    %v520 = vld [vmem:[#allocation11 + $0x58] sm:$0xf]
    %v521 = vld [vmem:[#allocation11 + $0x5c] sm:$0xf]
    %v522 = vld [vmem:[#allocation13] sm:$0x1]
    %v524 = vlaneseq
    %v525 = vshrl.u32 %v524, 7
    %v526 = vsub.s32 0, %v525
    %v527 = vrot.slane %v522, %v526
    %v553 = vunpack.c.l.b16 %v498
    %v554 = vunpack.c.l.b16 %v499
    %v555 = vunpack.c.l.b16 %v500
    %v556 = vunpack.c.l.b16 %v501
    %v557 = vunpack.c.l.b16 %v502
    %v558 = vunpack.c.l.b16 %v503
    %v559 = vunpack.c.l.b16 %v504
    %v560 = vunpack.c.l.b16 %v505
    %v561 = vunpack.c.l.b16 %v506
    %v562 = vunpack.c.l.b16 %v507
    %v563 = vunpack.c.l.b16 %v508
    %v564 = vunpack.c.l.b16 %v509
    %v565 = vunpack.c.l.b16 %v510
    %v566 = vunpack.c.l.b16 %v511
    %v567 = vunpack.c.l.b16 %v512
    %v568 = vunpack.c.l.b16 %v513
    %v569 = vunpack.c.l.b16 %v514
    %v570 = vunpack.c.l.b16 %v515
    %v571 = vunpack.c.l.b16 %v516
    %v572 = vunpack.c.l.b16 %v517
    %v573 = vunpack.c.l.b16 %v518
    %v574 = vunpack.c.l.b16 %v519
    %v575 = vunpack.c.l.b16 %v520
    %v576 = vunpack.c.l.b16 %v521
    %v577 = vpack.c.b16 %v554, %v553
    %v578 = vpack.c.b16 %v556, %v555
    %v579 = vpack.c.b16 %v558, %v557
    %v580 = vpack.c.b16 %v560, %v559
    %v581 = vpack.c.b16 %v562, %v561
    %v582 = vpack.c.b16 %v564, %v563
    %v583 = vpack.c.b16 %v566, %v565
    %v584 = vpack.c.b16 %v568, %v567
    %v585 = vpack.c.b16 %v570, %v569
    %v586 = vpack.c.b16 %v572, %v571
    %v587 = vpack.c.b16 %v574, %v573
    %v588 = vpack.c.b16 %v576, %v575
    %v602 = vsel %vm397, %v497, 0
    %604 = vmatprep.subr.bf16.mxu0 0
    %605 = vmatpush1.bf16.msra.mxu0 %v577
    %606 = vmatprep.subr.bf16.mxu0 0
    %607 = vmatpush1.bf16.msra.mxu0 %v578
    %608 = vmatprep.subr.bf16.mxu0 0
    %609 = vmatpush1.bf16.msra.mxu0 %v579
    %610 = vmatprep.subr.bf16.mxu0 0
    %611 = vmatpush1.bf16.msra.mxu0 %v580
    %612 = vmatprep.subr.bf16.mxu0 0
    %613 = vmatpush1.bf16.msra.mxu0 %v581
    %614 = vmatprep.subr.bf16.mxu0 0
    %615 = vmatpush1.bf16.msra.mxu0 %v582
    %616 = vmatprep.subr.bf16.mxu0 0
    %617 = vmatpush1.bf16.msra.mxu0 %v583
    %618 = vmatprep.subr.bf16.mxu0 0
    %619 = vmatpush1.bf16.msra.mxu0 %v584
    %620 = vmatprep.subr.bf16.mxu0 0
    %621 = vmatpush1.bf16.msra.mxu0 %v585
    %622 = vmatprep.subr.bf16.mxu0 0
    %623 = vmatpush1.bf16.msra.mxu0 %v586
    %624 = vmatprep.subr.bf16.mxu0 0
    %625 = vmatpush1.bf16.msra.mxu0 %v587
    %626 = vmatprep.subr.bf16.mxu0 0
    %627 = vmatpush1.bf16.msra.mxu0 %v588
    %628 = vmatprep.subr.bf16.mxu0 0
    %629 = vmatpush1.bf16.msra.mxu0 0
    %630 = vmatprep.subr.bf16.mxu0 0
    %631 = vmatpush1.bf16.msra.mxu0 0
    %632 = vmatprep.subr.bf16.mxu0 0
    %633 = vmatpush1.bf16.msra.mxu0 0
    %634 = vmatprep.subr.bf16.mxu0 0
    %635 = vmatpush1.bf16.msra.mxu0 0
    %636 = vmatprep.mubr.bf16.mxu0 %v602
    %637 = vmatmul.mubr.bf16.gmra.mrb[0].mxu0 %v496
    %v638 = vpop.f32.mrb[0].mxu0
    %v639 = vadd.f32 %v527, %v638
    %v640 = vpop.f32.mrb[0].mxu0
    %v641 = vpop.f32.mrb[0].mxu0
    %v642 = vpop.f32.mrb[0].mxu0
    %643 = vdwg.mxu0
    %644 = vst [vmem:[#allocation14] sm:$0xff] %v639
    // Predicated region
    $region58: #{gpt_qdrl_forward.3} parent=1 // pred_check
      _
    $region59: #{gpt_qdrl_forward.3} parent=1 // pred_check_branch
      %646 = sbr.rel (0) target = $region61
    $region60: #{gpt_qdrl_forward.3} parent=1 // pred_region
      %s648 = ssub.s32 128, 128
      %649 = vsyncadd [#allocation4], %s648
      %s651 = sshll.u32 [#allocation14], 4
      %s652 = int_to_ptr.vmem [resolvable:$true] %s651
      %654 = dma.vmem_to_hbm [thread:$0]  %s652, 128, %s7, [#allocation4]
    $region61: #{gpt_qdrl_forward.3} parent=1 // pred_fallthru
      _
    // Predicated region
    $region62: #{gpt_qdrl_forward.3} parent=1 // pred_check
      _
    $region63: #{gpt_qdrl_forward.3} parent=1 // pred_check_branch
      %656 = sbr.rel (0) target = $region65
    $region64: #{gpt_qdrl_forward.3} parent=1 // pred_region
      %657 = dma.done [#allocation4], 128
    $region65: #{gpt_qdrl_forward.3} parent=1 // pred_fallthru
      _
    %658 = vsyncpa [#allocation3], 1
    %659 = vsyncpa [#allocation6], 1
    %660 = vsyncpa [#allocation9], 1
    %661 = vsyncpa [#allocation12], 1
    %662 = vsyncpa [#allocation4], 1

// kernel: gpt_qdrl_forward.4
$region0: #{gpt_qdrl_forward.4}
  #allocation0 [shape = 'u32[]', space=smem, size = 0x4, offset = 0x4, fixed_abs, tag = 'smem constant byte address 0x4 - core index']
  #allocation1 [shape = 'u32[144,128]{1,0:T(1,128)}', space=vmem, size = 0x12000, scoped, tag = 'internal scratch']
  %s0 = inlined_call_operand.hbm [shape: f32[2,24,32], index: 0, kind: input, shape index: {}]
  %s1 = inlined_call_operand.hbm [shape: f32[2,1,32], index: 1, kind: input, shape index: {}]
  %s2 = inlined_call_operand.hbm [shape: f32[2,1,32], index: 2, kind: input, shape index: {}]
  %s3 = inlined_call_operand.hbm [shape: bf16[2,32,96], index: 3, kind: input, shape index: {}]
  %s4 = inlined_call_operand.hbm [shape: f32[2,1,96], index: 4, kind: input, shape index: {}]
  %s5 = inlined_call_operand.hbm [shape: bf16[2,32,32], index: 5, kind: input, shape index: {}]
  %s6 = inlined_call_operand.hbm [shape: f32[2,1,32], index: 6, kind: input, shape index: {}]
  %s7 = inlined_call_operand.hbm [shape: f32[2,1,32], index: 7, kind: input, shape index: {}]
  %s8 = inlined_call_operand.hbm [shape: f32[2,1,32], index: 8, kind: input, shape index: {}]
  %s9 = inlined_call_operand.hbm [shape: bf16[2,32,128], index: 9, kind: input, shape index: {}]
  %s10 = inlined_call_operand.hbm [shape: f32[2,1,128], index: 10, kind: input, shape index: {}]
  %s11 = inlined_call_operand.hbm [shape: bf16[2,128,32], index: 11, kind: input, shape index: {}]
  %s12 = inlined_call_operand.hbm [shape: f32[2,1,32], index: 12, kind: input, shape index: {}]
  %s13 = inlined_call_operand.hbm [shape: f32[1,32], index: 13, kind: input, shape index: {}]
  %s14 = inlined_call_operand.hbm [shape: f32[1,32], index: 14, kind: input, shape index: {}]
  %s15 = inlined_call_operand.hbm [shape: f32[2,24,32], index: 15, kind: output, shape index: {}]
  %s16 = sld [smem:[#allocation0]]
  $region161: #{gpt_qdrl_forward.4} parent=0
    _
  %s18 = ssub.s32 1, %s16
  %s19 = scalar_select 0, %s18, %s16
  $region1: #{gpt_qdrl_forward.4} parent=0
    #allocation2 [shape = 'u8[24576]{0}', space=vmem, size = 0x6000, scoped, tag = 'input window, operand 0']
    #allocation3 [shape = 's32[2]{0}', space=sflag, size = 0x8, scoped, tag = 'scoped memory for gpt_qdrl_forward.4']
    #allocation4 [shape = 's32[2]{0}', space=sflag, size = 0x8, scoped, tag = 'scoped memory for gpt_qdrl_forward.4']
    #allocation5 [shape = 'u8[1024]{0}', space=vmem, size = 0x400, scoped, tag = 'input window, operand 1']
    #allocation6 [shape = 's32[2]{0}', space=sflag, size = 0x8, scoped, tag = 'scoped memory for gpt_qdrl_forward.4']
    #allocation7 [shape = 'u8[1024]{0}', space=vmem, size = 0x400, scoped, tag = 'input window, operand 2']
    #allocation8 [shape = 'u8[16384]{0}', space=vmem, size = 0x4000, scoped, tag = 'input window, operand 3']
    #allocation9 [shape = 's32[2]{0}', space=sflag, size = 0x8, scoped, tag = 'scoped memory for gpt_qdrl_forward.4']
    #allocation10 [shape = 'u8[1024]{0}', space=vmem, size = 0x400, scoped, tag = 'input window, operand 4']
    #allocation11 [shape = 'u8[16384]{0}', space=vmem, size = 0x4000, scoped, tag = 'input window, operand 5']
    #allocation12 [shape = 's32[2]{0}', space=sflag, size = 0x8, scoped, tag = 'scoped memory for gpt_qdrl_forward.4']
    #allocation13 [shape = 'u8[1024]{0}', space=vmem, size = 0x400, scoped, tag = 'input window, operand 6']
    #allocation14 [shape = 'u8[1024]{0}', space=vmem, size = 0x400, scoped, tag = 'input window, operand 7']
    #allocation15 [shape = 's32[2]{0}', space=sflag, size = 0x8, scoped, tag = 'scoped memory for gpt_qdrl_forward.4']
    #allocation16 [shape = 'u8[1024]{0}', space=vmem, size = 0x400, scoped, tag = 'input window, operand 8']
    #allocation17 [shape = 'u8[16384]{0}', space=vmem, size = 0x4000, scoped, tag = 'input window, operand 9']
    #allocation18 [shape = 's32[2]{0}', space=sflag, size = 0x8, scoped, tag = 'scoped memory for gpt_qdrl_forward.4']
    #allocation19 [shape = 'u8[1024]{0}', space=vmem, size = 0x400, scoped, tag = 'input window, operand 10']
    #allocation20 [shape = 'u8[65536]{0}', space=vmem, size = 0x10000, scoped, tag = 'input window, operand 11']
    #allocation21 [shape = 's32[2]{0}', space=sflag, size = 0x8, scoped, tag = 'scoped memory for gpt_qdrl_forward.4']
    #allocation22 [shape = 'u8[1024]{0}', space=vmem, size = 0x400, scoped, tag = 'input window, operand 12']
    #allocation23 [shape = 'u8[512]{0}', space=vmem, size = 0x400, scoped, tag = 'input window, operand 13, single buffered']
    #allocation24 [shape = 's32[1]{0}', space=sflag, size = 0x4, scoped, tag = 'scoped memory for gpt_qdrl_forward.4']
    #allocation25 [shape = 'u8[512]{0}', space=vmem, size = 0x400, scoped, tag = 'input window, operand 14, single buffered']
    #allocation26 [shape = 'u8[24576]{0}', space=vmem, size = 0x6000, scoped, tag = 'output window, operand 0']
    %20 = vsyncpa [#allocation3], 0
    %s21 = scalar_lea.sflag [#allocation3], 1
    %22 = vsyncpa %s21, 0
    %23 = vsyncpa [#allocation6], 0
    %s24 = scalar_lea.sflag [#allocation6], 1
    %25 = vsyncpa %s24, 0
    %26 = vsyncpa [#allocation9], 0
    %s27 = scalar_lea.sflag [#allocation9], 1
    %28 = vsyncpa %s27, 0
    %29 = vsyncpa [#allocation12], 0
    %s30 = scalar_lea.sflag [#allocation12], 1
    %31 = vsyncpa %s30, 0
    %32 = vsyncpa [#allocation15], 0
    %s33 = scalar_lea.sflag [#allocation15], 1
    %34 = vsyncpa %s33, 0
    %35 = vsyncpa [#allocation18], 0
    %s36 = scalar_lea.sflag [#allocation18], 1
    %37 = vsyncpa %s36, 0
    %38 = vsyncpa [#allocation21], 0
    %s39 = scalar_lea.sflag [#allocation21], 1
    %40 = vsyncpa %s39, 0
    %41 = vsyncpa [#allocation24], 0
    %42 = vsyncpa [#allocation4], 0
    %s43 = scalar_lea.sflag [#allocation4], 1
    %44 = vsyncpa %s43, 0
    loop: start=0, step=1, limit=6
    $region2: #{gpt_qdrl_forward.4} parent=1 // loop_pre_header
      _
    $region3: #{gpt_qdrl_forward.4} parent=1 // loop_header
      %s46 = sphi 0, %s50
      %p47 = scmp.ge.s32.totalorder %s46, 6
      %s53 = sphi 0, %s65
      %s54 = sphi 0, %s61
      %s55 = sphi 0, %s53
      %s56 = sphi 0, %s54
      %s57 = sphi 0, %s55
      %s58 = sphi 0, %s56
      %s68 = sphi 0, %s70
      %s71 = sphi 0, %s68
      %s72 = sphi 0, %s71
      %s88 = sphi 0, %s72
      %s94 = sphi 0, %s96
      %s97 = sphi 0, %s94
      %s98 = sphi 0, %s97
      %s114 = sphi 0, %s98
      %s120 = sphi 0, %s122
      %s123 = sphi 0, %s120
      %s124 = sphi 0, %s123
      %s140 = sphi 0, %s124
      %s146 = sphi 0, %s148
      %s149 = sphi 0, %s146
      %s150 = sphi 0, %s149
      %s166 = sphi 0, %s150
      %s172 = sphi 0, %s174
      %s175 = sphi 0, %s172
      %s176 = sphi 0, %s175
      %s192 = sphi 0, %s176
      %s198 = sphi 0, %s200
      %s201 = sphi 0, %s198
      %s202 = sphi 0, %s201
      %s218 = sphi 0, %s202
      %s224 = sphi 0, %s226
      %s227 = sphi 0, %s224
      %s228 = sphi 0, %s227
      %s244 = sphi 0, %s228
      %s250 = sphi 0, %s252
      %s253 = sphi 0, %s250
      %s254 = sphi 0, %s253
      %s270 = sphi 0, %s254
      %s276 = sphi 0, %s278
      %s279 = sphi 0, %s276
      %s280 = sphi 0, %s279
      %s296 = sphi 0, %s280
      %s302 = sphi 0, %s304
      %s305 = sphi 0, %s302
      %s306 = sphi 0, %s305
      %s322 = sphi 0, %s306
      %s328 = sphi 0, %s330
      %s331 = sphi 0, %s328
      %s332 = sphi 0, %s331
      %s348 = sphi 0, %s332
      %s354 = sphi 0, %s356
      %s357 = sphi 0, %s354
      %s358 = sphi 0, %s357
      %s374 = sphi 0, %s358
      %s380 = sphi 0, %s382
      %s383 = sphi 0, %s380
      %s384 = sphi 0, %s383
      %s400 = sphi 0, %s384
      %s404 = sphi 0, %s404
      %s406 = sphi 0, %s404
      %s407 = sphi 0, %s406
      %s421 = sphi 0, %s407
      %s425 = sphi 0, %s425
      %s427 = sphi 0, %s425
      %s428 = sphi 0, %s427
      %s442 = sphi 0, %s428
      %s448 = sphi 0, %s450
      %s451 = sphi 0, %s448
      %s452 = sphi 0, %s451
      %s468 = sphi 0, %s452
    $region4: #{gpt_qdrl_forward.4} parent=1 // loop_header_branch
      %49 = sbr.rel (%p47) target = $region8
    $region5: #{gpt_qdrl_forward.4} parent=1 // loop_body
      %s51 = ssub.s32 %s46, 1
      %s52 = ssub.s32 %s46, 2
      %s59 = sadd.s32 1, %s54
      %p60 = scmp.ge.s32.totalorder %s59, 2
      %s61 = scalar_select %p60, 0, %s59
      %s62 = sadd.s32 1, %s53
      %s63 = scalar_select %p60, %s62, %s53
      %p64 = scmp.ge.s32.totalorder %s63, 2
      %s65 = scalar_select %p64, 0, %s63
      %s66 = ssub.s32 %s53, %s65
      %p67 = scmp.eq.s32.totalorder %s66, 0
      %s69 = sadd.s32 %s68, 1
      %s70 = scalar_select %p67, %s68, %s69
      %p73 = pneg %p67
      %p74 = scmp.eq.s32.totalorder %s46, 3
      %p75 = por %p73, %p74
      %p76 = scmp.ne.s32.totalorder %s68, %s71
      %p77 = scmp.eq.s32.totalorder %s46, 0
      %p78 = por %p76, %p77
      %p79 = scmp.ne.s32.totalorder %s68, %s71
      %p80 = scmp.eq.s32.totalorder %s51, 3
      %p81 = por %p79, %p80
      %p82 = scmp.ne.s32.totalorder %s71, %s72
      %p83 = scmp.eq.s32.totalorder %s51, 0
      %p84 = por %p82, %p83
      %p85 = scmp.ne.s32.totalorder %s71, %s72
      %p86 = scmp.eq.s32.totalorder %s52, 3
      %p87 = por %p85, %p86
      %p89 = scmp.ne.s32.totalorder %s72, %s88
      %p90 = scmp.eq.s32.totalorder %s52, 0
      %p91 = por %p89, %p90
      %s92 = ssub.s32 %s54, %s61
      %p93 = scmp.eq.s32.totalorder %s92, 0
      %s95 = sadd.s32 %s94, 1
      %s96 = scalar_select %p93, %s94, %s95
      %p99 = pneg %p93
      %p100 = scmp.eq.s32.totalorder %s46, 3
      %p101 = por %p99, %p100
      %p102 = scmp.ne.s32.totalorder %s94, %s97
      %p103 = scmp.eq.s32.totalorder %s46, 0
      %p104 = por %p102, %p103
      %p105 = scmp.ne.s32.totalorder %s94, %s97
      %p106 = scmp.eq.s32.totalorder %s51, 3
      %p107 = por %p105, %p106
      %p108 = scmp.ne.s32.totalorder %s97, %s98
      %p109 = scmp.eq.s32.totalorder %s51, 0
      %p110 = por %p108, %p109
      %p111 = scmp.ne.s32.totalorder %s97, %s98
      %p112 = scmp.eq.s32.totalorder %s52, 3
      %p113 = por %p111, %p112
      %p115 = scmp.ne.s32.totalorder %s98, %s114
      %p116 = scmp.eq.s32.totalorder %s52, 0
      %p117 = por %p115, %p116
      %s118 = ssub.s32 %s54, %s61
      %p119 = scmp.eq.s32.totalorder %s118, 0
      %s121 = sadd.s32 %s120, 1
      %s122 = scalar_select %p119, %s120, %s121
      %p125 = pneg %p119
      %p126 = scmp.eq.s32.totalorder %s46, 3
      %p127 = por %p125, %p126
      %p128 = scmp.ne.s32.totalorder %s120, %s123
      %p129 = scmp.eq.s32.totalorder %s46, 0
      %p130 = por %p128, %p129
      %p131 = scmp.ne.s32.totalorder %s120, %s123
      %p132 = scmp.eq.s32.totalorder %s51, 3
      %p133 = por %p131, %p132
      %p134 = scmp.ne.s32.totalorder %s123, %s124
      %p135 = scmp.eq.s32.totalorder %s51, 0
      %p136 = por %p134, %p135
      %p137 = scmp.ne.s32.totalorder %s123, %s124
      %p138 = scmp.eq.s32.totalorder %s52, 3
      %p139 = por %p137, %p138
      %p141 = scmp.ne.s32.totalorder %s124, %s140
      %p142 = scmp.eq.s32.totalorder %s52, 0
      %p143 = por %p141, %p142
      %s144 = ssub.s32 %s54, %s61
      %p145 = scmp.eq.s32.totalorder %s144, 0
      %s147 = sadd.s32 %s146, 1
      %s148 = scalar_select %p145, %s146, %s147
      %p151 = pneg %p145
      %p152 = scmp.eq.s32.totalorder %s46, 3
      %p153 = por %p151, %p152
      %p154 = scmp.ne.s32.totalorder %s146, %s149
      %p155 = scmp.eq.s32.totalorder %s46, 0
      %p156 = por %p154, %p155
      %p157 = scmp.ne.s32.totalorder %s146, %s149
      %p158 = scmp.eq.s32.totalorder %s51, 3
      %p159 = por %p157, %p158
      %p160 = scmp.ne.s32.totalorder %s149, %s150
      %p161 = scmp.eq.s32.totalorder %s51, 0
      %p162 = por %p160, %p161
      %p163 = scmp.ne.s32.totalorder %s149, %s150
      %p164 = scmp.eq.s32.totalorder %s52, 3
      %p165 = por %p163, %p164
      %p167 = scmp.ne.s32.totalorder %s150, %s166
      %p168 = scmp.eq.s32.totalorder %s52, 0
      %p169 = por %p167, %p168
      %s170 = ssub.s32 %s54, %s61
      %p171 = scmp.eq.s32.totalorder %s170, 0
      %s173 = sadd.s32 %s172, 1
      %s174 = scalar_select %p171, %s172, %s173
      %p177 = pneg %p171
      %p178 = scmp.eq.s32.totalorder %s46, 3
      %p179 = por %p177, %p178
      %p180 = scmp.ne.s32.totalorder %s172, %s175
      %p181 = scmp.eq.s32.totalorder %s46, 0
      %p182 = por %p180, %p181
      %p183 = scmp.ne.s32.totalorder %s172, %s175
      %p184 = scmp.eq.s32.totalorder %s51, 3
      %p185 = por %p183, %p184
      %p186 = scmp.ne.s32.totalorder %s175, %s176
      %p187 = scmp.eq.s32.totalorder %s51, 0
      %p188 = por %p186, %p187
      %p189 = scmp.ne.s32.totalorder %s175, %s176
      %p190 = scmp.eq.s32.totalorder %s52, 3
      %p191 = por %p189, %p190
      %p193 = scmp.ne.s32.totalorder %s176, %s192
      %p194 = scmp.eq.s32.totalorder %s52, 0
      %p195 = por %p193, %p194
      %s196 = ssub.s32 %s54, %s61
      %p197 = scmp.eq.s32.totalorder %s196, 0
      %s199 = sadd.s32 %s198, 1
      %s200 = scalar_select %p197, %s198, %s199
      %p203 = pneg %p197
      %p204 = scmp.eq.s32.totalorder %s46, 3
      %p205 = por %p203, %p204
      %p206 = scmp.ne.s32.totalorder %s198, %s201
      %p207 = scmp.eq.s32.totalorder %s46, 0
      %p208 = por %p206, %p207
      %p209 = scmp.ne.s32.totalorder %s198, %s201
      %p210 = scmp.eq.s32.totalorder %s51, 3
      %p211 = por %p209, %p210
      %p212 = scmp.ne.s32.totalorder %s201, %s202
      %p213 = scmp.eq.s32.totalorder %s51, 0
      %p214 = por %p212, %p213
      %p215 = scmp.ne.s32.totalorder %s201, %s202
      %p216 = scmp.eq.s32.totalorder %s52, 3
      %p217 = por %p215, %p216
      %p219 = scmp.ne.s32.totalorder %s202, %s218
      %p220 = scmp.eq.s32.totalorder %s52, 0
      %p221 = por %p219, %p220
      %s222 = ssub.s32 %s54, %s61
      %p223 = scmp.eq.s32.totalorder %s222, 0
      %s225 = sadd.s32 %s224, 1
      %s226 = scalar_select %p223, %s224, %s225
      %p229 = pneg %p223
      %p230 = scmp.eq.s32.totalorder %s46, 3
      %p231 = por %p229, %p230
      %p232 = scmp.ne.s32.totalorder %s224, %s227
      %p233 = scmp.eq.s32.totalorder %s46, 0
      %p234 = por %p232, %p233
      %p235 = scmp.ne.s32.totalorder %s224, %s227
      %p236 = scmp.eq.s32.totalorder %s51, 3
      %p237 = por %p235, %p236
      %p238 = scmp.ne.s32.totalorder %s227, %s228
      %p239 = scmp.eq.s32.totalorder %s51, 0
      %p240 = por %p238, %p239
      %p241 = scmp.ne.s32.totalorder %s227, %s228
      %p242 = scmp.eq.s32.totalorder %s52, 3
      %p243 = por %p241, %p242
      %p245 = scmp.ne.s32.totalorder %s228, %s244
      %p246 = scmp.eq.s32.totalorder %s52, 0
      %p247 = por %p245, %p246
      %s248 = ssub.s32 %s54, %s61
      %p249 = scmp.eq.s32.totalorder %s248, 0
      %s251 = sadd.s32 %s250, 1
      %s252 = scalar_select %p249, %s250, %s251
      %p255 = pneg %p249
      %p256 = scmp.eq.s32.totalorder %s46, 3
      %p257 = por %p255, %p256
      %p258 = scmp.ne.s32.totalorder %s250, %s253
      %p259 = scmp.eq.s32.totalorder %s46, 0
      %p260 = por %p258, %p259
      %p261 = scmp.ne.s32.totalorder %s250, %s253
      %p262 = scmp.eq.s32.totalorder %s51, 3
      %p263 = por %p261, %p262
      %p264 = scmp.ne.s32.totalorder %s253, %s254
      %p265 = scmp.eq.s32.totalorder %s51, 0
      %p266 = por %p264, %p265
      %p267 = scmp.ne.s32.totalorder %s253, %s254
      %p268 = scmp.eq.s32.totalorder %s52, 3
      %p269 = por %p267, %p268
      %p271 = scmp.ne.s32.totalorder %s254, %s270
      %p272 = scmp.eq.s32.totalorder %s52, 0
      %p273 = por %p271, %p272
      %s274 = ssub.s32 %s54, %s61
      %p275 = scmp.eq.s32.totalorder %s274, 0
      %s277 = sadd.s32 %s276, 1
      %s278 = scalar_select %p275, %s276, %s277
      %p281 = pneg %p275
      %p282 = scmp.eq.s32.totalorder %s46, 3
      %p283 = por %p281, %p282
      %p284 = scmp.ne.s32.totalorder %s276, %s279
      %p285 = scmp.eq.s32.totalorder %s46, 0
      %p286 = por %p284, %p285
      %p287 = scmp.ne.s32.totalorder %s276, %s279
      %p288 = scmp.eq.s32.totalorder %s51, 3
      %p289 = por %p287, %p288
      %p290 = scmp.ne.s32.totalorder %s279, %s280
      %p291 = scmp.eq.s32.totalorder %s51, 0
      %p292 = por %p290, %p291
      %p293 = scmp.ne.s32.totalorder %s279, %s280
      %p294 = scmp.eq.s32.totalorder %s52, 3
      %p295 = por %p293, %p294
      %p297 = scmp.ne.s32.totalorder %s280, %s296
      %p298 = scmp.eq.s32.totalorder %s52, 0
      %p299 = por %p297, %p298
      %s300 = ssub.s32 %s54, %s61
      %p301 = scmp.eq.s32.totalorder %s300, 0
      %s303 = sadd.s32 %s302, 1
      %s304 = scalar_select %p301, %s302, %s303
      %p307 = pneg %p301
      %p308 = scmp.eq.s32.totalorder %s46, 3
      %p309 = por %p307, %p308
      %p310 = scmp.ne.s32.totalorder %s302, %s305
      %p311 = scmp.eq.s32.totalorder %s46, 0
      %p312 = por %p310, %p311
      %p313 = scmp.ne.s32.totalorder %s302, %s305
      %p314 = scmp.eq.s32.totalorder %s51, 3
      %p315 = por %p313, %p314
      %p316 = scmp.ne.s32.totalorder %s305, %s306
      %p317 = scmp.eq.s32.totalorder %s51, 0
      %p318 = por %p316, %p317
      %p319 = scmp.ne.s32.totalorder %s305, %s306
      %p320 = scmp.eq.s32.totalorder %s52, 3
      %p321 = por %p319, %p320
      %p323 = scmp.ne.s32.totalorder %s306, %s322
      %p324 = scmp.eq.s32.totalorder %s52, 0
      %p325 = por %p323, %p324
      %s326 = ssub.s32 %s54, %s61
      %p327 = scmp.eq.s32.totalorder %s326, 0
      %s329 = sadd.s32 %s328, 1
      %s330 = scalar_select %p327, %s328, %s329
      %p333 = pneg %p327
      %p334 = scmp.eq.s32.totalorder %s46, 3
      %p335 = por %p333, %p334
      %p336 = scmp.ne.s32.totalorder %s328, %s331
      %p337 = scmp.eq.s32.totalorder %s46, 0
      %p338 = por %p336, %p337
      %p339 = scmp.ne.s32.totalorder %s328, %s331
      %p340 = scmp.eq.s32.totalorder %s51, 3
      %p341 = por %p339, %p340
      %p342 = scmp.ne.s32.totalorder %s331, %s332
      %p343 = scmp.eq.s32.totalorder %s51, 0
      %p344 = por %p342, %p343
      %p345 = scmp.ne.s32.totalorder %s331, %s332
      %p346 = scmp.eq.s32.totalorder %s52, 3
      %p347 = por %p345, %p346
      %p349 = scmp.ne.s32.totalorder %s332, %s348
      %p350 = scmp.eq.s32.totalorder %s52, 0
      %p351 = por %p349, %p350
      %s352 = ssub.s32 %s54, %s61
      %p353 = scmp.eq.s32.totalorder %s352, 0
      %s355 = sadd.s32 %s354, 1
      %s356 = scalar_select %p353, %s354, %s355
      %p359 = pneg %p353
      %p360 = scmp.eq.s32.totalorder %s46, 3
      %p361 = por %p359, %p360
      %p362 = scmp.ne.s32.totalorder %s354, %s357
      %p363 = scmp.eq.s32.totalorder %s46, 0
      %p364 = por %p362, %p363
      %p365 = scmp.ne.s32.totalorder %s354, %s357
      %p366 = scmp.eq.s32.totalorder %s51, 3
      %p367 = por %p365, %p366
      %p368 = scmp.ne.s32.totalorder %s357, %s358
      %p369 = scmp.eq.s32.totalorder %s51, 0
      %p370 = por %p368, %p369
      %p371 = scmp.ne.s32.totalorder %s357, %s358
      %p372 = scmp.eq.s32.totalorder %s52, 3
      %p373 = por %p371, %p372
      %p375 = scmp.ne.s32.totalorder %s358, %s374
      %p376 = scmp.eq.s32.totalorder %s52, 0
      %p377 = por %p375, %p376
      %s378 = ssub.s32 %s54, %s61
      %p379 = scmp.eq.s32.totalorder %s378, 0
      %s381 = sadd.s32 %s380, 1
      %s382 = scalar_select %p379, %s380, %s381
      %p385 = pneg %p379
      %p386 = scmp.eq.s32.totalorder %s46, 3
      %p387 = por %p385, %p386
      %p388 = scmp.ne.s32.totalorder %s380, %s383
      %p389 = scmp.eq.s32.totalorder %s46, 0
      %p390 = por %p388, %p389
      %p391 = scmp.ne.s32.totalorder %s380, %s383
      %p392 = scmp.eq.s32.totalorder %s51, 3
      %p393 = por %p391, %p392
      %p394 = scmp.ne.s32.totalorder %s383, %s384
      %p395 = scmp.eq.s32.totalorder %s51, 0
      %p396 = por %p394, %p395
      %p397 = scmp.ne.s32.totalorder %s383, %s384
      %p398 = scmp.eq.s32.totalorder %s52, 3
      %p399 = por %p397, %p398
      %p401 = scmp.ne.s32.totalorder %s384, %s400
      %p402 = scmp.eq.s32.totalorder %s52, 0
      %p403 = por %p401, %p402
      %s405 = sadd.s32 %s404, 1
      %p408 = scmp.eq.s32.totalorder %s46, 3
      %p409 = scmp.ne.s32.totalorder %s404, %s406
      %p410 = scmp.eq.s32.totalorder %s46, 0
      %p411 = por %p409, %p410
      %p412 = scmp.ne.s32.totalorder %s404, %s406
      %p413 = scmp.eq.s32.totalorder %s51, 3
      %p414 = por %p412, %p413
      %p415 = scmp.ne.s32.totalorder %s406, %s407
      %p416 = scmp.eq.s32.totalorder %s51, 0
      %p417 = por %p415, %p416
      %p418 = scmp.ne.s32.totalorder %s406, %s407
      %p419 = scmp.eq.s32.totalorder %s52, 3
      %p420 = por %p418, %p419
      %p422 = scmp.ne.s32.totalorder %s407, %s421
      %p423 = scmp.eq.s32.totalorder %s52, 0
      %p424 = por %p422, %p423
      %s426 = sadd.s32 %s425, 1
      %p429 = scmp.eq.s32.totalorder %s46, 3
      %p430 = scmp.ne.s32.totalorder %s425, %s427
      %p431 = scmp.eq.s32.totalorder %s46, 0
      %p432 = por %p430, %p431
      %p433 = scmp.ne.s32.totalorder %s425, %s427
      %p434 = scmp.eq.s32.totalorder %s51, 3
      %p435 = por %p433, %p434
      %p436 = scmp.ne.s32.totalorder %s427, %s428
      %p437 = scmp.eq.s32.totalorder %s51, 0
      %p438 = por %p436, %p437
      %p439 = scmp.ne.s32.totalorder %s427, %s428
      %p440 = scmp.eq.s32.totalorder %s52, 3
      %p441 = por %p439, %p440
      %p443 = scmp.ne.s32.totalorder %s428, %s442
      %p444 = scmp.eq.s32.totalorder %s52, 0
      %p445 = por %p443, %p444
      %s446 = ssub.s32 %s53, %s65
      %p447 = scmp.eq.s32.totalorder %s446, 0
      %s449 = sadd.s32 %s448, 1
      %s450 = scalar_select %p447, %s448, %s449
      %p453 = pneg %p447
      %p454 = scmp.eq.s32.totalorder %s46, 3
      %p455 = por %p453, %p454
      %p456 = scmp.ne.s32.totalorder %s448, %s451
      %p457 = scmp.eq.s32.totalorder %s46, 0
      %p458 = por %p456, %p457
      %p459 = scmp.ne.s32.totalorder %s448, %s451
      %p460 = scmp.eq.s32.totalorder %s51, 3
      %p461 = por %p459, %p460
      %p462 = scmp.ne.s32.totalorder %s451, %s452
      %p463 = scmp.eq.s32.totalorder %s51, 0
      %p464 = por %p462, %p463
      %p465 = scmp.ne.s32.totalorder %s451, %s452
      %p466 = scmp.eq.s32.totalorder %s52, 3
      %p467 = por %p465, %p466
      %p469 = scmp.ne.s32.totalorder %s452, %s468
      %p470 = scmp.eq.s32.totalorder %s52, 0
      %p471 = por %p469, %p470
      %p472 = scmp.le.s32.totalorder 1, %s46
      %p473 = scmp.lt.s32.totalorder %s46, 5
      %p474 = pnand %p472, %p473
      %p475 = pneg %p474
      // Predicated region
      $region9: #{gpt_qdrl_forward.4} parent=5 // pred_check
        _
      $region10: #{gpt_qdrl_forward.4} parent=5 // pred_check_branch
        %477 = sbr.rel (%p474) target = $region12
      $region11: #{gpt_qdrl_forward.4} parent=5 // pred_region
        %s478 = ssub.s32 %s46, 1
        // Predicated region
        $region13: #{gpt_qdrl_forward.4} parent=11 // pred_check
          %p479 = pneg %p417
        $region14: #{gpt_qdrl_forward.4} parent=11 // pred_check_branch
          %481 = sbr.rel (%p479) target = $region16
        $region15: #{gpt_qdrl_forward.4} parent=11 // pred_region
          %s483 = ssub.s32 16, 16
          %484 = vsyncadd [#allocation24], %s483
          %s486 = sshll.u32 [#allocation23], 4
          %s487 = int_to_ptr.vmem [resolvable:$true] %s486
          %489 = dma.hbm_to_vmem [thread:$0]  %s13, 16, %s487, [#allocation24]
        $region16: #{gpt_qdrl_forward.4} parent=11 // pred_fallthru
          _
        // Predicated region
        $region17: #{gpt_qdrl_forward.4} parent=11 // pred_check
          %p490 = pneg %p438
        $region18: #{gpt_qdrl_forward.4} parent=11 // pred_check_branch
          %492 = sbr.rel (%p490) target = $region20
        $region19: #{gpt_qdrl_forward.4} parent=11 // pred_region
          %s494 = ssub.s32 16, 16
          %495 = vsyncadd [#allocation24], %s494
          %s497 = sshll.u32 [#allocation25], 4
          %s498 = int_to_ptr.vmem [resolvable:$true] %s497
          %500 = dma.hbm_to_vmem [thread:$0]  %s14, 16, %s498, [#allocation24]
        $region20: #{gpt_qdrl_forward.4} parent=11 // pred_fallthru
          _
      $region12: #{gpt_qdrl_forward.4} parent=5 // pred_fallthru
        _
      %p501 = scmp.lt.s32.totalorder %s46, 4
      // Predicated region
      $region21: #{gpt_qdrl_forward.4} parent=5 // pred_check
        %p502 = pneg %p501
      $region22: #{gpt_qdrl_forward.4} parent=5 // pred_check_branch
        %504 = sbr.rel (%p502) target = $region24
      $region23: #{gpt_qdrl_forward.4} parent=5 // pred_region
        // Predicated region
        $region25: #{gpt_qdrl_forward.4} parent=23 // pred_check
          %p505 = pneg %p78
        $region26: #{gpt_qdrl_forward.4} parent=23 // pred_check_branch
          %507 = sbr.rel (%p505) target = $region28
        $region27: #{gpt_qdrl_forward.4} parent=23 // pred_region
          %s508 = sand.u32 %s68, 1
          %s509 = scalar_lea.sflag [#allocation3], %s508
          %s510 = sand.u32 %s68, 1
          %s511 = smul.addr %s510, 24
          %s512 = scalar_lea.vmem [#allocation2], %s511
          %s514 = ssub.s32 384, 384
          %515 = vsyncadd %s509, %s514
          %s516 = smul.addr %s53, 3
          %s517 = smul.addr %s516, 128
          %s518 = scalar_lea.hbm %s0, %s517
          %s519 = sshll.u32 %s512, 4
          %s520 = int_to_ptr.vmem [resolvable:$true] %s519
          %525 = dma.hbm_to_vmem [thread:$0]  %s518, 384, %s520, %s509, 128, 128, 8
        $region28: #{gpt_qdrl_forward.4} parent=23 // pred_fallthru
          _
        // Predicated region
        $region29: #{gpt_qdrl_forward.4} parent=23 // pred_check
          %p526 = pneg %p104
        $region30: #{gpt_qdrl_forward.4} parent=23 // pred_check_branch
          %528 = sbr.rel (%p526) target = $region32
        $region31: #{gpt_qdrl_forward.4} parent=23 // pred_region
          %s529 = sand.u32 %s46, 1
          %s530 = scalar_lea.sflag [#allocation6], %s529
          %s531 = sand.u32 %s94, 1
          %s532 = scalar_lea.vmem [#allocation5], %s531
          %s534 = ssub.s32 16, 16
          %535 = vsyncadd %s530, %s534
          %s536 = smul.addr %s54, 16
          %s537 = scalar_lea.hbm %s1, %s536
          %s539 = sshll.u32 %s532, 4
          %s540 = int_to_ptr.vmem [resolvable:$true] %s539
          %542 = dma.hbm_to_vmem [thread:$0]  %s537, 16, %s540, %s530
        $region32: #{gpt_qdrl_forward.4} parent=23 // pred_fallthru
          _
        // Predicated region
        $region33: #{gpt_qdrl_forward.4} parent=23 // pred_check
          %p543 = pneg %p130
        $region34: #{gpt_qdrl_forward.4} parent=23 // pred_check_branch
          %545 = sbr.rel (%p543) target = $region36
        $region35: #{gpt_qdrl_forward.4} parent=23 // pred_region
          %s546 = sand.u32 %s46, 1
          %s547 = scalar_lea.sflag [#allocation6], %s546
          %s548 = sand.u32 %s120, 1
          %s549 = scalar_lea.vmem [#allocation7], %s548
          %s551 = ssub.s32 16, 16
          %552 = vsyncadd %s547, %s551
          %s553 = smul.addr %s54, 16
          %s554 = scalar_lea.hbm %s2, %s553
          %s556 = sshll.u32 %s549, 4
          %s557 = int_to_ptr.vmem [resolvable:$true] %s556
          %559 = dma.hbm_to_vmem [thread:$0]  %s554, 16, %s557, %s547
        $region36: #{gpt_qdrl_forward.4} parent=23 // pred_fallthru
          _
        // Predicated region
        $region37: #{gpt_qdrl_forward.4} parent=23 // pred_check
          %p560 = pneg %p156
        $region38: #{gpt_qdrl_forward.4} parent=23 // pred_check_branch
          %562 = sbr.rel (%p560) target = $region40
        $region39: #{gpt_qdrl_forward.4} parent=23 // pred_region
          %s563 = sand.u32 %s46, 1
          %s564 = scalar_lea.sflag [#allocation9], %s563
          %s565 = sand.u32 %s146, 1
          %s566 = smul.addr %s565, 16
          %s567 = scalar_lea.vmem [#allocation8], %s566
          %s569 = ssub.s32 256, 256
          %570 = vsyncadd %s564, %s569
          %s571 = smul.addr %s54, 4
          %s572 = smul.addr %s571, 64
          %s573 = scalar_lea.hbm %s3, %s572
          %s574 = sshll.u32 %s567, 4
          %s575 = int_to_ptr.vmem [resolvable:$true] %s574
          %580 = dma.hbm_to_vmem [thread:$0]  %s573, 256, %s575, %s564, 64, 64, 4
        $region40: #{gpt_qdrl_forward.4} parent=23 // pred_fallthru
          _
        // Predicated region
        $region41: #{gpt_qdrl_forward.4} parent=23 // pred_check
          %p581 = pneg %p182
        $region42: #{gpt_qdrl_forward.4} parent=23 // pred_check_branch
          %583 = sbr.rel (%p581) target = $region44
        $region43: #{gpt_qdrl_forward.4} parent=23 // pred_region
          %s584 = sand.u32 %s46, 1
          %s585 = scalar_lea.sflag [#allocation9], %s584
          %s586 = sand.u32 %s172, 1
          %s587 = scalar_lea.vmem [#allocation10], %s586
          %s589 = ssub.s32 16, 16
          %590 = vsyncadd %s585, %s589
          %s591 = smul.addr %s54, 16
          %s592 = scalar_lea.hbm %s4, %s591
          %s594 = sshll.u32 %s587, 4
          %s595 = int_to_ptr.vmem [resolvable:$true] %s594
          %597 = dma.hbm_to_vmem [thread:$0]  %s592, 16, %s595, %s585
        $region44: #{gpt_qdrl_forward.4} parent=23 // pred_fallthru
          _
        // Predicated region
        $region45: #{gpt_qdrl_forward.4} parent=23 // pred_check
          %p598 = pneg %p208
        $region46: #{gpt_qdrl_forward.4} parent=23 // pred_check_branch
          %600 = sbr.rel (%p598) target = $region48
        $region47: #{gpt_qdrl_forward.4} parent=23 // pred_region
          %s601 = sand.u32 %s46, 1
          %s602 = scalar_lea.sflag [#allocation12], %s601
          %s603 = sand.u32 %s198, 1
          %s604 = smul.addr %s603, 16
          %s605 = scalar_lea.vmem [#allocation11], %s604
          %s607 = ssub.s32 256, 256
          %608 = vsyncadd %s602, %s607
          %s609 = smul.addr %s54, 4
          %s610 = smul.addr %s609, 64
          %s611 = scalar_lea.hbm %s5, %s610
          %s612 = sshll.u32 %s605, 4
          %s613 = int_to_ptr.vmem [resolvable:$true] %s612
          %618 = dma.hbm_to_vmem [thread:$0]  %s611, 256, %s613, %s602, 64, 64, 4
        $region48: #{gpt_qdrl_forward.4} parent=23 // pred_fallthru
          _
        // Predicated region
        $region49: #{gpt_qdrl_forward.4} parent=23 // pred_check
          %p619 = pneg %p234
        $region50: #{gpt_qdrl_forward.4} parent=23 // pred_check_branch
          %621 = sbr.rel (%p619) target = $region52
        $region51: #{gpt_qdrl_forward.4} parent=23 // pred_region
          %s622 = sand.u32 %s46, 1
          %s623 = scalar_lea.sflag [#allocation12], %s622
          %s624 = sand.u32 %s224, 1
          %s625 = scalar_lea.vmem [#allocation13], %s624
          %s627 = ssub.s32 16, 16
          %628 = vsyncadd %s623, %s627
          %s629 = smul.addr %s54, 16
          %s630 = scalar_lea.hbm %s6, %s629
          %s632 = sshll.u32 %s625, 4
          %s633 = int_to_ptr.vmem [resolvable:$true] %s632
          %635 = dma.hbm_to_vmem [thread:$0]  %s630, 16, %s633, %s623
        $region52: #{gpt_qdrl_forward.4} parent=23 // pred_fallthru
          _
        // Predicated region
        $region53: #{gpt_qdrl_forward.4} parent=23 // pred_check
          %p636 = pneg %p260
        $region54: #{gpt_qdrl_forward.4} parent=23 // pred_check_branch
          %638 = sbr.rel (%p636) target = $region56
        $region55: #{gpt_qdrl_forward.4} parent=23 // pred_region
          %s639 = sand.u32 %s46, 1
          %s640 = scalar_lea.sflag [#allocation15], %s639
          %s641 = sand.u32 %s250, 1
          %s642 = scalar_lea.vmem [#allocation14], %s641
          %s644 = ssub.s32 16, 16
          %645 = vsyncadd %s640, %s644
          %s646 = smul.addr %s54, 16
          %s647 = scalar_lea.hbm %s7, %s646
          %s649 = sshll.u32 %s642, 4
          %s650 = int_to_ptr.vmem [resolvable:$true] %s649
          %652 = dma.hbm_to_vmem [thread:$0]  %s647, 16, %s650, %s640
        $region56: #{gpt_qdrl_forward.4} parent=23 // pred_fallthru
          _
        // Predicated region
        $region57: #{gpt_qdrl_forward.4} parent=23 // pred_check
          %p653 = pneg %p286
        $region58: #{gpt_qdrl_forward.4} parent=23 // pred_check_branch
          %655 = sbr.rel (%p653) target = $region60
        $region59: #{gpt_qdrl_forward.4} parent=23 // pred_region
          %s656 = sand.u32 %s46, 1
          %s657 = scalar_lea.sflag [#allocation15], %s656
          %s658 = sand.u32 %s276, 1
          %s659 = scalar_lea.vmem [#allocation16], %s658
          %s661 = ssub.s32 16, 16
          %662 = vsyncadd %s657, %s661
          %s663 = smul.addr %s54, 16
          %s664 = scalar_lea.hbm %s8, %s663
          %s666 = sshll.u32 %s659, 4
          %s667 = int_to_ptr.vmem [resolvable:$true] %s666
          %669 = dma.hbm_to_vmem [thread:$0]  %s664, 16, %s667, %s657
        $region60: #{gpt_qdrl_forward.4} parent=23 // pred_fallthru
          _
        // Predicated region
        $region61: #{gpt_qdrl_forward.4} parent=23 // pred_check
          %p670 = pneg %p312
        $region62: #{gpt_qdrl_forward.4} parent=23 // pred_check_branch
          %672 = sbr.rel (%p670) target = $region64
        $region63: #{gpt_qdrl_forward.4} parent=23 // pred_region
          %s673 = sand.u32 %s46, 1
          %s674 = scalar_lea.sflag [#allocation18], %s673
          %s675 = sand.u32 %s302, 1
          %s676 = smul.addr %s675, 16
          %s677 = scalar_lea.vmem [#allocation17], %s676
          %s679 = ssub.s32 256, 256
          %680 = vsyncadd %s674, %s679
          %s681 = smul.addr %s54, 4
          %s682 = smul.addr %s681, 64
          %s683 = scalar_lea.hbm %s9, %s682
          %s684 = sshll.u32 %s677, 4
          %s685 = int_to_ptr.vmem [resolvable:$true] %s684
          %690 = dma.hbm_to_vmem [thread:$0]  %s683, 256, %s685, %s674, 64, 64, 4
        $region64: #{gpt_qdrl_forward.4} parent=23 // pred_fallthru
          _
        // Predicated region
        $region65: #{gpt_qdrl_forward.4} parent=23 // pred_check
          %p691 = pneg %p338
        $region66: #{gpt_qdrl_forward.4} parent=23 // pred_check_branch
          %693 = sbr.rel (%p691) target = $region68
        $region67: #{gpt_qdrl_forward.4} parent=23 // pred_region
          %s694 = sand.u32 %s46, 1
          %s695 = scalar_lea.sflag [#allocation18], %s694
          %s696 = sand.u32 %s328, 1
          %s697 = scalar_lea.vmem [#allocation19], %s696
          %s699 = ssub.s32 16, 16
          %700 = vsyncadd %s695, %s699
          %s701 = smul.addr %s54, 16
          %s702 = scalar_lea.hbm %s10, %s701
          %s704 = sshll.u32 %s697, 4
          %s705 = int_to_ptr.vmem [resolvable:$true] %s704
          %707 = dma.hbm_to_vmem [thread:$0]  %s702, 16, %s705, %s695
        $region68: #{gpt_qdrl_forward.4} parent=23 // pred_fallthru
          _
        // Predicated region
        $region69: #{gpt_qdrl_forward.4} parent=23 // pred_check
          %p708 = pneg %p364
        $region70: #{gpt_qdrl_forward.4} parent=23 // pred_check_branch
          %710 = sbr.rel (%p708) target = $region72
        $region71: #{gpt_qdrl_forward.4} parent=23 // pred_region
          %s711 = sand.u32 %s46, 1
          %s712 = scalar_lea.sflag [#allocation21], %s711
          %s713 = sand.u32 %s354, 1
          %s714 = smul.addr %s713, 64
          %s715 = scalar_lea.vmem [#allocation20], %s714
          %s717 = ssub.s32 1024, 1024
          %718 = vsyncadd %s712, %s717
          %s719 = smul.addr %s54, 16
          %s720 = smul.addr %s719, 64
          %s721 = scalar_lea.hbm %s11, %s720
          %s722 = sshll.u32 %s715, 4
          %s723 = int_to_ptr.vmem [resolvable:$true] %s722
          %728 = dma.hbm_to_vmem [thread:$0]  %s721, 1024, %s723, %s712, 64, 64, 4
        $region72: #{gpt_qdrl_forward.4} parent=23 // pred_fallthru
          _
        // Predicated region
        $region73: #{gpt_qdrl_forward.4} parent=23 // pred_check
          %p729 = pneg %p390
        $region74: #{gpt_qdrl_forward.4} parent=23 // pred_check_branch
          %731 = sbr.rel (%p729) target = $region76
        $region75: #{gpt_qdrl_forward.4} parent=23 // pred_region
          %s732 = sand.u32 %s46, 1
          %s733 = scalar_lea.sflag [#allocation21], %s732
          %s734 = sand.u32 %s380, 1
          %s735 = scalar_lea.vmem [#allocation22], %s734
          %s737 = ssub.s32 16, 16
          %738 = vsyncadd %s733, %s737
          %s739 = smul.addr %s54, 16
          %s740 = scalar_lea.hbm %s12, %s739
          %s742 = sshll.u32 %s735, 4
          %s743 = int_to_ptr.vmem [resolvable:$true] %s742
          %745 = dma.hbm_to_vmem [thread:$0]  %s740, 16, %s743, %s733
        $region76: #{gpt_qdrl_forward.4} parent=23 // pred_fallthru
          _
      $region24: #{gpt_qdrl_forward.4} parent=5 // pred_fallthru
        _
      %p746 = scmp.le.s32.totalorder 1, %s46
      %p747 = scmp.lt.s32.totalorder %s46, 5
      %p748 = pnand %p746, %p747
      %p749 = pneg %p748
      // Predicated region
      $region77: #{gpt_qdrl_forward.4} parent=5 // pred_check
        _
      $region78: #{gpt_qdrl_forward.4} parent=5 // pred_check_branch
        %751 = sbr.rel (%p748) target = $region80
      $region79: #{gpt_qdrl_forward.4} parent=5 // pred_region
        %s752 = ssub.s32 %s46, 1
        %s753 = sand.u32 %s71, 1
        %s754 = scalar_lea.sflag [#allocation3], %s753
        %s755 = sand.u32 %s71, 1
        %s756 = smul.addr %s755, 24
        %s757 = scalar_lea.vmem [#allocation2], %s756
        // Predicated region
        $region81: #{gpt_qdrl_forward.4} parent=79 // pred_check
          %p758 = pneg %p84
        $region82: #{gpt_qdrl_forward.4} parent=79 // pred_check_branch
          %760 = sbr.rel (%p758) target = $region84
        $region83: #{gpt_qdrl_forward.4} parent=79 // pred_region
          %761 = dma.done %s754, 384
        $region84: #{gpt_qdrl_forward.4} parent=79 // pred_fallthru
          _
        %s762 = sand.u32 %s51, 1
        %s763 = scalar_lea.sflag [#allocation6], %s762
        %s764 = sand.u32 %s97, 1
        %s765 = scalar_lea.vmem [#allocation5], %s764
        // Predicated region
        $region85: #{gpt_qdrl_forward.4} parent=79 // pred_check
          %p766 = pneg %p110
        $region86: #{gpt_qdrl_forward.4} parent=79 // pred_check_branch
          %768 = sbr.rel (%p766) target = $region88
        $region87: #{gpt_qdrl_forward.4} parent=79 // pred_region
          %769 = dma.done %s763, 16
        $region88: #{gpt_qdrl_forward.4} parent=79 // pred_fallthru
          _
        %s770 = sand.u32 %s51, 1
        %s771 = scalar_lea.sflag [#allocation6], %s770
        %s772 = sand.u32 %s123, 1
        %s773 = scalar_lea.vmem [#allocation7], %s772
        // Predicated region
        $region89: #{gpt_qdrl_forward.4} parent=79 // pred_check
          %p774 = pneg %p136
        $region90: #{gpt_qdrl_forward.4} parent=79 // pred_check_branch
          %776 = sbr.rel (%p774) target = $region92
        $region91: #{gpt_qdrl_forward.4} parent=79 // pred_region
          %777 = dma.done %s771, 16
        $region92: #{gpt_qdrl_forward.4} parent=79 // pred_fallthru
          _
        %s778 = sand.u32 %s51, 1
        %s779 = scalar_lea.sflag [#allocation9], %s778
        %s780 = sand.u32 %s149, 1
        %s781 = smul.addr %s780, 16
        %s782 = scalar_lea.vmem [#allocation8], %s781
        // Predicated region
        $region93: #{gpt_qdrl_forward.4} parent=79 // pred_check
          %p783 = pneg %p162
        $region94: #{gpt_qdrl_forward.4} parent=79 // pred_check_branch
          %785 = sbr.rel (%p783) target = $region96
        $region95: #{gpt_qdrl_forward.4} parent=79 // pred_region
          %786 = dma.done %s779, 256
        $region96: #{gpt_qdrl_forward.4} parent=79 // pred_fallthru
          _
        %s787 = sand.u32 %s51, 1
        %s788 = scalar_lea.sflag [#allocation9], %s787
        %s789 = sand.u32 %s175, 1
        %s790 = scalar_lea.vmem [#allocation10], %s789
        // Predicated region
        $region97: #{gpt_qdrl_forward.4} parent=79 // pred_check
          %p791 = pneg %p188
        $region98: #{gpt_qdrl_forward.4} parent=79 // pred_check_branch
          %793 = sbr.rel (%p791) target = $region100
        $region99: #{gpt_qdrl_forward.4} parent=79 // pred_region
          %794 = dma.done %s788, 16
        $region100: #{gpt_qdrl_forward.4} parent=79 // pred_fallthru
          _
        %s795 = sand.u32 %s51, 1
        %s796 = scalar_lea.sflag [#allocation12], %s795
        %s797 = sand.u32 %s201, 1
        %s798 = smul.addr %s797, 16
        %s799 = scalar_lea.vmem [#allocation11], %s798
        // Predicated region
        $region101: #{gpt_qdrl_forward.4} parent=79 // pred_check
          %p800 = pneg %p214
        $region102: #{gpt_qdrl_forward.4} parent=79 // pred_check_branch
          %802 = sbr.rel (%p800) target = $region104
        $region103: #{gpt_qdrl_forward.4} parent=79 // pred_region
          %803 = dma.done %s796, 256
        $region104: #{gpt_qdrl_forward.4} parent=79 // pred_fallthru
          _
        %s804 = sand.u32 %s51, 1
        %s805 = scalar_lea.sflag [#allocation12], %s804
        %s806 = sand.u32 %s227, 1
        %s807 = scalar_lea.vmem [#allocation13], %s806
        // Predicated region
        $region105: #{gpt_qdrl_forward.4} parent=79 // pred_check
          %p808 = pneg %p240
        $region106: #{gpt_qdrl_forward.4} parent=79 // pred_check_branch
          %810 = sbr.rel (%p808) target = $region108
        $region107: #{gpt_qdrl_forward.4} parent=79 // pred_region
          %811 = dma.done %s805, 16
        $region108: #{gpt_qdrl_forward.4} parent=79 // pred_fallthru
          _
        %s812 = sand.u32 %s51, 1
        %s813 = scalar_lea.sflag [#allocation15], %s812
        %s814 = sand.u32 %s253, 1
        %s815 = scalar_lea.vmem [#allocation14], %s814
        // Predicated region
        $region109: #{gpt_qdrl_forward.4} parent=79 // pred_check
          %p816 = pneg %p266
        $region110: #{gpt_qdrl_forward.4} parent=79 // pred_check_branch
          %818 = sbr.rel (%p816) target = $region112
        $region111: #{gpt_qdrl_forward.4} parent=79 // pred_region
          %819 = dma.done %s813, 16
        $region112: #{gpt_qdrl_forward.4} parent=79 // pred_fallthru
          _
        %s820 = sand.u32 %s51, 1
        %s821 = scalar_lea.sflag [#allocation15], %s820
        %s822 = sand.u32 %s279, 1
        %s823 = scalar_lea.vmem [#allocation16], %s822
        // Predicated region
        $region113: #{gpt_qdrl_forward.4} parent=79 // pred_check
          %p824 = pneg %p292
        $region114: #{gpt_qdrl_forward.4} parent=79 // pred_check_branch
          %826 = sbr.rel (%p824) target = $region116
        $region115: #{gpt_qdrl_forward.4} parent=79 // pred_region
          %827 = dma.done %s821, 16
        $region116: #{gpt_qdrl_forward.4} parent=79 // pred_fallthru
          _
        %s828 = sand.u32 %s51, 1
        %s829 = scalar_lea.sflag [#allocation18], %s828
        %s830 = sand.u32 %s305, 1
        %s831 = smul.addr %s830, 16
        %s832 = scalar_lea.vmem [#allocation17], %s831
        // Predicated region
        $region117: #{gpt_qdrl_forward.4} parent=79 // pred_check
          %p833 = pneg %p318
        $region118: #{gpt_qdrl_forward.4} parent=79 // pred_check_branch
          %835 = sbr.rel (%p833) target = $region120
        $region119: #{gpt_qdrl_forward.4} parent=79 // pred_region
          %836 = dma.done %s829, 256
        $region120: #{gpt_qdrl_forward.4} parent=79 // pred_fallthru
          _
        %s837 = sand.u32 %s51, 1
        %s838 = scalar_lea.sflag [#allocation18], %s837
        %s839 = sand.u32 %s331, 1
        %s840 = scalar_lea.vmem [#allocation19], %s839
        // Predicated region
        $region121: #{gpt_qdrl_forward.4} parent=79 // pred_check
          %p841 = pneg %p344
        $region122: #{gpt_qdrl_forward.4} parent=79 // pred_check_branch
          %843 = sbr.rel (%p841) target = $region124
        $region123: #{gpt_qdrl_forward.4} parent=79 // pred_region
          %844 = dma.done %s838, 16
        $region124: #{gpt_qdrl_forward.4} parent=79 // pred_fallthru
          _
        %s845 = sand.u32 %s51, 1
        %s846 = scalar_lea.sflag [#allocation21], %s845
        %s847 = sand.u32 %s357, 1
        %s848 = smul.addr %s847, 64
        %s849 = scalar_lea.vmem [#allocation20], %s848
        // Predicated region
        $region125: #{gpt_qdrl_forward.4} parent=79 // pred_check
          %p850 = pneg %p370
        $region126: #{gpt_qdrl_forward.4} parent=79 // pred_check_branch
          %852 = sbr.rel (%p850) target = $region128
        $region127: #{gpt_qdrl_forward.4} parent=79 // pred_region
          %853 = dma.done %s846, 1024
        $region128: #{gpt_qdrl_forward.4} parent=79 // pred_fallthru
          _
        %s854 = sand.u32 %s51, 1
        %s855 = scalar_lea.sflag [#allocation21], %s854
        %s856 = sand.u32 %s383, 1
        %s857 = scalar_lea.vmem [#allocation22], %s856
        // Predicated region
        $region129: #{gpt_qdrl_forward.4} parent=79 // pred_check
          %p858 = pneg %p396
        $region130: #{gpt_qdrl_forward.4} parent=79 // pred_check_branch
          %860 = sbr.rel (%p858) target = $region132
        $region131: #{gpt_qdrl_forward.4} parent=79 // pred_region
          %861 = dma.done %s855, 16
        $region132: #{gpt_qdrl_forward.4} parent=79 // pred_fallthru
          _
        // Predicated region
        $region133: #{gpt_qdrl_forward.4} parent=79 // pred_check
          %p862 = pneg %p417
        $region134: #{gpt_qdrl_forward.4} parent=79 // pred_check_branch
          %864 = sbr.rel (%p862) target = $region136
        $region135: #{gpt_qdrl_forward.4} parent=79 // pred_region
          %865 = dma.done [#allocation24], 16
        $region136: #{gpt_qdrl_forward.4} parent=79 // pred_fallthru
          _
        // Predicated region
        $region137: #{gpt_qdrl_forward.4} parent=79 // pred_check
          %p866 = pneg %p438
        $region138: #{gpt_qdrl_forward.4} parent=79 // pred_check_branch
          %868 = sbr.rel (%p866) target = $region140
        $region139: #{gpt_qdrl_forward.4} parent=79 // pred_region
          %869 = dma.done [#allocation24], 16
        $region140: #{gpt_qdrl_forward.4} parent=79 // pred_fallthru
          _
        %s870 = sand.u32 %s71, 1
        %s871 = scalar_lea.sflag [#allocation3], %s870
        %s872 = sand.u32 %s71, 1
        %s873 = smul.addr %s872, 24
        %s874 = scalar_lea.vmem [#allocation2], %s873
        %p875 = pneg %p84
        %p876 = pneg %p81
        %s877 = sand.u32 %s51, 1
        %s878 = scalar_lea.sflag [#allocation6], %s877
        %s879 = sand.u32 %s97, 1
        %s880 = scalar_lea.vmem [#allocation5], %s879
        %p881 = pneg %p110
        %p882 = pneg %p107
        %s883 = sand.u32 %s51, 1
        %s884 = scalar_lea.sflag [#allocation6], %s883
        %s885 = sand.u32 %s123, 1
        %s886 = scalar_lea.vmem [#allocation7], %s885
        %p887 = pneg %p136
        %p888 = pneg %p133
        %s889 = sand.u32 %s51, 1
        %s890 = scalar_lea.sflag [#allocation9], %s889
        %s891 = sand.u32 %s149, 1
        %s892 = smul.addr %s891, 16
        %s893 = scalar_lea.vmem [#allocation8], %s892
        %p894 = pneg %p162
        %p895 = pneg %p159
        %s896 = sand.u32 %s51, 1
        %s897 = scalar_lea.sflag [#allocation9], %s896
        %s898 = sand.u32 %s175, 1
        %s899 = scalar_lea.vmem [#allocation10], %s898
        %p900 = pneg %p188
        %p901 = pneg %p185
        %s902 = sand.u32 %s51, 1
        %s903 = scalar_lea.sflag [#allocation12], %s902
        %s904 = sand.u32 %s201, 1
        %s905 = smul.addr %s904, 16
        %s906 = scalar_lea.vmem [#allocation11], %s905
        %p907 = pneg %p214
        %p908 = pneg %p211
        %s909 = sand.u32 %s51, 1
        %s910 = scalar_lea.sflag [#allocation12], %s909
        %s911 = sand.u32 %s227, 1
        %s912 = scalar_lea.vmem [#allocation13], %s911
        %p913 = pneg %p240
        %p914 = pneg %p237
        %s915 = sand.u32 %s51, 1
        %s916 = scalar_lea.sflag [#allocation15], %s915
        %s917 = sand.u32 %s253, 1
        %s918 = scalar_lea.vmem [#allocation14], %s917
        %p919 = pneg %p266
        %p920 = pneg %p263
        %s921 = sand.u32 %s51, 1
        %s922 = scalar_lea.sflag [#allocation15], %s921
        %s923 = sand.u32 %s279, 1
        %s924 = scalar_lea.vmem [#allocation16], %s923
        %p925 = pneg %p292
        %p926 = pneg %p289
        %s927 = sand.u32 %s51, 1
        %s928 = scalar_lea.sflag [#allocation18], %s927
        %s929 = sand.u32 %s305, 1
        %s930 = smul.addr %s929, 16
        %s931 = scalar_lea.vmem [#allocation17], %s930
        %p932 = pneg %p318
        %p933 = pneg %p315
        %s934 = sand.u32 %s51, 1
        %s935 = scalar_lea.sflag [#allocation18], %s934
        %s936 = sand.u32 %s331, 1
        %s937 = scalar_lea.vmem [#allocation19], %s936
        %p938 = pneg %p344
        %p939 = pneg %p341
        %s940 = sand.u32 %s51, 1
        %s941 = scalar_lea.sflag [#allocation21], %s940
        %s942 = sand.u32 %s357, 1
        %s943 = smul.addr %s942, 64
        %s944 = scalar_lea.vmem [#allocation20], %s943
        %p945 = pneg %p370
        %p946 = pneg %p367
        %s947 = sand.u32 %s51, 1
        %s948 = scalar_lea.sflag [#allocation21], %s947
        %s949 = sand.u32 %s383, 1
        %s950 = scalar_lea.vmem [#allocation22], %s949
        %p951 = pneg %p396
        %p952 = pneg %p393
        %p953 = pneg %p417
        %p954 = pneg %p414
        %p955 = pneg %p438
        %p956 = pneg %p435
        %p957 = pneg %p464
        %p958 = pneg %p461
        %s959 = sand.u32 %s451, 1
        %s960 = scalar_lea.sflag [#allocation4], %s959
        %s961 = sand.u32 %s451, 1
        %s962 = smul.addr %s961, 24
        %s963 = scalar_lea.vmem [#allocation26], %s962
        %p965 = scmp.eq.s32.totalorder %s56, 0
        // Predicated region
        $region141: #{gpt_qdrl_forward.4} parent=79 // pred_check
          %p966 = pneg %p965
        $region142: #{gpt_qdrl_forward.4} parent=79 // pred_check_branch
          %968 = sbr.rel (%p966) target = $region144
        $region143: #{gpt_qdrl_forward.4} parent=79 // pred_region
          %v969 = vld [vmem:[%s757] sm:$0xff]
          %v970 = vld [vmem:[%s757 + $0x8] sm:$0xff]
          %v971 = vld [vmem:[%s757 + $0x10] sm:$0xff]
          %vm972 = vcmask 261120
          %973 = vst.msk [vmem:[%s963] sm:$0xff] %vm972, %v969
          %974 = vst.msk [vmem:[%s963 + $0x8] sm:$0xff] %vm972, %v970
          %975 = vst.msk [vmem:[%s963 + $0x10] sm:$0xff] %vm972, %v971
        $region144: #{gpt_qdrl_forward.4} parent=79 // pred_fallthru
          _
        %v976 = vld [vmem:[%s963] sm:$0xff]
        %v977 = vld [vmem:[%s963 + $0x8] sm:$0xff]
        %v978 = vld [vmem:[%s963 + $0x10] sm:$0xff]
        %v979 = vlaneseq
        %v980 = vshrl.u32 %v979, 7
        %v981 = vadd.s32 %v980, 8
        %v982 = vadd.s32 %v980, 16
        %v983 = vlaneseq
        %v984 = vand.u32 %v983, 127
        %vm985 = vcmp.le.s32.totalorder %v984, %v980
        %vm986 = vcmp.le.s32.totalorder %v984, %v981
        %vm987 = vcmp.le.s32.totalorder %v984, %v982
        %v988 = vld [vmem:[%s765] sm:$0x1]
        %v989 = vld [vmem:[%s773] sm:$0x1]
        %vm990 = vcmask 261120
        %v991 = vsel %vm990, %v976, 0.0
        %992 = vadd.xlane.f32.xlu0 %v991
        %v993 = vpop.xlane.xlu0 %992
        %v994 = vsel %vm990, %v977, 0.0
        %995 = vadd.xlane.f32.xlu0 %v994
        %v996 = vpop.xlane.xlu0 %995
        %v997 = vsel %vm990, %v978, 0.0
        %998 = vadd.xlane.f32.xlu0 %v997
        %v999 = vpop.xlane.xlu0 %998
        %v1000 = vrcp.pop 32.0
        %v1001 = vmul.f32 %v993, %v1000
        %v1002 = vmul.f32 %v996, %v1000
        %v1003 = vmul.f32 %v999, %v1000
        %v1004 = vsub.f32 %v976, %v1001
        %v1005 = vsub.f32 %v977, %v1002
        %v1006 = vsub.f32 %v978, %v1003
        %v1007 = vmul.f32 %v1004, %v1004
        %v1008 = vmul.f32 %v1005, %v1005
        %v1009 = vmul.f32 %v1006, %v1006
        %v1010 = vsel %vm990, %v1007, 0.0
        %1011 = vadd.xlane.f32.xlu0 %v1010
        %v1012 = vpop.xlane.xlu0 %1011
        %v1013 = vsel %vm990, %v1008, 0.0
        %1014 = vadd.xlane.f32.xlu0 %v1013
        %v1015 = vpop.xlane.xlu0 %1014
        %v1016 = vsel %vm990, %v1009, 0.0
        %1017 = vadd.xlane.f32.xlu0 %v1016
        %v1018 = vpop.xlane.xlu0 %1017
        %v1019 = vmul.f32 %v1012, %v1000
        %v1020 = vmul.f32 %v1015, %v1000
        %v1021 = vmul.f32 %v1018, %v1000
        %v1022 = vadd.f32 %v1019, 1e-05
        %v1023 = vadd.f32 %v1020, 1e-05
        %v1024 = vadd.f32 %v1021, 1e-05
        %v1025 = vrsqrt.pop %v1022
        %v1026 = vrsqrt.pop %v1023
        %v1027 = vrsqrt.pop %v1024
        %v1028 = vmul.f32 %v1004, %v1025
        %v1029 = vmul.f32 %v1005, %v1026
        %v1030 = vmul.f32 %v1006, %v1027
        %v1032 = vlaneseq
        %v1033 = vshrl.u32 %v1032, 7
        %v1034 = vsub.s32 0, %v1033
        %v1035 = vrot.slane %v988, %v1034
        %v1037 = vmul.f32 %v1028, %v1035
        %v1038 = vmul.f32 %v1029, %v1035
        %v1039 = vmul.f32 %v1030, %v1035
        %v1041 = vlaneseq
        %v1042 = vshrl.u32 %v1041, 7
        %v1043 = vsub.s32 0, %v1042
        %v1044 = vrot.slane %v989, %v1043
        %v1046 = vadd.f32 %v1037, %v1044
        %v1047 = vadd.f32 %v1038, %v1044
        %v1048 = vadd.f32 %v1039, %v1044
        %v1049 = vpack.c.bf16 %v1047, %v1046
        %v1050 = vpack.c.bf16 %v1048, %v1048
        %v1051 = vld [vmem:[%s782] sm:$0xf]
        %v1052 = vld [vmem:[%s782 + $0x4] sm:$0xf]
        %v1053 = vld [vmem:[%s782 + $0x8] sm:$0xf]
        %v1054 = vld [vmem:[%s782 + $0xc] sm:$0xf]
        %v1055 = vld [vmem:[%s790] sm:$0x1]
        %v1057 = vlaneseq
        %v1058 = vshrl.u32 %v1057, 7
        %v1059 = vsub.s32 0, %v1058
        %v1060 = vrot.slane %v1055, %v1059
        %v1066 = vunpack.c.l.b16 %v1051
        %v1067 = vunpack.c.l.b16 %v1052
        %v1068 = vunpack.c.l.b16 %v1053
        %v1069 = vunpack.c.l.b16 %v1054
        %v1070 = vpack.c.b16 %v1067, %v1066
        %v1071 = vpack.c.b16 %v1069, %v1068
        %v1075 = vsel %vm990, %v1049, 0
        %v1078 = vsel %vm990, %v1050, 0
        %1080 = vmatprep.subr.bf16.mxu0 0
        %1081 = vmatpush1.bf16.msra.mxu0 %v1070
        %1082 = vmatprep.subr.bf16.mxu0 0
        %1083 = vmatpush1.bf16.msra.mxu0 %v1071
        %1084 = vmatprep.subr.bf16.mxu0 0
        %1085 = vmatpush1.bf16.msra.mxu0 0
        %1086 = vmatprep.subr.bf16.mxu0 0
        %1087 = vmatpush1.bf16.msra.mxu0 0
        %1088 = vmatprep.subr.bf16.mxu0 0
        %1089 = vmatpush1.bf16.msra.mxu0 0
        %1090 = vmatprep.subr.bf16.mxu0 0
        %1091 = vmatpush1.bf16.msra.mxu0 0
        %1092 = vmatprep.subr.bf16.mxu0 0
        %1093 = vmatpush1.bf16.msra.mxu0 0
        %1094 = vmatprep.subr.bf16.mxu0 0
        %1095 = vmatpush1.bf16.msra.mxu0 0
        %1096 = vmatprep.subr.bf16.mxu0 0
        %1097 = vmatpush1.bf16.msra.mxu0 0
        %1098 = vmatprep.subr.bf16.mxu0 0
        %1099 = vmatpush1.bf16.msra.mxu0 0
        %1100 = vmatprep.subr.bf16.mxu0 0
        %1101 = vmatpush1.bf16.msra.mxu0 0
        %1102 = vmatprep.subr.bf16.mxu0 0
        %1103 = vmatpush1.bf16.msra.mxu0 0
        %1104 = vmatprep.subr.bf16.mxu0 0
        %1105 = vmatpush1.bf16.msra.mxu0 0
        %1106 = vmatprep.subr.bf16.mxu0 0
        %1107 = vmatpush1.bf16.msra.mxu0 0
        %1108 = vmatprep.subr.bf16.mxu0 0
        %1109 = vmatpush1.bf16.msra.mxu0 0
        %1110 = vmatprep.subr.bf16.mxu0 0
        %1111 = vmatpush1.bf16.msra.mxu0 0
        %1112 = vmatprep.mubr.bf16.mxu0 0
        %1113 = vmatmul.mubr.bf16.gmra.mrb[0].mxu0 %v1075
        %v1114 = vpop.f32.mrb[0].mxu0
        %v1115 = vadd.f32 %v1060, %v1114
        %v1116 = vpop.f32.mrb[0].mxu0
        %v1117 = vpop.f32.mrb[0].mxu0
        %v1118 = vadd.f32 %v1060, %v1117
        %v1119 = vpop.f32.mrb[0].mxu0
        %1120 = vmatprep.mubr.bf16.mxu0 0
        %1121 = vmatmul.mubr.bf16.gmra.mrb[0].mxu0 %v1078
        %v1122 = vpop.f32.mrb[0].mxu0
        %v1123 = vadd.f32 %v1060, %v1122
        %v1124 = vpop.f32.mrb[0].mxu0
        %v1125 = vpop.f32.mrb[0].mxu0
        %v1126 = vpop.f32.mrb[0].mxu0
        %1127 = vdwg.mxu0
        %v1128 = vld [vmem:[%s799] sm:$0xf]
        %v1129 = vld [vmem:[%s799 + $0x4] sm:$0xf]
        %v1130 = vld [vmem:[%s799 + $0x8] sm:$0xf]
        %v1131 = vld [vmem:[%s799 + $0xc] sm:$0xf]
        %v1132 = vpack.c.bf16 %v1118, %v1115
        %v1133 = vpack.c.bf16 %v1123, %v1123
        %1136 = vrot.lane.b32.xlu0 %v1132, 96
        %v1137 = vpop.permute.xlu0 %1136
        %1138 = vrot.lane.b32.xlu0 %v1133, 96
        %v1139 = vpop.permute.xlu0 %1138
        %vm1140 = vcmask 64512
        %v1142 = vsel %vm1140, %v1132, 0
        %v1145 = vsel %vm1140, %v1133, 0
        %v1148 = vsel %vm1140, %v1137, 0
        %v1151 = vsel %vm1140, %v1139, 0
        %1153 = vmatprep.subr.bf16.mxu0 0
        %1154 = vmatpush1.bf16.xpose.msra.mxu0 %v1148
        %1155 = vmatprep.subr.bf16.mxu0 0
        %1156 = vmatpush1.bf16.xpose.msra.mxu0 %v1151
        %1157 = vmatprep.subr.bf16.mxu0 0
        %1158 = vmatpush1.bf16.xpose.msra.mxu0 0
        %1159 = vmatprep.subr.bf16.mxu0 0
        %1160 = vmatpush1.bf16.xpose.msra.mxu0 0
        %1161 = vmatprep.subr.bf16.mxu0 0
        %1162 = vmatpush1.bf16.xpose.msra.mxu0 0
        %1163 = vmatprep.subr.bf16.mxu0 0
        %1164 = vmatpush1.bf16.xpose.msra.mxu0 0
        %1165 = vmatprep.subr.bf16.mxu0 0
        %1166 = vmatpush1.bf16.xpose.msra.mxu0 0
        %1167 = vmatprep.subr.bf16.mxu0 0
        %1168 = vmatpush1.bf16.xpose.msra.mxu0 0
        %1169 = vmatprep.subr.bf16.mxu0 0
        %1170 = vmatpush1.bf16.xpose.msra.mxu0 0
        %1171 = vmatprep.subr.bf16.mxu0 0
        %1172 = vmatpush1.bf16.xpose.msra.mxu0 0
        %1173 = vmatprep.subr.bf16.mxu0 0
        %1174 = vmatpush1.bf16.xpose.msra.mxu0 0
        %1175 = vmatprep.subr.bf16.mxu0 0
        %1176 = vmatpush1.bf16.xpose.msra.mxu0 0
        %1177 = vmatprep.subr.bf16.mxu0 0
        %1178 = vmatpush1.bf16.xpose.msra.mxu0 0
        %1179 = vmatprep.subr.bf16.mxu0 0
        %1180 = vmatpush1.bf16.xpose.msra.mxu0 0
        %1181 = vmatprep.subr.bf16.mxu0 0
        %1182 = vmatpush1.bf16.xpose.msra.mxu0 0
        %1183 = vmatprep.subr.bf16.mxu0 0
        %1184 = vmatpush1.bf16.xpose.msra.mxu0 0
        %1185 = vmatprep.mubr.bf16.mxu0 0
        %1186 = vmatmul.mubr.bf16.gmra.mrb[0].mxu0 %v1142
        %v1187 = vpop.f32.mrb[0].mxu0
        %v1188 = vadd.f32 0.0, %v1187
        %v1189 = vpop.f32.mrb[0].mxu0
        %v1190 = vpop.f32.mrb[0].mxu0
        %v1191 = vadd.f32 0.0, %v1190
        %v1192 = vpop.f32.mrb[0].mxu0
        %1193 = vmatprep.mubr.bf16.mxu0 0
        %1194 = vmatmul.mubr.bf16.gmra.mrb[0].mxu0 %v1145
        %v1195 = vpop.f32.mrb[0].mxu0
        %v1196 = vadd.f32 0.0, %v1195
        %v1197 = vpop.f32.mrb[0].mxu0
        %v1198 = vpop.f32.mrb[0].mxu0
        %v1199 = vpop.f32.mrb[0].mxu0
        %1200 = vdwg.mxu0
        %v1201 = vmul.f32 %v1188, 0.35355338
        %v1202 = vmul.f32 %v1191, 0.35355338
        %v1203 = vmul.f32 %v1196, 0.35355338
        %v1204 = vsel %vm985, %v1201, -1e+30
        %v1205 = vsel %vm986, %v1202, -1e+30
        %v1206 = vsel %vm987, %v1203, -1e+30
        %vm1207 = vcmask 195584
        %v1208 = vsel %vm1207, %v1204, -inf
        %1209 = vmax.xlane.f32.xlu0 %v1208
        %v1210 = vpop.xlane.xlu0 %1209
        %v1211 = vsel %vm1207, %v1205, -inf
        %1212 = vmax.xlane.f32.xlu0 %v1211
        %v1213 = vpop.xlane.xlu0 %1212
        %v1214 = vsel %vm1207, %v1206, -inf
        %1215 = vmax.xlane.f32.xlu0 %v1214
        %v1216 = vpop.xlane.xlu0 %1215
        %v1217 = vsub.f32 %v1204, %v1210
        %v1218 = vsub.f32 %v1205, %v1213
        %v1219 = vsub.f32 %v1206, %v1216
        %v1220 = vmul.f32 %v1217, 1.442695
        %v1221 = vpow.pop %v1220
        %v1222 = vmul.f32 %v1218, 1.442695
        %v1223 = vpow.pop %v1222
        %v1224 = vmul.f32 %v1219, 1.442695
        %v1225 = vpow.pop %v1224
        %v1226 = vsel %vm1207, %v1221, 0.0
        %1227 = vadd.xlane.f32.xlu0 %v1226
        %v1228 = vpop.xlane.xlu0 %1227
        %v1229 = vsel %vm1207, %v1223, 0.0
        %1230 = vadd.xlane.f32.xlu0 %v1229
        %v1231 = vpop.xlane.xlu0 %1230
        %v1232 = vsel %vm1207, %v1225, 0.0
        %1233 = vadd.xlane.f32.xlu0 %v1232
        %v1234 = vpop.xlane.xlu0 %1233
        %v1235 = vrcp.pop %v1228
        %v1236 = vmul.f32 %v1221, %v1235
        %v1237 = vrcp.pop %v1231
        %v1238 = vmul.f32 %v1223, %v1237
        %v1239 = vrcp.pop %v1234
        %v1240 = vmul.f32 %v1225, %v1239
        %v1241 = vpack.c.bf16 %v1238, %v1236
        %v1242 = vpack.c.bf16 %v1240, %v1240
        %1243 = vrot.lane.b32.xlu0 %v1132, 64
        %v1244 = vpop.permute.xlu0 %1243
        %1245 = vrot.lane.b32.xlu0 %v1133, 64
        %v1246 = vpop.permute.xlu0 %1245
        %v1249 = vsel %vm1207, %v1241, 0
        %v1252 = vsel %vm1207, %v1242, 0
        %vm1254 = vcmask 1043456
        %v1256 = vsel %vm1254, %v1246, 0
        %1258 = vmatprep.subr.bf16.mxu0 0
        %1259 = vmatpush1.bf16.msra.mxu0 %v1244
        %1260 = vmatprep.subr.bf16.mxu0 0
        %1261 = vmatpush1.bf16.msra.mxu0 %v1256
        %1262 = vmatprep.subr.bf16.mxu0 0
        %1263 = vmatpush1.bf16.msra.mxu0 0
        %1264 = vmatprep.subr.bf16.mxu0 0
        %1265 = vmatpush1.bf16.msra.mxu0 0
        %1266 = vmatprep.subr.bf16.mxu0 0
        %1267 = vmatpush1.bf16.msra.mxu0 0
        %1268 = vmatprep.subr.bf16.mxu0 0
        %1269 = vmatpush1.bf16.msra.mxu0 0
        %1270 = vmatprep.subr.bf16.mxu0 0
        %1271 = vmatpush1.bf16.msra.mxu0 0
        %1272 = vmatprep.subr.bf16.mxu0 0
        %1273 = vmatpush1.bf16.msra.mxu0 0
        %1274 = vmatprep.subr.bf16.mxu0 0
        %1275 = vmatpush1.bf16.msra.mxu0 0
        %1276 = vmatprep.subr.bf16.mxu0 0
        %1277 = vmatpush1.bf16.msra.mxu0 0
        %1278 = vmatprep.subr.bf16.mxu0 0
        %1279 = vmatpush1.bf16.msra.mxu0 0
        %1280 = vmatprep.subr.bf16.mxu0 0
        %1281 = vmatpush1.bf16.msra.mxu0 0
        %1282 = vmatprep.subr.bf16.mxu0 0
        %1283 = vmatpush1.bf16.msra.mxu0 0
        %1284 = vmatprep.subr.bf16.mxu0 0
        %1285 = vmatpush1.bf16.msra.mxu0 0
        %1286 = vmatprep.subr.bf16.mxu0 0
        %1287 = vmatpush1.bf16.msra.mxu0 0
        %1288 = vmatprep.subr.bf16.mxu0 0
        %1289 = vmatpush1.bf16.msra.mxu0 0
        %1290 = vmatprep.mubr.bf16.mxu0 0
        %1291 = vmatmul.mubr.bf16.gmra.mrb[0].mxu0 %v1249
        %v1292 = vpop.f32.mrb[0].mxu0
        %v1293 = vadd.f32 0.0, %v1292
        %v1294 = vpop.f32.mrb[0].mxu0
        %v1295 = vpop.f32.mrb[0].mxu0
        %v1296 = vadd.f32 0.0, %v1295
        %v1297 = vpop.f32.mrb[0].mxu0
        %1298 = vmatprep.mubr.bf16.mxu0 0
        %1299 = vmatmul.mubr.bf16.gmra.mrb[0].mxu0 %v1252
        %v1300 = vpop.f32.mrb[0].mxu0
        %v1301 = vadd.f32 0.0, %v1300
        %v1302 = vpop.f32.mrb[0].mxu0
        %v1303 = vpop.f32.mrb[0].mxu0
        %v1304 = vpop.f32.mrb[0].mxu0
        %1305 = vdwg.mxu0
        %v1306 = vpack.c.bf16 %v1296, %v1293
        %v1307 = vpack.c.bf16 %v1301, %v1301
        %1308 = vrot.lane.b32.xlu0 %v1132, 120
        %v1309 = vpop.permute.xlu0 %1308
        %1310 = vrot.lane.b32.xlu0 %v1133, 120
        %v1311 = vpop.permute.xlu0 %1310
        %1312 = vrot.lane.b32.xlu0 %v1132, 88
        %v1313 = vpop.permute.xlu0 %1312
        %1314 = vrot.lane.b32.xlu0 %v1133, 88
        %v1315 = vpop.permute.xlu0 %1314
        %v1317 = vsel %vm1140, %v1309, 0
        %v1320 = vsel %vm1140, %v1311, 0
        %v1323 = vsel %vm1140, %v1313, 0
        %v1326 = vsel %vm1140, %v1315, 0
        %1328 = vmatprep.subr.bf16.mxu0 0
        %1329 = vmatpush1.bf16.xpose.msra.mxu0 %v1323
        %1330 = vmatprep.subr.bf16.mxu0 0
        %1331 = vmatpush1.bf16.xpose.msra.mxu0 %v1326
        %1332 = vmatprep.subr.bf16.mxu0 0
        %1333 = vmatpush1.bf16.xpose.msra.mxu0 0
        %1334 = vmatprep.subr.bf16.mxu0 0
        %1335 = vmatpush1.bf16.xpose.msra.mxu0 0
        %1336 = vmatprep.subr.bf16.mxu0 0
        %1337 = vmatpush1.bf16.xpose.msra.mxu0 0
        %1338 = vmatprep.subr.bf16.mxu0 0
        %1339 = vmatpush1.bf16.xpose.msra.mxu0 0
        %1340 = vmatprep.subr.bf16.mxu0 0
        %1341 = vmatpush1.bf16.xpose.msra.mxu0 0
        %1342 = vmatprep.subr.bf16.mxu0 0
        %1343 = vmatpush1.bf16.xpose.msra.mxu0 0
        %1344 = vmatprep.subr.bf16.mxu0 0
        %1345 = vmatpush1.bf16.xpose.msra.mxu0 0
        %1346 = vmatprep.subr.bf16.mxu0 0
        %1347 = vmatpush1.bf16.xpose.msra.mxu0 0
        %1348 = vmatprep.subr.bf16.mxu0 0
        %1349 = vmatpush1.bf16.xpose.msra.mxu0 0
        %1350 = vmatprep.subr.bf16.mxu0 0
        %1351 = vmatpush1.bf16.xpose.msra.mxu0 0
        %1352 = vmatprep.subr.bf16.mxu0 0
        %1353 = vmatpush1.bf16.xpose.msra.mxu0 0
        %1354 = vmatprep.subr.bf16.mxu0 0
        %1355 = vmatpush1.bf16.xpose.msra.mxu0 0
        %1356 = vmatprep.subr.bf16.mxu0 0
        %1357 = vmatpush1.bf16.xpose.msra.mxu0 0
        %1358 = vmatprep.subr.bf16.mxu0 0
        %1359 = vmatpush1.bf16.xpose.msra.mxu0 0
        %1360 = vmatprep.mubr.bf16.mxu0 0
        %1361 = vmatmul.mubr.bf16.gmra.mrb[0].mxu0 %v1317
        %v1362 = vpop.f32.mrb[0].mxu0
        %v1363 = vadd.f32 0.0, %v1362
        %v1364 = vpop.f32.mrb[0].mxu0
        %v1365 = vpop.f32.mrb[0].mxu0
        %v1366 = vadd.f32 0.0, %v1365
        %v1367 = vpop.f32.mrb[0].mxu0
        %1368 = vmatprep.mubr.bf16.mxu0 0
        %1369 = vmatmul.mubr.bf16.gmra.mrb[0].mxu0 %v1320
        %v1370 = vpop.f32.mrb[0].mxu0
        %v1371 = vadd.f32 0.0, %v1370
        %v1372 = vpop.f32.mrb[0].mxu0
        %v1373 = vpop.f32.mrb[0].mxu0
        %v1374 = vpop.f32.mrb[0].mxu0
        %1375 = vdwg.mxu0
        %v1376 = vmul.f32 %v1363, 0.35355338
        %v1377 = vmul.f32 %v1366, 0.35355338
        %v1378 = vmul.f32 %v1371, 0.35355338
        %v1379 = vsel %vm985, %v1376, -1e+30
        %v1380 = vsel %vm986, %v1377, -1e+30
        %v1381 = vsel %vm987, %v1378, -1e+30
        %v1382 = vsel %vm1207, %v1379, -inf
        %1383 = vmax.xlane.f32.xlu0 %v1382
        %v1384 = vpop.xlane.xlu0 %1383
        %v1385 = vsel %vm1207, %v1380, -inf
        %1386 = vmax.xlane.f32.xlu0 %v1385
        %v1387 = vpop.xlane.xlu0 %1386
        %v1388 = vsel %vm1207, %v1381, -inf
        %1389 = vmax.xlane.f32.xlu0 %v1388
        %v1390 = vpop.xlane.xlu0 %1389
        %v1391 = vsub.f32 %v1379, %v1384
        %v1392 = vsub.f32 %v1380, %v1387
        %v1393 = vsub.f32 %v1381, %v1390
        %v1394 = vmul.f32 %v1391, 1.442695
        %v1395 = vpow.pop %v1394
        %v1396 = vmul.f32 %v1392, 1.442695
        %v1397 = vpow.pop %v1396
        %v1398 = vmul.f32 %v1393, 1.442695
        %v1399 = vpow.pop %v1398
        %v1400 = vsel %vm1207, %v1395, 0.0
        %1401 = vadd.xlane.f32.xlu0 %v1400
        %v1402 = vpop.xlane.xlu0 %1401
        %v1403 = vsel %vm1207, %v1397, 0.0
        %1404 = vadd.xlane.f32.xlu0 %v1403
        %v1405 = vpop.xlane.xlu0 %1404
        %v1406 = vsel %vm1207, %v1399, 0.0
        %1407 = vadd.xlane.f32.xlu0 %v1406
        %v1408 = vpop.xlane.xlu0 %1407
        %v1409 = vrcp.pop %v1402
        %v1410 = vmul.f32 %v1395, %v1409
        %v1411 = vrcp.pop %v1405
        %v1412 = vmul.f32 %v1397, %v1411
        %v1413 = vrcp.pop %v1408
        %v1414 = vmul.f32 %v1399, %v1413
        %v1415 = vpack.c.bf16 %v1412, %v1410
        %v1416 = vpack.c.bf16 %v1414, %v1414
        %1417 = vrot.lane.b32.xlu0 %v1132, 56
        %v1418 = vpop.permute.xlu0 %1417
        %1419 = vrot.lane.b32.xlu0 %v1133, 56
        %v1420 = vpop.permute.xlu0 %1419
        %v1423 = vsel %vm1207, %v1415, 0
        %v1426 = vsel %vm1207, %v1416, 0
        %v1429 = vsel %vm1254, %v1420, 0
        %1431 = vmatprep.subr.bf16.mxu0 0
        %1432 = vmatpush1.bf16.msra.mxu0 %v1418
        %1433 = vmatprep.subr.bf16.mxu0 0
        %1434 = vmatpush1.bf16.msra.mxu0 %v1429
        %1435 = vmatprep.subr.bf16.mxu0 0
        %1436 = vmatpush1.bf16.msra.mxu0 0
        %1437 = vmatprep.subr.bf16.mxu0 0
        %1438 = vmatpush1.bf16.msra.mxu0 0
        %1439 = vmatprep.subr.bf16.mxu0 0
        %1440 = vmatpush1.bf16.msra.mxu0 0
        %1441 = vmatprep.subr.bf16.mxu0 0
        %1442 = vmatpush1.bf16.msra.mxu0 0
        %1443 = vmatprep.subr.bf16.mxu0 0
        %1444 = vmatpush1.bf16.msra.mxu0 0
        %1445 = vmatprep.subr.bf16.mxu0 0
        %1446 = vmatpush1.bf16.msra.mxu0 0
        %1447 = vmatprep.subr.bf16.mxu0 0
        %1448 = vmatpush1.bf16.msra.mxu0 0
        %1449 = vmatprep.subr.bf16.mxu0 0
        %1450 = vmatpush1.bf16.msra.mxu0 0
        %1451 = vmatprep.subr.bf16.mxu0 0
        %1452 = vmatpush1.bf16.msra.mxu0 0
        %1453 = vmatprep.subr.bf16.mxu0 0
        %1454 = vmatpush1.bf16.msra.mxu0 0
        %1455 = vmatprep.subr.bf16.mxu0 0
        %1456 = vmatpush1.bf16.msra.mxu0 0
        %1457 = vmatprep.subr.bf16.mxu0 0
        %1458 = vmatpush1.bf16.msra.mxu0 0
        %1459 = vmatprep.subr.bf16.mxu0 0
        %1460 = vmatpush1.bf16.msra.mxu0 0
        %1461 = vmatprep.subr.bf16.mxu0 0
        %1462 = vmatpush1.bf16.msra.mxu0 0
        %1463 = vmatprep.mubr.bf16.mxu0 0
        %1464 = vmatmul.mubr.bf16.gmra.mrb[0].mxu0 %v1423
        %v1465 = vpop.f32.mrb[0].mxu0
        %v1466 = vadd.f32 0.0, %v1465
        %v1467 = vpop.f32.mrb[0].mxu0
        %v1468 = vpop.f32.mrb[0].mxu0
        %v1469 = vadd.f32 0.0, %v1468
        %v1470 = vpop.f32.mrb[0].mxu0
        %1471 = vmatprep.mubr.bf16.mxu0 0
        %1472 = vmatmul.mubr.bf16.gmra.mrb[0].mxu0 %v1426
        %v1473 = vpop.f32.mrb[0].mxu0
        %v1474 = vadd.f32 0.0, %v1473
        %v1475 = vpop.f32.mrb[0].mxu0
        %v1476 = vpop.f32.mrb[0].mxu0
        %v1477 = vpop.f32.mrb[0].mxu0
        %1478 = vdwg.mxu0
        %v1479 = vpack.c.bf16 %v1469, %v1466
        %v1480 = vpack.c.bf16 %v1474, %v1474
        %v1482 = vsel %vm1140, %v1479, 0
        %v1485 = vsel %vm1140, %v1480, 0
        %v1488 = vsel %vm1254, %v1129, 0
        %1490 = vmatprep.subr.bf16.mxu0 0
        %1491 = vmatpush1.bf16.msra.mxu0 %v1488
        %1492 = vmatprep.subr.bf16.mxu0 0
        %1493 = vmatpush1.bf16.msra.mxu0 0
        %1494 = vmatprep.subr.bf16.mxu0 0
        %1495 = vmatpush1.bf16.msra.mxu0 0
        %1496 = vmatprep.subr.bf16.mxu0 0
        %1497 = vmatpush1.bf16.msra.mxu0 0
        %1498 = vmatprep.subr.bf16.mxu0 0
        %1499 = vmatpush1.bf16.msra.mxu0 0
        %1500 = vmatprep.subr.bf16.mxu0 0
        %1501 = vmatpush1.bf16.msra.mxu0 0
        %1502 = vmatprep.subr.bf16.mxu0 0
        %1503 = vmatpush1.bf16.msra.mxu0 0
        %1504 = vmatprep.subr.bf16.mxu0 0
        %1505 = vmatpush1.bf16.msra.mxu0 0
        %1506 = vmatprep.subr.bf16.mxu0 0
        %1507 = vmatpush1.bf16.msra.mxu0 0
        %1508 = vmatprep.subr.bf16.mxu0 0
        %1509 = vmatpush1.bf16.msra.mxu0 0
        %1510 = vmatprep.subr.bf16.mxu0 0
        %1511 = vmatpush1.bf16.msra.mxu0 0
        %1512 = vmatprep.subr.bf16.mxu0 0
        %1513 = vmatpush1.bf16.msra.mxu0 0
        %1514 = vmatprep.subr.bf16.mxu0 0
        %1515 = vmatpush1.bf16.msra.mxu0 0
        %1516 = vmatprep.subr.bf16.mxu0 0
        %1517 = vmatpush1.bf16.msra.mxu0 0
        %1518 = vmatprep.subr.bf16.mxu0 0
        %1519 = vmatpush1.bf16.msra.mxu0 0
        %1520 = vmatprep.subr.bf16.mxu0 0
        %1521 = vmatpush1.bf16.msra.mxu0 0
        %1522 = vmatprep.mubr.bf16.mxu0 0
        %1523 = vmatmul.mubr.bf16.gmra.mrb[0].mxu0 %v1482
        %v1524 = vpop.f32.mrb[0].mxu0
        %v1525 = vadd.f32 0.0, %v1524
        %v1526 = vpop.f32.mrb[0].mxu0
        %v1527 = vpop.f32.mrb[0].mxu0
        %v1528 = vadd.f32 0.0, %v1527
        %v1529 = vpop.f32.mrb[0].mxu0
        %1530 = vmatprep.mubr.bf16.mxu0 0
        %1531 = vmatmul.mubr.bf16.gmra.mrb[0].mxu0 %v1485
        %v1532 = vpop.f32.mrb[0].mxu0
        %v1533 = vadd.f32 0.0, %v1532
        %v1534 = vpop.f32.mrb[0].mxu0
        %v1535 = vpop.f32.mrb[0].mxu0
        %v1536 = vpop.f32.mrb[0].mxu0
        %1537 = vdwg.mxu0
        %v1539 = vsel %vm1140, %v1306, 0
        %v1542 = vsel %vm1140, %v1307, 0
        %v1545 = vsel %vm1254, %v1128, 0
        %1547 = vmatprep.subr.bf16.mxu0 0
        %1548 = vmatpush1.bf16.msra.mxu0 %v1545
        %1549 = vmatprep.subr.bf16.mxu0 0
        %1550 = vmatpush1.bf16.msra.mxu0 0
        %1551 = vmatprep.subr.bf16.mxu0 0
        %1552 = vmatpush1.bf16.msra.mxu0 0
        %1553 = vmatprep.subr.bf16.mxu0 0
        %1554 = vmatpush1.bf16.msra.mxu0 0
        %1555 = vmatprep.subr.bf16.mxu0 0
        %1556 = vmatpush1.bf16.msra.mxu0 0
        %1557 = vmatprep.subr.bf16.mxu0 0
        %1558 = vmatpush1.bf16.msra.mxu0 0
        %1559 = vmatprep.subr.bf16.mxu0 0
        %1560 = vmatpush1.bf16.msra.mxu0 0
        %1561 = vmatprep.subr.bf16.mxu0 0
        %1562 = vmatpush1.bf16.msra.mxu0 0
        %1563 = vmatprep.subr.bf16.mxu0 0
        %1564 = vmatpush1.bf16.msra.mxu0 0
        %1565 = vmatprep.subr.bf16.mxu0 0
        %1566 = vmatpush1.bf16.msra.mxu0 0
        %1567 = vmatprep.subr.bf16.mxu0 0
        %1568 = vmatpush1.bf16.msra.mxu0 0
        %1569 = vmatprep.subr.bf16.mxu0 0
        %1570 = vmatpush1.bf16.msra.mxu0 0
        %1571 = vmatprep.subr.bf16.mxu0 0
        %1572 = vmatpush1.bf16.msra.mxu0 0
        %1573 = vmatprep.subr.bf16.mxu0 0
        %1574 = vmatpush1.bf16.msra.mxu0 0
        %1575 = vmatprep.subr.bf16.mxu0 0
        %1576 = vmatpush1.bf16.msra.mxu0 0
        %1577 = vmatprep.subr.bf16.mxu0 0
        %1578 = vmatpush1.bf16.msra.mxu0 0
        %1579 = vmatprep.mubr.bf16.mxu0 0
        %1580 = vmatmul.mubr.bf16.gmra.mrb[0].mxu0 %v1539
        %v1581 = vpop.f32.mrb[0].mxu0
        %v1582 = vadd.f32 %v1525, %v1581
        %v1583 = vpop.f32.mrb[0].mxu0
        %v1584 = vpop.f32.mrb[0].mxu0
        %v1585 = vadd.f32 %v1528, %v1584
        %v1586 = vpop.f32.mrb[0].mxu0
        %1587 = vmatprep.mubr.bf16.mxu0 0
        %1588 = vmatmul.mubr.bf16.gmra.mrb[0].mxu0 %v1542
        %v1589 = vpop.f32.mrb[0].mxu0
        %v1590 = vadd.f32 %v1533, %v1589
        %v1591 = vpop.f32.mrb[0].mxu0
        %v1592 = vpop.f32.mrb[0].mxu0
        %v1593 = vpop.f32.mrb[0].mxu0
        %1594 = vdwg.mxu0
        %1595 = vrot.lane.b32.xlu0 %v1132, 112
        %v1596 = vpop.permute.xlu0 %1595
        %1597 = vrot.lane.b32.xlu0 %v1133, 112
        %v1598 = vpop.permute.xlu0 %1597
        %1599 = vrot.lane.b32.xlu0 %v1132, 80
        %v1600 = vpop.permute.xlu0 %1599
        %1601 = vrot.lane.b32.xlu0 %v1133, 80
        %v1602 = vpop.permute.xlu0 %1601
        %v1604 = vsel %vm1140, %v1596, 0
        %v1607 = vsel %vm1140, %v1598, 0
        %v1610 = vsel %vm1140, %v1600, 0
        %v1613 = vsel %vm1140, %v1602, 0
        %1615 = vmatprep.subr.bf16.mxu0 0
        %1616 = vmatpush1.bf16.xpose.msra.mxu0 %v1610
        %1617 = vmatprep.subr.bf16.mxu0 0
        %1618 = vmatpush1.bf16.xpose.msra.mxu0 %v1613
        %1619 = vmatprep.subr.bf16.mxu0 0
        %1620 = vmatpush1.bf16.xpose.msra.mxu0 0
        %1621 = vmatprep.subr.bf16.mxu0 0
        %1622 = vmatpush1.bf16.xpose.msra.mxu0 0
        %1623 = vmatprep.subr.bf16.mxu0 0
        %1624 = vmatpush1.bf16.xpose.msra.mxu0 0
        %1625 = vmatprep.subr.bf16.mxu0 0
        %1626 = vmatpush1.bf16.xpose.msra.mxu0 0
        %1627 = vmatprep.subr.bf16.mxu0 0
        %1628 = vmatpush1.bf16.xpose.msra.mxu0 0
        %1629 = vmatprep.subr.bf16.mxu0 0
        %1630 = vmatpush1.bf16.xpose.msra.mxu0 0
        %1631 = vmatprep.subr.bf16.mxu0 0
        %1632 = vmatpush1.bf16.xpose.msra.mxu0 0
        %1633 = vmatprep.subr.bf16.mxu0 0
        %1634 = vmatpush1.bf16.xpose.msra.mxu0 0
        %1635 = vmatprep.subr.bf16.mxu0 0
        %1636 = vmatpush1.bf16.xpose.msra.mxu0 0
        %1637 = vmatprep.subr.bf16.mxu0 0
        %1638 = vmatpush1.bf16.xpose.msra.mxu0 0
        %1639 = vmatprep.subr.bf16.mxu0 0
        %1640 = vmatpush1.bf16.xpose.msra.mxu0 0
        %1641 = vmatprep.subr.bf16.mxu0 0
        %1642 = vmatpush1.bf16.xpose.msra.mxu0 0
        %1643 = vmatprep.subr.bf16.mxu0 0
        %1644 = vmatpush1.bf16.xpose.msra.mxu0 0
        %1645 = vmatprep.subr.bf16.mxu0 0
        %1646 = vmatpush1.bf16.xpose.msra.mxu0 0
        %1647 = vmatprep.mubr.bf16.mxu0 0
        %1648 = vmatmul.mubr.bf16.gmra.mrb[0].mxu0 %v1604
        %v1649 = vpop.f32.mrb[0].mxu0
        %v1650 = vadd.f32 0.0, %v1649
        %v1651 = vpop.f32.mrb[0].mxu0
        %v1652 = vpop.f32.mrb[0].mxu0
        %v1653 = vadd.f32 0.0, %v1652
        %v1654 = vpop.f32.mrb[0].mxu0
        %1655 = vmatprep.mubr.bf16.mxu0 0
        %1656 = vmatmul.mubr.bf16.gmra.mrb[0].mxu0 %v1607
        %v1657 = vpop.f32.mrb[0].mxu0
        %v1658 = vadd.f32 0.0, %v1657
        %v1659 = vpop.f32.mrb[0].mxu0
        %v1660 = vpop.f32.mrb[0].mxu0
        %v1661 = vpop.f32.mrb[0].mxu0
        %1662 = vdwg.mxu0
        %v1663 = vmul.f32 %v1650, 0.35355338
        %v1664 = vmul.f32 %v1653, 0.35355338
        %v1665 = vmul.f32 %v1658, 0.35355338
        %v1666 = vsel %vm985, %v1663, -1e+30
        %v1667 = vsel %vm986, %v1664, -1e+30
        %v1668 = vsel %vm987, %v1665, -1e+30
        %v1669 = vsel %vm1207, %v1666, -inf
        %1670 = vmax.xlane.f32.xlu0 %v1669
        %v1671 = vpop.xlane.xlu0 %1670
        %v1672 = vsel %vm1207, %v1667, -inf
        %1673 = vmax.xlane.f32.xlu0 %v1672
        %v1674 = vpop.xlane.xlu0 %1673
        %v1675 = vsel %vm1207, %v1668, -inf
        %1676 = vmax.xlane.f32.xlu0 %v1675
        %v1677 = vpop.xlane.xlu0 %1676
        %v1678 = vsub.f32 %v1666, %v1671
        %v1679 = vsub.f32 %v1667, %v1674
        %v1680 = vsub.f32 %v1668, %v1677
        %v1681 = vmul.f32 %v1678, 1.442695
        %v1682 = vpow.pop %v1681
        %v1683 = vmul.f32 %v1679, 1.442695
        %v1684 = vpow.pop %v1683
        %v1685 = vmul.f32 %v1680, 1.442695
        %v1686 = vpow.pop %v1685
        %v1687 = vsel %vm1207, %v1682, 0.0
        %1688 = vadd.xlane.f32.xlu0 %v1687
        %v1689 = vpop.xlane.xlu0 %1688
        %v1690 = vsel %vm1207, %v1684, 0.0
        %1691 = vadd.xlane.f32.xlu0 %v1690
        %v1692 = vpop.xlane.xlu0 %1691
        %v1693 = vsel %vm1207, %v1686, 0.0
        %1694 = vadd.xlane.f32.xlu0 %v1693
        %v1695 = vpop.xlane.xlu0 %1694
        %v1696 = vrcp.pop %v1689
        %v1697 = vmul.f32 %v1682, %v1696
        %v1698 = vrcp.pop %v1692
        %v1699 = vmul.f32 %v1684, %v1698
        %v1700 = vrcp.pop %v1695
        %v1701 = vmul.f32 %v1686, %v1700
        %v1702 = vpack.c.bf16 %v1699, %v1697
        %v1703 = vpack.c.bf16 %v1701, %v1701
        %1704 = vrot.lane.b32.xlu0 %v1132, 48
        %v1705 = vpop.permute.xlu0 %1704
        %1706 = vrot.lane.b32.xlu0 %v1133, 48
        %v1707 = vpop.permute.xlu0 %1706
        %v1710 = vsel %vm1207, %v1702, 0
        %v1713 = vsel %vm1207, %v1703, 0
        %v1716 = vsel %vm1254, %v1707, 0
        %1718 = vmatprep.subr.bf16.mxu0 0
        %1719 = vmatpush1.bf16.msra.mxu0 %v1705
        %1720 = vmatprep.subr.bf16.mxu0 0
        %1721 = vmatpush1.bf16.msra.mxu0 %v1716
        %1722 = vmatprep.subr.bf16.mxu0 0
        %1723 = vmatpush1.bf16.msra.mxu0 0
        %1724 = vmatprep.subr.bf16.mxu0 0
        %1725 = vmatpush1.bf16.msra.mxu0 0
        %1726 = vmatprep.subr.bf16.mxu0 0
        %1727 = vmatpush1.bf16.msra.mxu0 0
        %1728 = vmatprep.subr.bf16.mxu0 0
        %1729 = vmatpush1.bf16.msra.mxu0 0
        %1730 = vmatprep.subr.bf16.mxu0 0
        %1731 = vmatpush1.bf16.msra.mxu0 0
        %1732 = vmatprep.subr.bf16.mxu0 0
        %1733 = vmatpush1.bf16.msra.mxu0 0
        %1734 = vmatprep.subr.bf16.mxu0 0
        %1735 = vmatpush1.bf16.msra.mxu0 0
        %1736 = vmatprep.subr.bf16.mxu0 0
        %1737 = vmatpush1.bf16.msra.mxu0 0
        %1738 = vmatprep.subr.bf16.mxu0 0
        %1739 = vmatpush1.bf16.msra.mxu0 0
        %1740 = vmatprep.subr.bf16.mxu0 0
        %1741 = vmatpush1.bf16.msra.mxu0 0
        %1742 = vmatprep.subr.bf16.mxu0 0
        %1743 = vmatpush1.bf16.msra.mxu0 0
        %1744 = vmatprep.subr.bf16.mxu0 0
        %1745 = vmatpush1.bf16.msra.mxu0 0
        %1746 = vmatprep.subr.bf16.mxu0 0
        %1747 = vmatpush1.bf16.msra.mxu0 0
        %1748 = vmatprep.subr.bf16.mxu0 0
        %1749 = vmatpush1.bf16.msra.mxu0 0
        %1750 = vmatprep.mubr.bf16.mxu0 0
        %1751 = vmatmul.mubr.bf16.gmra.mrb[0].mxu0 %v1710
        %v1752 = vpop.f32.mrb[0].mxu0
        %v1753 = vadd.f32 0.0, %v1752
        %v1754 = vpop.f32.mrb[0].mxu0
        %v1755 = vpop.f32.mrb[0].mxu0
        %v1756 = vadd.f32 0.0, %v1755
        %v1757 = vpop.f32.mrb[0].mxu0
        %1758 = vmatprep.mubr.bf16.mxu0 0
        %1759 = vmatmul.mubr.bf16.gmra.mrb[0].mxu0 %v1713
        %v1760 = vpop.f32.mrb[0].mxu0
        %v1761 = vadd.f32 0.0, %v1760
        %v1762 = vpop.f32.mrb[0].mxu0
        %v1763 = vpop.f32.mrb[0].mxu0
        %v1764 = vpop.f32.mrb[0].mxu0
        %1765 = vdwg.mxu0
        %v1766 = vpack.c.bf16 %v1756, %v1753
        %v1767 = vpack.c.bf16 %v1761, %v1761
        %v1769 = vsel %vm1140, %v1766, 0
        %v1772 = vsel %vm1140, %v1767, 0
        %v1775 = vsel %vm1254, %v1130, 0
        %1777 = vmatprep.subr.bf16.mxu0 0
        %1778 = vmatpush1.bf16.msra.mxu0 %v1775
        %1779 = vmatprep.subr.bf16.mxu0 0
        %1780 = vmatpush1.bf16.msra.mxu0 0
        %1781 = vmatprep.subr.bf16.mxu0 0
        %1782 = vmatpush1.bf16.msra.mxu0 0
        %1783 = vmatprep.subr.bf16.mxu0 0
        %1784 = vmatpush1.bf16.msra.mxu0 0
        %1785 = vmatprep.subr.bf16.mxu0 0
        %1786 = vmatpush1.bf16.msra.mxu0 0
        %1787 = vmatprep.subr.bf16.mxu0 0
        %1788 = vmatpush1.bf16.msra.mxu0 0
        %1789 = vmatprep.subr.bf16.mxu0 0
        %1790 = vmatpush1.bf16.msra.mxu0 0
        %1791 = vmatprep.subr.bf16.mxu0 0
        %1792 = vmatpush1.bf16.msra.mxu0 0
        %1793 = vmatprep.subr.bf16.mxu0 0
        %1794 = vmatpush1.bf16.msra.mxu0 0
        %1795 = vmatprep.subr.bf16.mxu0 0
        %1796 = vmatpush1.bf16.msra.mxu0 0
        %1797 = vmatprep.subr.bf16.mxu0 0
        %1798 = vmatpush1.bf16.msra.mxu0 0
        %1799 = vmatprep.subr.bf16.mxu0 0
        %1800 = vmatpush1.bf16.msra.mxu0 0
        %1801 = vmatprep.subr.bf16.mxu0 0
        %1802 = vmatpush1.bf16.msra.mxu0 0
        %1803 = vmatprep.subr.bf16.mxu0 0
        %1804 = vmatpush1.bf16.msra.mxu0 0
        %1805 = vmatprep.subr.bf16.mxu0 0
        %1806 = vmatpush1.bf16.msra.mxu0 0
        %1807 = vmatprep.subr.bf16.mxu0 0
        %1808 = vmatpush1.bf16.msra.mxu0 0
        %1809 = vmatprep.mubr.bf16.mxu0 0
        %1810 = vmatmul.mubr.bf16.gmra.mrb[0].mxu0 %v1769
        %v1811 = vpop.f32.mrb[0].mxu0
        %v1812 = vadd.f32 0.0, %v1811
        %v1813 = vpop.f32.mrb[0].mxu0
        %v1814 = vpop.f32.mrb[0].mxu0
        %v1815 = vadd.f32 0.0, %v1814
        %v1816 = vpop.f32.mrb[0].mxu0
        %1817 = vmatprep.mubr.bf16.mxu0 0
        %1818 = vmatmul.mubr.bf16.gmra.mrb[0].mxu0 %v1772
        %v1819 = vpop.f32.mrb[0].mxu0
        %v1820 = vadd.f32 0.0, %v1819
        %v1821 = vpop.f32.mrb[0].mxu0
        %v1822 = vpop.f32.mrb[0].mxu0
        %v1823 = vpop.f32.mrb[0].mxu0
        %1824 = vdwg.mxu0
        %v1825 = vadd.f32 %v1582, %v1812
        %v1826 = vadd.f32 %v1585, %v1815
        %v1827 = vadd.f32 %v1590, %v1820
        %1828 = vrot.lane.b32.xlu0 %v1132, 104
        %v1829 = vpop.permute.xlu0 %1828
        %1830 = vrot.lane.b32.xlu0 %v1133, 104
        %v1831 = vpop.permute.xlu0 %1830
        %1832 = vrot.lane.b32.xlu0 %v1132, 72
        %v1833 = vpop.permute.xlu0 %1832
        %1834 = vrot.lane.b32.xlu0 %v1133, 72
        %v1835 = vpop.permute.xlu0 %1834
        %v1837 = vsel %vm1140, %v1829, 0
        %v1840 = vsel %vm1140, %v1831, 0
        %v1843 = vsel %vm1140, %v1833, 0
        %v1846 = vsel %vm1140, %v1835, 0
        %1848 = vmatprep.subr.bf16.mxu0 0
        %1849 = vmatpush1.bf16.xpose.msra.mxu0 %v1843
        %1850 = vmatprep.subr.bf16.mxu0 0
        %1851 = vmatpush1.bf16.xpose.msra.mxu0 %v1846
        %1852 = vmatprep.subr.bf16.mxu0 0
        %1853 = vmatpush1.bf16.xpose.msra.mxu0 0
        %1854 = vmatprep.subr.bf16.mxu0 0
        %1855 = vmatpush1.bf16.xpose.msra.mxu0 0
        %1856 = vmatprep.subr.bf16.mxu0 0
        %1857 = vmatpush1.bf16.xpose.msra.mxu0 0
        %1858 = vmatprep.subr.bf16.mxu0 0
        %1859 = vmatpush1.bf16.xpose.msra.mxu0 0
        %1860 = vmatprep.subr.bf16.mxu0 0
        %1861 = vmatpush1.bf16.xpose.msra.mxu0 0
        %1862 = vmatprep.subr.bf16.mxu0 0
        %1863 = vmatpush1.bf16.xpose.msra.mxu0 0
        %1864 = vmatprep.subr.bf16.mxu0 0
        %1865 = vmatpush1.bf16.xpose.msra.mxu0 0
        %1866 = vmatprep.subr.bf16.mxu0 0
        %1867 = vmatpush1.bf16.xpose.msra.mxu0 0
        %1868 = vmatprep.subr.bf16.mxu0 0
        %1869 = vmatpush1.bf16.xpose.msra.mxu0 0
        %1870 = vmatprep.subr.bf16.mxu0 0
        %1871 = vmatpush1.bf16.xpose.msra.mxu0 0
        %1872 = vmatprep.subr.bf16.mxu0 0
        %1873 = vmatpush1.bf16.xpose.msra.mxu0 0
        %1874 = vmatprep.subr.bf16.mxu0 0
        %1875 = vmatpush1.bf16.xpose.msra.mxu0 0
        %1876 = vmatprep.subr.bf16.mxu0 0
        %1877 = vmatpush1.bf16.xpose.msra.mxu0 0
        %1878 = vmatprep.subr.bf16.mxu0 0
        %1879 = vmatpush1.bf16.xpose.msra.mxu0 0
        %1880 = vmatprep.mubr.bf16.mxu0 0
        %1881 = vmatmul.mubr.bf16.gmra.mrb[0].mxu0 %v1837
        %v1882 = vpop.f32.mrb[0].mxu0
        %v1883 = vadd.f32 0.0, %v1882
        %v1884 = vpop.f32.mrb[0].mxu0
        %v1885 = vpop.f32.mrb[0].mxu0
        %v1886 = vadd.f32 0.0, %v1885
        %v1887 = vpop.f32.mrb[0].mxu0
        %1888 = vmatprep.mubr.bf16.mxu0 0
        %1889 = vmatmul.mubr.bf16.gmra.mrb[0].mxu0 %v1840
        %v1890 = vpop.f32.mrb[0].mxu0
        %v1891 = vadd.f32 0.0, %v1890
        %v1892 = vpop.f32.mrb[0].mxu0
        %v1893 = vpop.f32.mrb[0].mxu0
        %v1894 = vpop.f32.mrb[0].mxu0
        %1895 = vdwg.mxu0
        %v1896 = vmul.f32 %v1883, 0.35355338
        %v1897 = vmul.f32 %v1886, 0.35355338
        %v1898 = vmul.f32 %v1891, 0.35355338
        %v1899 = vsel %vm985, %v1896, -1e+30
        %v1900 = vsel %vm986, %v1897, -1e+30
        %v1901 = vsel %vm987, %v1898, -1e+30
        %v1902 = vsel %vm1207, %v1899, -inf
        %1903 = vmax.xlane.f32.xlu0 %v1902
        %v1904 = vpop.xlane.xlu0 %1903
        %v1905 = vsel %vm1207, %v1900, -inf
        %1906 = vmax.xlane.f32.xlu0 %v1905
        %v1907 = vpop.xlane.xlu0 %1906
        %v1908 = vsel %vm1207, %v1901, -inf
        %1909 = vmax.xlane.f32.xlu0 %v1908
        %v1910 = vpop.xlane.xlu0 %1909
        %v1911 = vsub.f32 %v1899, %v1904
        %v1912 = vsub.f32 %v1900, %v1907
        %v1913 = vsub.f32 %v1901, %v1910
        %v1914 = vmul.f32 %v1911, 1.442695
        %v1915 = vpow.pop %v1914
        %v1916 = vmul.f32 %v1912, 1.442695
        %v1917 = vpow.pop %v1916
        %v1918 = vmul.f32 %v1913, 1.442695
        %v1919 = vpow.pop %v1918
        %v1920 = vsel %vm1207, %v1915, 0.0
        %1921 = vadd.xlane.f32.xlu0 %v1920
        %v1922 = vpop.xlane.xlu0 %1921
        %v1923 = vsel %vm1207, %v1917, 0.0
        %1924 = vadd.xlane.f32.xlu0 %v1923
        %v1925 = vpop.xlane.xlu0 %1924
        %v1926 = vsel %vm1207, %v1919, 0.0
        %1927 = vadd.xlane.f32.xlu0 %v1926
        %v1928 = vpop.xlane.xlu0 %1927
        %v1929 = vrcp.pop %v1922
        %v1930 = vmul.f32 %v1915, %v1929
        %v1931 = vrcp.pop %v1925
        %v1932 = vmul.f32 %v1917, %v1931
        %v1933 = vrcp.pop %v1928
        %v1934 = vmul.f32 %v1919, %v1933
        %v1935 = vpack.c.bf16 %v1932, %v1930
        %v1936 = vpack.c.bf16 %v1934, %v1934
        %1937 = vrot.lane.b32.xlu0 %v1132, 40
        %v1938 = vpop.permute.xlu0 %1937
        %1939 = vrot.lane.b32.xlu0 %v1133, 40
        %v1940 = vpop.permute.xlu0 %1939
        %v1943 = vsel %vm1207, %v1935, 0
        %v1946 = vsel %vm1207, %v1936, 0
        %v1949 = vsel %vm1254, %v1940, 0
        %1951 = vmatprep.subr.bf16.mxu0 0
        %1952 = vmatpush1.bf16.msra.mxu0 %v1938
        %1953 = vmatprep.subr.bf16.mxu0 0
        %1954 = vmatpush1.bf16.msra.mxu0 %v1949
        %1955 = vmatprep.subr.bf16.mxu0 0
        %1956 = vmatpush1.bf16.msra.mxu0 0
        %1957 = vmatprep.subr.bf16.mxu0 0
        %1958 = vmatpush1.bf16.msra.mxu0 0
        %1959 = vmatprep.subr.bf16.mxu0 0
        %1960 = vmatpush1.bf16.msra.mxu0 0
        %1961 = vmatprep.subr.bf16.mxu0 0
        %1962 = vmatpush1.bf16.msra.mxu0 0
        %1963 = vmatprep.subr.bf16.mxu0 0
        %1964 = vmatpush1.bf16.msra.mxu0 0
        %1965 = vmatprep.subr.bf16.mxu0 0
        %1966 = vmatpush1.bf16.msra.mxu0 0
        %1967 = vmatprep.subr.bf16.mxu0 0
        %1968 = vmatpush1.bf16.msra.mxu0 0
        %1969 = vmatprep.subr.bf16.mxu0 0
        %1970 = vmatpush1.bf16.msra.mxu0 0
        %1971 = vmatprep.subr.bf16.mxu0 0
        %1972 = vmatpush1.bf16.msra.mxu0 0
        %1973 = vmatprep.subr.bf16.mxu0 0
        %1974 = vmatpush1.bf16.msra.mxu0 0
        %1975 = vmatprep.subr.bf16.mxu0 0
        %1976 = vmatpush1.bf16.msra.mxu0 0
        %1977 = vmatprep.subr.bf16.mxu0 0
        %1978 = vmatpush1.bf16.msra.mxu0 0
        %1979 = vmatprep.subr.bf16.mxu0 0
        %1980 = vmatpush1.bf16.msra.mxu0 0
        %1981 = vmatprep.subr.bf16.mxu0 0
        %1982 = vmatpush1.bf16.msra.mxu0 0
        %1983 = vmatprep.mubr.bf16.mxu0 0
        %1984 = vmatmul.mubr.bf16.gmra.mrb[0].mxu0 %v1943
        %v1985 = vpop.f32.mrb[0].mxu0
        %v1986 = vadd.f32 0.0, %v1985
        %v1987 = vpop.f32.mrb[0].mxu0
        %v1988 = vpop.f32.mrb[0].mxu0
        %v1989 = vadd.f32 0.0, %v1988
        %v1990 = vpop.f32.mrb[0].mxu0
        %1991 = vmatprep.mubr.bf16.mxu0 0
        %1992 = vmatmul.mubr.bf16.gmra.mrb[0].mxu0 %v1946
        %v1993 = vpop.f32.mrb[0].mxu0
        %v1994 = vadd.f32 0.0, %v1993
        %v1995 = vpop.f32.mrb[0].mxu0
        %v1996 = vpop.f32.mrb[0].mxu0
        %v1997 = vpop.f32.mrb[0].mxu0
        %1998 = vdwg.mxu0
        %v1999 = vpack.c.bf16 %v1989, %v1986
        %v2000 = vpack.c.bf16 %v1994, %v1994
        %v2002 = vsel %vm1140, %v1999, 0
        %v2005 = vsel %vm1140, %v2000, 0
        %v2008 = vsel %vm1254, %v1131, 0
        %2010 = vmatprep.subr.bf16.mxu0 0
        %2011 = vmatpush1.bf16.msra.mxu0 %v2008
        %2012 = vmatprep.subr.bf16.mxu0 0
        %2013 = vmatpush1.bf16.msra.mxu0 0
        %2014 = vmatprep.subr.bf16.mxu0 0
        %2015 = vmatpush1.bf16.msra.mxu0 0
        %2016 = vmatprep.subr.bf16.mxu0 0
        %2017 = vmatpush1.bf16.msra.mxu0 0
        %2018 = vmatprep.subr.bf16.mxu0 0
        %2019 = vmatpush1.bf16.msra.mxu0 0
        %2020 = vmatprep.subr.bf16.mxu0 0
        %2021 = vmatpush1.bf16.msra.mxu0 0
        %2022 = vmatprep.subr.bf16.mxu0 0
        %2023 = vmatpush1.bf16.msra.mxu0 0
        %2024 = vmatprep.subr.bf16.mxu0 0
        %2025 = vmatpush1.bf16.msra.mxu0 0
        %2026 = vmatprep.subr.bf16.mxu0 0
        %2027 = vmatpush1.bf16.msra.mxu0 0
        %2028 = vmatprep.subr.bf16.mxu0 0
        %2029 = vmatpush1.bf16.msra.mxu0 0
        %2030 = vmatprep.subr.bf16.mxu0 0
        %2031 = vmatpush1.bf16.msra.mxu0 0
        %2032 = vmatprep.subr.bf16.mxu0 0
        %2033 = vmatpush1.bf16.msra.mxu0 0
        %2034 = vmatprep.subr.bf16.mxu0 0
        %2035 = vmatpush1.bf16.msra.mxu0 0
        %2036 = vmatprep.subr.bf16.mxu0 0
        %2037 = vmatpush1.bf16.msra.mxu0 0
        %2038 = vmatprep.subr.bf16.mxu0 0
        %2039 = vmatpush1.bf16.msra.mxu0 0
        %2040 = vmatprep.subr.bf16.mxu0 0
        %2041 = vmatpush1.bf16.msra.mxu0 0
        %2042 = vmatprep.mubr.bf16.mxu0 0
        %2043 = vmatmul.mubr.bf16.gmra.mrb[0].mxu0 %v2002
        %v2044 = vpop.f32.mrb[0].mxu0
        %v2045 = vadd.f32 0.0, %v2044
        %v2046 = vpop.f32.mrb[0].mxu0
        %v2047 = vpop.f32.mrb[0].mxu0
        %v2048 = vadd.f32 0.0, %v2047
        %v2049 = vpop.f32.mrb[0].mxu0
        %2050 = vmatprep.mubr.bf16.mxu0 0
        %2051 = vmatmul.mubr.bf16.gmra.mrb[0].mxu0 %v2005
        %v2052 = vpop.f32.mrb[0].mxu0
        %v2053 = vadd.f32 0.0, %v2052
        %v2054 = vpop.f32.mrb[0].mxu0
        %v2055 = vpop.f32.mrb[0].mxu0
        %v2056 = vpop.f32.mrb[0].mxu0
        %2057 = vdwg.mxu0
        %v2058 = vadd.f32 %v1825, %v2045
        %v2059 = vadd.f32 %v1826, %v2048
        %v2060 = vadd.f32 %v1827, %v2053
        %v2061 = vadd.f32 %v976, %v2058
        %v2062 = vadd.f32 %v977, %v2059
        %v2063 = vadd.f32 %v978, %v2060
        %v2064 = vld [vmem:[%s807] sm:$0x1]
        %v2066 = vlaneseq
        %v2067 = vshrl.u32 %v2066, 7
        %v2068 = vsub.s32 0, %v2067
        %v2069 = vrot.slane %v2064, %v2068
        %v2071 = vadd.f32 %v2061, %v2069
        %v2072 = vadd.f32 %v2062, %v2069
        %v2073 = vadd.f32 %v2063, %v2069
        %v2074 = vld [vmem:[%s815] sm:$0x1]
        %v2075 = vld [vmem:[%s823] sm:$0x1]
        %v2076 = vsel %vm990, %v2071, 0.0
        %2077 = vadd.xlane.f32.xlu0 %v2076
        %v2078 = vpop.xlane.xlu0 %2077
        %v2079 = vsel %vm990, %v2072, 0.0
        %2080 = vadd.xlane.f32.xlu0 %v2079
        %v2081 = vpop.xlane.xlu0 %2080
        %v2082 = vsel %vm990, %v2073, 0.0
        %2083 = vadd.xlane.f32.xlu0 %v2082
        %v2084 = vpop.xlane.xlu0 %2083
        %v2085 = vmul.f32 %v2078, %v1000
        %v2086 = vmul.f32 %v2081, %v1000
        %v2087 = vmul.f32 %v2084, %v1000
        %v2088 = vsub.f32 %v2071, %v2085
        %v2089 = vsub.f32 %v2072, %v2086
        %v2090 = vsub.f32 %v2073, %v2087
        %v2091 = vmul.f32 %v2088, %v2088
        %v2092 = vmul.f32 %v2089, %v2089
        %v2093 = vmul.f32 %v2090, %v2090
        %v2094 = vsel %vm990, %v2091, 0.0
        %2095 = vadd.xlane.f32.xlu0 %v2094
        %v2096 = vpop.xlane.xlu0 %2095
        %v2097 = vsel %vm990, %v2092, 0.0
        %2098 = vadd.xlane.f32.xlu0 %v2097
        %v2099 = vpop.xlane.xlu0 %2098
        %v2100 = vsel %vm990, %v2093, 0.0
        %2101 = vadd.xlane.f32.xlu0 %v2100
        %v2102 = vpop.xlane.xlu0 %2101
        %v2103 = vmul.f32 %v2096, %v1000
        %v2104 = vmul.f32 %v2099, %v1000
        %v2105 = vmul.f32 %v2102, %v1000
        %v2106 = vadd.f32 %v2103, 1e-05
        %v2107 = vadd.f32 %v2104, 1e-05
        %v2108 = vadd.f32 %v2105, 1e-05
        %v2109 = vrsqrt.pop %v2106
        %v2110 = vrsqrt.pop %v2107
        %v2111 = vrsqrt.pop %v2108
        %v2112 = vmul.f32 %v2088, %v2109
        %v2113 = vmul.f32 %v2089, %v2110
        %v2114 = vmul.f32 %v2090, %v2111
        %v2116 = vlaneseq
        %v2117 = vshrl.u32 %v2116, 7
        %v2118 = vsub.s32 0, %v2117
        %v2119 = vrot.slane %v2074, %v2118
        %v2121 = vmul.f32 %v2112, %v2119
        %v2122 = vmul.f32 %v2113, %v2119
        %v2123 = vmul.f32 %v2114, %v2119
        %v2125 = vlaneseq
        %v2126 = vshrl.u32 %v2125, 7
        %v2127 = vsub.s32 0, %v2126
        %v2128 = vrot.slane %v2075, %v2127
        %v2130 = vadd.f32 %v2121, %v2128
        %v2131 = vadd.f32 %v2122, %v2128
        %v2132 = vadd.f32 %v2123, %v2128
        %v2133 = vpack.c.bf16 %v2131, %v2130
        %v2134 = vpack.c.bf16 %v2132, %v2132
        %v2135 = vld [vmem:[%s832] sm:$0xf]
        %v2136 = vld [vmem:[%s832 + $0x4] sm:$0xf]
        %v2137 = vld [vmem:[%s832 + $0x8] sm:$0xf]
        %v2138 = vld [vmem:[%s832 + $0xc] sm:$0xf]
        %v2139 = vld [vmem:[%s840] sm:$0x1]
        %v2141 = vlaneseq
        %v2142 = vshrl.u32 %v2141, 7
        %v2143 = vsub.s32 0, %v2142
        %v2144 = vrot.slane %v2139, %v2143
        %v2150 = vunpack.c.l.b16 %v2135
        %v2151 = vunpack.c.l.b16 %v2136
        %v2152 = vunpack.c.l.b16 %v2137
        %v2153 = vunpack.c.l.b16 %v2138
        %v2154 = vpack.c.b16 %v2151, %v2150
        %v2155 = vpack.c.b16 %v2153, %v2152
        %v2159 = vsel %vm990, %v2133, 0
        %v2162 = vsel %vm990, %v2134, 0
        %2164 = vmatprep.subr.bf16.mxu0 0
        %2165 = vmatpush1.bf16.msra.mxu0 %v2154
        %2166 = vmatprep.subr.bf16.mxu0 0
        %2167 = vmatpush1.bf16.msra.mxu0 %v2155
        %2168 = vmatprep.subr.bf16.mxu0 0
        %2169 = vmatpush1.bf16.msra.mxu0 0
        %2170 = vmatprep.subr.bf16.mxu0 0
        %2171 = vmatpush1.bf16.msra.mxu0 0
        %2172 = vmatprep.subr.bf16.mxu0 0
        %2173 = vmatpush1.bf16.msra.mxu0 0
        %2174 = vmatprep.subr.bf16.mxu0 0
        %2175 = vmatpush1.bf16.msra.mxu0 0
        %2176 = vmatprep.subr.bf16.mxu0 0
        %2177 = vmatpush1.bf16.msra.mxu0 0
        %2178 = vmatprep.subr.bf16.mxu0 0
        %2179 = vmatpush1.bf16.msra.mxu0 0
        %2180 = vmatprep.subr.bf16.mxu0 0
        %2181 = vmatpush1.bf16.msra.mxu0 0
        %2182 = vmatprep.subr.bf16.mxu0 0
        %2183 = vmatpush1.bf16.msra.mxu0 0
        %2184 = vmatprep.subr.bf16.mxu0 0
        %2185 = vmatpush1.bf16.msra.mxu0 0
        %2186 = vmatprep.subr.bf16.mxu0 0
        %2187 = vmatpush1.bf16.msra.mxu0 0
        %2188 = vmatprep.subr.bf16.mxu0 0
        %2189 = vmatpush1.bf16.msra.mxu0 0
        %2190 = vmatprep.subr.bf16.mxu0 0
        %2191 = vmatpush1.bf16.msra.mxu0 0
        %2192 = vmatprep.subr.bf16.mxu0 0
        %2193 = vmatpush1.bf16.msra.mxu0 0
        %2194 = vmatprep.subr.bf16.mxu0 0
        %2195 = vmatpush1.bf16.msra.mxu0 0
        %2196 = vmatprep.mubr.bf16.mxu0 0
        %2197 = vmatmul.mubr.bf16.gmra.mrb[0].mxu0 %v2159
        %v2198 = vpop.f32.mrb[0].mxu0
        %v2199 = vadd.f32 %v2144, %v2198
        %v2200 = vpop.f32.mrb[0].mxu0
        %v2201 = vpop.f32.mrb[0].mxu0
        %v2202 = vadd.f32 %v2144, %v2201
        %v2203 = vpop.f32.mrb[0].mxu0
        %2204 = vmatprep.mubr.bf16.mxu0 0
        %2205 = vmatmul.mubr.bf16.gmra.mrb[0].mxu0 %v2162
        %v2206 = vpop.f32.mrb[0].mxu0
        %v2207 = vadd.f32 %v2144, %v2206
        %v2208 = vpop.f32.mrb[0].mxu0
        %v2209 = vpop.f32.mrb[0].mxu0
        %v2210 = vpop.f32.mrb[0].mxu0
        %2211 = vdwg.mxu0
        %v2212 = vmul.f32 %v2199, 0.5
        %v2213 = vmul.f32 %v2202, 0.5
        %v2214 = vmul.f32 %v2207, 0.5
        %v2215 = vmul.f32 %v2199, 0.70710677
        %v2216 = vmul.f32 %v2202, 0.70710677
        %v2217 = vmul.f32 %v2207, 0.70710677
        %vm2218 = vcmp.ge.f32.partialorder %v2215, 0.0
        %vm2219 = vcmp.ge.f32.partialorder %v2216, 0.0
        %vm2220 = vcmp.ge.f32.partialorder %v2217, 0.0
        %v2221 = vsel %vm2218, 1.0, -1.0
        %v2222 = vsel %vm2219, 1.0, -1.0
        %v2223 = vsel %vm2220, 1.0, -1.0
        %v2224 = vand.u32 2147483647, %v2215
        %v2225 = vand.u32 2147483647, %v2216
        %v2226 = vand.u32 2147483647, %v2217
        %v2227 = vmul.f32 %v2224, 0.3275911
        %v2228 = vmul.f32 %v2225, 0.3275911
        %v2229 = vmul.f32 %v2226, 0.3275911
        %v2230 = vadd.f32 %v2227, 1.0
        %v2231 = vadd.f32 %v2228, 1.0
        %v2232 = vadd.f32 %v2229, 1.0
        %v2233 = vrcp.pop %v2230
        %v2234 = vmul.f32 1.0, %v2233
        %v2235 = vrcp.pop %v2231
        %v2236 = vmul.f32 1.0, %v2235
        %v2237 = vrcp.pop %v2232
        %v2238 = vmul.f32 1.0, %v2237
        %v2239 = vmul.f32 %v2234, 1.0614054
        %v2240 = vmul.f32 %v2236, 1.0614054
        %v2241 = vmul.f32 %v2238, 1.0614054
        %v2242 = vadd.f32 %v2239, -1.4531521
        %v2243 = vadd.f32 %v2240, -1.4531521
        %v2244 = vadd.f32 %v2241, -1.4531521
        %v2245 = vmul.f32 %v2242, %v2234
        %v2246 = vmul.f32 %v2243, %v2236
        %v2247 = vmul.f32 %v2244, %v2238
        %v2248 = vadd.f32 %v2245, 1.4214138
        %v2249 = vadd.f32 %v2246, 1.4214138
        %v2250 = vadd.f32 %v2247, 1.4214138
        %v2251 = vmul.f32 %v2248, %v2234
        %v2252 = vmul.f32 %v2249, %v2236
        %v2253 = vmul.f32 %v2250, %v2238
        %v2254 = vadd.f32 %v2251, -0.28449672
        %v2255 = vadd.f32 %v2252, -0.28449672
        %v2256 = vadd.f32 %v2253, -0.28449672
        %v2257 = vmul.f32 %v2254, %v2234
        %v2258 = vmul.f32 %v2255, %v2236
        %v2259 = vmul.f32 %v2256, %v2238
        %v2260 = vadd.f32 %v2257, 0.2548296
        %v2261 = vadd.f32 %v2258, 0.2548296
        %v2262 = vadd.f32 %v2259, 0.2548296
        %v2263 = vmul.f32 %v2260, %v2234
        %v2264 = vmul.f32 %v2261, %v2236
        %v2265 = vmul.f32 %v2262, %v2238
        %v2266 = vsub.f32 0.0, %v2224
        %v2267 = vsub.f32 0.0, %v2225
        %v2268 = vsub.f32 0.0, %v2226
        %v2269 = vmul.f32 %v2266, %v2224
        %v2270 = vmul.f32 %v2267, %v2225
        %v2271 = vmul.f32 %v2268, %v2226
        %v2272 = vmul.f32 %v2269, 1.442695
        %v2273 = vpow.pop %v2272
        %v2274 = vmul.f32 %v2270, 1.442695
        %v2275 = vpow.pop %v2274
        %v2276 = vmul.f32 %v2271, 1.442695
        %v2277 = vpow.pop %v2276
        %v2278 = vmul.f32 %v2263, %v2273
        %v2279 = vmul.f32 %v2264, %v2275
        %v2280 = vmul.f32 %v2265, %v2277
        %v2281 = vsub.f32 1.0, %v2278
        %v2282 = vsub.f32 1.0, %v2279
        %v2283 = vsub.f32 1.0, %v2280
        %v2284 = vmul.f32 %v2221, %v2281
        %v2285 = vmul.f32 %v2222, %v2282
        %v2286 = vmul.f32 %v2223, %v2283
        %v2287 = vadd.f32 %v2284, 1.0
        %v2288 = vadd.f32 %v2285, 1.0
        %v2289 = vadd.f32 %v2286, 1.0
        %v2290 = vmul.f32 %v2212, %v2287
        %v2291 = vmul.f32 %v2213, %v2288
        %v2292 = vmul.f32 %v2214, %v2289
        %v2293 = vpack.c.bf16 %v2291, %v2290
        %v2294 = vpack.c.bf16 %v2292, %v2292
        %v2295 = vld [vmem:[%s849] sm:$0xf]
        %v2296 = vld [vmem:[%s849 + $0x4] sm:$0xf]
        %v2297 = vld [vmem:[%s849 + $0x8] sm:$0xf]
        %v2298 = vld [vmem:[%s849 + $0xc] sm:$0xf]
        %v2299 = vld [vmem:[%s849 + $0x10] sm:$0xf]
        %v2300 = vld [vmem:[%s849 + $0x14] sm:$0xf]
        %v2301 = vld [vmem:[%s849 + $0x18] sm:$0xf]
        %v2302 = vld [vmem:[%s849 + $0x1c] sm:$0xf]
        %v2303 = vld [vmem:[%s849 + $0x20] sm:$0xf]
        %v2304 = vld [vmem:[%s849 + $0x24] sm:$0xf]
        %v2305 = vld [vmem:[%s849 + $0x28] sm:$0xf]
        %v2306 = vld [vmem:[%s849 + $0x2c] sm:$0xf]
        %v2307 = vld [vmem:[%s849 + $0x30] sm:$0xf]
        %v2308 = vld [vmem:[%s849 + $0x34] sm:$0xf]
        %v2309 = vld [vmem:[%s849 + $0x38] sm:$0xf]
        %v2310 = vld [vmem:[%s849 + $0x3c] sm:$0xf]
        %v2327 = vunpack.c.l.b16 %v2295
        %v2328 = vunpack.c.l.b16 %v2296
        %v2329 = vunpack.c.l.b16 %v2297
        %v2330 = vunpack.c.l.b16 %v2298
        %v2331 = vunpack.c.l.b16 %v2299
        %v2332 = vunpack.c.l.b16 %v2300
        %v2333 = vunpack.c.l.b16 %v2301
        %v2334 = vunpack.c.l.b16 %v2302
        %v2335 = vunpack.c.l.b16 %v2303
        %v2336 = vunpack.c.l.b16 %v2304
        %v2337 = vunpack.c.l.b16 %v2305
        %v2338 = vunpack.c.l.b16 %v2306
        %v2339 = vunpack.c.l.b16 %v2307
        %v2340 = vunpack.c.l.b16 %v2308
        %v2341 = vunpack.c.l.b16 %v2309
        %v2342 = vunpack.c.l.b16 %v2310
        %v2343 = vpack.c.b16 %v2328, %v2327
        %v2344 = vpack.c.b16 %v2330, %v2329
        %v2345 = vpack.c.b16 %v2332, %v2331
        %v2346 = vpack.c.b16 %v2334, %v2333
        %v2347 = vpack.c.b16 %v2336, %v2335
        %v2348 = vpack.c.b16 %v2338, %v2337
        %v2349 = vpack.c.b16 %v2340, %v2339
        %v2350 = vpack.c.b16 %v2342, %v2341
        %2359 = vmatprep.subr.bf16.mxu0 0
        %2360 = vmatpush1.bf16.msra.mxu0 %v2343
        %2361 = vmatprep.subr.bf16.mxu0 0
        %2362 = vmatpush1.bf16.msra.mxu0 %v2344
        %2363 = vmatprep.subr.bf16.mxu0 0
        %2364 = vmatpush1.bf16.msra.mxu0 %v2345
        %2365 = vmatprep.subr.bf16.mxu0 0
        %2366 = vmatpush1.bf16.msra.mxu0 %v2346
        %2367 = vmatprep.subr.bf16.mxu0 0
        %2368 = vmatpush1.bf16.msra.mxu0 %v2347
        %2369 = vmatprep.subr.bf16.mxu0 0
        %2370 = vmatpush1.bf16.msra.mxu0 %v2348
        %2371 = vmatprep.subr.bf16.mxu0 0
        %2372 = vmatpush1.bf16.msra.mxu0 %v2349
        %2373 = vmatprep.subr.bf16.mxu0 0
        %2374 = vmatpush1.bf16.msra.mxu0 %v2350
        %2375 = vmatprep.subr.bf16.mxu0 0
        %2376 = vmatpush1.bf16.msra.mxu0 0
        %2377 = vmatprep.subr.bf16.mxu0 0
        %2378 = vmatpush1.bf16.msra.mxu0 0
        %2379 = vmatprep.subr.bf16.mxu0 0
        %2380 = vmatpush1.bf16.msra.mxu0 0
        %2381 = vmatprep.subr.bf16.mxu0 0
        %2382 = vmatpush1.bf16.msra.mxu0 0
        %2383 = vmatprep.subr.bf16.mxu0 0
        %2384 = vmatpush1.bf16.msra.mxu0 0
        %2385 = vmatprep.subr.bf16.mxu0 0
        %2386 = vmatpush1.bf16.msra.mxu0 0
        %2387 = vmatprep.subr.bf16.mxu0 0
        %2388 = vmatpush1.bf16.msra.mxu0 0
        %2389 = vmatprep.subr.bf16.mxu0 0
        %2390 = vmatpush1.bf16.msra.mxu0 0
        %2391 = vmatprep.mubr.bf16.mxu0 0
        %2392 = vmatmul.mubr.bf16.gmra.mrb[0].mxu0 %v2293
        %v2393 = vpop.f32.mrb[0].mxu0
        %v2394 = vadd.f32 0.0, %v2393
        %v2395 = vpop.f32.mrb[0].mxu0
        %v2396 = vpop.f32.mrb[0].mxu0
        %v2397 = vadd.f32 0.0, %v2396
        %v2398 = vpop.f32.mrb[0].mxu0
        %2399 = vmatprep.mubr.bf16.mxu0 0
        %2400 = vmatmul.mubr.bf16.gmra.mrb[0].mxu0 %v2294
        %v2401 = vpop.f32.mrb[0].mxu0
        %v2402 = vadd.f32 0.0, %v2401
        %v2403 = vpop.f32.mrb[0].mxu0
        %v2404 = vpop.f32.mrb[0].mxu0
        %v2405 = vpop.f32.mrb[0].mxu0
        %2406 = vdwg.mxu0
        %v2407 = vadd.f32 %v2071, %v2394
        %v2408 = vadd.f32 %v2072, %v2397
        %v2409 = vadd.f32 %v2073, %v2402
        %v2410 = vld [vmem:[%s857] sm:$0x1]
        %v2412 = vlaneseq
        %v2413 = vshrl.u32 %v2412, 7
        %v2414 = vsub.s32 0, %v2413
        %v2415 = vrot.slane %v2410, %v2414
        %v2417 = vadd.f32 %v2407, %v2415
        %v2418 = vadd.f32 %v2408, %v2415
        %v2419 = vadd.f32 %v2409, %v2415
        %2420 = vst.msk [vmem:[%s963] sm:$0xff] %vm990, %v2417
        %2421 = vst.msk [vmem:[%s963 + $0x8] sm:$0xff] %vm990, %v2418
        %2422 = vst.msk [vmem:[%s963 + $0x10] sm:$0xff] %vm990, %v2419
        %p2423 = scmp.eq.s32.totalorder %s56, 1
        // Predicated region
        $region145: #{gpt_qdrl_forward.4} parent=79 // pred_check
          %p2424 = pneg %p2423
        $region146: #{gpt_qdrl_forward.4} parent=79 // pred_check_branch
          %2426 = sbr.rel (%p2424) target = $region148
        $region147: #{gpt_qdrl_forward.4} parent=79 // pred_region
          %v2427 = vld [vmem:[#allocation23] sm:$0x1]
          %v2428 = vld [vmem:[#allocation25] sm:$0x1]
          %v2429 = vsel %vm990, %v2417, 0.0
          %2430 = vadd.xlane.f32.xlu0 %v2429
          %v2431 = vpop.xlane.xlu0 %2430
          %v2432 = vsel %vm990, %v2418, 0.0
          %2433 = vadd.xlane.f32.xlu0 %v2432
          %v2434 = vpop.xlane.xlu0 %2433
          %v2435 = vsel %vm990, %v2419, 0.0
          %2436 = vadd.xlane.f32.xlu0 %v2435
          %v2437 = vpop.xlane.xlu0 %2436
          %v2438 = vmul.f32 %v2431, %v1000
          %v2439 = vmul.f32 %v2434, %v1000
          %v2440 = vmul.f32 %v2437, %v1000
          %v2441 = vsub.f32 %v2417, %v2438
          %v2442 = vsub.f32 %v2418, %v2439
          %v2443 = vsub.f32 %v2419, %v2440
          %v2444 = vmul.f32 %v2441, %v2441
          %v2445 = vmul.f32 %v2442, %v2442
          %v2446 = vmul.f32 %v2443, %v2443
          %v2447 = vsel %vm990, %v2444, 0.0
          %2448 = vadd.xlane.f32.xlu0 %v2447
          %v2449 = vpop.xlane.xlu0 %2448
          %v2450 = vsel %vm990, %v2445, 0.0
          %2451 = vadd.xlane.f32.xlu0 %v2450
          %v2452 = vpop.xlane.xlu0 %2451
          %v2453 = vsel %vm990, %v2446, 0.0
          %2454 = vadd.xlane.f32.xlu0 %v2453
          %v2455 = vpop.xlane.xlu0 %2454
          %v2456 = vmul.f32 %v2449, %v1000
          %v2457 = vmul.f32 %v2452, %v1000
          %v2458 = vmul.f32 %v2455, %v1000
          %v2459 = vadd.f32 %v2456, 1e-05
          %v2460 = vadd.f32 %v2457, 1e-05
          %v2461 = vadd.f32 %v2458, 1e-05
          %v2462 = vrsqrt.pop %v2459
          %v2463 = vrsqrt.pop %v2460
          %v2464 = vrsqrt.pop %v2461
          %v2465 = vmul.f32 %v2441, %v2462
          %v2466 = vmul.f32 %v2442, %v2463
          %v2467 = vmul.f32 %v2443, %v2464
          %v2469 = vlaneseq
          %v2470 = vshrl.u32 %v2469, 7
          %v2471 = vsub.s32 0, %v2470
          %v2472 = vrot.slane %v2427, %v2471
          %v2474 = vmul.f32 %v2465, %v2472
          %v2475 = vmul.f32 %v2466, %v2472
          %v2476 = vmul.f32 %v2467, %v2472
          %v2478 = vlaneseq
          %v2479 = vshrl.u32 %v2478, 7
          %v2480 = vsub.s32 0, %v2479
          %v2481 = vrot.slane %v2428, %v2480
          %v2483 = vadd.f32 %v2474, %v2481
          %v2484 = vadd.f32 %v2475, %v2481
          %v2485 = vadd.f32 %v2476, %v2481
          %2486 = vst.msk [vmem:[%s963] sm:$0xff] %vm990, %v2483
          %2487 = vst.msk [vmem:[%s963 + $0x8] sm:$0xff] %vm990, %v2484
          %2488 = vst.msk [vmem:[%s963 + $0x10] sm:$0xff] %vm990, %v2485
        $region148: #{gpt_qdrl_forward.4} parent=79 // pred_fallthru
          _
        %s2489 = sand.u32 %s451, 1
        %s2490 = scalar_lea.sflag [#allocation4], %s2489
        %s2491 = sand.u32 %s451, 1
        %s2492 = smul.addr %s2491, 24
        %s2493 = scalar_lea.vmem [#allocation26], %s2492
        // Predicated region
        $region149: #{gpt_qdrl_forward.4} parent=79 // pred_check
          %p2494 = pneg %p461
        $region150: #{gpt_qdrl_forward.4} parent=79 // pred_check_branch
          %2496 = sbr.rel (%p2494) target = $region152
        $region151: #{gpt_qdrl_forward.4} parent=79 // pred_region
          %s2498 = ssub.s32 384, 384
          %2499 = vsyncadd %s2490, %s2498
          %s2500 = smul.addr %s55, 3
          %s2501 = smul.addr %s2500, 128
          %s2502 = scalar_lea.hbm %s15, %s2501
          %s2503 = sshll.u32 %s2493, 4
          %s2504 = int_to_ptr.vmem [resolvable:$true] %s2503
          %2509 = dma.vmem_to_hbm [thread:$0]  %s2504, 384, %s2502, %s2490, 128, 128, 8
        $region152: #{gpt_qdrl_forward.4} parent=79 // pred_fallthru
          _
      $region80: #{gpt_qdrl_forward.4} parent=5 // pred_fallthru
        _
      %p2510 = scmp.le.s32.totalorder 2, %s46
      // Predicated region
      $region153: #{gpt_qdrl_forward.4} parent=5 // pred_check
        %p2511 = pneg %p2510
      $region154: #{gpt_qdrl_forward.4} parent=5 // pred_check_branch
        %2513 = sbr.rel (%p2511) target = $region156
      $region155: #{gpt_qdrl_forward.4} parent=5 // pred_region
        %s2514 = ssub.s32 %s46, 2
        // Predicated region
        $region157: #{gpt_qdrl_forward.4} parent=155 // pred_check
          %p2515 = pneg %p467
        $region158: #{gpt_qdrl_forward.4} parent=155 // pred_check_branch
          %2517 = sbr.rel (%p2515) target = $region160
        $region159: #{gpt_qdrl_forward.4} parent=155 // pred_region
          %s2518 = sand.u32 %s452, 1
          %s2519 = scalar_lea.sflag [#allocation4], %s2518
          %s2520 = sand.u32 %s452, 1
          %s2521 = smul.addr %s2520, 24
          %s2522 = scalar_lea.vmem [#allocation26], %s2521
          %2523 = dma.done %s2519, 384
        $region160: #{gpt_qdrl_forward.4} parent=155 // pred_fallthru
          _
      $region156: #{gpt_qdrl_forward.4} parent=5 // pred_fallthru
        _
    $region6: #{gpt_qdrl_forward.4} parent=1 // loop_footer
      %s50 = sadd.s32 1, %s46
    $region7: #{gpt_qdrl_forward.4} parent=1 // loop_footer_branch
      %45 = sbr.rel target = $region3
    $region8: #{gpt_qdrl_forward.4} parent=1 // loop_exit
      _
    %2524 = vsyncpa [#allocation3], 1
    %s2525 = scalar_lea.sflag [#allocation3], 1
    %2526 = vsyncpa %s2525, 1
    %2527 = vsyncpa [#allocation6], 1
    %s2528 = scalar_lea.sflag [#allocation6], 1
    %2529 = vsyncpa %s2528, 1
    %2530 = vsyncpa [#allocation9], 1
    %s2531 = scalar_lea.sflag [#allocation9], 1
    %2532 = vsyncpa %s2531, 1
    %2533 = vsyncpa [#allocation12], 1
    %s2534 = scalar_lea.sflag [#allocation12], 1
    %2535 = vsyncpa %s2534, 1
    %2536 = vsyncpa [#allocation15], 1
    %s2537 = scalar_lea.sflag [#allocation15], 1
    %2538 = vsyncpa %s2537, 1
    %2539 = vsyncpa [#allocation18], 1
    %s2540 = scalar_lea.sflag [#allocation18], 1
    %2541 = vsyncpa %s2540, 1
    %2542 = vsyncpa [#allocation21], 1
    %s2543 = scalar_lea.sflag [#allocation21], 1
    %2544 = vsyncpa %s2543, 1
    %2545 = vsyncpa [#allocation24], 1
    %2546 = vsyncpa [#allocation4], 1
    %s2547 = scalar_lea.sflag [#allocation4], 1
    %2548 = vsyncpa %s2547, 1

// kernel: gpt_qdrl_forward.5
$region0: #{gpt_qdrl_forward.5}
  #allocation0 [shape = 'u32[]', space=smem, size = 0x4, offset = 0x4, fixed_abs, tag = 'smem constant byte address 0x4 - core index']
  #allocation1 [shape = 'u32[144,128]{1,0:T(1,128)}', space=vmem, size = 0x12000, scoped, tag = 'internal scratch']
  %s0 = inlined_call_operand.hbm [shape: f32[8,32], index: 0, kind: input, shape index: {}]
  %s1 = inlined_call_operand.hbm [shape: bf16[32,1152], index: 1, kind: input, shape index: {}]
  %s2 = inlined_call_operand.hbm [shape: f32[1,1152], index: 2, kind: input, shape index: {}]
  %s3 = inlined_call_operand.hbm [shape: bf16[1152,1152], index: 3, kind: input, shape index: {}]
  %s4 = inlined_call_operand.hbm [shape: f32[1,1152], index: 4, kind: input, shape index: {}]
  %s5 = inlined_call_operand.hbm [shape: bf16[1152,128], index: 5, kind: input, shape index: {}]
  %s6 = inlined_call_operand.hbm [shape: f32[1,128], index: 6, kind: input, shape index: {}]
  %s7 = inlined_call_operand.hbm [shape: f32[8,128], index: 7, kind: output, shape index: {}]
  %s8 = sld [smem:[#allocation0]]
  $region66: #{gpt_qdrl_forward.5} parent=0
    _
  %s10 = ssub.s32 1, %s8
  %s11 = scalar_select 0, %s10, %s8
  $region1: #{gpt_qdrl_forward.5} parent=0
    #allocation2 [shape = 'u8[4096]{0}', space=vmem, size = 0x1000, scoped, tag = 'input window, operand 0, single buffered']
    #allocation3 [shape = 's32[1]{0}', space=sflag, size = 0x4, scoped, tag = 'scoped memory for gpt_qdrl_forward.5']
    #allocation4 [shape = 's32[1]{0}', space=sflag, size = 0x4, scoped, tag = 'scoped memory for gpt_qdrl_forward.5']
    #allocation5 [shape = 'u8[73728]{0}', space=vmem, size = 0x12000, scoped, tag = 'input window, operand 1, single buffered']
    #allocation6 [shape = 's32[1]{0}', space=sflag, size = 0x4, scoped, tag = 'scoped memory for gpt_qdrl_forward.5']
    #allocation7 [shape = 'u8[4608]{0}', space=vmem, size = 0x1400, scoped, tag = 'input window, operand 2, single buffered']
    #allocation8 [shape = 'u8[2654208]{0}', space=vmem, size = 0x288000, scoped, tag = 'input window, operand 3, single buffered']
    #allocation9 [shape = 's32[1]{0}', space=sflag, size = 0x4, scoped, tag = 'scoped memory for gpt_qdrl_forward.5']
    #allocation10 [shape = 'u8[4608]{0}', space=vmem, size = 0x1400, scoped, tag = 'input window, operand 4, single buffered']
    #allocation11 [shape = 'u8[294912]{0}', space=vmem, size = 0x48000, scoped, tag = 'input window, operand 5, single buffered']
    #allocation12 [shape = 's32[1]{0}', space=sflag, size = 0x4, scoped, tag = 'scoped memory for gpt_qdrl_forward.5']
    #allocation13 [shape = 'u8[512]{0}', space=vmem, size = 0x400, scoped, tag = 'input window, operand 6, single buffered']
    #allocation14 [shape = 'u8[4096]{0}', space=vmem, size = 0x1000, scoped, tag = 'output window, operand 0, single buffered']
    %12 = vsyncpa [#allocation3], 0
    %13 = vsyncpa [#allocation6], 0
    %14 = vsyncpa [#allocation9], 0
    %15 = vsyncpa [#allocation12], 0
    %16 = vsyncpa [#allocation4], 0
    // Predicated region
    $region2: #{gpt_qdrl_forward.5} parent=1 // pred_check
      _
    $region3: #{gpt_qdrl_forward.5} parent=1 // pred_check_branch
      %18 = sbr.rel (0) target = $region5
    $region4: #{gpt_qdrl_forward.5} parent=1 // pred_region
      %s20 = ssub.s32 128, 128
      %21 = vsyncadd [#allocation3], %s20
      %s23 = sshll.u32 [#allocation2], 4
      %s24 = int_to_ptr.vmem [resolvable:$true] %s23
      %26 = dma.hbm_to_vmem [thread:$0]  %s0, 128, %s24, [#allocation3]
    $region5: #{gpt_qdrl_forward.5} parent=1 // pred_fallthru
      _
    // Predicated region
    $region6: #{gpt_qdrl_forward.5} parent=1 // pred_check
      _
    $region7: #{gpt_qdrl_forward.5} parent=1 // pred_check_branch
      %28 = sbr.rel (0) target = $region9
    $region8: #{gpt_qdrl_forward.5} parent=1 // pred_region
      %s30 = ssub.s32 2304, 2304
      %31 = vsyncadd [#allocation6], %s30
      %s32 = sshll.u32 [#allocation5], 4
      %s33 = int_to_ptr.vmem [resolvable:$true] %s32
      %38 = dma.hbm_to_vmem [thread:$0]  %s1, 2304, %s33, [#allocation6], 576, 576, 36
    $region9: #{gpt_qdrl_forward.5} parent=1 // pred_fallthru
      _
    // Predicated region
    $region10: #{gpt_qdrl_forward.5} parent=1 // pred_check
      _
    $region11: #{gpt_qdrl_forward.5} parent=1 // pred_check_branch
      %40 = sbr.rel (0) target = $region13
    $region12: #{gpt_qdrl_forward.5} parent=1 // pred_region
      %s42 = ssub.s32 144, 144
      %43 = vsyncadd [#allocation6], %s42
      %s45 = sshll.u32 [#allocation7], 4
      %s46 = int_to_ptr.vmem [resolvable:$true] %s45
      %48 = dma.hbm_to_vmem [thread:$0]  %s2, 144, %s46, [#allocation6]
    $region13: #{gpt_qdrl_forward.5} parent=1 // pred_fallthru
      _
    // Predicated region
    $region14: #{gpt_qdrl_forward.5} parent=1 // pred_check
      _
    $region15: #{gpt_qdrl_forward.5} parent=1 // pred_check_branch
      %50 = sbr.rel (0) target = $region17
    $region16: #{gpt_qdrl_forward.5} parent=1 // pred_region
      %s52 = ssub.s32 82944, 82944
      %53 = vsyncadd [#allocation9], %s52
      %s54 = sshll.u32 [#allocation8], 4
      %s55 = int_to_ptr.vmem [resolvable:$true] %s54
      %60 = dma.hbm_to_vmem [thread:$0]  %s3, 82944, %s55, [#allocation9], 576, 576, 36
    $region17: #{gpt_qdrl_forward.5} parent=1 // pred_fallthru
      _
    // Predicated region
    $region18: #{gpt_qdrl_forward.5} parent=1 // pred_check
      _
    $region19: #{gpt_qdrl_forward.5} parent=1 // pred_check_branch
      %62 = sbr.rel (0) target = $region21
    $region20: #{gpt_qdrl_forward.5} parent=1 // pred_region
      %s64 = ssub.s32 144, 144
      %65 = vsyncadd [#allocation9], %s64
      %s67 = sshll.u32 [#allocation10], 4
      %s68 = int_to_ptr.vmem [resolvable:$true] %s67
      %70 = dma.hbm_to_vmem [thread:$0]  %s4, 144, %s68, [#allocation9]
    $region21: #{gpt_qdrl_forward.5} parent=1 // pred_fallthru
      _
    // Predicated region
    $region22: #{gpt_qdrl_forward.5} parent=1 // pred_check
      _
    $region23: #{gpt_qdrl_forward.5} parent=1 // pred_check_branch
      %72 = sbr.rel (0) target = $region25
    $region24: #{gpt_qdrl_forward.5} parent=1 // pred_region
      %s74 = ssub.s32 9216, 9216
      %75 = vsyncadd [#allocation12], %s74
      %s76 = sshll.u32 [#allocation11], 4
      %s77 = int_to_ptr.vmem [resolvable:$true] %s76
      %82 = dma.hbm_to_vmem [thread:$0]  %s5, 9216, %s77, [#allocation12], 64, 64, 4
    $region25: #{gpt_qdrl_forward.5} parent=1 // pred_fallthru
      _
    // Predicated region
    $region26: #{gpt_qdrl_forward.5} parent=1 // pred_check
      _
    $region27: #{gpt_qdrl_forward.5} parent=1 // pred_check_branch
      %84 = sbr.rel (0) target = $region29
    $region28: #{gpt_qdrl_forward.5} parent=1 // pred_region
      %s86 = ssub.s32 16, 16
      %87 = vsyncadd [#allocation12], %s86
      %s89 = sshll.u32 [#allocation13], 4
      %s90 = int_to_ptr.vmem [resolvable:$true] %s89
      %92 = dma.hbm_to_vmem [thread:$0]  %s6, 16, %s90, [#allocation12]
    $region29: #{gpt_qdrl_forward.5} parent=1 // pred_fallthru
      _
    // Predicated region
    $region30: #{gpt_qdrl_forward.5} parent=1 // pred_check
      _
    $region31: #{gpt_qdrl_forward.5} parent=1 // pred_check_branch
      %94 = sbr.rel (0) target = $region33
    $region32: #{gpt_qdrl_forward.5} parent=1 // pred_region
      %95 = dma.done [#allocation3], 128
    $region33: #{gpt_qdrl_forward.5} parent=1 // pred_fallthru
      _
    // Predicated region
    $region34: #{gpt_qdrl_forward.5} parent=1 // pred_check
      _
    $region35: #{gpt_qdrl_forward.5} parent=1 // pred_check_branch
      %97 = sbr.rel (0) target = $region37
    $region36: #{gpt_qdrl_forward.5} parent=1 // pred_region
      %98 = dma.done [#allocation6], 2304
    $region37: #{gpt_qdrl_forward.5} parent=1 // pred_fallthru
      _
    // Predicated region
    $region38: #{gpt_qdrl_forward.5} parent=1 // pred_check
      _
    $region39: #{gpt_qdrl_forward.5} parent=1 // pred_check_branch
      %100 = sbr.rel (0) target = $region41
    $region40: #{gpt_qdrl_forward.5} parent=1 // pred_region
      %101 = dma.done [#allocation6], 144
    $region41: #{gpt_qdrl_forward.5} parent=1 // pred_fallthru
      _
    // Predicated region
    $region42: #{gpt_qdrl_forward.5} parent=1 // pred_check
      _
    $region43: #{gpt_qdrl_forward.5} parent=1 // pred_check_branch
      %103 = sbr.rel (0) target = $region45
    $region44: #{gpt_qdrl_forward.5} parent=1 // pred_region
      %104 = dma.done [#allocation9], 82944
    $region45: #{gpt_qdrl_forward.5} parent=1 // pred_fallthru
      _
    // Predicated region
    $region46: #{gpt_qdrl_forward.5} parent=1 // pred_check
      _
    $region47: #{gpt_qdrl_forward.5} parent=1 // pred_check_branch
      %106 = sbr.rel (0) target = $region49
    $region48: #{gpt_qdrl_forward.5} parent=1 // pred_region
      %107 = dma.done [#allocation9], 144
    $region49: #{gpt_qdrl_forward.5} parent=1 // pred_fallthru
      _
    // Predicated region
    $region50: #{gpt_qdrl_forward.5} parent=1 // pred_check
      _
    $region51: #{gpt_qdrl_forward.5} parent=1 // pred_check_branch
      %109 = sbr.rel (0) target = $region53
    $region52: #{gpt_qdrl_forward.5} parent=1 // pred_region
      %110 = dma.done [#allocation12], 9216
    $region53: #{gpt_qdrl_forward.5} parent=1 // pred_fallthru
      _
    // Predicated region
    $region54: #{gpt_qdrl_forward.5} parent=1 // pred_check
      _
    $region55: #{gpt_qdrl_forward.5} parent=1 // pred_check_branch
      %112 = sbr.rel (0) target = $region57
    $region56: #{gpt_qdrl_forward.5} parent=1 // pred_region
      %113 = dma.done [#allocation12], 16
    $region57: #{gpt_qdrl_forward.5} parent=1 // pred_fallthru
      _
    %v115 = vld [vmem:[#allocation2] sm:$0xff]
    %v116 = vpack.c.bf16 %v115, %v115
    %v117 = vld [vmem:[#allocation5] sm:$0xff]
    %v118 = vld [vmem:[#allocation5 + $0x8] sm:$0xff]
    %v119 = vld [vmem:[#allocation5 + $0x10] sm:$0xff]
    %v120 = vld [vmem:[#allocation5 + $0x18] sm:$0xff]
    %v121 = vld [vmem:[#allocation5 + $0x20] sm:$0xf]
    %v122 = vld [vmem:[#allocation5 + $0x24] sm:$0xff]
    %v123 = vld [vmem:[#allocation5 + $0x2c] sm:$0xff]
    %v124 = vld [vmem:[#allocation5 + $0x34] sm:$0xff]
    %v125 = vld [vmem:[#allocation5 + $0x3c] sm:$0xff]
    %v126 = vld [vmem:[#allocation5 + $0x44] sm:$0xf]
    %v127 = vld [vmem:[#allocation5 + $0x48] sm:$0xff]
    %v128 = vld [vmem:[#allocation5 + $0x50] sm:$0xff]
    %v129 = vld [vmem:[#allocation5 + $0x58] sm:$0xff]
    %v130 = vld [vmem:[#allocation5 + $0x60] sm:$0xff]
    %v131 = vld [vmem:[#allocation5 + $0x68] sm:$0xf]
    %v132 = vld [vmem:[#allocation5 + $0x6c] sm:$0xff]
    %v133 = vld [vmem:[#allocation5 + $0x74] sm:$0xff]
    %v134 = vld [vmem:[#allocation5 + $0x7c] sm:$0xff]
    %v135 = vld [vmem:[#allocation5 + $0x84] sm:$0xff]
    %v136 = vld [vmem:[#allocation5 + $0x8c] sm:$0xf]
    %v137 = vld [vmem:[#allocation7] sm:$0xff]
    %v138 = vld [vmem:[#allocation7 + $0x8] sm:$0x1]
    %v141 = vlaneseq
    %v142 = vshrl.u32 %v141, 7
    %v143 = vsub.s32 0, %v142
    %v144 = vrot.slane %v137, %v143
    %v145 = vlaneseq
    %v146 = vshrl.u32 %v145, 7
    %v147 = vsub.s32 1, %v146
    %v148 = vrot.slane %v137, %v147
    %v149 = vlaneseq
    %v150 = vshrl.u32 %v149, 7
    %v151 = vsub.s32 2, %v150
    %v152 = vrot.slane %v137, %v151
    %v153 = vlaneseq
    %v154 = vshrl.u32 %v153, 7
    %v155 = vsub.s32 3, %v154
    %v156 = vrot.slane %v137, %v155
    %v157 = vlaneseq
    %v158 = vshrl.u32 %v157, 7
    %v159 = vsub.s32 4, %v158
    %v160 = vrot.slane %v137, %v159
    %v161 = vlaneseq
    %v162 = vshrl.u32 %v161, 7
    %v163 = vsub.s32 5, %v162
    %v164 = vrot.slane %v137, %v163
    %v165 = vlaneseq
    %v166 = vshrl.u32 %v165, 7
    %v167 = vsub.s32 6, %v166
    %v168 = vrot.slane %v137, %v167
    %v169 = vlaneseq
    %v170 = vshrl.u32 %v169, 7
    %v171 = vsub.s32 7, %v170
    %v172 = vrot.slane %v137, %v171
    %v173 = vlaneseq
    %v174 = vshrl.u32 %v173, 7
    %v175 = vsub.s32 0, %v174
    %v176 = vrot.slane %v138, %v175
    %v206 = vunpack.c.l.b16 %v117
    %v207 = vunpack.c.h.b16 %v117
    %v208 = vunpack.c.l.b16 %v118
    %v209 = vunpack.c.h.b16 %v118
    %v210 = vunpack.c.l.b16 %v119
    %v211 = vunpack.c.h.b16 %v119
    %v212 = vunpack.c.l.b16 %v120
    %v213 = vunpack.c.h.b16 %v120
    %v214 = vunpack.c.l.b16 %v121
    %v215 = vunpack.c.l.b16 %v122
    %v216 = vunpack.c.h.b16 %v122
    %v217 = vunpack.c.l.b16 %v123
    %v218 = vunpack.c.h.b16 %v123
    %v219 = vunpack.c.l.b16 %v124
    %v220 = vunpack.c.h.b16 %v124
    %v221 = vunpack.c.l.b16 %v125
    %v222 = vunpack.c.h.b16 %v125
    %v223 = vunpack.c.l.b16 %v126
    %v224 = vunpack.c.l.b16 %v127
    %v225 = vunpack.c.h.b16 %v127
    %v226 = vunpack.c.l.b16 %v128
    %v227 = vunpack.c.h.b16 %v128
    %v228 = vunpack.c.l.b16 %v129
    %v229 = vunpack.c.h.b16 %v129
    %v230 = vunpack.c.l.b16 %v130
    %v231 = vunpack.c.h.b16 %v130
    %v232 = vunpack.c.l.b16 %v131
    %v233 = vunpack.c.l.b16 %v132
    %v234 = vunpack.c.h.b16 %v132
    %v235 = vunpack.c.l.b16 %v133
    %v236 = vunpack.c.h.b16 %v133
    %v237 = vunpack.c.l.b16 %v134
    %v238 = vunpack.c.h.b16 %v134
    %v239 = vunpack.c.l.b16 %v135
    %v240 = vunpack.c.h.b16 %v135
    %v241 = vunpack.c.l.b16 %v136
    %v242 = vpack.c.b16 %v215, %v206
    %v243 = vpack.c.b16 %v216, %v207
    %v244 = vpack.c.b16 %v217, %v208
    %v245 = vpack.c.b16 %v218, %v209
    %v246 = vpack.c.b16 %v219, %v210
    %v247 = vpack.c.b16 %v220, %v211
    %v248 = vpack.c.b16 %v221, %v212
    %v249 = vpack.c.b16 %v222, %v213
    %v250 = vpack.c.b16 %v223, %v214
    %v251 = vpack.c.b16 %v233, %v224
    %v252 = vpack.c.b16 %v234, %v225
    %v253 = vpack.c.b16 %v235, %v226
    %v254 = vpack.c.b16 %v236, %v227
    %v255 = vpack.c.b16 %v237, %v228
    %v256 = vpack.c.b16 %v238, %v229
    %v257 = vpack.c.b16 %v239, %v230
    %v258 = vpack.c.b16 %v240, %v231
    %v259 = vpack.c.b16 %v241, %v232
    %vm278 = vcmask 261120
    %v280 = vsel %vm278, %v116, 0
    %282 = vmatprep.subr.bf16.mxu0 %v243
    %283 = vmatpush1.bf16.msra.mxu0 %v242
    %284 = vmatprep.subr.bf16.mxu0 %v252
    %285 = vmatpush1.bf16.msra.mxu0 %v251
    %286 = vmatprep.subr.bf16.mxu0 0
    %287 = vmatpush1.bf16.msra.mxu0 0
    %288 = vmatprep.subr.bf16.mxu0 0
    %289 = vmatpush1.bf16.msra.mxu0 0
    %290 = vmatprep.subr.bf16.mxu0 0
    %291 = vmatpush1.bf16.msra.mxu0 0
    %292 = vmatprep.subr.bf16.mxu0 0
    %293 = vmatpush1.bf16.msra.mxu0 0
    %294 = vmatprep.subr.bf16.mxu0 0
    %295 = vmatpush1.bf16.msra.mxu0 0
    %296 = vmatprep.subr.bf16.mxu0 0
    %297 = vmatpush1.bf16.msra.mxu0 0
    %298 = vmatprep.subr.bf16.mxu0 0
    %299 = vmatpush1.bf16.msra.mxu0 0
    %300 = vmatprep.subr.bf16.mxu0 0
    %301 = vmatpush1.bf16.msra.mxu0 0
    %302 = vmatprep.subr.bf16.mxu0 0
    %303 = vmatpush1.bf16.msra.mxu0 0
    %304 = vmatprep.subr.bf16.mxu0 0
    %305 = vmatpush1.bf16.msra.mxu0 0
    %306 = vmatprep.subr.bf16.mxu0 0
    %307 = vmatpush1.bf16.msra.mxu0 0
    %308 = vmatprep.subr.bf16.mxu0 0
    %309 = vmatpush1.bf16.msra.mxu0 0
    %310 = vmatprep.subr.bf16.mxu0 0
    %311 = vmatpush1.bf16.msra.mxu0 0
    %312 = vmatprep.subr.bf16.mxu0 0
    %313 = vmatpush1.bf16.msra.mxu0 0
    %314 = vmatprep.mubr.bf16.mxu0 0
    %315 = vmatmul.mubr.bf16.gmra.mrb[0].mxu0 %v280
    %v316 = vpop.f32.mrb[0].mxu0
    %v317 = vadd.f32 %v144, %v316
    %v318 = vpop.f32.mrb[0].mxu0
    %v319 = vadd.f32 %v148, %v318
    %v320 = vpop.f32.mrb[0].mxu0
    %v321 = vpop.f32.mrb[0].mxu0
    %322 = vdwg.mxu0
    %323 = vmatprep.subr.bf16.mxu0 %v245
    %324 = vmatpush1.bf16.msra.mxu0 %v244
    %325 = vmatprep.subr.bf16.mxu0 %v254
    %326 = vmatpush1.bf16.msra.mxu0 %v253
    %327 = vmatprep.subr.bf16.mxu0 0
    %328 = vmatpush1.bf16.msra.mxu0 0
    %329 = vmatprep.subr.bf16.mxu0 0
    %330 = vmatpush1.bf16.msra.mxu0 0
    %331 = vmatprep.subr.bf16.mxu0 0
    %332 = vmatpush1.bf16.msra.mxu0 0
    %333 = vmatprep.subr.bf16.mxu0 0
    %334 = vmatpush1.bf16.msra.mxu0 0
    %335 = vmatprep.subr.bf16.mxu0 0
    %336 = vmatpush1.bf16.msra.mxu0 0
    %337 = vmatprep.subr.bf16.mxu0 0
    %338 = vmatpush1.bf16.msra.mxu0 0
    %339 = vmatprep.subr.bf16.mxu0 0
    %340 = vmatpush1.bf16.msra.mxu0 0
    %341 = vmatprep.subr.bf16.mxu0 0
    %342 = vmatpush1.bf16.msra.mxu0 0
    %343 = vmatprep.subr.bf16.mxu0 0
    %344 = vmatpush1.bf16.msra.mxu0 0
    %345 = vmatprep.subr.bf16.mxu0 0
    %346 = vmatpush1.bf16.msra.mxu0 0
    %347 = vmatprep.subr.bf16.mxu0 0
    %348 = vmatpush1.bf16.msra.mxu0 0
    %349 = vmatprep.subr.bf16.mxu0 0
    %350 = vmatpush1.bf16.msra.mxu0 0
    %351 = vmatprep.subr.bf16.mxu0 0
    %352 = vmatpush1.bf16.msra.mxu0 0
    %353 = vmatprep.subr.bf16.mxu0 0
    %354 = vmatpush1.bf16.msra.mxu0 0
    %355 = vmatprep.mubr.bf16.mxu0 0
    %356 = vmatmul.mubr.bf16.gmra.mrb[0].mxu0 %v280
    %v357 = vpop.f32.mrb[0].mxu0
    %v358 = vadd.f32 %v152, %v357
    %v359 = vpop.f32.mrb[0].mxu0
    %v360 = vadd.f32 %v156, %v359
    %v361 = vpop.f32.mrb[0].mxu0
    %v362 = vpop.f32.mrb[0].mxu0
    %363 = vdwg.mxu0
    %364 = vmatprep.subr.bf16.mxu0 %v247
    %365 = vmatpush1.bf16.msra.mxu0 %v246
    %366 = vmatprep.subr.bf16.mxu0 %v256
    %367 = vmatpush1.bf16.msra.mxu0 %v255
    %368 = vmatprep.subr.bf16.mxu0 0
    %369 = vmatpush1.bf16.msra.mxu0 0
    %370 = vmatprep.subr.bf16.mxu0 0
    %371 = vmatpush1.bf16.msra.mxu0 0
    %372 = vmatprep.subr.bf16.mxu0 0
    %373 = vmatpush1.bf16.msra.mxu0 0
    %374 = vmatprep.subr.bf16.mxu0 0
    %375 = vmatpush1.bf16.msra.mxu0 0
    %376 = vmatprep.subr.bf16.mxu0 0
    %377 = vmatpush1.bf16.msra.mxu0 0
    %378 = vmatprep.subr.bf16.mxu0 0
    %379 = vmatpush1.bf16.msra.mxu0 0
    %380 = vmatprep.subr.bf16.mxu0 0
    %381 = vmatpush1.bf16.msra.mxu0 0
    %382 = vmatprep.subr.bf16.mxu0 0
    %383 = vmatpush1.bf16.msra.mxu0 0
    %384 = vmatprep.subr.bf16.mxu0 0
    %385 = vmatpush1.bf16.msra.mxu0 0
    %386 = vmatprep.subr.bf16.mxu0 0
    %387 = vmatpush1.bf16.msra.mxu0 0
    %388 = vmatprep.subr.bf16.mxu0 0
    %389 = vmatpush1.bf16.msra.mxu0 0
    %390 = vmatprep.subr.bf16.mxu0 0
    %391 = vmatpush1.bf16.msra.mxu0 0
    %392 = vmatprep.subr.bf16.mxu0 0
    %393 = vmatpush1.bf16.msra.mxu0 0
    %394 = vmatprep.subr.bf16.mxu0 0
    %395 = vmatpush1.bf16.msra.mxu0 0
    %396 = vmatprep.mubr.bf16.mxu0 0
    %397 = vmatmul.mubr.bf16.gmra.mrb[0].mxu0 %v280
    %v398 = vpop.f32.mrb[0].mxu0
    %v399 = vadd.f32 %v160, %v398
    %v400 = vpop.f32.mrb[0].mxu0
    %v401 = vadd.f32 %v164, %v400
    %v402 = vpop.f32.mrb[0].mxu0
    %v403 = vpop.f32.mrb[0].mxu0
    %404 = vdwg.mxu0
    %405 = vmatprep.subr.bf16.mxu0 %v249
    %406 = vmatpush1.bf16.msra.mxu0 %v248
    %407 = vmatprep.subr.bf16.mxu0 %v258
    %408 = vmatpush1.bf16.msra.mxu0 %v257
    %409 = vmatprep.subr.bf16.mxu0 0
    %410 = vmatpush1.bf16.msra.mxu0 0
    %411 = vmatprep.subr.bf16.mxu0 0
    %412 = vmatpush1.bf16.msra.mxu0 0
    %413 = vmatprep.subr.bf16.mxu0 0
    %414 = vmatpush1.bf16.msra.mxu0 0
    %415 = vmatprep.subr.bf16.mxu0 0
    %416 = vmatpush1.bf16.msra.mxu0 0
    %417 = vmatprep.subr.bf16.mxu0 0
    %418 = vmatpush1.bf16.msra.mxu0 0
    %419 = vmatprep.subr.bf16.mxu0 0
    %420 = vmatpush1.bf16.msra.mxu0 0
    %421 = vmatprep.subr.bf16.mxu0 0
    %422 = vmatpush1.bf16.msra.mxu0 0
    %423 = vmatprep.subr.bf16.mxu0 0
    %424 = vmatpush1.bf16.msra.mxu0 0
    %425 = vmatprep.subr.bf16.mxu0 0
    %426 = vmatpush1.bf16.msra.mxu0 0
    %427 = vmatprep.subr.bf16.mxu0 0
    %428 = vmatpush1.bf16.msra.mxu0 0
    %429 = vmatprep.subr.bf16.mxu0 0
    %430 = vmatpush1.bf16.msra.mxu0 0
    %431 = vmatprep.subr.bf16.mxu0 0
    %432 = vmatpush1.bf16.msra.mxu0 0
    %433 = vmatprep.subr.bf16.mxu0 0
    %434 = vmatpush1.bf16.msra.mxu0 0
    %435 = vmatprep.subr.bf16.mxu0 0
    %436 = vmatpush1.bf16.msra.mxu0 0
    %437 = vmatprep.mubr.bf16.mxu0 0
    %438 = vmatmul.mubr.bf16.gmra.mrb[0].mxu0 %v280
    %v439 = vpop.f32.mrb[0].mxu0
    %v440 = vadd.f32 %v168, %v439
    %v441 = vpop.f32.mrb[0].mxu0
    %v442 = vadd.f32 %v172, %v441
    %v443 = vpop.f32.mrb[0].mxu0
    %v444 = vpop.f32.mrb[0].mxu0
    %445 = vdwg.mxu0
    %446 = vmatprep.subr.bf16.mxu0 0
    %447 = vmatpush1.bf16.msra.mxu0 %v250
    %448 = vmatprep.subr.bf16.mxu0 0
    %449 = vmatpush1.bf16.msra.mxu0 %v259
    %450 = vmatprep.subr.bf16.mxu0 0
    %451 = vmatpush1.bf16.msra.mxu0 0
    %452 = vmatprep.subr.bf16.mxu0 0
    %453 = vmatpush1.bf16.msra.mxu0 0
    %454 = vmatprep.subr.bf16.mxu0 0
    %455 = vmatpush1.bf16.msra.mxu0 0
    %456 = vmatprep.subr.bf16.mxu0 0
    %457 = vmatpush1.bf16.msra.mxu0 0
    %458 = vmatprep.subr.bf16.mxu0 0
    %459 = vmatpush1.bf16.msra.mxu0 0
    %460 = vmatprep.subr.bf16.mxu0 0
    %461 = vmatpush1.bf16.msra.mxu0 0
    %462 = vmatprep.subr.bf16.mxu0 0
    %463 = vmatpush1.bf16.msra.mxu0 0
    %464 = vmatprep.subr.bf16.mxu0 0
    %465 = vmatpush1.bf16.msra.mxu0 0
    %466 = vmatprep.subr.bf16.mxu0 0
    %467 = vmatpush1.bf16.msra.mxu0 0
    %468 = vmatprep.subr.bf16.mxu0 0
    %469 = vmatpush1.bf16.msra.mxu0 0
    %470 = vmatprep.subr.bf16.mxu0 0
    %471 = vmatpush1.bf16.msra.mxu0 0
    %472 = vmatprep.subr.bf16.mxu0 0
    %473 = vmatpush1.bf16.msra.mxu0 0
    %474 = vmatprep.subr.bf16.mxu0 0
    %475 = vmatpush1.bf16.msra.mxu0 0
    %476 = vmatprep.subr.bf16.mxu0 0
    %477 = vmatpush1.bf16.msra.mxu0 0
    %478 = vmatprep.mubr.bf16.mxu0 0
    %479 = vmatmul.mubr.bf16.gmra.mrb[0].mxu0 %v280
    %v480 = vpop.f32.mrb[0].mxu0
    %v481 = vadd.f32 %v176, %v480
    %v482 = vpop.f32.mrb[0].mxu0
    %v483 = vpop.f32.mrb[0].mxu0
    %v484 = vpop.f32.mrb[0].mxu0
    %485 = vdwg.mxu0
    %v486 = vmul.f32 %v317, 0.5
    %v487 = vmul.f32 %v319, 0.5
    %v488 = vmul.f32 %v358, 0.5
    %v489 = vmul.f32 %v360, 0.5
    %v490 = vmul.f32 %v399, 0.5
    %v491 = vmul.f32 %v401, 0.5
    %v492 = vmul.f32 %v440, 0.5
    %v493 = vmul.f32 %v442, 0.5
    %v494 = vmul.f32 %v481, 0.5
    %v495 = vmul.f32 %v317, 0.70710677
    %v496 = vmul.f32 %v319, 0.70710677
    %v497 = vmul.f32 %v358, 0.70710677
    %v498 = vmul.f32 %v360, 0.70710677
    %v499 = vmul.f32 %v399, 0.70710677
    %v500 = vmul.f32 %v401, 0.70710677
    %v501 = vmul.f32 %v440, 0.70710677
    %v502 = vmul.f32 %v442, 0.70710677
    %v503 = vmul.f32 %v481, 0.70710677
    %vm504 = vcmp.ge.f32.partialorder %v495, 0.0
    %vm505 = vcmp.ge.f32.partialorder %v496, 0.0
    %vm506 = vcmp.ge.f32.partialorder %v497, 0.0
    %vm507 = vcmp.ge.f32.partialorder %v498, 0.0
    %vm508 = vcmp.ge.f32.partialorder %v499, 0.0
    %vm509 = vcmp.ge.f32.partialorder %v500, 0.0
    %vm510 = vcmp.ge.f32.partialorder %v501, 0.0
    %vm511 = vcmp.ge.f32.partialorder %v502, 0.0
    %vm512 = vcmp.ge.f32.partialorder %v503, 0.0
    %v513 = vsel %vm504, 1.0, -1.0
    %v514 = vsel %vm505, 1.0, -1.0
    %v515 = vsel %vm506, 1.0, -1.0
    %v516 = vsel %vm507, 1.0, -1.0
    %v517 = vsel %vm508, 1.0, -1.0
    %v518 = vsel %vm509, 1.0, -1.0
    %v519 = vsel %vm510, 1.0, -1.0
    %v520 = vsel %vm511, 1.0, -1.0
    %v521 = vsel %vm512, 1.0, -1.0
    %v522 = vand.u32 2147483647, %v495
    %v523 = vand.u32 2147483647, %v496
    %v524 = vand.u32 2147483647, %v497
    %v525 = vand.u32 2147483647, %v498
    %v526 = vand.u32 2147483647, %v499
    %v527 = vand.u32 2147483647, %v500
    %v528 = vand.u32 2147483647, %v501
    %v529 = vand.u32 2147483647, %v502
    %v530 = vand.u32 2147483647, %v503
    %v531 = vmul.f32 %v522, 0.3275911
    %v532 = vmul.f32 %v523, 0.3275911
    %v533 = vmul.f32 %v524, 0.3275911
    %v534 = vmul.f32 %v525, 0.3275911
    %v535 = vmul.f32 %v526, 0.3275911
    %v536 = vmul.f32 %v527, 0.3275911
    %v537 = vmul.f32 %v528, 0.3275911
    %v538 = vmul.f32 %v529, 0.3275911
    %v539 = vmul.f32 %v530, 0.3275911
    %v540 = vadd.f32 %v531, 1.0
    %v541 = vadd.f32 %v532, 1.0
    %v542 = vadd.f32 %v533, 1.0
    %v543 = vadd.f32 %v534, 1.0
    %v544 = vadd.f32 %v535, 1.0
    %v545 = vadd.f32 %v536, 1.0
    %v546 = vadd.f32 %v537, 1.0
    %v547 = vadd.f32 %v538, 1.0
    %v548 = vadd.f32 %v539, 1.0
    %v549 = vrcp.pop %v540
    %v550 = vmul.f32 1.0, %v549
    %v551 = vrcp.pop %v541
    %v552 = vmul.f32 1.0, %v551
    %v553 = vrcp.pop %v542
    %v554 = vmul.f32 1.0, %v553
    %v555 = vrcp.pop %v543
    %v556 = vmul.f32 1.0, %v555
    %v557 = vrcp.pop %v544
    %v558 = vmul.f32 1.0, %v557
    %v559 = vrcp.pop %v545
    %v560 = vmul.f32 1.0, %v559
    %v561 = vrcp.pop %v546
    %v562 = vmul.f32 1.0, %v561
    %v563 = vrcp.pop %v547
    %v564 = vmul.f32 1.0, %v563
    %v565 = vrcp.pop %v548
    %v566 = vmul.f32 1.0, %v565
    %v567 = vmul.f32 %v550, 1.0614054
    %v568 = vmul.f32 %v552, 1.0614054
    %v569 = vmul.f32 %v554, 1.0614054
    %v570 = vmul.f32 %v556, 1.0614054
    %v571 = vmul.f32 %v558, 1.0614054
    %v572 = vmul.f32 %v560, 1.0614054
    %v573 = vmul.f32 %v562, 1.0614054
    %v574 = vmul.f32 %v564, 1.0614054
    %v575 = vmul.f32 %v566, 1.0614054
    %v576 = vadd.f32 %v567, -1.4531521
    %v577 = vadd.f32 %v568, -1.4531521
    %v578 = vadd.f32 %v569, -1.4531521
    %v579 = vadd.f32 %v570, -1.4531521
    %v580 = vadd.f32 %v571, -1.4531521
    %v581 = vadd.f32 %v572, -1.4531521
    %v582 = vadd.f32 %v573, -1.4531521
    %v583 = vadd.f32 %v574, -1.4531521
    %v584 = vadd.f32 %v575, -1.4531521
    %v585 = vmul.f32 %v576, %v550
    %v586 = vmul.f32 %v577, %v552
    %v587 = vmul.f32 %v578, %v554
    %v588 = vmul.f32 %v579, %v556
    %v589 = vmul.f32 %v580, %v558
    %v590 = vmul.f32 %v581, %v560
    %v591 = vmul.f32 %v582, %v562
    %v592 = vmul.f32 %v583, %v564
    %v593 = vmul.f32 %v584, %v566
    %v594 = vadd.f32 %v585, 1.4214138
    %v595 = vadd.f32 %v586, 1.4214138
    %v596 = vadd.f32 %v587, 1.4214138
    %v597 = vadd.f32 %v588, 1.4214138
    %v598 = vadd.f32 %v589, 1.4214138
    %v599 = vadd.f32 %v590, 1.4214138
    %v600 = vadd.f32 %v591, 1.4214138
    %v601 = vadd.f32 %v592, 1.4214138
    %v602 = vadd.f32 %v593, 1.4214138
    %v603 = vmul.f32 %v594, %v550
    %v604 = vmul.f32 %v595, %v552
    %v605 = vmul.f32 %v596, %v554
    %v606 = vmul.f32 %v597, %v556
    %v607 = vmul.f32 %v598, %v558
    %v608 = vmul.f32 %v599, %v560
    %v609 = vmul.f32 %v600, %v562
    %v610 = vmul.f32 %v601, %v564
    %v611 = vmul.f32 %v602, %v566
    %v612 = vadd.f32 %v603, -0.28449672
    %v613 = vadd.f32 %v604, -0.28449672
    %v614 = vadd.f32 %v605, -0.28449672
    %v615 = vadd.f32 %v606, -0.28449672
    %v616 = vadd.f32 %v607, -0.28449672
    %v617 = vadd.f32 %v608, -0.28449672
    %v618 = vadd.f32 %v609, -0.28449672
    %v619 = vadd.f32 %v610, -0.28449672
    %v620 = vadd.f32 %v611, -0.28449672
    %v621 = vmul.f32 %v612, %v550
    %v622 = vmul.f32 %v613, %v552
    %v623 = vmul.f32 %v614, %v554
    %v624 = vmul.f32 %v615, %v556
    %v625 = vmul.f32 %v616, %v558
    %v626 = vmul.f32 %v617, %v560
    %v627 = vmul.f32 %v618, %v562
    %v628 = vmul.f32 %v619, %v564
    %v629 = vmul.f32 %v620, %v566
    %v630 = vadd.f32 %v621, 0.2548296
    %v631 = vadd.f32 %v622, 0.2548296
    %v632 = vadd.f32 %v623, 0.2548296
    %v633 = vadd.f32 %v624, 0.2548296
    %v634 = vadd.f32 %v625, 0.2548296
    %v635 = vadd.f32 %v626, 0.2548296
    %v636 = vadd.f32 %v627, 0.2548296
    %v637 = vadd.f32 %v628, 0.2548296
    %v638 = vadd.f32 %v629, 0.2548296
    %v639 = vmul.f32 %v630, %v550
    %v640 = vmul.f32 %v631, %v552
    %v641 = vmul.f32 %v632, %v554
    %v642 = vmul.f32 %v633, %v556
    %v643 = vmul.f32 %v634, %v558
    %v644 = vmul.f32 %v635, %v560
    %v645 = vmul.f32 %v636, %v562
    %v646 = vmul.f32 %v637, %v564
    %v647 = vmul.f32 %v638, %v566
    %v648 = vsub.f32 0.0, %v522
    %v649 = vsub.f32 0.0, %v523
    %v650 = vsub.f32 0.0, %v524
    %v651 = vsub.f32 0.0, %v525
    %v652 = vsub.f32 0.0, %v526
    %v653 = vsub.f32 0.0, %v527
    %v654 = vsub.f32 0.0, %v528
    %v655 = vsub.f32 0.0, %v529
    %v656 = vsub.f32 0.0, %v530
    %v657 = vmul.f32 %v648, %v522
    %v658 = vmul.f32 %v649, %v523
    %v659 = vmul.f32 %v650, %v524
    %v660 = vmul.f32 %v651, %v525
    %v661 = vmul.f32 %v652, %v526
    %v662 = vmul.f32 %v653, %v527
    %v663 = vmul.f32 %v654, %v528
    %v664 = vmul.f32 %v655, %v529
    %v665 = vmul.f32 %v656, %v530
    %v666 = vmul.f32 %v657, 1.442695
    %v667 = vpow.pop %v666
    %v668 = vmul.f32 %v658, 1.442695
    %v669 = vpow.pop %v668
    %v670 = vmul.f32 %v659, 1.442695
    %v671 = vpow.pop %v670
    %v672 = vmul.f32 %v660, 1.442695
    %v673 = vpow.pop %v672
    %v674 = vmul.f32 %v661, 1.442695
    %v675 = vpow.pop %v674
    %v676 = vmul.f32 %v662, 1.442695
    %v677 = vpow.pop %v676
    %v678 = vmul.f32 %v663, 1.442695
    %v679 = vpow.pop %v678
    %v680 = vmul.f32 %v664, 1.442695
    %v681 = vpow.pop %v680
    %v682 = vmul.f32 %v665, 1.442695
    %v683 = vpow.pop %v682
    %v684 = vmul.f32 %v639, %v667
    %v685 = vmul.f32 %v640, %v669
    %v686 = vmul.f32 %v641, %v671
    %v687 = vmul.f32 %v642, %v673
    %v688 = vmul.f32 %v643, %v675
    %v689 = vmul.f32 %v644, %v677
    %v690 = vmul.f32 %v645, %v679
    %v691 = vmul.f32 %v646, %v681
    %v692 = vmul.f32 %v647, %v683
    %v693 = vsub.f32 1.0, %v684
    %v694 = vsub.f32 1.0, %v685
    %v695 = vsub.f32 1.0, %v686
    %v696 = vsub.f32 1.0, %v687
    %v697 = vsub.f32 1.0, %v688
    %v698 = vsub.f32 1.0, %v689
    %v699 = vsub.f32 1.0, %v690
    %v700 = vsub.f32 1.0, %v691
    %v701 = vsub.f32 1.0, %v692
    %v702 = vmul.f32 %v513, %v693
    %v703 = vmul.f32 %v514, %v694
    %v704 = vmul.f32 %v515, %v695
    %v705 = vmul.f32 %v516, %v696
    %v706 = vmul.f32 %v517, %v697
    %v707 = vmul.f32 %v518, %v698
    %v708 = vmul.f32 %v519, %v699
    %v709 = vmul.f32 %v520, %v700
    %v710 = vmul.f32 %v521, %v701
    %v711 = vadd.f32 %v702, 1.0
    %v712 = vadd.f32 %v703, 1.0
    %v713 = vadd.f32 %v704, 1.0
    %v714 = vadd.f32 %v705, 1.0
    %v715 = vadd.f32 %v706, 1.0
    %v716 = vadd.f32 %v707, 1.0
    %v717 = vadd.f32 %v708, 1.0
    %v718 = vadd.f32 %v709, 1.0
    %v719 = vadd.f32 %v710, 1.0
    %v720 = vmul.f32 %v486, %v711
    %v721 = vmul.f32 %v487, %v712
    %v722 = vmul.f32 %v488, %v713
    %v723 = vmul.f32 %v489, %v714
    %v724 = vmul.f32 %v490, %v715
    %v725 = vmul.f32 %v491, %v716
    %v726 = vmul.f32 %v492, %v717
    %v727 = vmul.f32 %v493, %v718
    %v728 = vmul.f32 %v494, %v719
    %v729 = vpack.c.bf16 %v720, %v720
    %v730 = vpack.c.bf16 %v721, %v721
    %v731 = vpack.c.bf16 %v722, %v722
    %v732 = vpack.c.bf16 %v723, %v723
    %v733 = vpack.c.bf16 %v724, %v724
    %v734 = vpack.c.bf16 %v725, %v725
    %v735 = vpack.c.bf16 %v726, %v726
    %v736 = vpack.c.bf16 %v727, %v727
    %v737 = vpack.c.bf16 %v728, %v728
    %v738 = vld [vmem:[#allocation8] sm:$0xff]
    %v739 = vld [vmem:[#allocation8 + $0x8] sm:$0xff]
    %v740 = vld [vmem:[#allocation8 + $0x10] sm:$0xff]
    %v741 = vld [vmem:[#allocation8 + $0x18] sm:$0xff]
    %v742 = vld [vmem:[#allocation8 + $0x20] sm:$0xf]
    %v743 = vld [vmem:[#allocation8 + $0x24] sm:$0xff]
    %v744 = vld [vmem:[#allocation8 + $0x2c] sm:$0xff]
    %v745 = vld [vmem:[#allocation8 + $0x34] sm:$0xff]
    %v746 = vld [vmem:[#allocation8 + $0x3c] sm:$0xff]
    %v747 = vld [vmem:[#allocation8 + $0x44] sm:$0xf]
    %v748 = vld [vmem:[#allocation8 + $0x48] sm:$0xff]
    %v749 = vld [vmem:[#allocation8 + $0x50] sm:$0xff]
    %v750 = vld [vmem:[#allocation8 + $0x58] sm:$0xff]
    %v751 = vld [vmem:[#allocation8 + $0x60] sm:$0xff]
    %v752 = vld [vmem:[#allocation8 + $0x68] sm:$0xf]
    %v753 = vld [vmem:[#allocation8 + $0x6c] sm:$0xff]
    %v754 = vld [vmem:[#allocation8 + $0x74] sm:$0xff]
    %v755 = vld [vmem:[#allocation8 + $0x7c] sm:$0xff]
    %v756 = vld [vmem:[#allocation8 + $0x84] sm:$0xff]
    %v757 = vld [vmem:[#allocation8 + $0x8c] sm:$0xf]
    %v758 = vld [vmem:[#allocation8 + $0x90] sm:$0xff]
    %v759 = vld [vmem:[#allocation8 + $0x98] sm:$0xff]
    %v760 = vld [vmem:[#allocation8 + $0xa0] sm:$0xff]
    %v761 = vld [vmem:[#allocation8 + $0xa8] sm:$0xff]
    %v762 = vld [vmem:[#allocation8 + $0xb0] sm:$0xf]
    %v763 = vld [vmem:[#allocation8 + $0xb4] sm:$0xff]
    %v764 = vld [vmem:[#allocation8 + $0xbc] sm:$0xff]
    %v765 = vld [vmem:[#allocation8 + $0xc4] sm:$0xff]
    %v766 = vld [vmem:[#allocation8 + $0xcc] sm:$0xff]
    %v767 = vld [vmem:[#allocation8 + $0xd4] sm:$0xf]
    %v768 = vld [vmem:[#allocation8 + $0xd8] sm:$0xff]
    %v769 = vld [vmem:[#allocation8 + $0xe0] sm:$0xff]
    %v770 = vld [vmem:[#allocation8 + $0xe8] sm:$0xff]
    %v771 = vld [vmem:[#allocation8 + $0xf0] sm:$0xff]
    %v772 = vld [vmem:[#allocation8 + $0xf8] sm:$0xf]
    %v773 = vld [vmem:[#allocation8 + $0xfc] sm:$0xff]
    %v774 = vld [vmem:[#allocation8 + $0x104] sm:$0xff]
    %v775 = vld [vmem:[#allocation8 + $0x10c] sm:$0xff]
    %v776 = vld [vmem:[#allocation8 + $0x114] sm:$0xff]
    %v777 = vld [vmem:[#allocation8 + $0x11c] sm:$0xf]
    %v778 = vld [vmem:[#allocation8 + $0x120] sm:$0xff]
    %v779 = vld [vmem:[#allocation8 + $0x128] sm:$0xff]
    %v780 = vld [vmem:[#allocation8 + $0x130] sm:$0xff]
    %v781 = vld [vmem:[#allocation8 + $0x138] sm:$0xff]
    %v782 = vld [vmem:[#allocation8 + $0x140] sm:$0xf]
    %v783 = vld [vmem:[#allocation8 + $0x144] sm:$0xff]
    %v784 = vld [vmem:[#allocation8 + $0x14c] sm:$0xff]
    %v785 = vld [vmem:[#allocation8 + $0x154] sm:$0xff]
    %v786 = vld [vmem:[#allocation8 + $0x15c] sm:$0xff]
    %v787 = vld [vmem:[#allocation8 + $0x164] sm:$0xf]
    %v788 = vld [vmem:[#allocation8 + $0x168] sm:$0xff]
    %v789 = vld [vmem:[#allocation8 + $0x170] sm:$0xff]
    %v790 = vld [vmem:[#allocation8 + $0x178] sm:$0xff]
    %v791 = vld [vmem:[#allocation8 + $0x180] sm:$0xff]
    %v792 = vld [vmem:[#allocation8 + $0x188] sm:$0xf]
    %v793 = vld [vmem:[#allocation8 + $0x18c] sm:$0xff]
    %v794 = vld [vmem:[#allocation8 + $0x194] sm:$0xff]
    %v795 = vld [vmem:[#allocation8 + $0x19c] sm:$0xff]
    %v796 = vld [vmem:[#allocation8 + $0x1a4] sm:$0xff]
    %v797 = vld [vmem:[#allocation8 + $0x1ac] sm:$0xf]
    %v798 = vld [vmem:[#allocation8 + $0x1b0] sm:$0xff]
    %v799 = vld [vmem:[#allocation8 + $0x1b8] sm:$0xff]
    %v800 = vld [vmem:[#allocation8 + $0x1c0] sm:$0xff]
    %v801 = vld [vmem:[#allocation8 + $0x1c8] sm:$0xff]
    %v802 = vld [vmem:[#allocation8 + $0x1d0] sm:$0xf]
    %v803 = vld [vmem:[#allocation8 + $0x1d4] sm:$0xff]
    %v804 = vld [vmem:[#allocation8 + $0x1dc] sm:$0xff]
    %v805 = vld [vmem:[#allocation8 + $0x1e4] sm:$0xff]
    %v806 = vld [vmem:[#allocation8 + $0x1ec] sm:$0xff]
    %v807 = vld [vmem:[#allocation8 + $0x1f4] sm:$0xf]
    %v808 = vld [vmem:[#allocation8 + $0x1f8] sm:$0xff]
    %v809 = vld [vmem:[#allocation8 + $0x200] sm:$0xff]
    %v810 = vld [vmem:[#allocation8 + $0x208] sm:$0xff]
    %v811 = vld [vmem:[#allocation8 + $0x210] sm:$0xff]
    %v812 = vld [vmem:[#allocation8 + $0x218] sm:$0xf]
    %v813 = vld [vmem:[#allocation8 + $0x21c] sm:$0xff]
    %v814 = vld [vmem:[#allocation8 + $0x224] sm:$0xff]
    %v815 = vld [vmem:[#allocation8 + $0x22c] sm:$0xff]
    %v816 = vld [vmem:[#allocation8 + $0x234] sm:$0xff]
    %v817 = vld [vmem:[#allocation8 + $0x23c] sm:$0xf]
    %v818 = vld [vmem:[#allocation8 + $0x240] sm:$0xff]
    %v819 = vld [vmem:[#allocation8 + $0x248] sm:$0xff]
    %v820 = vld [vmem:[#allocation8 + $0x250] sm:$0xff]
    %v821 = vld [vmem:[#allocation8 + $0x258] sm:$0xff]
    %v822 = vld [vmem:[#allocation8 + $0x260] sm:$0xf]
    %v823 = vld [vmem:[#allocation8 + $0x264] sm:$0xff]
    %v824 = vld [vmem:[#allocation8 + $0x26c] sm:$0xff]
    %v825 = vld [vmem:[#allocation8 + $0x274] sm:$0xff]
    %v826 = vld [vmem:[#allocation8 + $0x27c] sm:$0xff]
    %v827 = vld [vmem:[#allocation8 + $0x284] sm:$0xf]
    %v828 = vld [vmem:[#allocation8 + $0x288] sm:$0xff]
    %v829 = vld [vmem:[#allocation8 + $0x290] sm:$0xff]
    %v830 = vld [vmem:[#allocation8 + $0x298] sm:$0xff]
    %v831 = vld [vmem:[#allocation8 + $0x2a0] sm:$0xff]
    %v832 = vld [vmem:[#allocation8 + $0x2a8] sm:$0xf]
    %v833 = vld [vmem:[#allocation8 + $0x2ac] sm:$0xff]
    %v834 = vld [vmem:[#allocation8 + $0x2b4] sm:$0xff]
    %v835 = vld [vmem:[#allocation8 + $0x2bc] sm:$0xff]
    %v836 = vld [vmem:[#allocation8 + $0x2c4] sm:$0xff]
    %v837 = vld [vmem:[#allocation8 + $0x2cc] sm:$0xf]
    %v838 = vld [vmem:[#allocation8 + $0x2d0] sm:$0xff]
    %v839 = vld [vmem:[#allocation8 + $0x2d8] sm:$0xff]
    %v840 = vld [vmem:[#allocation8 + $0x2e0] sm:$0xff]
    %v841 = vld [vmem:[#allocation8 + $0x2e8] sm:$0xff]
    %v842 = vld [vmem:[#allocation8 + $0x2f0] sm:$0xf]
    %v843 = vld [vmem:[#allocation8 + $0x2f4] sm:$0xff]
    %v844 = vld [vmem:[#allocation8 + $0x2fc] sm:$0xff]
    %v845 = vld [vmem:[#allocation8 + $0x304] sm:$0xff]
    %v846 = vld [vmem:[#allocation8 + $0x30c] sm:$0xff]
    %v847 = vld [vmem:[#allocation8 + $0x314] sm:$0xf]
    %v848 = vld [vmem:[#allocation8 + $0x318] sm:$0xff]
    %v849 = vld [vmem:[#allocation8 + $0x320] sm:$0xff]
    %v850 = vld [vmem:[#allocation8 + $0x328] sm:$0xff]
    %v851 = vld [vmem:[#allocation8 + $0x330] sm:$0xff]
    %v852 = vld [vmem:[#allocation8 + $0x338] sm:$0xf]
    %v853 = vld [vmem:[#allocation8 + $0x33c] sm:$0xff]
    %v854 = vld [vmem:[#allocation8 + $0x344] sm:$0xff]
    %v855 = vld [vmem:[#allocation8 + $0x34c] sm:$0xff]
    %v856 = vld [vmem:[#allocation8 + $0x354] sm:$0xff]
    %v857 = vld [vmem:[#allocation8 + $0x35c] sm:$0xf]
    %v858 = vld [vmem:[#allocation8 + $0x360] sm:$0xff]
    %v859 = vld [vmem:[#allocation8 + $0x368] sm:$0xff]
    %v860 = vld [vmem:[#allocation8 + $0x370] sm:$0xff]
    %v861 = vld [vmem:[#allocation8 + $0x378] sm:$0xff]
    %v862 = vld [vmem:[#allocation8 + $0x380] sm:$0xf]
    %v863 = vld [vmem:[#allocation8 + $0x384] sm:$0xff]
    %v864 = vld [vmem:[#allocation8 + $0x38c] sm:$0xff]
    %v865 = vld [vmem:[#allocation8 + $0x394] sm:$0xff]
    %v866 = vld [vmem:[#allocation8 + $0x39c] sm:$0xff]
    %v867 = vld [vmem:[#allocation8 + $0x3a4] sm:$0xf]
    %v868 = vld [vmem:[#allocation8 + $0x3a8] sm:$0xff]
    %v869 = vld [vmem:[#allocation8 + $0x3b0] sm:$0xff]
    %v870 = vld [vmem:[#allocation8 + $0x3b8] sm:$0xff]
    %v871 = vld [vmem:[#allocation8 + $0x3c0] sm:$0xff]
    %v872 = vld [vmem:[#allocation8 + $0x3c8] sm:$0xf]
    %v873 = vld [vmem:[#allocation8 + $0x3cc] sm:$0xff]
    %v874 = vld [vmem:[#allocation8 + $0x3d4] sm:$0xff]
    %v875 = vld [vmem:[#allocation8 + $0x3dc] sm:$0xff]
    %v876 = vld [vmem:[#allocation8 + $0x3e4] sm:$0xff]
    %v877 = vld [vmem:[#allocation8 + $0x3ec] sm:$0xf]
    %v878 = vld [vmem:[#allocation8 + $0x3f0] sm:$0xff]
    %v879 = vld [vmem:[#allocation8 + $0x3f8] sm:$0xff]
    %v880 = vld [vmem:[#allocation8 + $0x400] sm:$0xff]
    %v881 = vld [vmem:[#allocation8 + $0x408] sm:$0xff]
    %v882 = vld [vmem:[#allocation8 + $0x410] sm:$0xf]
    %v883 = vld [vmem:[#allocation8 + $0x414] sm:$0xff]
    %v884 = vld [vmem:[#allocation8 + $0x41c] sm:$0xff]
    %v885 = vld [vmem:[#allocation8 + $0x424] sm:$0xff]
    %v886 = vld [vmem:[#allocation8 + $0x42c] sm:$0xff]
    %v887 = vld [vmem:[#allocation8 + $0x434] sm:$0xf]
    %v888 = vld [vmem:[#allocation8 + $0x438] sm:$0xff]
    %v889 = vld [vmem:[#allocation8 + $0x440] sm:$0xff]
    %v890 = vld [vmem:[#allocation8 + $0x448] sm:$0xff]
    %v891 = vld [vmem:[#allocation8 + $0x450] sm:$0xff]
    %v892 = vld [vmem:[#allocation8 + $0x458] sm:$0xf]
    %v893 = vld [vmem:[#allocation8 + $0x45c] sm:$0xff]
    %v894 = vld [vmem:[#allocation8 + $0x464] sm:$0xff]
    %v895 = vld [vmem:[#allocation8 + $0x46c] sm:$0xff]
    %v896 = vld [vmem:[#allocation8 + $0x474] sm:$0xff]
    %v897 = vld [vmem:[#allocation8 + $0x47c] sm:$0xf]
    %v898 = vld [vmem:[#allocation8 + $0x480] sm:$0xff]
    %v899 = vld [vmem:[#allocation8 + $0x488] sm:$0xff]
    %v900 = vld [vmem:[#allocation8 + $0x490] sm:$0xff]
    %v901 = vld [vmem:[#allocation8 + $0x498] sm:$0xff]
    %v902 = vld [vmem:[#allocation8 + $0x4a0] sm:$0xf]
    %v903 = vld [vmem:[#allocation8 + $0x4a4] sm:$0xff]
    %v904 = vld [vmem:[#allocation8 + $0x4ac] sm:$0xff]
    %v905 = vld [vmem:[#allocation8 + $0x4b4] sm:$0xff]
    %v906 = vld [vmem:[#allocation8 + $0x4bc] sm:$0xff]
    %v907 = vld [vmem:[#allocation8 + $0x4c4] sm:$0xf]
    %v908 = vld [vmem:[#allocation8 + $0x4c8] sm:$0xff]
    %v909 = vld [vmem:[#allocation8 + $0x4d0] sm:$0xff]
    %v910 = vld [vmem:[#allocation8 + $0x4d8] sm:$0xff]
    %v911 = vld [vmem:[#allocation8 + $0x4e0] sm:$0xff]
    %v912 = vld [vmem:[#allocation8 + $0x4e8] sm:$0xf]
    %v913 = vld [vmem:[#allocation8 + $0x4ec] sm:$0xff]
    %v914 = vld [vmem:[#allocation8 + $0x4f4] sm:$0xff]
    %v915 = vld [vmem:[#allocation8 + $0x4fc] sm:$0xff]
    %v916 = vld [vmem:[#allocation8 + $0x504] sm:$0xff]
    %v917 = vld [vmem:[#allocation8 + $0x50c] sm:$0xf]
    %v918 = vld [vmem:[#allocation8 + $0x510] sm:$0xff]
    %v919 = vld [vmem:[#allocation8 + $0x518] sm:$0xff]
    %v920 = vld [vmem:[#allocation8 + $0x520] sm:$0xff]
    %v921 = vld [vmem:[#allocation8 + $0x528] sm:$0xff]
    %v922 = vld [vmem:[#allocation8 + $0x530] sm:$0xf]
    %v923 = vld [vmem:[#allocation8 + $0x534] sm:$0xff]
    %v924 = vld [vmem:[#allocation8 + $0x53c] sm:$0xff]
    %v925 = vld [vmem:[#allocation8 + $0x544] sm:$0xff]
    %v926 = vld [vmem:[#allocation8 + $0x54c] sm:$0xff]
    %v927 = vld [vmem:[#allocation8 + $0x554] sm:$0xf]
    %v928 = vld [vmem:[#allocation8 + $0x558] sm:$0xff]
    %v929 = vld [vmem:[#allocation8 + $0x560] sm:$0xff]
    %v930 = vld [vmem:[#allocation8 + $0x568] sm:$0xff]
    %v931 = vld [vmem:[#allocation8 + $0x570] sm:$0xff]
    %v932 = vld [vmem:[#allocation8 + $0x578] sm:$0xf]
    %v933 = vld [vmem:[#allocation8 + $0x57c] sm:$0xff]
    %v934 = vld [vmem:[#allocation8 + $0x584] sm:$0xff]
    %v935 = vld [vmem:[#allocation8 + $0x58c] sm:$0xff]
    %v936 = vld [vmem:[#allocation8 + $0x594] sm:$0xff]
    %v937 = vld [vmem:[#allocation8 + $0x59c] sm:$0xf]
    %v938 = vld [vmem:[#allocation8 + $0x5a0] sm:$0xff]
    %v939 = vld [vmem:[#allocation8 + $0x5a8] sm:$0xff]
    %v940 = vld [vmem:[#allocation8 + $0x5b0] sm:$0xff]
    %v941 = vld [vmem:[#allocation8 + $0x5b8] sm:$0xff]
    %v942 = vld [vmem:[#allocation8 + $0x5c0] sm:$0xf]
    %v943 = vld [vmem:[#allocation8 + $0x5c4] sm:$0xff]
    %v944 = vld [vmem:[#allocation8 + $0x5cc] sm:$0xff]
    %v945 = vld [vmem:[#allocation8 + $0x5d4] sm:$0xff]
    %v946 = vld [vmem:[#allocation8 + $0x5dc] sm:$0xff]
    %v947 = vld [vmem:[#allocation8 + $0x5e4] sm:$0xf]
    %v948 = vld [vmem:[#allocation8 + $0x5e8] sm:$0xff]
    %v949 = vld [vmem:[#allocation8 + $0x5f0] sm:$0xff]
    %v950 = vld [vmem:[#allocation8 + $0x5f8] sm:$0xff]
    %v951 = vld [vmem:[#allocation8 + $0x600] sm:$0xff]
    %v952 = vld [vmem:[#allocation8 + $0x608] sm:$0xf]
    %v953 = vld [vmem:[#allocation8 + $0x60c] sm:$0xff]
    %v954 = vld [vmem:[#allocation8 + $0x614] sm:$0xff]
    %v955 = vld [vmem:[#allocation8 + $0x61c] sm:$0xff]
    %v956 = vld [vmem:[#allocation8 + $0x624] sm:$0xff]
    %v957 = vld [vmem:[#allocation8 + $0x62c] sm:$0xf]
    %v958 = vld [vmem:[#allocation8 + $0x630] sm:$0xff]
    %v959 = vld [vmem:[#allocation8 + $0x638] sm:$0xff]
    %v960 = vld [vmem:[#allocation8 + $0x640] sm:$0xff]
    %v961 = vld [vmem:[#allocation8 + $0x648] sm:$0xff]
    %v962 = vld [vmem:[#allocation8 + $0x650] sm:$0xf]
    %v963 = vld [vmem:[#allocation8 + $0x654] sm:$0xff]
    %v964 = vld [vmem:[#allocation8 + $0x65c] sm:$0xff]
    %v965 = vld [vmem:[#allocation8 + $0x664] sm:$0xff]
    %v966 = vld [vmem:[#allocation8 + $0x66c] sm:$0xff]
    %v967 = vld [vmem:[#allocation8 + $0x674] sm:$0xf]
    %v968 = vld [vmem:[#allocation8 + $0x678] sm:$0xff]
    %v969 = vld [vmem:[#allocation8 + $0x680] sm:$0xff]
    %v970 = vld [vmem:[#allocation8 + $0x688] sm:$0xff]
    %v971 = vld [vmem:[#allocation8 + $0x690] sm:$0xff]
    %v972 = vld [vmem:[#allocation8 + $0x698] sm:$0xf]
    %v973 = vld [vmem:[#allocation8 + $0x69c] sm:$0xff]
    %v974 = vld [vmem:[#allocation8 + $0x6a4] sm:$0xff]
    %v975 = vld [vmem:[#allocation8 + $0x6ac] sm:$0xff]
    %v976 = vld [vmem:[#allocation8 + $0x6b4] sm:$0xff]
    %v977 = vld [vmem:[#allocation8 + $0x6bc] sm:$0xf]
    %v978 = vld [vmem:[#allocation8 + $0x6c0] sm:$0xff]
    %v979 = vld [vmem:[#allocation8 + $0x6c8] sm:$0xff]
    %v980 = vld [vmem:[#allocation8 + $0x6d0] sm:$0xff]
    %v981 = vld [vmem:[#allocation8 + $0x6d8] sm:$0xff]
    %v982 = vld [vmem:[#allocation8 + $0x6e0] sm:$0xf]
    %v983 = vld [vmem:[#allocation8 + $0x6e4] sm:$0xff]
    %v984 = vld [vmem:[#allocation8 + $0x6ec] sm:$0xff]
    %v985 = vld [vmem:[#allocation8 + $0x6f4] sm:$0xff]
    %v986 = vld [vmem:[#allocation8 + $0x6fc] sm:$0xff]
    %v987 = vld [vmem:[#allocation8 + $0x704] sm:$0xf]
    %v988 = vld [vmem:[#allocation8 + $0x708] sm:$0xff]
    %v989 = vld [vmem:[#allocation8 + $0x710] sm:$0xff]
    %v990 = vld [vmem:[#allocation8 + $0x718] sm:$0xff]
    %v991 = vld [vmem:[#allocation8 + $0x720] sm:$0xff]
    %v992 = vld [vmem:[#allocation8 + $0x728] sm:$0xf]
    %v993 = vld [vmem:[#allocation8 + $0x72c] sm:$0xff]
    %v994 = vld [vmem:[#allocation8 + $0x734] sm:$0xff]
    %v995 = vld [vmem:[#allocation8 + $0x73c] sm:$0xff]
    %v996 = vld [vmem:[#allocation8 + $0x744] sm:$0xff]
    %v997 = vld [vmem:[#allocation8 + $0x74c] sm:$0xf]
    %v998 = vld [vmem:[#allocation8 + $0x750] sm:$0xff]
    %v999 = vld [vmem:[#allocation8 + $0x758] sm:$0xff]
    %v1000 = vld [vmem:[#allocation8 + $0x760] sm:$0xff]
    %v1001 = vld [vmem:[#allocation8 + $0x768] sm:$0xff]
    %v1002 = vld [vmem:[#allocation8 + $0x770] sm:$0xf]
    %v1003 = vld [vmem:[#allocation8 + $0x774] sm:$0xff]
    %v1004 = vld [vmem:[#allocation8 + $0x77c] sm:$0xff]
    %v1005 = vld [vmem:[#allocation8 + $0x784] sm:$0xff]
    %v1006 = vld [vmem:[#allocation8 + $0x78c] sm:$0xff]
    %v1007 = vld [vmem:[#allocation8 + $0x794] sm:$0xf]
    %v1008 = vld [vmem:[#allocation8 + $0x798] sm:$0xff]
    %v1009 = vld [vmem:[#allocation8 + $0x7a0] sm:$0xff]
    %v1010 = vld [vmem:[#allocation8 + $0x7a8] sm:$0xff]
    %v1011 = vld [vmem:[#allocation8 + $0x7b0] sm:$0xff]
    %v1012 = vld [vmem:[#allocation8 + $0x7b8] sm:$0xf]
    %v1013 = vld [vmem:[#allocation8 + $0x7bc] sm:$0xff]
    %v1014 = vld [vmem:[#allocation8 + $0x7c4] sm:$0xff]
    %v1015 = vld [vmem:[#allocation8 + $0x7cc] sm:$0xff]
    %v1016 = vld [vmem:[#allocation8 + $0x7d4] sm:$0xff]
    %v1017 = vld [vmem:[#allocation8 + $0x7dc] sm:$0xf]
    %v1018 = vld [vmem:[#allocation8 + $0x7e0] sm:$0xff]
    %v1019 = vld [vmem:[#allocation8 + $0x7e8] sm:$0xff]
    %v1020 = vld [vmem:[#allocation8 + $0x7f0] sm:$0xff]
    %v1021 = vld [vmem:[#allocation8 + $0x7f8] sm:$0xff]
    %v1022 = vld [vmem:[#allocation8 + $0x800] sm:$0xf]
    %v1023 = vld [vmem:[#allocation8 + $0x804] sm:$0xff]
    %v1024 = vld [vmem:[#allocation8 + $0x80c] sm:$0xff]
    %v1025 = vld [vmem:[#allocation8 + $0x814] sm:$0xff]
    %v1026 = vld [vmem:[#allocation8 + $0x81c] sm:$0xff]
    %v1027 = vld [vmem:[#allocation8 + $0x824] sm:$0xf]
    %v1028 = vld [vmem:[#allocation8 + $0x828] sm:$0xff]
    %v1029 = vld [vmem:[#allocation8 + $0x830] sm:$0xff]
    %v1030 = vld [vmem:[#allocation8 + $0x838] sm:$0xff]
    %v1031 = vld [vmem:[#allocation8 + $0x840] sm:$0xff]
    %v1032 = vld [vmem:[#allocation8 + $0x848] sm:$0xf]
    %v1033 = vld [vmem:[#allocation8 + $0x84c] sm:$0xff]
    %v1034 = vld [vmem:[#allocation8 + $0x854] sm:$0xff]
    %v1035 = vld [vmem:[#allocation8 + $0x85c] sm:$0xff]
    %v1036 = vld [vmem:[#allocation8 + $0x864] sm:$0xff]
    %v1037 = vld [vmem:[#allocation8 + $0x86c] sm:$0xf]
    %v1038 = vld [vmem:[#allocation8 + $0x870] sm:$0xff]
    %v1039 = vld [vmem:[#allocation8 + $0x878] sm:$0xff]
    %v1040 = vld [vmem:[#allocation8 + $0x880] sm:$0xff]
    %v1041 = vld [vmem:[#allocation8 + $0x888] sm:$0xff]
    %v1042 = vld [vmem:[#allocation8 + $0x890] sm:$0xf]
    %v1043 = vld [vmem:[#allocation8 + $0x894] sm:$0xff]
    %v1044 = vld [vmem:[#allocation8 + $0x89c] sm:$0xff]
    %v1045 = vld [vmem:[#allocation8 + $0x8a4] sm:$0xff]
    %v1046 = vld [vmem:[#allocation8 + $0x8ac] sm:$0xff]
    %v1047 = vld [vmem:[#allocation8 + $0x8b4] sm:$0xf]
    %v1048 = vld [vmem:[#allocation8 + $0x8b8] sm:$0xff]
    %v1049 = vld [vmem:[#allocation8 + $0x8c0] sm:$0xff]
    %v1050 = vld [vmem:[#allocation8 + $0x8c8] sm:$0xff]
    %v1051 = vld [vmem:[#allocation8 + $0x8d0] sm:$0xff]
    %v1052 = vld [vmem:[#allocation8 + $0x8d8] sm:$0xf]
    %v1053 = vld [vmem:[#allocation8 + $0x8dc] sm:$0xff]
    %v1054 = vld [vmem:[#allocation8 + $0x8e4] sm:$0xff]
    %v1055 = vld [vmem:[#allocation8 + $0x8ec] sm:$0xff]
    %v1056 = vld [vmem:[#allocation8 + $0x8f4] sm:$0xff]
    %v1057 = vld [vmem:[#allocation8 + $0x8fc] sm:$0xf]
    %v1058 = vld [vmem:[#allocation8 + $0x900] sm:$0xff]
    %v1059 = vld [vmem:[#allocation8 + $0x908] sm:$0xff]
    %v1060 = vld [vmem:[#allocation8 + $0x910] sm:$0xff]
    %v1061 = vld [vmem:[#allocation8 + $0x918] sm:$0xff]
    %v1062 = vld [vmem:[#allocation8 + $0x920] sm:$0xf]
    %v1063 = vld [vmem:[#allocation8 + $0x924] sm:$0xff]
    %v1064 = vld [vmem:[#allocation8 + $0x92c] sm:$0xff]
    %v1065 = vld [vmem:[#allocation8 + $0x934] sm:$0xff]
    %v1066 = vld [vmem:[#allocation8 + $0x93c] sm:$0xff]
    %v1067 = vld [vmem:[#allocation8 + $0x944] sm:$0xf]
    %v1068 = vld [vmem:[#allocation8 + $0x948] sm:$0xff]
    %v1069 = vld [vmem:[#allocation8 + $0x950] sm:$0xff]
    %v1070 = vld [vmem:[#allocation8 + $0x958] sm:$0xff]
    %v1071 = vld [vmem:[#allocation8 + $0x960] sm:$0xff]
    %v1072 = vld [vmem:[#allocation8 + $0x968] sm:$0xf]
    %v1073 = vld [vmem:[#allocation8 + $0x96c] sm:$0xff]
    %v1074 = vld [vmem:[#allocation8 + $0x974] sm:$0xff]
    %v1075 = vld [vmem:[#allocation8 + $0x97c] sm:$0xff]
    %v1076 = vld [vmem:[#allocation8 + $0x984] sm:$0xff]
    %v1077 = vld [vmem:[#allocation8 + $0x98c] sm:$0xf]
    %v1078 = vld [vmem:[#allocation8 + $0x990] sm:$0xff]
    %v1079 = vld [vmem:[#allocation8 + $0x998] sm:$0xff]
    %v1080 = vld [vmem:[#allocation8 + $0x9a0] sm:$0xff]
    %v1081 = vld [vmem:[#allocation8 + $0x9a8] sm:$0xff]
    %v1082 = vld [vmem:[#allocation8 + $0x9b0] sm:$0xf]
    %v1083 = vld [vmem:[#allocation8 + $0x9b4] sm:$0xff]
    %v1084 = vld [vmem:[#allocation8 + $0x9bc] sm:$0xff]
    %v1085 = vld [vmem:[#allocation8 + $0x9c4] sm:$0xff]
    %v1086 = vld [vmem:[#allocation8 + $0x9cc] sm:$0xff]
    %v1087 = vld [vmem:[#allocation8 + $0x9d4] sm:$0xf]
    %v1088 = vld [vmem:[#allocation8 + $0x9d8] sm:$0xff]
    %v1089 = vld [vmem:[#allocation8 + $0x9e0] sm:$0xff]
    %v1090 = vld [vmem:[#allocation8 + $0x9e8] sm:$0xff]
    %v1091 = vld [vmem:[#allocation8 + $0x9f0] sm:$0xff]
    %v1092 = vld [vmem:[#allocation8 + $0x9f8] sm:$0xf]
    %v1093 = vld [vmem:[#allocation8 + $0x9fc] sm:$0xff]
    %v1094 = vld [vmem:[#allocation8 + $0xa04] sm:$0xff]
    %v1095 = vld [vmem:[#allocation8 + $0xa0c] sm:$0xff]
    %v1096 = vld [vmem:[#allocation8 + $0xa14] sm:$0xff]
    %v1097 = vld [vmem:[#allocation8 + $0xa1c] sm:$0xf]
    %v1098 = vld [vmem:[#allocation8 + $0xa20] sm:$0xff]
    %v1099 = vld [vmem:[#allocation8 + $0xa28] sm:$0xff]
    %v1100 = vld [vmem:[#allocation8 + $0xa30] sm:$0xff]
    %v1101 = vld [vmem:[#allocation8 + $0xa38] sm:$0xff]
    %v1102 = vld [vmem:[#allocation8 + $0xa40] sm:$0xf]
    %v1103 = vld [vmem:[#allocation8 + $0xa44] sm:$0xff]
    %v1104 = vld [vmem:[#allocation8 + $0xa4c] sm:$0xff]
    %v1105 = vld [vmem:[#allocation8 + $0xa54] sm:$0xff]
    %v1106 = vld [vmem:[#allocation8 + $0xa5c] sm:$0xff]
    %v1107 = vld [vmem:[#allocation8 + $0xa64] sm:$0xf]
    %v1108 = vld [vmem:[#allocation8 + $0xa68] sm:$0xff]
    %v1109 = vld [vmem:[#allocation8 + $0xa70] sm:$0xff]
    %v1110 = vld [vmem:[#allocation8 + $0xa78] sm:$0xff]
    %v1111 = vld [vmem:[#allocation8 + $0xa80] sm:$0xff]
    %v1112 = vld [vmem:[#allocation8 + $0xa88] sm:$0xf]
    %v1113 = vld [vmem:[#allocation8 + $0xa8c] sm:$0xff]
    %v1114 = vld [vmem:[#allocation8 + $0xa94] sm:$0xff]
    %v1115 = vld [vmem:[#allocation8 + $0xa9c] sm:$0xff]
    %v1116 = vld [vmem:[#allocation8 + $0xaa4] sm:$0xff]
    %v1117 = vld [vmem:[#allocation8 + $0xaac] sm:$0xf]
    %v1118 = vld [vmem:[#allocation8 + $0xab0] sm:$0xff]
    %v1119 = vld [vmem:[#allocation8 + $0xab8] sm:$0xff]
    %v1120 = vld [vmem:[#allocation8 + $0xac0] sm:$0xff]
    %v1121 = vld [vmem:[#allocation8 + $0xac8] sm:$0xff]
    %v1122 = vld [vmem:[#allocation8 + $0xad0] sm:$0xf]
    %v1123 = vld [vmem:[#allocation8 + $0xad4] sm:$0xff]
    %v1124 = vld [vmem:[#allocation8 + $0xadc] sm:$0xff]
    %v1125 = vld [vmem:[#allocation8 + $0xae4] sm:$0xff]
    %v1126 = vld [vmem:[#allocation8 + $0xaec] sm:$0xff]
    %v1127 = vld [vmem:[#allocation8 + $0xaf4] sm:$0xf]
    %v1128 = vld [vmem:[#allocation8 + $0xaf8] sm:$0xff]
    %v1129 = vld [vmem:[#allocation8 + $0xb00] sm:$0xff]
    %v1130 = vld [vmem:[#allocation8 + $0xb08] sm:$0xff]
    %v1131 = vld [vmem:[#allocation8 + $0xb10] sm:$0xff]
    %v1132 = vld [vmem:[#allocation8 + $0xb18] sm:$0xf]
    %v1133 = vld [vmem:[#allocation8 + $0xb1c] sm:$0xff]
    %v1134 = vld [vmem:[#allocation8 + $0xb24] sm:$0xff]
    %v1135 = vld [vmem:[#allocation8 + $0xb2c] sm:$0xff]
    %v1136 = vld [vmem:[#allocation8 + $0xb34] sm:$0xff]
    %v1137 = vld [vmem:[#allocation8 + $0xb3c] sm:$0xf]
    %v1138 = vld [vmem:[#allocation8 + $0xb40] sm:$0xff]
    %v1139 = vld [vmem:[#allocation8 + $0xb48] sm:$0xff]
    %v1140 = vld [vmem:[#allocation8 + $0xb50] sm:$0xff]
    %v1141 = vld [vmem:[#allocation8 + $0xb58] sm:$0xff]
    %v1142 = vld [vmem:[#allocation8 + $0xb60] sm:$0xf]
    %v1143 = vld [vmem:[#allocation8 + $0xb64] sm:$0xff]
    %v1144 = vld [vmem:[#allocation8 + $0xb6c] sm:$0xff]
    %v1145 = vld [vmem:[#allocation8 + $0xb74] sm:$0xff]
    %v1146 = vld [vmem:[#allocation8 + $0xb7c] sm:$0xff]
    %v1147 = vld [vmem:[#allocation8 + $0xb84] sm:$0xf]
    %v1148 = vld [vmem:[#allocation8 + $0xb88] sm:$0xff]
    %v1149 = vld [vmem:[#allocation8 + $0xb90] sm:$0xff]
    %v1150 = vld [vmem:[#allocation8 + $0xb98] sm:$0xff]
    %v1151 = vld [vmem:[#allocation8 + $0xba0] sm:$0xff]
    %v1152 = vld [vmem:[#allocation8 + $0xba8] sm:$0xf]
    %v1153 = vld [vmem:[#allocation8 + $0xbac] sm:$0xff]
    %v1154 = vld [vmem:[#allocation8 + $0xbb4] sm:$0xff]
    %v1155 = vld [vmem:[#allocation8 + $0xbbc] sm:$0xff]
    %v1156 = vld [vmem:[#allocation8 + $0xbc4] sm:$0xff]
    %v1157 = vld [vmem:[#allocation8 + $0xbcc] sm:$0xf]
    %v1158 = vld [vmem:[#allocation8 + $0xbd0] sm:$0xff]
    %v1159 = vld [vmem:[#allocation8 + $0xbd8] sm:$0xff]
    %v1160 = vld [vmem:[#allocation8 + $0xbe0] sm:$0xff]
    %v1161 = vld [vmem:[#allocation8 + $0xbe8] sm:$0xff]
    %v1162 = vld [vmem:[#allocation8 + $0xbf0] sm:$0xf]
    %v1163 = vld [vmem:[#allocation8 + $0xbf4] sm:$0xff]
    %v1164 = vld [vmem:[#allocation8 + $0xbfc] sm:$0xff]
    %v1165 = vld [vmem:[#allocation8 + $0xc04] sm:$0xff]
    %v1166 = vld [vmem:[#allocation8 + $0xc0c] sm:$0xff]
    %v1167 = vld [vmem:[#allocation8 + $0xc14] sm:$0xf]
    %v1168 = vld [vmem:[#allocation8 + $0xc18] sm:$0xff]
    %v1169 = vld [vmem:[#allocation8 + $0xc20] sm:$0xff]
    %v1170 = vld [vmem:[#allocation8 + $0xc28] sm:$0xff]
    %v1171 = vld [vmem:[#allocation8 + $0xc30] sm:$0xff]
    %v1172 = vld [vmem:[#allocation8 + $0xc38] sm:$0xf]
    %v1173 = vld [vmem:[#allocation8 + $0xc3c] sm:$0xff]
    %v1174 = vld [vmem:[#allocation8 + $0xc44] sm:$0xff]
    %v1175 = vld [vmem:[#allocation8 + $0xc4c] sm:$0xff]
    %v1176 = vld [vmem:[#allocation8 + $0xc54] sm:$0xff]
    %v1177 = vld [vmem:[#allocation8 + $0xc5c] sm:$0xf]
    %v1178 = vld [vmem:[#allocation8 + $0xc60] sm:$0xff]
    %v1179 = vld [vmem:[#allocation8 + $0xc68] sm:$0xff]
    %v1180 = vld [vmem:[#allocation8 + $0xc70] sm:$0xff]
    %v1181 = vld [vmem:[#allocation8 + $0xc78] sm:$0xff]
    %v1182 = vld [vmem:[#allocation8 + $0xc80] sm:$0xf]
    %v1183 = vld [vmem:[#allocation8 + $0xc84] sm:$0xff]
    %v1184 = vld [vmem:[#allocation8 + $0xc8c] sm:$0xff]
    %v1185 = vld [vmem:[#allocation8 + $0xc94] sm:$0xff]
    %v1186 = vld [vmem:[#allocation8 + $0xc9c] sm:$0xff]
    %v1187 = vld [vmem:[#allocation8 + $0xca4] sm:$0xf]
    %v1188 = vld [vmem:[#allocation8 + $0xca8] sm:$0xff]
    %v1189 = vld [vmem:[#allocation8 + $0xcb0] sm:$0xff]
    %v1190 = vld [vmem:[#allocation8 + $0xcb8] sm:$0xff]
    %v1191 = vld [vmem:[#allocation8 + $0xcc0] sm:$0xff]
    %v1192 = vld [vmem:[#allocation8 + $0xcc8] sm:$0xf]
    %v1193 = vld [vmem:[#allocation8 + $0xccc] sm:$0xff]
    %v1194 = vld [vmem:[#allocation8 + $0xcd4] sm:$0xff]
    %v1195 = vld [vmem:[#allocation8 + $0xcdc] sm:$0xff]
    %v1196 = vld [vmem:[#allocation8 + $0xce4] sm:$0xff]
    %v1197 = vld [vmem:[#allocation8 + $0xcec] sm:$0xf]
    %v1198 = vld [vmem:[#allocation8 + $0xcf0] sm:$0xff]
    %v1199 = vld [vmem:[#allocation8 + $0xcf8] sm:$0xff]
    %v1200 = vld [vmem:[#allocation8 + $0xd00] sm:$0xff]
    %v1201 = vld [vmem:[#allocation8 + $0xd08] sm:$0xff]
    %v1202 = vld [vmem:[#allocation8 + $0xd10] sm:$0xf]
    %v1203 = vld [vmem:[#allocation8 + $0xd14] sm:$0xff]
    %v1204 = vld [vmem:[#allocation8 + $0xd1c] sm:$0xff]
    %v1205 = vld [vmem:[#allocation8 + $0xd24] sm:$0xff]
    %v1206 = vld [vmem:[#allocation8 + $0xd2c] sm:$0xff]
    %v1207 = vld [vmem:[#allocation8 + $0xd34] sm:$0xf]
    %v1208 = vld [vmem:[#allocation8 + $0xd38] sm:$0xff]
    %v1209 = vld [vmem:[#allocation8 + $0xd40] sm:$0xff]
    %v1210 = vld [vmem:[#allocation8 + $0xd48] sm:$0xff]
    %v1211 = vld [vmem:[#allocation8 + $0xd50] sm:$0xff]
    %v1212 = vld [vmem:[#allocation8 + $0xd58] sm:$0xf]
    %v1213 = vld [vmem:[#allocation8 + $0xd5c] sm:$0xff]
    %v1214 = vld [vmem:[#allocation8 + $0xd64] sm:$0xff]
    %v1215 = vld [vmem:[#allocation8 + $0xd6c] sm:$0xff]
    %v1216 = vld [vmem:[#allocation8 + $0xd74] sm:$0xff]
    %v1217 = vld [vmem:[#allocation8 + $0xd7c] sm:$0xf]
    %v1218 = vld [vmem:[#allocation8 + $0xd80] sm:$0xff]
    %v1219 = vld [vmem:[#allocation8 + $0xd88] sm:$0xff]
    %v1220 = vld [vmem:[#allocation8 + $0xd90] sm:$0xff]
    %v1221 = vld [vmem:[#allocation8 + $0xd98] sm:$0xff]
    %v1222 = vld [vmem:[#allocation8 + $0xda0] sm:$0xf]
    %v1223 = vld [vmem:[#allocation8 + $0xda4] sm:$0xff]
    %v1224 = vld [vmem:[#allocation8 + $0xdac] sm:$0xff]
    %v1225 = vld [vmem:[#allocation8 + $0xdb4] sm:$0xff]
    %v1226 = vld [vmem:[#allocation8 + $0xdbc] sm:$0xff]
    %v1227 = vld [vmem:[#allocation8 + $0xdc4] sm:$0xf]
    %v1228 = vld [vmem:[#allocation8 + $0xdc8] sm:$0xff]
    %v1229 = vld [vmem:[#allocation8 + $0xdd0] sm:$0xff]
    %v1230 = vld [vmem:[#allocation8 + $0xdd8] sm:$0xff]
    %v1231 = vld [vmem:[#allocation8 + $0xde0] sm:$0xff]
    %v1232 = vld [vmem:[#allocation8 + $0xde8] sm:$0xf]
    %v1233 = vld [vmem:[#allocation8 + $0xdec] sm:$0xff]
    %v1234 = vld [vmem:[#allocation8 + $0xdf4] sm:$0xff]
    %v1235 = vld [vmem:[#allocation8 + $0xdfc] sm:$0xff]
    %v1236 = vld [vmem:[#allocation8 + $0xe04] sm:$0xff]
    %v1237 = vld [vmem:[#allocation8 + $0xe0c] sm:$0xf]
    %v1238 = vld [vmem:[#allocation8 + $0xe10] sm:$0xff]
    %v1239 = vld [vmem:[#allocation8 + $0xe18] sm:$0xff]
    %v1240 = vld [vmem:[#allocation8 + $0xe20] sm:$0xff]
    %v1241 = vld [vmem:[#allocation8 + $0xe28] sm:$0xff]
    %v1242 = vld [vmem:[#allocation8 + $0xe30] sm:$0xf]
    %v1243 = vld [vmem:[#allocation8 + $0xe34] sm:$0xff]
    %v1244 = vld [vmem:[#allocation8 + $0xe3c] sm:$0xff]
    %v1245 = vld [vmem:[#allocation8 + $0xe44] sm:$0xff]
    %v1246 = vld [vmem:[#allocation8 + $0xe4c] sm:$0xff]
    %v1247 = vld [vmem:[#allocation8 + $0xe54] sm:$0xf]
    %v1248 = vld [vmem:[#allocation8 + $0xe58] sm:$0xff]
    %v1249 = vld [vmem:[#allocation8 + $0xe60] sm:$0xff]
    %v1250 = vld [vmem:[#allocation8 + $0xe68] sm:$0xff]
    %v1251 = vld [vmem:[#allocation8 + $0xe70] sm:$0xff]
    %v1252 = vld [vmem:[#allocation8 + $0xe78] sm:$0xf]
    %v1253 = vld [vmem:[#allocation8 + $0xe7c] sm:$0xff]
    %v1254 = vld [vmem:[#allocation8 + $0xe84] sm:$0xff]
    %v1255 = vld [vmem:[#allocation8 + $0xe8c] sm:$0xff]
    %v1256 = vld [vmem:[#allocation8 + $0xe94] sm:$0xff]
    %v1257 = vld [vmem:[#allocation8 + $0xe9c] sm:$0xf]
    %v1258 = vld [vmem:[#allocation8 + $0xea0] sm:$0xff]
    %v1259 = vld [vmem:[#allocation8 + $0xea8] sm:$0xff]
    %v1260 = vld [vmem:[#allocation8 + $0xeb0] sm:$0xff]
    %v1261 = vld [vmem:[#allocation8 + $0xeb8] sm:$0xff]
    %v1262 = vld [vmem:[#allocation8 + $0xec0] sm:$0xf]
    %v1263 = vld [vmem:[#allocation8 + $0xec4] sm:$0xff]
    %v1264 = vld [vmem:[#allocation8 + $0xecc] sm:$0xff]
    %v1265 = vld [vmem:[#allocation8 + $0xed4] sm:$0xff]
    %v1266 = vld [vmem:[#allocation8 + $0xedc] sm:$0xff]
    %v1267 = vld [vmem:[#allocation8 + $0xee4] sm:$0xf]
    %v1268 = vld [vmem:[#allocation8 + $0xee8] sm:$0xff]
    %v1269 = vld [vmem:[#allocation8 + $0xef0] sm:$0xff]
    %v1270 = vld [vmem:[#allocation8 + $0xef8] sm:$0xff]
    %v1271 = vld [vmem:[#allocation8 + $0xf00] sm:$0xff]
    %v1272 = vld [vmem:[#allocation8 + $0xf08] sm:$0xf]
    %v1273 = vld [vmem:[#allocation8 + $0xf0c] sm:$0xff]
    %v1274 = vld [vmem:[#allocation8 + $0xf14] sm:$0xff]
    %v1275 = vld [vmem:[#allocation8 + $0xf1c] sm:$0xff]
    %v1276 = vld [vmem:[#allocation8 + $0xf24] sm:$0xff]
    %v1277 = vld [vmem:[#allocation8 + $0xf2c] sm:$0xf]
    %v1278 = vld [vmem:[#allocation8 + $0xf30] sm:$0xff]
    %v1279 = vld [vmem:[#allocation8 + $0xf38] sm:$0xff]
    %v1280 = vld [vmem:[#allocation8 + $0xf40] sm:$0xff]
    %v1281 = vld [vmem:[#allocation8 + $0xf48] sm:$0xff]
    %v1282 = vld [vmem:[#allocation8 + $0xf50] sm:$0xf]
    %v1283 = vld [vmem:[#allocation8 + $0xf54] sm:$0xff]
    %v1284 = vld [vmem:[#allocation8 + $0xf5c] sm:$0xff]
    %v1285 = vld [vmem:[#allocation8 + $0xf64] sm:$0xff]
    %v1286 = vld [vmem:[#allocation8 + $0xf6c] sm:$0xff]
    %v1287 = vld [vmem:[#allocation8 + $0xf74] sm:$0xf]
    %v1288 = vld [vmem:[#allocation8 + $0xf78] sm:$0xff]
    %v1289 = vld [vmem:[#allocation8 + $0xf80] sm:$0xff]
    %v1290 = vld [vmem:[#allocation8 + $0xf88] sm:$0xff]
    %v1291 = vld [vmem:[#allocation8 + $0xf90] sm:$0xff]
    %v1292 = vld [vmem:[#allocation8 + $0xf98] sm:$0xf]
    %v1293 = vld [vmem:[#allocation8 + $0xf9c] sm:$0xff]
    %v1294 = vld [vmem:[#allocation8 + $0xfa4] sm:$0xff]
    %v1295 = vld [vmem:[#allocation8 + $0xfac] sm:$0xff]
    %v1296 = vld [vmem:[#allocation8 + $0xfb4] sm:$0xff]
    %v1297 = vld [vmem:[#allocation8 + $0xfbc] sm:$0xf]
    %v1298 = vld [vmem:[#allocation8 + $0xfc0] sm:$0xff]
    %v1299 = vld [vmem:[#allocation8 + $0xfc8] sm:$0xff]
    %v1300 = vld [vmem:[#allocation8 + $0xfd0] sm:$0xff]
    %v1301 = vld [vmem:[#allocation8 + $0xfd8] sm:$0xff]
    %v1302 = vld [vmem:[#allocation8 + $0xfe0] sm:$0xf]
    %v1303 = vld [vmem:[#allocation8 + $0xfe4] sm:$0xff]
    %v1304 = vld [vmem:[#allocation8 + $0xfec] sm:$0xff]
    %v1305 = vld [vmem:[#allocation8 + $0xff4] sm:$0xff]
    %v1306 = vld [vmem:[#allocation8 + $0xffc] sm:$0xff]
    %v1307 = vld [vmem:[#allocation8 + $0x1004] sm:$0xf]
    %v1308 = vld [vmem:[#allocation8 + $0x1008] sm:$0xff]
    %v1309 = vld [vmem:[#allocation8 + $0x1010] sm:$0xff]
    %v1310 = vld [vmem:[#allocation8 + $0x1018] sm:$0xff]
    %v1311 = vld [vmem:[#allocation8 + $0x1020] sm:$0xff]
    %v1312 = vld [vmem:[#allocation8 + $0x1028] sm:$0xf]
    %v1313 = vld [vmem:[#allocation8 + $0x102c] sm:$0xff]
    %v1314 = vld [vmem:[#allocation8 + $0x1034] sm:$0xff]
    %v1315 = vld [vmem:[#allocation8 + $0x103c] sm:$0xff]
    %v1316 = vld [vmem:[#allocation8 + $0x1044] sm:$0xff]
    %v1317 = vld [vmem:[#allocation8 + $0x104c] sm:$0xf]
    %v1318 = vld [vmem:[#allocation8 + $0x1050] sm:$0xff]
    %v1319 = vld [vmem:[#allocation8 + $0x1058] sm:$0xff]
    %v1320 = vld [vmem:[#allocation8 + $0x1060] sm:$0xff]
    %v1321 = vld [vmem:[#allocation8 + $0x1068] sm:$0xff]
    %v1322 = vld [vmem:[#allocation8 + $0x1070] sm:$0xf]
    %v1323 = vld [vmem:[#allocation8 + $0x1074] sm:$0xff]
    %v1324 = vld [vmem:[#allocation8 + $0x107c] sm:$0xff]
    %v1325 = vld [vmem:[#allocation8 + $0x1084] sm:$0xff]
    %v1326 = vld [vmem:[#allocation8 + $0x108c] sm:$0xff]
    %v1327 = vld [vmem:[#allocation8 + $0x1094] sm:$0xf]
    %v1328 = vld [vmem:[#allocation8 + $0x1098] sm:$0xff]
    %v1329 = vld [vmem:[#allocation8 + $0x10a0] sm:$0xff]
    %v1330 = vld [vmem:[#allocation8 + $0x10a8] sm:$0xff]
    %v1331 = vld [vmem:[#allocation8 + $0x10b0] sm:$0xff]
    %v1332 = vld [vmem:[#allocation8 + $0x10b8] sm:$0xf]
    %v1333 = vld [vmem:[#allocation8 + $0x10bc] sm:$0xff]
    %v1334 = vld [vmem:[#allocation8 + $0x10c4] sm:$0xff]
    %v1335 = vld [vmem:[#allocation8 + $0x10cc] sm:$0xff]
    %v1336 = vld [vmem:[#allocation8 + $0x10d4] sm:$0xff]
    %v1337 = vld [vmem:[#allocation8 + $0x10dc] sm:$0xf]
    %v1338 = vld [vmem:[#allocation8 + $0x10e0] sm:$0xff]
    %v1339 = vld [vmem:[#allocation8 + $0x10e8] sm:$0xff]
    %v1340 = vld [vmem:[#allocation8 + $0x10f0] sm:$0xff]
    %v1341 = vld [vmem:[#allocation8 + $0x10f8] sm:$0xff]
    %v1342 = vld [vmem:[#allocation8 + $0x1100] sm:$0xf]
    %v1343 = vld [vmem:[#allocation8 + $0x1104] sm:$0xff]
    %v1344 = vld [vmem:[#allocation8 + $0x110c] sm:$0xff]
    %v1345 = vld [vmem:[#allocation8 + $0x1114] sm:$0xff]
    %v1346 = vld [vmem:[#allocation8 + $0x111c] sm:$0xff]
    %v1347 = vld [vmem:[#allocation8 + $0x1124] sm:$0xf]
    %v1348 = vld [vmem:[#allocation8 + $0x1128] sm:$0xff]
    %v1349 = vld [vmem:[#allocation8 + $0x1130] sm:$0xff]
    %v1350 = vld [vmem:[#allocation8 + $0x1138] sm:$0xff]
    %v1351 = vld [vmem:[#allocation8 + $0x1140] sm:$0xff]
    %v1352 = vld [vmem:[#allocation8 + $0x1148] sm:$0xf]
    %v1353 = vld [vmem:[#allocation8 + $0x114c] sm:$0xff]
    %v1354 = vld [vmem:[#allocation8 + $0x1154] sm:$0xff]
    %v1355 = vld [vmem:[#allocation8 + $0x115c] sm:$0xff]
    %v1356 = vld [vmem:[#allocation8 + $0x1164] sm:$0xff]
    %v1357 = vld [vmem:[#allocation8 + $0x116c] sm:$0xf]
    %v1358 = vld [vmem:[#allocation8 + $0x1170] sm:$0xff]
    %v1359 = vld [vmem:[#allocation8 + $0x1178] sm:$0xff]
    %v1360 = vld [vmem:[#allocation8 + $0x1180] sm:$0xff]
    %v1361 = vld [vmem:[#allocation8 + $0x1188] sm:$0xff]
    %v1362 = vld [vmem:[#allocation8 + $0x1190] sm:$0xf]
    %v1363 = vld [vmem:[#allocation8 + $0x1194] sm:$0xff]
    %v1364 = vld [vmem:[#allocation8 + $0x119c] sm:$0xff]
    %v1365 = vld [vmem:[#allocation8 + $0x11a4] sm:$0xff]
    %v1366 = vld [vmem:[#allocation8 + $0x11ac] sm:$0xff]
    %v1367 = vld [vmem:[#allocation8 + $0x11b4] sm:$0xf]
    %v1368 = vld [vmem:[#allocation8 + $0x11b8] sm:$0xff]
    %v1369 = vld [vmem:[#allocation8 + $0x11c0] sm:$0xff]
    %v1370 = vld [vmem:[#allocation8 + $0x11c8] sm:$0xff]
    %v1371 = vld [vmem:[#allocation8 + $0x11d0] sm:$0xff]
    %v1372 = vld [vmem:[#allocation8 + $0x11d8] sm:$0xf]
    %v1373 = vld [vmem:[#allocation8 + $0x11dc] sm:$0xff]
    %v1374 = vld [vmem:[#allocation8 + $0x11e4] sm:$0xff]
    %v1375 = vld [vmem:[#allocation8 + $0x11ec] sm:$0xff]
    %v1376 = vld [vmem:[#allocation8 + $0x11f4] sm:$0xff]
    %v1377 = vld [vmem:[#allocation8 + $0x11fc] sm:$0xf]
    %v1378 = vld [vmem:[#allocation8 + $0x1200] sm:$0xff]
    %v1379 = vld [vmem:[#allocation8 + $0x1208] sm:$0xff]
    %v1380 = vld [vmem:[#allocation8 + $0x1210] sm:$0xff]
    %v1381 = vld [vmem:[#allocation8 + $0x1218] sm:$0xff]
    %v1382 = vld [vmem:[#allocation8 + $0x1220] sm:$0xf]
    %v1383 = vld [vmem:[#allocation8 + $0x1224] sm:$0xff]
    %v1384 = vld [vmem:[#allocation8 + $0x122c] sm:$0xff]
    %v1385 = vld [vmem:[#allocation8 + $0x1234] sm:$0xff]
    %v1386 = vld [vmem:[#allocation8 + $0x123c] sm:$0xff]
    %v1387 = vld [vmem:[#allocation8 + $0x1244] sm:$0xf]
    %v1388 = vld [vmem:[#allocation8 + $0x1248] sm:$0xff]
    %v1389 = vld [vmem:[#allocation8 + $0x1250] sm:$0xff]
    %v1390 = vld [vmem:[#allocation8 + $0x1258] sm:$0xff]
    %v1391 = vld [vmem:[#allocation8 + $0x1260] sm:$0xff]
    %v1392 = vld [vmem:[#allocation8 + $0x1268] sm:$0xf]
    %v1393 = vld [vmem:[#allocation8 + $0x126c] sm:$0xff]
    %v1394 = vld [vmem:[#allocation8 + $0x1274] sm:$0xff]
    %v1395 = vld [vmem:[#allocation8 + $0x127c] sm:$0xff]
    %v1396 = vld [vmem:[#allocation8 + $0x1284] sm:$0xff]
    %v1397 = vld [vmem:[#allocation8 + $0x128c] sm:$0xf]
    %v1398 = vld [vmem:[#allocation8 + $0x1290] sm:$0xff]
    %v1399 = vld [vmem:[#allocation8 + $0x1298] sm:$0xff]
    %v1400 = vld [vmem:[#allocation8 + $0x12a0] sm:$0xff]
    %v1401 = vld [vmem:[#allocation8 + $0x12a8] sm:$0xff]
    %v1402 = vld [vmem:[#allocation8 + $0x12b0] sm:$0xf]
    %v1403 = vld [vmem:[#allocation8 + $0x12b4] sm:$0xff]
    %v1404 = vld [vmem:[#allocation8 + $0x12bc] sm:$0xff]
    %v1405 = vld [vmem:[#allocation8 + $0x12c4] sm:$0xff]
    %v1406 = vld [vmem:[#allocation8 + $0x12cc] sm:$0xff]
    %v1407 = vld [vmem:[#allocation8 + $0x12d4] sm:$0xf]
    %v1408 = vld [vmem:[#allocation8 + $0x12d8] sm:$0xff]
    %v1409 = vld [vmem:[#allocation8 + $0x12e0] sm:$0xff]
    %v1410 = vld [vmem:[#allocation8 + $0x12e8] sm:$0xff]
    %v1411 = vld [vmem:[#allocation8 + $0x12f0] sm:$0xff]
    %v1412 = vld [vmem:[#allocation8 + $0x12f8] sm:$0xf]
    %v1413 = vld [vmem:[#allocation8 + $0x12fc] sm:$0xff]
    %v1414 = vld [vmem:[#allocation8 + $0x1304] sm:$0xff]
    %v1415 = vld [vmem:[#allocation8 + $0x130c] sm:$0xff]
    %v1416 = vld [vmem:[#allocation8 + $0x1314] sm:$0xff]
    %v1417 = vld [vmem:[#allocation8 + $0x131c] sm:$0xf]
    %v1418 = vld [vmem:[#allocation8 + $0x1320] sm:$0xff]
    %v1419 = vld [vmem:[#allocation8 + $0x1328] sm:$0xff]
    %v1420 = vld [vmem:[#allocation8 + $0x1330] sm:$0xff]
    %v1421 = vld [vmem:[#allocation8 + $0x1338] sm:$0xff]
    %v1422 = vld [vmem:[#allocation8 + $0x1340] sm:$0xf]
    %v1423 = vld [vmem:[#allocation8 + $0x1344] sm:$0xff]
    %v1424 = vld [vmem:[#allocation8 + $0x134c] sm:$0xff]
    %v1425 = vld [vmem:[#allocation8 + $0x1354] sm:$0xff]
    %v1426 = vld [vmem:[#allocation8 + $0x135c] sm:$0xff]
    %v1427 = vld [vmem:[#allocation8 + $0x1364] sm:$0xf]
    %v1428 = vld [vmem:[#allocation8 + $0x1368] sm:$0xff]
    %v1429 = vld [vmem:[#allocation8 + $0x1370] sm:$0xff]
    %v1430 = vld [vmem:[#allocation8 + $0x1378] sm:$0xff]
    %v1431 = vld [vmem:[#allocation8 + $0x1380] sm:$0xff]
    %v1432 = vld [vmem:[#allocation8 + $0x1388] sm:$0xf]
    %v1433 = vld [vmem:[#allocation8 + $0x138c] sm:$0xff]
    %v1434 = vld [vmem:[#allocation8 + $0x1394] sm:$0xff]
    %v1435 = vld [vmem:[#allocation8 + $0x139c] sm:$0xff]
    %v1436 = vld [vmem:[#allocation8 + $0x13a4] sm:$0xff]
    %v1437 = vld [vmem:[#allocation8 + $0x13ac] sm:$0xf]
    %v1438 = vld [vmem:[#allocation8 + $0x13b0] sm:$0xff]
    %v1439 = vld [vmem:[#allocation8 + $0x13b8] sm:$0xff]
    %v1440 = vld [vmem:[#allocation8 + $0x13c0] sm:$0xff]
    %v1441 = vld [vmem:[#allocation8 + $0x13c8] sm:$0xff]
    %v1442 = vld [vmem:[#allocation8 + $0x13d0] sm:$0xf]
    %v1443 = vld [vmem:[#allocation8 + $0x13d4] sm:$0xff]
    %v1444 = vld [vmem:[#allocation8 + $0x13dc] sm:$0xff]
    %v1445 = vld [vmem:[#allocation8 + $0x13e4] sm:$0xff]
    %v1446 = vld [vmem:[#allocation8 + $0x13ec] sm:$0xff]
    %v1447 = vld [vmem:[#allocation8 + $0x13f4] sm:$0xf]
    %v1448 = vld [vmem:[#allocation8 + $0x13f8] sm:$0xff]
    %v1449 = vld [vmem:[#allocation8 + $0x1400] sm:$0xff]
    %v1450 = vld [vmem:[#allocation8 + $0x1408] sm:$0xff]
    %v1451 = vld [vmem:[#allocation8 + $0x1410] sm:$0xff]
    %v1452 = vld [vmem:[#allocation8 + $0x1418] sm:$0xf]
    %v1453 = vld [vmem:[#allocation8 + $0x141c] sm:$0xff]
    %v1454 = vld [vmem:[#allocation8 + $0x1424] sm:$0xff]
    %v1455 = vld [vmem:[#allocation8 + $0x142c] sm:$0xff]
    %v1456 = vld [vmem:[#allocation8 + $0x1434] sm:$0xff]
    %v1457 = vld [vmem:[#allocation8 + $0x143c] sm:$0xf]
    %v1458 = vld [vmem:[#allocation10] sm:$0xff]
    %v1459 = vld [vmem:[#allocation10 + $0x8] sm:$0x1]
    %v1462 = vlaneseq
    %v1463 = vshrl.u32 %v1462, 7
    %v1464 = vsub.s32 0, %v1463
    %v1465 = vrot.slane %v1458, %v1464
    %v1466 = vlaneseq
    %v1467 = vshrl.u32 %v1466, 7
    %v1468 = vsub.s32 1, %v1467
    %v1469 = vrot.slane %v1458, %v1468
    %v1470 = vlaneseq
    %v1471 = vshrl.u32 %v1470, 7
    %v1472 = vsub.s32 2, %v1471
    %v1473 = vrot.slane %v1458, %v1472
    %v1474 = vlaneseq
    %v1475 = vshrl.u32 %v1474, 7
    %v1476 = vsub.s32 3, %v1475
    %v1477 = vrot.slane %v1458, %v1476
    %v1478 = vlaneseq
    %v1479 = vshrl.u32 %v1478, 7
    %v1480 = vsub.s32 4, %v1479
    %v1481 = vrot.slane %v1458, %v1480
    %v1482 = vlaneseq
    %v1483 = vshrl.u32 %v1482, 7
    %v1484 = vsub.s32 5, %v1483
    %v1485 = vrot.slane %v1458, %v1484
    %v1486 = vlaneseq
    %v1487 = vshrl.u32 %v1486, 7
    %v1488 = vsub.s32 6, %v1487
    %v1489 = vrot.slane %v1458, %v1488
    %v1490 = vlaneseq
    %v1491 = vshrl.u32 %v1490, 7
    %v1492 = vsub.s32 7, %v1491
    %v1493 = vrot.slane %v1458, %v1492
    %v1494 = vlaneseq
    %v1495 = vshrl.u32 %v1494, 7
    %v1496 = vsub.s32 0, %v1495
    %v1497 = vrot.slane %v1459, %v1496
    %v2227 = vunpack.c.l.b16 %v738
    %v2228 = vunpack.c.h.b16 %v738
    %v2229 = vunpack.c.l.b16 %v739
    %v2230 = vunpack.c.h.b16 %v739
    %v2231 = vunpack.c.l.b16 %v740
    %v2232 = vunpack.c.h.b16 %v740
    %v2233 = vunpack.c.l.b16 %v741
    %v2234 = vunpack.c.h.b16 %v741
    %v2235 = vunpack.c.l.b16 %v742
    %v2236 = vunpack.c.l.b16 %v743
    %v2237 = vunpack.c.h.b16 %v743
    %v2238 = vunpack.c.l.b16 %v744
    %v2239 = vunpack.c.h.b16 %v744
    %v2240 = vunpack.c.l.b16 %v745
    %v2241 = vunpack.c.h.b16 %v745
    %v2242 = vunpack.c.l.b16 %v746
    %v2243 = vunpack.c.h.b16 %v746
    %v2244 = vunpack.c.l.b16 %v747
    %v2245 = vunpack.c.l.b16 %v748
    %v2246 = vunpack.c.h.b16 %v748
    %v2247 = vunpack.c.l.b16 %v749
    %v2248 = vunpack.c.h.b16 %v749
    %v2249 = vunpack.c.l.b16 %v750
    %v2250 = vunpack.c.h.b16 %v750
    %v2251 = vunpack.c.l.b16 %v751
    %v2252 = vunpack.c.h.b16 %v751
    %v2253 = vunpack.c.l.b16 %v752
    %v2254 = vunpack.c.l.b16 %v753
    %v2255 = vunpack.c.h.b16 %v753
    %v2256 = vunpack.c.l.b16 %v754
    %v2257 = vunpack.c.h.b16 %v754
    %v2258 = vunpack.c.l.b16 %v755
    %v2259 = vunpack.c.h.b16 %v755
    %v2260 = vunpack.c.l.b16 %v756
    %v2261 = vunpack.c.h.b16 %v756
    %v2262 = vunpack.c.l.b16 %v757
    %v2263 = vunpack.c.l.b16 %v758
    %v2264 = vunpack.c.h.b16 %v758
    %v2265 = vunpack.c.l.b16 %v759
    %v2266 = vunpack.c.h.b16 %v759
    %v2267 = vunpack.c.l.b16 %v760
    %v2268 = vunpack.c.h.b16 %v760
    %v2269 = vunpack.c.l.b16 %v761
    %v2270 = vunpack.c.h.b16 %v761
    %v2271 = vunpack.c.l.b16 %v762
    %v2272 = vunpack.c.l.b16 %v763
    %v2273 = vunpack.c.h.b16 %v763
    %v2274 = vunpack.c.l.b16 %v764
    %v2275 = vunpack.c.h.b16 %v764
    %v2276 = vunpack.c.l.b16 %v765
    %v2277 = vunpack.c.h.b16 %v765
    %v2278 = vunpack.c.l.b16 %v766
    %v2279 = vunpack.c.h.b16 %v766
    %v2280 = vunpack.c.l.b16 %v767
    %v2281 = vunpack.c.l.b16 %v768
    %v2282 = vunpack.c.h.b16 %v768
    %v2283 = vunpack.c.l.b16 %v769
    %v2284 = vunpack.c.h.b16 %v769
    %v2285 = vunpack.c.l.b16 %v770
    %v2286 = vunpack.c.h.b16 %v770
    %v2287 = vunpack.c.l.b16 %v771
    %v2288 = vunpack.c.h.b16 %v771
    %v2289 = vunpack.c.l.b16 %v772
    %v2290 = vunpack.c.l.b16 %v773
    %v2291 = vunpack.c.h.b16 %v773
    %v2292 = vunpack.c.l.b16 %v774
    %v2293 = vunpack.c.h.b16 %v774
    %v2294 = vunpack.c.l.b16 %v775
    %v2295 = vunpack.c.h.b16 %v775
    %v2296 = vunpack.c.l.b16 %v776
    %v2297 = vunpack.c.h.b16 %v776
    %v2298 = vunpack.c.l.b16 %v777
    %v2299 = vunpack.c.l.b16 %v778
    %v2300 = vunpack.c.h.b16 %v778
    %v2301 = vunpack.c.l.b16 %v779
    %v2302 = vunpack.c.h.b16 %v779
    %v2303 = vunpack.c.l.b16 %v780
    %v2304 = vunpack.c.h.b16 %v780
    %v2305 = vunpack.c.l.b16 %v781
    %v2306 = vunpack.c.h.b16 %v781
    %v2307 = vunpack.c.l.b16 %v782
    %v2308 = vunpack.c.l.b16 %v783
    %v2309 = vunpack.c.h.b16 %v783
    %v2310 = vunpack.c.l.b16 %v784
    %v2311 = vunpack.c.h.b16 %v784
    %v2312 = vunpack.c.l.b16 %v785
    %v2313 = vunpack.c.h.b16 %v785
    %v2314 = vunpack.c.l.b16 %v786
    %v2315 = vunpack.c.h.b16 %v786
    %v2316 = vunpack.c.l.b16 %v787
    %v2317 = vunpack.c.l.b16 %v788
    %v2318 = vunpack.c.h.b16 %v788
    %v2319 = vunpack.c.l.b16 %v789
    %v2320 = vunpack.c.h.b16 %v789
    %v2321 = vunpack.c.l.b16 %v790
    %v2322 = vunpack.c.h.b16 %v790
    %v2323 = vunpack.c.l.b16 %v791
    %v2324 = vunpack.c.h.b16 %v791
    %v2325 = vunpack.c.l.b16 %v792
    %v2326 = vunpack.c.l.b16 %v793
    %v2327 = vunpack.c.h.b16 %v793
    %v2328 = vunpack.c.l.b16 %v794
    %v2329 = vunpack.c.h.b16 %v794
    %v2330 = vunpack.c.l.b16 %v795
    %v2331 = vunpack.c.h.b16 %v795
    %v2332 = vunpack.c.l.b16 %v796
    %v2333 = vunpack.c.h.b16 %v796
    %v2334 = vunpack.c.l.b16 %v797
    %v2335 = vunpack.c.l.b16 %v798
    %v2336 = vunpack.c.h.b16 %v798
    %v2337 = vunpack.c.l.b16 %v799
    %v2338 = vunpack.c.h.b16 %v799
    %v2339 = vunpack.c.l.b16 %v800
    %v2340 = vunpack.c.h.b16 %v800
    %v2341 = vunpack.c.l.b16 %v801
    %v2342 = vunpack.c.h.b16 %v801
    %v2343 = vunpack.c.l.b16 %v802
    %v2344 = vunpack.c.l.b16 %v803
    %v2345 = vunpack.c.h.b16 %v803
    %v2346 = vunpack.c.l.b16 %v804
    %v2347 = vunpack.c.h.b16 %v804
    %v2348 = vunpack.c.l.b16 %v805
    %v2349 = vunpack.c.h.b16 %v805
    %v2350 = vunpack.c.l.b16 %v806
    %v2351 = vunpack.c.h.b16 %v806
    %v2352 = vunpack.c.l.b16 %v807
    %v2353 = vunpack.c.l.b16 %v808
    %v2354 = vunpack.c.h.b16 %v808
    %v2355 = vunpack.c.l.b16 %v809
    %v2356 = vunpack.c.h.b16 %v809
    %v2357 = vunpack.c.l.b16 %v810
    %v2358 = vunpack.c.h.b16 %v810
    %v2359 = vunpack.c.l.b16 %v811
    %v2360 = vunpack.c.h.b16 %v811
    %v2361 = vunpack.c.l.b16 %v812
    %v2362 = vunpack.c.l.b16 %v813
    %v2363 = vunpack.c.h.b16 %v813
    %v2364 = vunpack.c.l.b16 %v814
    %v2365 = vunpack.c.h.b16 %v814
    %v2366 = vunpack.c.l.b16 %v815
    %v2367 = vunpack.c.h.b16 %v815
    %v2368 = vunpack.c.l.b16 %v816
    %v2369 = vunpack.c.h.b16 %v816
    %v2370 = vunpack.c.l.b16 %v817
    %v2371 = vunpack.c.l.b16 %v818
    %v2372 = vunpack.c.h.b16 %v818
    %v2373 = vunpack.c.l.b16 %v819
    %v2374 = vunpack.c.h.b16 %v819
    %v2375 = vunpack.c.l.b16 %v820
    %v2376 = vunpack.c.h.b16 %v820
    %v2377 = vunpack.c.l.b16 %v821
    %v2378 = vunpack.c.h.b16 %v821
    %v2379 = vunpack.c.l.b16 %v822
    %v2380 = vunpack.c.l.b16 %v823
    %v2381 = vunpack.c.h.b16 %v823
    %v2382 = vunpack.c.l.b16 %v824
    %v2383 = vunpack.c.h.b16 %v824
    %v2384 = vunpack.c.l.b16 %v825
    %v2385 = vunpack.c.h.b16 %v825
    %v2386 = vunpack.c.l.b16 %v826
    %v2387 = vunpack.c.h.b16 %v826
    %v2388 = vunpack.c.l.b16 %v827
    %v2389 = vunpack.c.l.b16 %v828
    %v2390 = vunpack.c.h.b16 %v828
    %v2391 = vunpack.c.l.b16 %v829
    %v2392 = vunpack.c.h.b16 %v829
    %v2393 = vunpack.c.l.b16 %v830
    %v2394 = vunpack.c.h.b16 %v830
    %v2395 = vunpack.c.l.b16 %v831
    %v2396 = vunpack.c.h.b16 %v831
    %v2397 = vunpack.c.l.b16 %v832
    %v2398 = vunpack.c.l.b16 %v833
    %v2399 = vunpack.c.h.b16 %v833
    %v2400 = vunpack.c.l.b16 %v834
    %v2401 = vunpack.c.h.b16 %v834
    %v2402 = vunpack.c.l.b16 %v835
    %v2403 = vunpack.c.h.b16 %v835
    %v2404 = vunpack.c.l.b16 %v836
    %v2405 = vunpack.c.h.b16 %v836
    %v2406 = vunpack.c.l.b16 %v837
    %v2407 = vunpack.c.l.b16 %v838
    %v2408 = vunpack.c.h.b16 %v838
    %v2409 = vunpack.c.l.b16 %v839
    %v2410 = vunpack.c.h.b16 %v839
    %v2411 = vunpack.c.l.b16 %v840
    %v2412 = vunpack.c.h.b16 %v840
    %v2413 = vunpack.c.l.b16 %v841
    %v2414 = vunpack.c.h.b16 %v841
    %v2415 = vunpack.c.l.b16 %v842
    %v2416 = vunpack.c.l.b16 %v843
    %v2417 = vunpack.c.h.b16 %v843
    %v2418 = vunpack.c.l.b16 %v844
    %v2419 = vunpack.c.h.b16 %v844
    %v2420 = vunpack.c.l.b16 %v845
    %v2421 = vunpack.c.h.b16 %v845
    %v2422 = vunpack.c.l.b16 %v846
    %v2423 = vunpack.c.h.b16 %v846
    %v2424 = vunpack.c.l.b16 %v847
    %v2425 = vunpack.c.l.b16 %v848
    %v2426 = vunpack.c.h.b16 %v848
    %v2427 = vunpack.c.l.b16 %v849
    %v2428 = vunpack.c.h.b16 %v849
    %v2429 = vunpack.c.l.b16 %v850
    %v2430 = vunpack.c.h.b16 %v850
    %v2431 = vunpack.c.l.b16 %v851
    %v2432 = vunpack.c.h.b16 %v851
    %v2433 = vunpack.c.l.b16 %v852
    %v2434 = vunpack.c.l.b16 %v853
    %v2435 = vunpack.c.h.b16 %v853
    %v2436 = vunpack.c.l.b16 %v854
    %v2437 = vunpack.c.h.b16 %v854
    %v2438 = vunpack.c.l.b16 %v855
    %v2439 = vunpack.c.h.b16 %v855
    %v2440 = vunpack.c.l.b16 %v856
    %v2441 = vunpack.c.h.b16 %v856
    %v2442 = vunpack.c.l.b16 %v857
    %v2443 = vunpack.c.l.b16 %v858
    %v2444 = vunpack.c.h.b16 %v858
    %v2445 = vunpack.c.l.b16 %v859
    %v2446 = vunpack.c.h.b16 %v859
    %v2447 = vunpack.c.l.b16 %v860
    %v2448 = vunpack.c.h.b16 %v860
    %v2449 = vunpack.c.l.b16 %v861
    %v2450 = vunpack.c.h.b16 %v861
    %v2451 = vunpack.c.l.b16 %v862
    %v2452 = vunpack.c.l.b16 %v863
    %v2453 = vunpack.c.h.b16 %v863
    %v2454 = vunpack.c.l.b16 %v864
    %v2455 = vunpack.c.h.b16 %v864
    %v2456 = vunpack.c.l.b16 %v865
    %v2457 = vunpack.c.h.b16 %v865
    %v2458 = vunpack.c.l.b16 %v866
    %v2459 = vunpack.c.h.b16 %v866
    %v2460 = vunpack.c.l.b16 %v867
    %v2461 = vunpack.c.l.b16 %v868
    %v2462 = vunpack.c.h.b16 %v868
    %v2463 = vunpack.c.l.b16 %v869
    %v2464 = vunpack.c.h.b16 %v869
    %v2465 = vunpack.c.l.b16 %v870
    %v2466 = vunpack.c.h.b16 %v870
    %v2467 = vunpack.c.l.b16 %v871
    %v2468 = vunpack.c.h.b16 %v871
    %v2469 = vunpack.c.l.b16 %v872
    %v2470 = vunpack.c.l.b16 %v873
    %v2471 = vunpack.c.h.b16 %v873
    %v2472 = vunpack.c.l.b16 %v874
    %v2473 = vunpack.c.h.b16 %v874
    %v2474 = vunpack.c.l.b16 %v875
    %v2475 = vunpack.c.h.b16 %v875
    %v2476 = vunpack.c.l.b16 %v876
    %v2477 = vunpack.c.h.b16 %v876
    %v2478 = vunpack.c.l.b16 %v877
    %v2479 = vunpack.c.l.b16 %v878
    %v2480 = vunpack.c.h.b16 %v878
    %v2481 = vunpack.c.l.b16 %v879
    %v2482 = vunpack.c.h.b16 %v879
    %v2483 = vunpack.c.l.b16 %v880
    %v2484 = vunpack.c.h.b16 %v880
    %v2485 = vunpack.c.l.b16 %v881
    %v2486 = vunpack.c.h.b16 %v881
    %v2487 = vunpack.c.l.b16 %v882
    %v2488 = vunpack.c.l.b16 %v883
    %v2489 = vunpack.c.h.b16 %v883
    %v2490 = vunpack.c.l.b16 %v884
    %v2491 = vunpack.c.h.b16 %v884
    %v2492 = vunpack.c.l.b16 %v885
    %v2493 = vunpack.c.h.b16 %v885
    %v2494 = vunpack.c.l.b16 %v886
    %v2495 = vunpack.c.h.b16 %v886
    %v2496 = vunpack.c.l.b16 %v887
    %v2497 = vunpack.c.l.b16 %v888
    %v2498 = vunpack.c.h.b16 %v888
    %v2499 = vunpack.c.l.b16 %v889
    %v2500 = vunpack.c.h.b16 %v889
    %v2501 = vunpack.c.l.b16 %v890
    %v2502 = vunpack.c.h.b16 %v890
    %v2503 = vunpack.c.l.b16 %v891
    %v2504 = vunpack.c.h.b16 %v891
    %v2505 = vunpack.c.l.b16 %v892
    %v2506 = vunpack.c.l.b16 %v893
    %v2507 = vunpack.c.h.b16 %v893
    %v2508 = vunpack.c.l.b16 %v894
    %v2509 = vunpack.c.h.b16 %v894
    %v2510 = vunpack.c.l.b16 %v895
    %v2511 = vunpack.c.h.b16 %v895
    %v2512 = vunpack.c.l.b16 %v896
    %v2513 = vunpack.c.h.b16 %v896
    %v2514 = vunpack.c.l.b16 %v897
    %v2515 = vunpack.c.l.b16 %v898
    %v2516 = vunpack.c.h.b16 %v898
    %v2517 = vunpack.c.l.b16 %v899
    %v2518 = vunpack.c.h.b16 %v899
    %v2519 = vunpack.c.l.b16 %v900
    %v2520 = vunpack.c.h.b16 %v900
    %v2521 = vunpack.c.l.b16 %v901
    %v2522 = vunpack.c.h.b16 %v901
    %v2523 = vunpack.c.l.b16 %v902
    %v2524 = vunpack.c.l.b16 %v903
    %v2525 = vunpack.c.h.b16 %v903
    %v2526 = vunpack.c.l.b16 %v904
    %v2527 = vunpack.c.h.b16 %v904
    %v2528 = vunpack.c.l.b16 %v905
    %v2529 = vunpack.c.h.b16 %v905
    %v2530 = vunpack.c.l.b16 %v906
    %v2531 = vunpack.c.h.b16 %v906
    %v2532 = vunpack.c.l.b16 %v907
    %v2533 = vunpack.c.l.b16 %v908
    %v2534 = vunpack.c.h.b16 %v908
    %v2535 = vunpack.c.l.b16 %v909
    %v2536 = vunpack.c.h.b16 %v909
    %v2537 = vunpack.c.l.b16 %v910
    %v2538 = vunpack.c.h.b16 %v910
    %v2539 = vunpack.c.l.b16 %v911
    %v2540 = vunpack.c.h.b16 %v911
    %v2541 = vunpack.c.l.b16 %v912
    %v2542 = vunpack.c.l.b16 %v913
    %v2543 = vunpack.c.h.b16 %v913
    %v2544 = vunpack.c.l.b16 %v914
    %v2545 = vunpack.c.h.b16 %v914
    %v2546 = vunpack.c.l.b16 %v915
    %v2547 = vunpack.c.h.b16 %v915
    %v2548 = vunpack.c.l.b16 %v916
    %v2549 = vunpack.c.h.b16 %v916
    %v2550 = vunpack.c.l.b16 %v917
    %v2551 = vunpack.c.l.b16 %v918
    %v2552 = vunpack.c.h.b16 %v918
    %v2553 = vunpack.c.l.b16 %v919
    %v2554 = vunpack.c.h.b16 %v919
    %v2555 = vunpack.c.l.b16 %v920
    %v2556 = vunpack.c.h.b16 %v920
    %v2557 = vunpack.c.l.b16 %v921
    %v2558 = vunpack.c.h.b16 %v921
    %v2559 = vunpack.c.l.b16 %v922
    %v2560 = vunpack.c.l.b16 %v923
    %v2561 = vunpack.c.h.b16 %v923
    %v2562 = vunpack.c.l.b16 %v924
    %v2563 = vunpack.c.h.b16 %v924
    %v2564 = vunpack.c.l.b16 %v925
    %v2565 = vunpack.c.h.b16 %v925
    %v2566 = vunpack.c.l.b16 %v926
    %v2567 = vunpack.c.h.b16 %v926
    %v2568 = vunpack.c.l.b16 %v927
    %v2569 = vunpack.c.l.b16 %v928
    %v2570 = vunpack.c.h.b16 %v928
    %v2571 = vunpack.c.l.b16 %v929
    %v2572 = vunpack.c.h.b16 %v929
    %v2573 = vunpack.c.l.b16 %v930
    %v2574 = vunpack.c.h.b16 %v930
    %v2575 = vunpack.c.l.b16 %v931
    %v2576 = vunpack.c.h.b16 %v931
    %v2577 = vunpack.c.l.b16 %v932
    %v2578 = vunpack.c.l.b16 %v933
    %v2579 = vunpack.c.h.b16 %v933
    %v2580 = vunpack.c.l.b16 %v934
    %v2581 = vunpack.c.h.b16 %v934
    %v2582 = vunpack.c.l.b16 %v935
    %v2583 = vunpack.c.h.b16 %v935
    %v2584 = vunpack.c.l.b16 %v936
    %v2585 = vunpack.c.h.b16 %v936
    %v2586 = vunpack.c.l.b16 %v937
    %v2587 = vunpack.c.l.b16 %v938
    %v2588 = vunpack.c.h.b16 %v938
    %v2589 = vunpack.c.l.b16 %v939
    %v2590 = vunpack.c.h.b16 %v939
    %v2591 = vunpack.c.l.b16 %v940
    %v2592 = vunpack.c.h.b16 %v940
    %v2593 = vunpack.c.l.b16 %v941
    %v2594 = vunpack.c.h.b16 %v941
    %v2595 = vunpack.c.l.b16 %v942
    %v2596 = vunpack.c.l.b16 %v943
    %v2597 = vunpack.c.h.b16 %v943
    %v2598 = vunpack.c.l.b16 %v944
    %v2599 = vunpack.c.h.b16 %v944
    %v2600 = vunpack.c.l.b16 %v945
    %v2601 = vunpack.c.h.b16 %v945
    %v2602 = vunpack.c.l.b16 %v946
    %v2603 = vunpack.c.h.b16 %v946
    %v2604 = vunpack.c.l.b16 %v947
    %v2605 = vunpack.c.l.b16 %v948
    %v2606 = vunpack.c.h.b16 %v948
    %v2607 = vunpack.c.l.b16 %v949
    %v2608 = vunpack.c.h.b16 %v949
    %v2609 = vunpack.c.l.b16 %v950
    %v2610 = vunpack.c.h.b16 %v950
    %v2611 = vunpack.c.l.b16 %v951
    %v2612 = vunpack.c.h.b16 %v951
    %v2613 = vunpack.c.l.b16 %v952
    %v2614 = vunpack.c.l.b16 %v953
    %v2615 = vunpack.c.h.b16 %v953
    %v2616 = vunpack.c.l.b16 %v954
    %v2617 = vunpack.c.h.b16 %v954
    %v2618 = vunpack.c.l.b16 %v955
    %v2619 = vunpack.c.h.b16 %v955
    %v2620 = vunpack.c.l.b16 %v956
    %v2621 = vunpack.c.h.b16 %v956
    %v2622 = vunpack.c.l.b16 %v957
    %v2623 = vunpack.c.l.b16 %v958
    %v2624 = vunpack.c.h.b16 %v958
    %v2625 = vunpack.c.l.b16 %v959
    %v2626 = vunpack.c.h.b16 %v959
    %v2627 = vunpack.c.l.b16 %v960
    %v2628 = vunpack.c.h.b16 %v960
    %v2629 = vunpack.c.l.b16 %v961
    %v2630 = vunpack.c.h.b16 %v961
    %v2631 = vunpack.c.l.b16 %v962
    %v2632 = vunpack.c.l.b16 %v963
    %v2633 = vunpack.c.h.b16 %v963
    %v2634 = vunpack.c.l.b16 %v964
    %v2635 = vunpack.c.h.b16 %v964
    %v2636 = vunpack.c.l.b16 %v965
    %v2637 = vunpack.c.h.b16 %v965
    %v2638 = vunpack.c.l.b16 %v966
    %v2639 = vunpack.c.h.b16 %v966
    %v2640 = vunpack.c.l.b16 %v967
    %v2641 = vunpack.c.l.b16 %v968
    %v2642 = vunpack.c.h.b16 %v968
    %v2643 = vunpack.c.l.b16 %v969
    %v2644 = vunpack.c.h.b16 %v969
    %v2645 = vunpack.c.l.b16 %v970
    %v2646 = vunpack.c.h.b16 %v970
    %v2647 = vunpack.c.l.b16 %v971
    %v2648 = vunpack.c.h.b16 %v971
    %v2649 = vunpack.c.l.b16 %v972
    %v2650 = vunpack.c.l.b16 %v973
    %v2651 = vunpack.c.h.b16 %v973
    %v2652 = vunpack.c.l.b16 %v974
    %v2653 = vunpack.c.h.b16 %v974
    %v2654 = vunpack.c.l.b16 %v975
    %v2655 = vunpack.c.h.b16 %v975
    %v2656 = vunpack.c.l.b16 %v976
    %v2657 = vunpack.c.h.b16 %v976
    %v2658 = vunpack.c.l.b16 %v977
    %v2659 = vunpack.c.l.b16 %v978
    %v2660 = vunpack.c.h.b16 %v978
    %v2661 = vunpack.c.l.b16 %v979
    %v2662 = vunpack.c.h.b16 %v979
    %v2663 = vunpack.c.l.b16 %v980
    %v2664 = vunpack.c.h.b16 %v980
    %v2665 = vunpack.c.l.b16 %v981
    %v2666 = vunpack.c.h.b16 %v981
    %v2667 = vunpack.c.l.b16 %v982
    %v2668 = vunpack.c.l.b16 %v983
    %v2669 = vunpack.c.h.b16 %v983
    %v2670 = vunpack.c.l.b16 %v984
    %v2671 = vunpack.c.h.b16 %v984
    %v2672 = vunpack.c.l.b16 %v985
    %v2673 = vunpack.c.h.b16 %v985
    %v2674 = vunpack.c.l.b16 %v986
    %v2675 = vunpack.c.h.b16 %v986
    %v2676 = vunpack.c.l.b16 %v987
    %v2677 = vunpack.c.l.b16 %v988
    %v2678 = vunpack.c.h.b16 %v988
    %v2679 = vunpack.c.l.b16 %v989
    %v2680 = vunpack.c.h.b16 %v989
    %v2681 = vunpack.c.l.b16 %v990
    %v2682 = vunpack.c.h.b16 %v990
    %v2683 = vunpack.c.l.b16 %v991
    %v2684 = vunpack.c.h.b16 %v991
    %v2685 = vunpack.c.l.b16 %v992
    %v2686 = vunpack.c.l.b16 %v993
    %v2687 = vunpack.c.h.b16 %v993
    %v2688 = vunpack.c.l.b16 %v994
    %v2689 = vunpack.c.h.b16 %v994
    %v2690 = vunpack.c.l.b16 %v995
    %v2691 = vunpack.c.h.b16 %v995
    %v2692 = vunpack.c.l.b16 %v996
    %v2693 = vunpack.c.h.b16 %v996
    %v2694 = vunpack.c.l.b16 %v997
    %v2695 = vunpack.c.l.b16 %v998
    %v2696 = vunpack.c.h.b16 %v998
    %v2697 = vunpack.c.l.b16 %v999
    %v2698 = vunpack.c.h.b16 %v999
    %v2699 = vunpack.c.l.b16 %v1000
    %v2700 = vunpack.c.h.b16 %v1000
    %v2701 = vunpack.c.l.b16 %v1001
    %v2702 = vunpack.c.h.b16 %v1001
    %v2703 = vunpack.c.l.b16 %v1002
    %v2704 = vunpack.c.l.b16 %v1003
    %v2705 = vunpack.c.h.b16 %v1003
    %v2706 = vunpack.c.l.b16 %v1004
    %v2707 = vunpack.c.h.b16 %v1004
    %v2708 = vunpack.c.l.b16 %v1005
    %v2709 = vunpack.c.h.b16 %v1005
    %v2710 = vunpack.c.l.b16 %v1006
    %v2711 = vunpack.c.h.b16 %v1006
    %v2712 = vunpack.c.l.b16 %v1007
    %v2713 = vunpack.c.l.b16 %v1008
    %v2714 = vunpack.c.h.b16 %v1008
    %v2715 = vunpack.c.l.b16 %v1009
    %v2716 = vunpack.c.h.b16 %v1009
    %v2717 = vunpack.c.l.b16 %v1010
    %v2718 = vunpack.c.h.b16 %v1010
    %v2719 = vunpack.c.l.b16 %v1011
    %v2720 = vunpack.c.h.b16 %v1011
    %v2721 = vunpack.c.l.b16 %v1012
    %v2722 = vunpack.c.l.b16 %v1013
    %v2723 = vunpack.c.h.b16 %v1013
    %v2724 = vunpack.c.l.b16 %v1014
    %v2725 = vunpack.c.h.b16 %v1014
    %v2726 = vunpack.c.l.b16 %v1015
    %v2727 = vunpack.c.h.b16 %v1015
    %v2728 = vunpack.c.l.b16 %v1016
    %v2729 = vunpack.c.h.b16 %v1016
    %v2730 = vunpack.c.l.b16 %v1017
    %v2731 = vunpack.c.l.b16 %v1018
    %v2732 = vunpack.c.h.b16 %v1018
    %v2733 = vunpack.c.l.b16 %v1019
    %v2734 = vunpack.c.h.b16 %v1019
    %v2735 = vunpack.c.l.b16 %v1020
    %v2736 = vunpack.c.h.b16 %v1020
    %v2737 = vunpack.c.l.b16 %v1021
    %v2738 = vunpack.c.h.b16 %v1021
    %v2739 = vunpack.c.l.b16 %v1022
    %v2740 = vunpack.c.l.b16 %v1023
    %v2741 = vunpack.c.h.b16 %v1023
    %v2742 = vunpack.c.l.b16 %v1024
    %v2743 = vunpack.c.h.b16 %v1024
    %v2744 = vunpack.c.l.b16 %v1025
    %v2745 = vunpack.c.h.b16 %v1025
    %v2746 = vunpack.c.l.b16 %v1026
    %v2747 = vunpack.c.h.b16 %v1026
    %v2748 = vunpack.c.l.b16 %v1027
    %v2749 = vunpack.c.l.b16 %v1028
    %v2750 = vunpack.c.h.b16 %v1028
    %v2751 = vunpack.c.l.b16 %v1029
    %v2752 = vunpack.c.h.b16 %v1029
    %v2753 = vunpack.c.l.b16 %v1030
    %v2754 = vunpack.c.h.b16 %v1030
    %v2755 = vunpack.c.l.b16 %v1031
    %v2756 = vunpack.c.h.b16 %v1031
    %v2757 = vunpack.c.l.b16 %v1032
    %v2758 = vunpack.c.l.b16 %v1033
    %v2759 = vunpack.c.h.b16 %v1033
    %v2760 = vunpack.c.l.b16 %v1034
    %v2761 = vunpack.c.h.b16 %v1034
    %v2762 = vunpack.c.l.b16 %v1035
    %v2763 = vunpack.c.h.b16 %v1035
    %v2764 = vunpack.c.l.b16 %v1036
    %v2765 = vunpack.c.h.b16 %v1036
    %v2766 = vunpack.c.l.b16 %v1037
    %v2767 = vunpack.c.l.b16 %v1038
    %v2768 = vunpack.c.h.b16 %v1038
    %v2769 = vunpack.c.l.b16 %v1039
    %v2770 = vunpack.c.h.b16 %v1039
    %v2771 = vunpack.c.l.b16 %v1040
    %v2772 = vunpack.c.h.b16 %v1040
    %v2773 = vunpack.c.l.b16 %v1041
    %v2774 = vunpack.c.h.b16 %v1041
    %v2775 = vunpack.c.l.b16 %v1042
    %v2776 = vunpack.c.l.b16 %v1043
    %v2777 = vunpack.c.h.b16 %v1043
    %v2778 = vunpack.c.l.b16 %v1044
    %v2779 = vunpack.c.h.b16 %v1044
    %v2780 = vunpack.c.l.b16 %v1045
    %v2781 = vunpack.c.h.b16 %v1045
    %v2782 = vunpack.c.l.b16 %v1046
    %v2783 = vunpack.c.h.b16 %v1046
    %v2784 = vunpack.c.l.b16 %v1047
    %v2785 = vunpack.c.l.b16 %v1048
    %v2786 = vunpack.c.h.b16 %v1048
    %v2787 = vunpack.c.l.b16 %v1049
    %v2788 = vunpack.c.h.b16 %v1049
    %v2789 = vunpack.c.l.b16 %v1050
    %v2790 = vunpack.c.h.b16 %v1050
    %v2791 = vunpack.c.l.b16 %v1051
    %v2792 = vunpack.c.h.b16 %v1051
    %v2793 = vunpack.c.l.b16 %v1052
    %v2794 = vunpack.c.l.b16 %v1053
    %v2795 = vunpack.c.h.b16 %v1053
    %v2796 = vunpack.c.l.b16 %v1054
    %v2797 = vunpack.c.h.b16 %v1054
    %v2798 = vunpack.c.l.b16 %v1055
    %v2799 = vunpack.c.h.b16 %v1055
    %v2800 = vunpack.c.l.b16 %v1056
    %v2801 = vunpack.c.h.b16 %v1056
    %v2802 = vunpack.c.l.b16 %v1057
    %v2803 = vunpack.c.l.b16 %v1058
    %v2804 = vunpack.c.h.b16 %v1058
    %v2805 = vunpack.c.l.b16 %v1059
    %v2806 = vunpack.c.h.b16 %v1059
    %v2807 = vunpack.c.l.b16 %v1060
    %v2808 = vunpack.c.h.b16 %v1060
    %v2809 = vunpack.c.l.b16 %v1061
    %v2810 = vunpack.c.h.b16 %v1061
    %v2811 = vunpack.c.l.b16 %v1062
    %v2812 = vunpack.c.l.b16 %v1063
    %v2813 = vunpack.c.h.b16 %v1063
    %v2814 = vunpack.c.l.b16 %v1064
    %v2815 = vunpack.c.h.b16 %v1064
    %v2816 = vunpack.c.l.b16 %v1065
    %v2817 = vunpack.c.h.b16 %v1065
    %v2818 = vunpack.c.l.b16 %v1066
    %v2819 = vunpack.c.h.b16 %v1066
    %v2820 = vunpack.c.l.b16 %v1067
    %v2821 = vunpack.c.l.b16 %v1068
    %v2822 = vunpack.c.h.b16 %v1068
    %v2823 = vunpack.c.l.b16 %v1069
    %v2824 = vunpack.c.h.b16 %v1069
    %v2825 = vunpack.c.l.b16 %v1070
    %v2826 = vunpack.c.h.b16 %v1070
    %v2827 = vunpack.c.l.b16 %v1071
    %v2828 = vunpack.c.h.b16 %v1071
    %v2829 = vunpack.c.l.b16 %v1072
    %v2830 = vunpack.c.l.b16 %v1073
    %v2831 = vunpack.c.h.b16 %v1073
    %v2832 = vunpack.c.l.b16 %v1074
    %v2833 = vunpack.c.h.b16 %v1074
    %v2834 = vunpack.c.l.b16 %v1075
    %v2835 = vunpack.c.h.b16 %v1075
    %v2836 = vunpack.c.l.b16 %v1076
    %v2837 = vunpack.c.h.b16 %v1076
    %v2838 = vunpack.c.l.b16 %v1077
    %v2839 = vunpack.c.l.b16 %v1078
    %v2840 = vunpack.c.h.b16 %v1078
    %v2841 = vunpack.c.l.b16 %v1079
    %v2842 = vunpack.c.h.b16 %v1079
    %v2843 = vunpack.c.l.b16 %v1080
    %v2844 = vunpack.c.h.b16 %v1080
    %v2845 = vunpack.c.l.b16 %v1081
    %v2846 = vunpack.c.h.b16 %v1081
    %v2847 = vunpack.c.l.b16 %v1082
    %v2848 = vunpack.c.l.b16 %v1083
    %v2849 = vunpack.c.h.b16 %v1083
    %v2850 = vunpack.c.l.b16 %v1084
    %v2851 = vunpack.c.h.b16 %v1084
    %v2852 = vunpack.c.l.b16 %v1085
    %v2853 = vunpack.c.h.b16 %v1085
    %v2854 = vunpack.c.l.b16 %v1086
    %v2855 = vunpack.c.h.b16 %v1086
    %v2856 = vunpack.c.l.b16 %v1087
    %v2857 = vunpack.c.l.b16 %v1088
    %v2858 = vunpack.c.h.b16 %v1088
    %v2859 = vunpack.c.l.b16 %v1089
    %v2860 = vunpack.c.h.b16 %v1089
    %v2861 = vunpack.c.l.b16 %v1090
    %v2862 = vunpack.c.h.b16 %v1090
    %v2863 = vunpack.c.l.b16 %v1091
    %v2864 = vunpack.c.h.b16 %v1091
    %v2865 = vunpack.c.l.b16 %v1092
    %v2866 = vunpack.c.l.b16 %v1093
    %v2867 = vunpack.c.h.b16 %v1093
    %v2868 = vunpack.c.l.b16 %v1094
    %v2869 = vunpack.c.h.b16 %v1094
    %v2870 = vunpack.c.l.b16 %v1095
    %v2871 = vunpack.c.h.b16 %v1095
    %v2872 = vunpack.c.l.b16 %v1096
    %v2873 = vunpack.c.h.b16 %v1096
    %v2874 = vunpack.c.l.b16 %v1097
    %v2875 = vunpack.c.l.b16 %v1098
    %v2876 = vunpack.c.h.b16 %v1098
    %v2877 = vunpack.c.l.b16 %v1099
    %v2878 = vunpack.c.h.b16 %v1099
    %v2879 = vunpack.c.l.b16 %v1100
    %v2880 = vunpack.c.h.b16 %v1100
    %v2881 = vunpack.c.l.b16 %v1101
    %v2882 = vunpack.c.h.b16 %v1101
    %v2883 = vunpack.c.l.b16 %v1102
    %v2884 = vunpack.c.l.b16 %v1103
    %v2885 = vunpack.c.h.b16 %v1103
    %v2886 = vunpack.c.l.b16 %v1104
    %v2887 = vunpack.c.h.b16 %v1104
    %v2888 = vunpack.c.l.b16 %v1105
    %v2889 = vunpack.c.h.b16 %v1105
    %v2890 = vunpack.c.l.b16 %v1106
    %v2891 = vunpack.c.h.b16 %v1106
    %v2892 = vunpack.c.l.b16 %v1107
    %v2893 = vunpack.c.l.b16 %v1108
    %v2894 = vunpack.c.h.b16 %v1108
    %v2895 = vunpack.c.l.b16 %v1109
    %v2896 = vunpack.c.h.b16 %v1109
    %v2897 = vunpack.c.l.b16 %v1110
    %v2898 = vunpack.c.h.b16 %v1110
    %v2899 = vunpack.c.l.b16 %v1111
    %v2900 = vunpack.c.h.b16 %v1111
    %v2901 = vunpack.c.l.b16 %v1112
    %v2902 = vunpack.c.l.b16 %v1113
    %v2903 = vunpack.c.h.b16 %v1113
    %v2904 = vunpack.c.l.b16 %v1114
    %v2905 = vunpack.c.h.b16 %v1114
    %v2906 = vunpack.c.l.b16 %v1115
    %v2907 = vunpack.c.h.b16 %v1115
    %v2908 = vunpack.c.l.b16 %v1116
    %v2909 = vunpack.c.h.b16 %v1116
    %v2910 = vunpack.c.l.b16 %v1117
    %v2911 = vunpack.c.l.b16 %v1118
    %v2912 = vunpack.c.h.b16 %v1118
    %v2913 = vunpack.c.l.b16 %v1119
    %v2914 = vunpack.c.h.b16 %v1119
    %v2915 = vunpack.c.l.b16 %v1120
    %v2916 = vunpack.c.h.b16 %v1120
    %v2917 = vunpack.c.l.b16 %v1121
    %v2918 = vunpack.c.h.b16 %v1121
    %v2919 = vunpack.c.l.b16 %v1122
    %v2920 = vunpack.c.l.b16 %v1123
    %v2921 = vunpack.c.h.b16 %v1123
    %v2922 = vunpack.c.l.b16 %v1124
    %v2923 = vunpack.c.h.b16 %v1124
    %v2924 = vunpack.c.l.b16 %v1125
    %v2925 = vunpack.c.h.b16 %v1125
    %v2926 = vunpack.c.l.b16 %v1126
    %v2927 = vunpack.c.h.b16 %v1126
    %v2928 = vunpack.c.l.b16 %v1127
    %v2929 = vunpack.c.l.b16 %v1128
    %v2930 = vunpack.c.h.b16 %v1128
    %v2931 = vunpack.c.l.b16 %v1129
    %v2932 = vunpack.c.h.b16 %v1129
    %v2933 = vunpack.c.l.b16 %v1130
    %v2934 = vunpack.c.h.b16 %v1130
    %v2935 = vunpack.c.l.b16 %v1131
    %v2936 = vunpack.c.h.b16 %v1131
    %v2937 = vunpack.c.l.b16 %v1132
    %v2938 = vunpack.c.l.b16 %v1133
    %v2939 = vunpack.c.h.b16 %v1133
    %v2940 = vunpack.c.l.b16 %v1134
    %v2941 = vunpack.c.h.b16 %v1134
    %v2942 = vunpack.c.l.b16 %v1135
    %v2943 = vunpack.c.h.b16 %v1135
    %v2944 = vunpack.c.l.b16 %v1136
    %v2945 = vunpack.c.h.b16 %v1136
    %v2946 = vunpack.c.l.b16 %v1137
    %v2947 = vunpack.c.l.b16 %v1138
    %v2948 = vunpack.c.h.b16 %v1138
    %v2949 = vunpack.c.l.b16 %v1139
    %v2950 = vunpack.c.h.b16 %v1139
    %v2951 = vunpack.c.l.b16 %v1140
    %v2952 = vunpack.c.h.b16 %v1140
    %v2953 = vunpack.c.l.b16 %v1141
    %v2954 = vunpack.c.h.b16 %v1141
    %v2955 = vunpack.c.l.b16 %v1142
    %v2956 = vunpack.c.l.b16 %v1143
    %v2957 = vunpack.c.h.b16 %v1143
    %v2958 = vunpack.c.l.b16 %v1144
    %v2959 = vunpack.c.h.b16 %v1144
    %v2960 = vunpack.c.l.b16 %v1145
    %v2961 = vunpack.c.h.b16 %v1145
    %v2962 = vunpack.c.l.b16 %v1146
    %v2963 = vunpack.c.h.b16 %v1146
    %v2964 = vunpack.c.l.b16 %v1147
    %v2965 = vunpack.c.l.b16 %v1148
    %v2966 = vunpack.c.h.b16 %v1148
    %v2967 = vunpack.c.l.b16 %v1149
    %v2968 = vunpack.c.h.b16 %v1149
    %v2969 = vunpack.c.l.b16 %v1150
    %v2970 = vunpack.c.h.b16 %v1150
    %v2971 = vunpack.c.l.b16 %v1151
    %v2972 = vunpack.c.h.b16 %v1151
    %v2973 = vunpack.c.l.b16 %v1152
    %v2974 = vunpack.c.l.b16 %v1153
    %v2975 = vunpack.c.h.b16 %v1153
    %v2976 = vunpack.c.l.b16 %v1154
    %v2977 = vunpack.c.h.b16 %v1154
    %v2978 = vunpack.c.l.b16 %v1155
    %v2979 = vunpack.c.h.b16 %v1155
    %v2980 = vunpack.c.l.b16 %v1156
    %v2981 = vunpack.c.h.b16 %v1156
    %v2982 = vunpack.c.l.b16 %v1157
    %v2983 = vunpack.c.l.b16 %v1158
    %v2984 = vunpack.c.h.b16 %v1158
    %v2985 = vunpack.c.l.b16 %v1159
    %v2986 = vunpack.c.h.b16 %v1159
    %v2987 = vunpack.c.l.b16 %v1160
    %v2988 = vunpack.c.h.b16 %v1160
    %v2989 = vunpack.c.l.b16 %v1161
    %v2990 = vunpack.c.h.b16 %v1161
    %v2991 = vunpack.c.l.b16 %v1162
    %v2992 = vunpack.c.l.b16 %v1163
    %v2993 = vunpack.c.h.b16 %v1163
    %v2994 = vunpack.c.l.b16 %v1164
    %v2995 = vunpack.c.h.b16 %v1164
    %v2996 = vunpack.c.l.b16 %v1165
    %v2997 = vunpack.c.h.b16 %v1165
    %v2998 = vunpack.c.l.b16 %v1166
    %v2999 = vunpack.c.h.b16 %v1166
    %v3000 = vunpack.c.l.b16 %v1167
    %v3001 = vunpack.c.l.b16 %v1168
    %v3002 = vunpack.c.h.b16 %v1168
    %v3003 = vunpack.c.l.b16 %v1169
    %v3004 = vunpack.c.h.b16 %v1169
    %v3005 = vunpack.c.l.b16 %v1170
    %v3006 = vunpack.c.h.b16 %v1170
    %v3007 = vunpack.c.l.b16 %v1171
    %v3008 = vunpack.c.h.b16 %v1171
    %v3009 = vunpack.c.l.b16 %v1172
    %v3010 = vunpack.c.l.b16 %v1173
    %v3011 = vunpack.c.h.b16 %v1173
    %v3012 = vunpack.c.l.b16 %v1174
    %v3013 = vunpack.c.h.b16 %v1174
    %v3014 = vunpack.c.l.b16 %v1175
    %v3015 = vunpack.c.h.b16 %v1175
    %v3016 = vunpack.c.l.b16 %v1176
    %v3017 = vunpack.c.h.b16 %v1176
    %v3018 = vunpack.c.l.b16 %v1177
    %v3019 = vunpack.c.l.b16 %v1178
    %v3020 = vunpack.c.h.b16 %v1178
    %v3021 = vunpack.c.l.b16 %v1179
    %v3022 = vunpack.c.h.b16 %v1179
    %v3023 = vunpack.c.l.b16 %v1180
    %v3024 = vunpack.c.h.b16 %v1180
    %v3025 = vunpack.c.l.b16 %v1181
    %v3026 = vunpack.c.h.b16 %v1181
    %v3027 = vunpack.c.l.b16 %v1182
    %v3028 = vunpack.c.l.b16 %v1183
    %v3029 = vunpack.c.h.b16 %v1183
    %v3030 = vunpack.c.l.b16 %v1184
    %v3031 = vunpack.c.h.b16 %v1184
    %v3032 = vunpack.c.l.b16 %v1185
    %v3033 = vunpack.c.h.b16 %v1185
    %v3034 = vunpack.c.l.b16 %v1186
    %v3035 = vunpack.c.h.b16 %v1186
    %v3036 = vunpack.c.l.b16 %v1187
    %v3037 = vunpack.c.l.b16 %v1188
    %v3038 = vunpack.c.h.b16 %v1188
    %v3039 = vunpack.c.l.b16 %v1189
    %v3040 = vunpack.c.h.b16 %v1189
    %v3041 = vunpack.c.l.b16 %v1190
    %v3042 = vunpack.c.h.b16 %v1190
    %v3043 = vunpack.c.l.b16 %v1191
    %v3044 = vunpack.c.h.b16 %v1191
    %v3045 = vunpack.c.l.b16 %v1192
    %v3046 = vunpack.c.l.b16 %v1193
    %v3047 = vunpack.c.h.b16 %v1193
    %v3048 = vunpack.c.l.b16 %v1194
    %v3049 = vunpack.c.h.b16 %v1194
    %v3050 = vunpack.c.l.b16 %v1195
    %v3051 = vunpack.c.h.b16 %v1195
    %v3052 = vunpack.c.l.b16 %v1196
    %v3053 = vunpack.c.h.b16 %v1196
    %v3054 = vunpack.c.l.b16 %v1197
    %v3055 = vunpack.c.l.b16 %v1198
    %v3056 = vunpack.c.h.b16 %v1198
    %v3057 = vunpack.c.l.b16 %v1199
    %v3058 = vunpack.c.h.b16 %v1199
    %v3059 = vunpack.c.l.b16 %v1200
    %v3060 = vunpack.c.h.b16 %v1200
    %v3061 = vunpack.c.l.b16 %v1201
    %v3062 = vunpack.c.h.b16 %v1201
    %v3063 = vunpack.c.l.b16 %v1202
    %v3064 = vunpack.c.l.b16 %v1203
    %v3065 = vunpack.c.h.b16 %v1203
    %v3066 = vunpack.c.l.b16 %v1204
    %v3067 = vunpack.c.h.b16 %v1204
    %v3068 = vunpack.c.l.b16 %v1205
    %v3069 = vunpack.c.h.b16 %v1205
    %v3070 = vunpack.c.l.b16 %v1206
    %v3071 = vunpack.c.h.b16 %v1206
    %v3072 = vunpack.c.l.b16 %v1207
    %v3073 = vunpack.c.l.b16 %v1208
    %v3074 = vunpack.c.h.b16 %v1208
    %v3075 = vunpack.c.l.b16 %v1209
    %v3076 = vunpack.c.h.b16 %v1209
    %v3077 = vunpack.c.l.b16 %v1210
    %v3078 = vunpack.c.h.b16 %v1210
    %v3079 = vunpack.c.l.b16 %v1211
    %v3080 = vunpack.c.h.b16 %v1211
    %v3081 = vunpack.c.l.b16 %v1212
    %v3082 = vunpack.c.l.b16 %v1213
    %v3083 = vunpack.c.h.b16 %v1213
    %v3084 = vunpack.c.l.b16 %v1214
    %v3085 = vunpack.c.h.b16 %v1214
    %v3086 = vunpack.c.l.b16 %v1215
    %v3087 = vunpack.c.h.b16 %v1215
    %v3088 = vunpack.c.l.b16 %v1216
    %v3089 = vunpack.c.h.b16 %v1216
    %v3090 = vunpack.c.l.b16 %v1217
    %v3091 = vunpack.c.l.b16 %v1218
    %v3092 = vunpack.c.h.b16 %v1218
    %v3093 = vunpack.c.l.b16 %v1219
    %v3094 = vunpack.c.h.b16 %v1219
    %v3095 = vunpack.c.l.b16 %v1220
    %v3096 = vunpack.c.h.b16 %v1220
    %v3097 = vunpack.c.l.b16 %v1221
    %v3098 = vunpack.c.h.b16 %v1221
    %v3099 = vunpack.c.l.b16 %v1222
    %v3100 = vunpack.c.l.b16 %v1223
    %v3101 = vunpack.c.h.b16 %v1223
    %v3102 = vunpack.c.l.b16 %v1224
    %v3103 = vunpack.c.h.b16 %v1224
    %v3104 = vunpack.c.l.b16 %v1225
    %v3105 = vunpack.c.h.b16 %v1225
    %v3106 = vunpack.c.l.b16 %v1226
    %v3107 = vunpack.c.h.b16 %v1226
    %v3108 = vunpack.c.l.b16 %v1227
    %v3109 = vunpack.c.l.b16 %v1228
    %v3110 = vunpack.c.h.b16 %v1228
    %v3111 = vunpack.c.l.b16 %v1229
    %v3112 = vunpack.c.h.b16 %v1229
    %v3113 = vunpack.c.l.b16 %v1230
    %v3114 = vunpack.c.h.b16 %v1230
    %v3115 = vunpack.c.l.b16 %v1231
    %v3116 = vunpack.c.h.b16 %v1231
    %v3117 = vunpack.c.l.b16 %v1232
    %v3118 = vunpack.c.l.b16 %v1233
    %v3119 = vunpack.c.h.b16 %v1233
    %v3120 = vunpack.c.l.b16 %v1234
    %v3121 = vunpack.c.h.b16 %v1234
    %v3122 = vunpack.c.l.b16 %v1235
    %v3123 = vunpack.c.h.b16 %v1235
    %v3124 = vunpack.c.l.b16 %v1236
    %v3125 = vunpack.c.h.b16 %v1236
    %v3126 = vunpack.c.l.b16 %v1237
    %v3127 = vunpack.c.l.b16 %v1238
    %v3128 = vunpack.c.h.b16 %v1238
    %v3129 = vunpack.c.l.b16 %v1239
    %v3130 = vunpack.c.h.b16 %v1239
    %v3131 = vunpack.c.l.b16 %v1240
    %v3132 = vunpack.c.h.b16 %v1240
    %v3133 = vunpack.c.l.b16 %v1241
    %v3134 = vunpack.c.h.b16 %v1241
    %v3135 = vunpack.c.l.b16 %v1242
    %v3136 = vunpack.c.l.b16 %v1243
    %v3137 = vunpack.c.h.b16 %v1243
    %v3138 = vunpack.c.l.b16 %v1244
    %v3139 = vunpack.c.h.b16 %v1244
    %v3140 = vunpack.c.l.b16 %v1245
    %v3141 = vunpack.c.h.b16 %v1245
    %v3142 = vunpack.c.l.b16 %v1246
    %v3143 = vunpack.c.h.b16 %v1246
    %v3144 = vunpack.c.l.b16 %v1247
    %v3145 = vunpack.c.l.b16 %v1248
    %v3146 = vunpack.c.h.b16 %v1248
    %v3147 = vunpack.c.l.b16 %v1249
    %v3148 = vunpack.c.h.b16 %v1249
    %v3149 = vunpack.c.l.b16 %v1250
    %v3150 = vunpack.c.h.b16 %v1250
    %v3151 = vunpack.c.l.b16 %v1251
    %v3152 = vunpack.c.h.b16 %v1251
    %v3153 = vunpack.c.l.b16 %v1252
    %v3154 = vunpack.c.l.b16 %v1253
    %v3155 = vunpack.c.h.b16 %v1253
    %v3156 = vunpack.c.l.b16 %v1254
    %v3157 = vunpack.c.h.b16 %v1254
    %v3158 = vunpack.c.l.b16 %v1255
    %v3159 = vunpack.c.h.b16 %v1255
    %v3160 = vunpack.c.l.b16 %v1256
    %v3161 = vunpack.c.h.b16 %v1256
    %v3162 = vunpack.c.l.b16 %v1257
    %v3163 = vunpack.c.l.b16 %v1258
    %v3164 = vunpack.c.h.b16 %v1258
    %v3165 = vunpack.c.l.b16 %v1259
    %v3166 = vunpack.c.h.b16 %v1259
    %v3167 = vunpack.c.l.b16 %v1260
    %v3168 = vunpack.c.h.b16 %v1260
    %v3169 = vunpack.c.l.b16 %v1261
    %v3170 = vunpack.c.h.b16 %v1261
    %v3171 = vunpack.c.l.b16 %v1262
    %v3172 = vunpack.c.l.b16 %v1263
    %v3173 = vunpack.c.h.b16 %v1263
    %v3174 = vunpack.c.l.b16 %v1264
    %v3175 = vunpack.c.h.b16 %v1264
    %v3176 = vunpack.c.l.b16 %v1265
    %v3177 = vunpack.c.h.b16 %v1265
    %v3178 = vunpack.c.l.b16 %v1266
    %v3179 = vunpack.c.h.b16 %v1266
    %v3180 = vunpack.c.l.b16 %v1267
    %v3181 = vunpack.c.l.b16 %v1268
    %v3182 = vunpack.c.h.b16 %v1268
    %v3183 = vunpack.c.l.b16 %v1269
    %v3184 = vunpack.c.h.b16 %v1269
    %v3185 = vunpack.c.l.b16 %v1270
    %v3186 = vunpack.c.h.b16 %v1270
    %v3187 = vunpack.c.l.b16 %v1271
    %v3188 = vunpack.c.h.b16 %v1271
    %v3189 = vunpack.c.l.b16 %v1272
    %v3190 = vunpack.c.l.b16 %v1273
    %v3191 = vunpack.c.h.b16 %v1273
    %v3192 = vunpack.c.l.b16 %v1274
    %v3193 = vunpack.c.h.b16 %v1274
    %v3194 = vunpack.c.l.b16 %v1275
    %v3195 = vunpack.c.h.b16 %v1275
    %v3196 = vunpack.c.l.b16 %v1276
    %v3197 = vunpack.c.h.b16 %v1276
    %v3198 = vunpack.c.l.b16 %v1277
    %v3199 = vunpack.c.l.b16 %v1278
    %v3200 = vunpack.c.h.b16 %v1278
    %v3201 = vunpack.c.l.b16 %v1279
    %v3202 = vunpack.c.h.b16 %v1279
    %v3203 = vunpack.c.l.b16 %v1280
    %v3204 = vunpack.c.h.b16 %v1280
    %v3205 = vunpack.c.l.b16 %v1281
    %v3206 = vunpack.c.h.b16 %v1281
    %v3207 = vunpack.c.l.b16 %v1282
    %v3208 = vunpack.c.l.b16 %v1283
    %v3209 = vunpack.c.h.b16 %v1283
    %v3210 = vunpack.c.l.b16 %v1284
    %v3211 = vunpack.c.h.b16 %v1284
    %v3212 = vunpack.c.l.b16 %v1285
    %v3213 = vunpack.c.h.b16 %v1285
    %v3214 = vunpack.c.l.b16 %v1286
    %v3215 = vunpack.c.h.b16 %v1286
    %v3216 = vunpack.c.l.b16 %v1287
    %v3217 = vunpack.c.l.b16 %v1288
    %v3218 = vunpack.c.h.b16 %v1288
    %v3219 = vunpack.c.l.b16 %v1289
    %v3220 = vunpack.c.h.b16 %v1289
    %v3221 = vunpack.c.l.b16 %v1290
    %v3222 = vunpack.c.h.b16 %v1290
    %v3223 = vunpack.c.l.b16 %v1291
    %v3224 = vunpack.c.h.b16 %v1291
    %v3225 = vunpack.c.l.b16 %v1292
    %v3226 = vunpack.c.l.b16 %v1293
    %v3227 = vunpack.c.h.b16 %v1293
    %v3228 = vunpack.c.l.b16 %v1294
    %v3229 = vunpack.c.h.b16 %v1294
    %v3230 = vunpack.c.l.b16 %v1295
    %v3231 = vunpack.c.h.b16 %v1295
    %v3232 = vunpack.c.l.b16 %v1296
    %v3233 = vunpack.c.h.b16 %v1296
    %v3234 = vunpack.c.l.b16 %v1297
    %v3235 = vunpack.c.l.b16 %v1298
    %v3236 = vunpack.c.h.b16 %v1298
    %v3237 = vunpack.c.l.b16 %v1299
    %v3238 = vunpack.c.h.b16 %v1299
    %v3239 = vunpack.c.l.b16 %v1300
    %v3240 = vunpack.c.h.b16 %v1300
    %v3241 = vunpack.c.l.b16 %v1301
    %v3242 = vunpack.c.h.b16 %v1301
    %v3243 = vunpack.c.l.b16 %v1302
    %v3244 = vunpack.c.l.b16 %v1303
    %v3245 = vunpack.c.h.b16 %v1303
    %v3246 = vunpack.c.l.b16 %v1304
    %v3247 = vunpack.c.h.b16 %v1304
    %v3248 = vunpack.c.l.b16 %v1305
    %v3249 = vunpack.c.h.b16 %v1305
    %v3250 = vunpack.c.l.b16 %v1306
    %v3251 = vunpack.c.h.b16 %v1306
    %v3252 = vunpack.c.l.b16 %v1307
    %v3253 = vunpack.c.l.b16 %v1308
    %v3254 = vunpack.c.h.b16 %v1308
    %v3255 = vunpack.c.l.b16 %v1309
    %v3256 = vunpack.c.h.b16 %v1309
    %v3257 = vunpack.c.l.b16 %v1310
    %v3258 = vunpack.c.h.b16 %v1310
    %v3259 = vunpack.c.l.b16 %v1311
    %v3260 = vunpack.c.h.b16 %v1311
    %v3261 = vunpack.c.l.b16 %v1312
    %v3262 = vunpack.c.l.b16 %v1313
    %v3263 = vunpack.c.h.b16 %v1313
    %v3264 = vunpack.c.l.b16 %v1314
    %v3265 = vunpack.c.h.b16 %v1314
    %v3266 = vunpack.c.l.b16 %v1315
    %v3267 = vunpack.c.h.b16 %v1315
    %v3268 = vunpack.c.l.b16 %v1316
    %v3269 = vunpack.c.h.b16 %v1316
    %v3270 = vunpack.c.l.b16 %v1317
    %v3271 = vunpack.c.l.b16 %v1318
    %v3272 = vunpack.c.h.b16 %v1318
    %v3273 = vunpack.c.l.b16 %v1319
    %v3274 = vunpack.c.h.b16 %v1319
    %v3275 = vunpack.c.l.b16 %v1320
    %v3276 = vunpack.c.h.b16 %v1320
    %v3277 = vunpack.c.l.b16 %v1321
    %v3278 = vunpack.c.h.b16 %v1321
    %v3279 = vunpack.c.l.b16 %v1322
    %v3280 = vunpack.c.l.b16 %v1323
    %v3281 = vunpack.c.h.b16 %v1323
    %v3282 = vunpack.c.l.b16 %v1324
    %v3283 = vunpack.c.h.b16 %v1324
    %v3284 = vunpack.c.l.b16 %v1325
    %v3285 = vunpack.c.h.b16 %v1325
    %v3286 = vunpack.c.l.b16 %v1326
    %v3287 = vunpack.c.h.b16 %v1326
    %v3288 = vunpack.c.l.b16 %v1327
    %v3289 = vunpack.c.l.b16 %v1328
    %v3290 = vunpack.c.h.b16 %v1328
    %v3291 = vunpack.c.l.b16 %v1329
    %v3292 = vunpack.c.h.b16 %v1329
    %v3293 = vunpack.c.l.b16 %v1330
    %v3294 = vunpack.c.h.b16 %v1330
    %v3295 = vunpack.c.l.b16 %v1331
    %v3296 = vunpack.c.h.b16 %v1331
    %v3297 = vunpack.c.l.b16 %v1332
    %v3298 = vunpack.c.l.b16 %v1333
    %v3299 = vunpack.c.h.b16 %v1333
    %v3300 = vunpack.c.l.b16 %v1334
    %v3301 = vunpack.c.h.b16 %v1334
    %v3302 = vunpack.c.l.b16 %v1335
    %v3303 = vunpack.c.h.b16 %v1335
    %v3304 = vunpack.c.l.b16 %v1336
    %v3305 = vunpack.c.h.b16 %v1336
    %v3306 = vunpack.c.l.b16 %v1337
    %v3307 = vunpack.c.l.b16 %v1338
    %v3308 = vunpack.c.h.b16 %v1338
    %v3309 = vunpack.c.l.b16 %v1339
    %v3310 = vunpack.c.h.b16 %v1339
    %v3311 = vunpack.c.l.b16 %v1340
    %v3312 = vunpack.c.h.b16 %v1340
    %v3313 = vunpack.c.l.b16 %v1341
    %v3314 = vunpack.c.h.b16 %v1341
    %v3315 = vunpack.c.l.b16 %v1342
    %v3316 = vunpack.c.l.b16 %v1343
    %v3317 = vunpack.c.h.b16 %v1343
    %v3318 = vunpack.c.l.b16 %v1344
    %v3319 = vunpack.c.h.b16 %v1344
    %v3320 = vunpack.c.l.b16 %v1345
    %v3321 = vunpack.c.h.b16 %v1345
    %v3322 = vunpack.c.l.b16 %v1346
    %v3323 = vunpack.c.h.b16 %v1346
    %v3324 = vunpack.c.l.b16 %v1347
    %v3325 = vunpack.c.l.b16 %v1348
    %v3326 = vunpack.c.h.b16 %v1348
    %v3327 = vunpack.c.l.b16 %v1349
    %v3328 = vunpack.c.h.b16 %v1349
    %v3329 = vunpack.c.l.b16 %v1350
    %v3330 = vunpack.c.h.b16 %v1350
    %v3331 = vunpack.c.l.b16 %v1351
    %v3332 = vunpack.c.h.b16 %v1351
    %v3333 = vunpack.c.l.b16 %v1352
    %v3334 = vunpack.c.l.b16 %v1353
    %v3335 = vunpack.c.h.b16 %v1353
    %v3336 = vunpack.c.l.b16 %v1354
    %v3337 = vunpack.c.h.b16 %v1354
    %v3338 = vunpack.c.l.b16 %v1355
    %v3339 = vunpack.c.h.b16 %v1355
    %v3340 = vunpack.c.l.b16 %v1356
    %v3341 = vunpack.c.h.b16 %v1356
    %v3342 = vunpack.c.l.b16 %v1357
    %v3343 = vunpack.c.l.b16 %v1358
    %v3344 = vunpack.c.h.b16 %v1358
    %v3345 = vunpack.c.l.b16 %v1359
    %v3346 = vunpack.c.h.b16 %v1359
    %v3347 = vunpack.c.l.b16 %v1360
    %v3348 = vunpack.c.h.b16 %v1360
    %v3349 = vunpack.c.l.b16 %v1361
    %v3350 = vunpack.c.h.b16 %v1361
    %v3351 = vunpack.c.l.b16 %v1362
    %v3352 = vunpack.c.l.b16 %v1363
    %v3353 = vunpack.c.h.b16 %v1363
    %v3354 = vunpack.c.l.b16 %v1364
    %v3355 = vunpack.c.h.b16 %v1364
    %v3356 = vunpack.c.l.b16 %v1365
    %v3357 = vunpack.c.h.b16 %v1365
    %v3358 = vunpack.c.l.b16 %v1366
    %v3359 = vunpack.c.h.b16 %v1366
    %v3360 = vunpack.c.l.b16 %v1367
    %v3361 = vunpack.c.l.b16 %v1368
    %v3362 = vunpack.c.h.b16 %v1368
    %v3363 = vunpack.c.l.b16 %v1369
    %v3364 = vunpack.c.h.b16 %v1369
    %v3365 = vunpack.c.l.b16 %v1370
    %v3366 = vunpack.c.h.b16 %v1370
    %v3367 = vunpack.c.l.b16 %v1371
    %v3368 = vunpack.c.h.b16 %v1371
    %v3369 = vunpack.c.l.b16 %v1372
    %v3370 = vunpack.c.l.b16 %v1373
    %v3371 = vunpack.c.h.b16 %v1373
    %v3372 = vunpack.c.l.b16 %v1374
    %v3373 = vunpack.c.h.b16 %v1374
    %v3374 = vunpack.c.l.b16 %v1375
    %v3375 = vunpack.c.h.b16 %v1375
    %v3376 = vunpack.c.l.b16 %v1376
    %v3377 = vunpack.c.h.b16 %v1376
    %v3378 = vunpack.c.l.b16 %v1377
    %v3379 = vunpack.c.l.b16 %v1378
    %v3380 = vunpack.c.h.b16 %v1378
    %v3381 = vunpack.c.l.b16 %v1379
    %v3382 = vunpack.c.h.b16 %v1379
    %v3383 = vunpack.c.l.b16 %v1380
    %v3384 = vunpack.c.h.b16 %v1380
    %v3385 = vunpack.c.l.b16 %v1381
    %v3386 = vunpack.c.h.b16 %v1381
    %v3387 = vunpack.c.l.b16 %v1382
    %v3388 = vunpack.c.l.b16 %v1383
    %v3389 = vunpack.c.h.b16 %v1383
    %v3390 = vunpack.c.l.b16 %v1384
    %v3391 = vunpack.c.h.b16 %v1384
    %v3392 = vunpack.c.l.b16 %v1385
    %v3393 = vunpack.c.h.b16 %v1385
    %v3394 = vunpack.c.l.b16 %v1386
    %v3395 = vunpack.c.h.b16 %v1386
    %v3396 = vunpack.c.l.b16 %v1387
    %v3397 = vunpack.c.l.b16 %v1388
    %v3398 = vunpack.c.h.b16 %v1388
    %v3399 = vunpack.c.l.b16 %v1389
    %v3400 = vunpack.c.h.b16 %v1389
    %v3401 = vunpack.c.l.b16 %v1390
    %v3402 = vunpack.c.h.b16 %v1390
    %v3403 = vunpack.c.l.b16 %v1391
    %v3404 = vunpack.c.h.b16 %v1391
    %v3405 = vunpack.c.l.b16 %v1392
    %v3406 = vunpack.c.l.b16 %v1393
    %v3407 = vunpack.c.h.b16 %v1393
    %v3408 = vunpack.c.l.b16 %v1394
    %v3409 = vunpack.c.h.b16 %v1394
    %v3410 = vunpack.c.l.b16 %v1395
    %v3411 = vunpack.c.h.b16 %v1395
    %v3412 = vunpack.c.l.b16 %v1396
    %v3413 = vunpack.c.h.b16 %v1396
    %v3414 = vunpack.c.l.b16 %v1397
    %v3415 = vunpack.c.l.b16 %v1398
    %v3416 = vunpack.c.h.b16 %v1398
    %v3417 = vunpack.c.l.b16 %v1399
    %v3418 = vunpack.c.h.b16 %v1399
    %v3419 = vunpack.c.l.b16 %v1400
    %v3420 = vunpack.c.h.b16 %v1400
    %v3421 = vunpack.c.l.b16 %v1401
    %v3422 = vunpack.c.h.b16 %v1401
    %v3423 = vunpack.c.l.b16 %v1402
    %v3424 = vunpack.c.l.b16 %v1403
    %v3425 = vunpack.c.h.b16 %v1403
    %v3426 = vunpack.c.l.b16 %v1404
    %v3427 = vunpack.c.h.b16 %v1404
    %v3428 = vunpack.c.l.b16 %v1405
    %v3429 = vunpack.c.h.b16 %v1405
    %v3430 = vunpack.c.l.b16 %v1406
    %v3431 = vunpack.c.h.b16 %v1406
    %v3432 = vunpack.c.l.b16 %v1407
    %v3433 = vunpack.c.l.b16 %v1408
    %v3434 = vunpack.c.h.b16 %v1408
    %v3435 = vunpack.c.l.b16 %v1409
    %v3436 = vunpack.c.h.b16 %v1409
    %v3437 = vunpack.c.l.b16 %v1410
    %v3438 = vunpack.c.h.b16 %v1410
    %v3439 = vunpack.c.l.b16 %v1411
    %v3440 = vunpack.c.h.b16 %v1411
    %v3441 = vunpack.c.l.b16 %v1412
    %v3442 = vunpack.c.l.b16 %v1413
    %v3443 = vunpack.c.h.b16 %v1413
    %v3444 = vunpack.c.l.b16 %v1414
    %v3445 = vunpack.c.h.b16 %v1414
    %v3446 = vunpack.c.l.b16 %v1415
    %v3447 = vunpack.c.h.b16 %v1415
    %v3448 = vunpack.c.l.b16 %v1416
    %v3449 = vunpack.c.h.b16 %v1416
    %v3450 = vunpack.c.l.b16 %v1417
    %v3451 = vunpack.c.l.b16 %v1418
    %v3452 = vunpack.c.h.b16 %v1418
    %v3453 = vunpack.c.l.b16 %v1419
    %v3454 = vunpack.c.h.b16 %v1419
    %v3455 = vunpack.c.l.b16 %v1420
    %v3456 = vunpack.c.h.b16 %v1420
    %v3457 = vunpack.c.l.b16 %v1421
    %v3458 = vunpack.c.h.b16 %v1421
    %v3459 = vunpack.c.l.b16 %v1422
    %v3460 = vunpack.c.l.b16 %v1423
    %v3461 = vunpack.c.h.b16 %v1423
    %v3462 = vunpack.c.l.b16 %v1424
    %v3463 = vunpack.c.h.b16 %v1424
    %v3464 = vunpack.c.l.b16 %v1425
    %v3465 = vunpack.c.h.b16 %v1425
    %v3466 = vunpack.c.l.b16 %v1426
    %v3467 = vunpack.c.h.b16 %v1426
    %v3468 = vunpack.c.l.b16 %v1427
    %v3469 = vunpack.c.l.b16 %v1428
    %v3470 = vunpack.c.h.b16 %v1428
    %v3471 = vunpack.c.l.b16 %v1429
    %v3472 = vunpack.c.h.b16 %v1429
    %v3473 = vunpack.c.l.b16 %v1430
    %v3474 = vunpack.c.h.b16 %v1430
    %v3475 = vunpack.c.l.b16 %v1431
    %v3476 = vunpack.c.h.b16 %v1431
    %v3477 = vunpack.c.l.b16 %v1432
    %v3478 = vunpack.c.l.b16 %v1433
    %v3479 = vunpack.c.h.b16 %v1433
    %v3480 = vunpack.c.l.b16 %v1434
    %v3481 = vunpack.c.h.b16 %v1434
    %v3482 = vunpack.c.l.b16 %v1435
    %v3483 = vunpack.c.h.b16 %v1435
    %v3484 = vunpack.c.l.b16 %v1436
    %v3485 = vunpack.c.h.b16 %v1436
    %v3486 = vunpack.c.l.b16 %v1437
    %v3487 = vunpack.c.l.b16 %v1438
    %v3488 = vunpack.c.h.b16 %v1438
    %v3489 = vunpack.c.l.b16 %v1439
    %v3490 = vunpack.c.h.b16 %v1439
    %v3491 = vunpack.c.l.b16 %v1440
    %v3492 = vunpack.c.h.b16 %v1440
    %v3493 = vunpack.c.l.b16 %v1441
    %v3494 = vunpack.c.h.b16 %v1441
    %v3495 = vunpack.c.l.b16 %v1442
    %v3496 = vunpack.c.l.b16 %v1443
    %v3497 = vunpack.c.h.b16 %v1443
    %v3498 = vunpack.c.l.b16 %v1444
    %v3499 = vunpack.c.h.b16 %v1444
    %v3500 = vunpack.c.l.b16 %v1445
    %v3501 = vunpack.c.h.b16 %v1445
    %v3502 = vunpack.c.l.b16 %v1446
    %v3503 = vunpack.c.h.b16 %v1446
    %v3504 = vunpack.c.l.b16 %v1447
    %v3505 = vunpack.c.l.b16 %v1448
    %v3506 = vunpack.c.h.b16 %v1448
    %v3507 = vunpack.c.l.b16 %v1449
    %v3508 = vunpack.c.h.b16 %v1449
    %v3509 = vunpack.c.l.b16 %v1450
    %v3510 = vunpack.c.h.b16 %v1450
    %v3511 = vunpack.c.l.b16 %v1451
    %v3512 = vunpack.c.h.b16 %v1451
    %v3513 = vunpack.c.l.b16 %v1452
    %v3514 = vunpack.c.l.b16 %v1453
    %v3515 = vunpack.c.h.b16 %v1453
    %v3516 = vunpack.c.l.b16 %v1454
    %v3517 = vunpack.c.h.b16 %v1454
    %v3518 = vunpack.c.l.b16 %v1455
    %v3519 = vunpack.c.h.b16 %v1455
    %v3520 = vunpack.c.l.b16 %v1456
    %v3521 = vunpack.c.h.b16 %v1456
    %v3522 = vunpack.c.l.b16 %v1457
    %v3523 = vpack.c.b16 %v2236, %v2227
    %v3524 = vpack.c.b16 %v2237, %v2228
    %v3525 = vpack.c.b16 %v2238, %v2229
    %v3526 = vpack.c.b16 %v2239, %v2230
    %v3527 = vpack.c.b16 %v2240, %v2231
    %v3528 = vpack.c.b16 %v2241, %v2232
    %v3529 = vpack.c.b16 %v2242, %v2233
    %v3530 = vpack.c.b16 %v2243, %v2234
    %v3531 = vpack.c.b16 %v2244, %v2235
    %v3532 = vpack.c.b16 %v2254, %v2245
    %v3533 = vpack.c.b16 %v2255, %v2246
    %v3534 = vpack.c.b16 %v2256, %v2247
    %v3535 = vpack.c.b16 %v2257, %v2248
    %v3536 = vpack.c.b16 %v2258, %v2249
    %v3537 = vpack.c.b16 %v2259, %v2250
    %v3538 = vpack.c.b16 %v2260, %v2251
    %v3539 = vpack.c.b16 %v2261, %v2252
    %v3540 = vpack.c.b16 %v2262, %v2253
    %v3541 = vpack.c.b16 %v2272, %v2263
    %v3542 = vpack.c.b16 %v2273, %v2264
    %v3543 = vpack.c.b16 %v2274, %v2265
    %v3544 = vpack.c.b16 %v2275, %v2266
    %v3545 = vpack.c.b16 %v2276, %v2267
    %v3546 = vpack.c.b16 %v2277, %v2268
    %v3547 = vpack.c.b16 %v2278, %v2269
    %v3548 = vpack.c.b16 %v2279, %v2270
    %v3549 = vpack.c.b16 %v2280, %v2271
    %v3550 = vpack.c.b16 %v2290, %v2281
    %v3551 = vpack.c.b16 %v2291, %v2282
    %v3552 = vpack.c.b16 %v2292, %v2283
    %v3553 = vpack.c.b16 %v2293, %v2284
    %v3554 = vpack.c.b16 %v2294, %v2285
    %v3555 = vpack.c.b16 %v2295, %v2286
    %v3556 = vpack.c.b16 %v2296, %v2287
    %v3557 = vpack.c.b16 %v2297, %v2288
    %v3558 = vpack.c.b16 %v2298, %v2289
    %v3559 = vpack.c.b16 %v2308, %v2299
    %v3560 = vpack.c.b16 %v2309, %v2300
    %v3561 = vpack.c.b16 %v2310, %v2301
    %v3562 = vpack.c.b16 %v2311, %v2302
    %v3563 = vpack.c.b16 %v2312, %v2303
    %v3564 = vpack.c.b16 %v2313, %v2304
    %v3565 = vpack.c.b16 %v2314, %v2305
    %v3566 = vpack.c.b16 %v2315, %v2306
    %v3567 = vpack.c.b16 %v2316, %v2307
    %v3568 = vpack.c.b16 %v2326, %v2317
    %v3569 = vpack.c.b16 %v2327, %v2318
    %v3570 = vpack.c.b16 %v2328, %v2319
    %v3571 = vpack.c.b16 %v2329, %v2320
    %v3572 = vpack.c.b16 %v2330, %v2321
    %v3573 = vpack.c.b16 %v2331, %v2322
    %v3574 = vpack.c.b16 %v2332, %v2323
    %v3575 = vpack.c.b16 %v2333, %v2324
    %v3576 = vpack.c.b16 %v2334, %v2325
    %v3577 = vpack.c.b16 %v2344, %v2335
    %v3578 = vpack.c.b16 %v2345, %v2336
    %v3579 = vpack.c.b16 %v2346, %v2337
    %v3580 = vpack.c.b16 %v2347, %v2338
    %v3581 = vpack.c.b16 %v2348, %v2339
    %v3582 = vpack.c.b16 %v2349, %v2340
    %v3583 = vpack.c.b16 %v2350, %v2341
    %v3584 = vpack.c.b16 %v2351, %v2342
    %v3585 = vpack.c.b16 %v2352, %v2343
    %v3586 = vpack.c.b16 %v2362, %v2353
    %v3587 = vpack.c.b16 %v2363, %v2354
    %v3588 = vpack.c.b16 %v2364, %v2355
    %v3589 = vpack.c.b16 %v2365, %v2356
    %v3590 = vpack.c.b16 %v2366, %v2357
    %v3591 = vpack.c.b16 %v2367, %v2358
    %v3592 = vpack.c.b16 %v2368, %v2359
    %v3593 = vpack.c.b16 %v2369, %v2360
    %v3594 = vpack.c.b16 %v2370, %v2361
    %v3595 = vpack.c.b16 %v2380, %v2371
    %v3596 = vpack.c.b16 %v2381, %v2372
    %v3597 = vpack.c.b16 %v2382, %v2373
    %v3598 = vpack.c.b16 %v2383, %v2374
    %v3599 = vpack.c.b16 %v2384, %v2375
    %v3600 = vpack.c.b16 %v2385, %v2376
    %v3601 = vpack.c.b16 %v2386, %v2377
    %v3602 = vpack.c.b16 %v2387, %v2378
    %v3603 = vpack.c.b16 %v2388, %v2379
    %v3604 = vpack.c.b16 %v2398, %v2389
    %v3605 = vpack.c.b16 %v2399, %v2390
    %v3606 = vpack.c.b16 %v2400, %v2391
    %v3607 = vpack.c.b16 %v2401, %v2392
    %v3608 = vpack.c.b16 %v2402, %v2393
    %v3609 = vpack.c.b16 %v2403, %v2394
    %v3610 = vpack.c.b16 %v2404, %v2395
    %v3611 = vpack.c.b16 %v2405, %v2396
    %v3612 = vpack.c.b16 %v2406, %v2397
    %v3613 = vpack.c.b16 %v2416, %v2407
    %v3614 = vpack.c.b16 %v2417, %v2408
    %v3615 = vpack.c.b16 %v2418, %v2409
    %v3616 = vpack.c.b16 %v2419, %v2410
    %v3617 = vpack.c.b16 %v2420, %v2411
    %v3618 = vpack.c.b16 %v2421, %v2412
    %v3619 = vpack.c.b16 %v2422, %v2413
    %v3620 = vpack.c.b16 %v2423, %v2414
    %v3621 = vpack.c.b16 %v2424, %v2415
    %v3622 = vpack.c.b16 %v2434, %v2425
    %v3623 = vpack.c.b16 %v2435, %v2426
    %v3624 = vpack.c.b16 %v2436, %v2427
    %v3625 = vpack.c.b16 %v2437, %v2428
    %v3626 = vpack.c.b16 %v2438, %v2429
    %v3627 = vpack.c.b16 %v2439, %v2430
    %v3628 = vpack.c.b16 %v2440, %v2431
    %v3629 = vpack.c.b16 %v2441, %v2432
    %v3630 = vpack.c.b16 %v2442, %v2433
    %v3631 = vpack.c.b16 %v2452, %v2443
    %v3632 = vpack.c.b16 %v2453, %v2444
    %v3633 = vpack.c.b16 %v2454, %v2445
    %v3634 = vpack.c.b16 %v2455, %v2446
    %v3635 = vpack.c.b16 %v2456, %v2447
    %v3636 = vpack.c.b16 %v2457, %v2448
    %v3637 = vpack.c.b16 %v2458, %v2449
    %v3638 = vpack.c.b16 %v2459, %v2450
    %v3639 = vpack.c.b16 %v2460, %v2451
    %v3640 = vpack.c.b16 %v2470, %v2461
    %v3641 = vpack.c.b16 %v2471, %v2462
    %v3642 = vpack.c.b16 %v2472, %v2463
    %v3643 = vpack.c.b16 %v2473, %v2464
    %v3644 = vpack.c.b16 %v2474, %v2465
    %v3645 = vpack.c.b16 %v2475, %v2466
    %v3646 = vpack.c.b16 %v2476, %v2467
    %v3647 = vpack.c.b16 %v2477, %v2468
    %v3648 = vpack.c.b16 %v2478, %v2469
    %v3649 = vpack.c.b16 %v2488, %v2479
    %v3650 = vpack.c.b16 %v2489, %v2480
    %v3651 = vpack.c.b16 %v2490, %v2481
    %v3652 = vpack.c.b16 %v2491, %v2482
    %v3653 = vpack.c.b16 %v2492, %v2483
    %v3654 = vpack.c.b16 %v2493, %v2484
    %v3655 = vpack.c.b16 %v2494, %v2485
    %v3656 = vpack.c.b16 %v2495, %v2486
    %v3657 = vpack.c.b16 %v2496, %v2487
    %v3658 = vpack.c.b16 %v2506, %v2497
    %v3659 = vpack.c.b16 %v2507, %v2498
    %v3660 = vpack.c.b16 %v2508, %v2499
    %v3661 = vpack.c.b16 %v2509, %v2500
    %v3662 = vpack.c.b16 %v2510, %v2501
    %v3663 = vpack.c.b16 %v2511, %v2502
    %v3664 = vpack.c.b16 %v2512, %v2503
    %v3665 = vpack.c.b16 %v2513, %v2504
    %v3666 = vpack.c.b16 %v2514, %v2505
    %v3667 = vpack.c.b16 %v2524, %v2515
    %v3668 = vpack.c.b16 %v2525, %v2516
    %v3669 = vpack.c.b16 %v2526, %v2517
    %v3670 = vpack.c.b16 %v2527, %v2518
    %v3671 = vpack.c.b16 %v2528, %v2519
    %v3672 = vpack.c.b16 %v2529, %v2520
    %v3673 = vpack.c.b16 %v2530, %v2521
    %v3674 = vpack.c.b16 %v2531, %v2522
    %v3675 = vpack.c.b16 %v2532, %v2523
    %v3676 = vpack.c.b16 %v2542, %v2533
    %v3677 = vpack.c.b16 %v2543, %v2534
    %v3678 = vpack.c.b16 %v2544, %v2535
    %v3679 = vpack.c.b16 %v2545, %v2536
    %v3680 = vpack.c.b16 %v2546, %v2537
    %v3681 = vpack.c.b16 %v2547, %v2538
    %v3682 = vpack.c.b16 %v2548, %v2539
    %v3683 = vpack.c.b16 %v2549, %v2540
    %v3684 = vpack.c.b16 %v2550, %v2541
    %v3685 = vpack.c.b16 %v2560, %v2551
    %v3686 = vpack.c.b16 %v2561, %v2552
    %v3687 = vpack.c.b16 %v2562, %v2553
    %v3688 = vpack.c.b16 %v2563, %v2554
    %v3689 = vpack.c.b16 %v2564, %v2555
    %v3690 = vpack.c.b16 %v2565, %v2556
    %v3691 = vpack.c.b16 %v2566, %v2557
    %v3692 = vpack.c.b16 %v2567, %v2558
    %v3693 = vpack.c.b16 %v2568, %v2559
    %v3694 = vpack.c.b16 %v2578, %v2569
    %v3695 = vpack.c.b16 %v2579, %v2570
    %v3696 = vpack.c.b16 %v2580, %v2571
    %v3697 = vpack.c.b16 %v2581, %v2572
    %v3698 = vpack.c.b16 %v2582, %v2573
    %v3699 = vpack.c.b16 %v2583, %v2574
    %v3700 = vpack.c.b16 %v2584, %v2575
    %v3701 = vpack.c.b16 %v2585, %v2576
    %v3702 = vpack.c.b16 %v2586, %v2577
    %v3703 = vpack.c.b16 %v2596, %v2587
    %v3704 = vpack.c.b16 %v2597, %v2588
    %v3705 = vpack.c.b16 %v2598, %v2589
    %v3706 = vpack.c.b16 %v2599, %v2590
    %v3707 = vpack.c.b16 %v2600, %v2591
    %v3708 = vpack.c.b16 %v2601, %v2592
    %v3709 = vpack.c.b16 %v2602, %v2593
    %v3710 = vpack.c.b16 %v2603, %v2594
    %v3711 = vpack.c.b16 %v2604, %v2595
    %v3712 = vpack.c.b16 %v2614, %v2605
    %v3713 = vpack.c.b16 %v2615, %v2606
    %v3714 = vpack.c.b16 %v2616, %v2607
    %v3715 = vpack.c.b16 %v2617, %v2608
    %v3716 = vpack.c.b16 %v2618, %v2609
    %v3717 = vpack.c.b16 %v2619, %v2610
    %v3718 = vpack.c.b16 %v2620, %v2611
    %v3719 = vpack.c.b16 %v2621, %v2612
    %v3720 = vpack.c.b16 %v2622, %v2613
    %v3721 = vpack.c.b16 %v2632, %v2623
    %v3722 = vpack.c.b16 %v2633, %v2624
    %v3723 = vpack.c.b16 %v2634, %v2625
    %v3724 = vpack.c.b16 %v2635, %v2626
    %v3725 = vpack.c.b16 %v2636, %v2627
    %v3726 = vpack.c.b16 %v2637, %v2628
    %v3727 = vpack.c.b16 %v2638, %v2629
    %v3728 = vpack.c.b16 %v2639, %v2630
    %v3729 = vpack.c.b16 %v2640, %v2631
    %v3730 = vpack.c.b16 %v2650, %v2641
    %v3731 = vpack.c.b16 %v2651, %v2642
    %v3732 = vpack.c.b16 %v2652, %v2643
    %v3733 = vpack.c.b16 %v2653, %v2644
    %v3734 = vpack.c.b16 %v2654, %v2645
    %v3735 = vpack.c.b16 %v2655, %v2646
    %v3736 = vpack.c.b16 %v2656, %v2647
    %v3737 = vpack.c.b16 %v2657, %v2648
    %v3738 = vpack.c.b16 %v2658, %v2649
    %v3739 = vpack.c.b16 %v2668, %v2659
    %v3740 = vpack.c.b16 %v2669, %v2660
    %v3741 = vpack.c.b16 %v2670, %v2661
    %v3742 = vpack.c.b16 %v2671, %v2662
    %v3743 = vpack.c.b16 %v2672, %v2663
    %v3744 = vpack.c.b16 %v2673, %v2664
    %v3745 = vpack.c.b16 %v2674, %v2665
    %v3746 = vpack.c.b16 %v2675, %v2666
    %v3747 = vpack.c.b16 %v2676, %v2667
    %v3748 = vpack.c.b16 %v2686, %v2677
    %v3749 = vpack.c.b16 %v2687, %v2678
    %v3750 = vpack.c.b16 %v2688, %v2679
    %v3751 = vpack.c.b16 %v2689, %v2680
    %v3752 = vpack.c.b16 %v2690, %v2681
    %v3753 = vpack.c.b16 %v2691, %v2682
    %v3754 = vpack.c.b16 %v2692, %v2683
    %v3755 = vpack.c.b16 %v2693, %v2684
    %v3756 = vpack.c.b16 %v2694, %v2685
    %v3757 = vpack.c.b16 %v2704, %v2695
    %v3758 = vpack.c.b16 %v2705, %v2696
    %v3759 = vpack.c.b16 %v2706, %v2697
    %v3760 = vpack.c.b16 %v2707, %v2698
    %v3761 = vpack.c.b16 %v2708, %v2699
    %v3762 = vpack.c.b16 %v2709, %v2700
    %v3763 = vpack.c.b16 %v2710, %v2701
    %v3764 = vpack.c.b16 %v2711, %v2702
    %v3765 = vpack.c.b16 %v2712, %v2703
    %v3766 = vpack.c.b16 %v2722, %v2713
    %v3767 = vpack.c.b16 %v2723, %v2714
    %v3768 = vpack.c.b16 %v2724, %v2715
    %v3769 = vpack.c.b16 %v2725, %v2716
    %v3770 = vpack.c.b16 %v2726, %v2717
    %v3771 = vpack.c.b16 %v2727, %v2718
    %v3772 = vpack.c.b16 %v2728, %v2719
    %v3773 = vpack.c.b16 %v2729, %v2720
    %v3774 = vpack.c.b16 %v2730, %v2721
    %v3775 = vpack.c.b16 %v2740, %v2731
    %v3776 = vpack.c.b16 %v2741, %v2732
    %v3777 = vpack.c.b16 %v2742, %v2733
    %v3778 = vpack.c.b16 %v2743, %v2734
    %v3779 = vpack.c.b16 %v2744, %v2735
    %v3780 = vpack.c.b16 %v2745, %v2736
    %v3781 = vpack.c.b16 %v2746, %v2737
    %v3782 = vpack.c.b16 %v2747, %v2738
    %v3783 = vpack.c.b16 %v2748, %v2739
    %v3784 = vpack.c.b16 %v2758, %v2749
    %v3785 = vpack.c.b16 %v2759, %v2750
    %v3786 = vpack.c.b16 %v2760, %v2751
    %v3787 = vpack.c.b16 %v2761, %v2752
    %v3788 = vpack.c.b16 %v2762, %v2753
    %v3789 = vpack.c.b16 %v2763, %v2754
    %v3790 = vpack.c.b16 %v2764, %v2755
    %v3791 = vpack.c.b16 %v2765, %v2756
    %v3792 = vpack.c.b16 %v2766, %v2757
    %v3793 = vpack.c.b16 %v2776, %v2767
    %v3794 = vpack.c.b16 %v2777, %v2768
    %v3795 = vpack.c.b16 %v2778, %v2769
    %v3796 = vpack.c.b16 %v2779, %v2770
    %v3797 = vpack.c.b16 %v2780, %v2771
    %v3798 = vpack.c.b16 %v2781, %v2772
    %v3799 = vpack.c.b16 %v2782, %v2773
    %v3800 = vpack.c.b16 %v2783, %v2774
    %v3801 = vpack.c.b16 %v2784, %v2775
    %v3802 = vpack.c.b16 %v2794, %v2785
    %v3803 = vpack.c.b16 %v2795, %v2786
    %v3804 = vpack.c.b16 %v2796, %v2787
    %v3805 = vpack.c.b16 %v2797, %v2788
    %v3806 = vpack.c.b16 %v2798, %v2789
    %v3807 = vpack.c.b16 %v2799, %v2790
    %v3808 = vpack.c.b16 %v2800, %v2791
    %v3809 = vpack.c.b16 %v2801, %v2792
    %v3810 = vpack.c.b16 %v2802, %v2793
    %v3811 = vpack.c.b16 %v2812, %v2803
    %v3812 = vpack.c.b16 %v2813, %v2804
    %v3813 = vpack.c.b16 %v2814, %v2805
    %v3814 = vpack.c.b16 %v2815, %v2806
    %v3815 = vpack.c.b16 %v2816, %v2807
    %v3816 = vpack.c.b16 %v2817, %v2808
    %v3817 = vpack.c.b16 %v2818, %v2809
    %v3818 = vpack.c.b16 %v2819, %v2810
    %v3819 = vpack.c.b16 %v2820, %v2811
    %v3820 = vpack.c.b16 %v2830, %v2821
    %v3821 = vpack.c.b16 %v2831, %v2822
    %v3822 = vpack.c.b16 %v2832, %v2823
    %v3823 = vpack.c.b16 %v2833, %v2824
    %v3824 = vpack.c.b16 %v2834, %v2825
    %v3825 = vpack.c.b16 %v2835, %v2826
    %v3826 = vpack.c.b16 %v2836, %v2827
    %v3827 = vpack.c.b16 %v2837, %v2828
    %v3828 = vpack.c.b16 %v2838, %v2829
    %v3829 = vpack.c.b16 %v2848, %v2839
    %v3830 = vpack.c.b16 %v2849, %v2840
    %v3831 = vpack.c.b16 %v2850, %v2841
    %v3832 = vpack.c.b16 %v2851, %v2842
    %v3833 = vpack.c.b16 %v2852, %v2843
    %v3834 = vpack.c.b16 %v2853, %v2844
    %v3835 = vpack.c.b16 %v2854, %v2845
    %v3836 = vpack.c.b16 %v2855, %v2846
    %v3837 = vpack.c.b16 %v2856, %v2847
    %v3838 = vpack.c.b16 %v2866, %v2857
    %v3839 = vpack.c.b16 %v2867, %v2858
    %v3840 = vpack.c.b16 %v2868, %v2859
    %v3841 = vpack.c.b16 %v2869, %v2860
    %v3842 = vpack.c.b16 %v2870, %v2861
    %v3843 = vpack.c.b16 %v2871, %v2862
    %v3844 = vpack.c.b16 %v2872, %v2863
    %v3845 = vpack.c.b16 %v2873, %v2864
    %v3846 = vpack.c.b16 %v2874, %v2865
    %v3847 = vpack.c.b16 %v2884, %v2875
    %v3848 = vpack.c.b16 %v2885, %v2876
    %v3849 = vpack.c.b16 %v2886, %v2877
    %v3850 = vpack.c.b16 %v2887, %v2878
    %v3851 = vpack.c.b16 %v2888, %v2879
    %v3852 = vpack.c.b16 %v2889, %v2880
    %v3853 = vpack.c.b16 %v2890, %v2881
    %v3854 = vpack.c.b16 %v2891, %v2882
    %v3855 = vpack.c.b16 %v2892, %v2883
    %v3856 = vpack.c.b16 %v2902, %v2893
    %v3857 = vpack.c.b16 %v2903, %v2894
    %v3858 = vpack.c.b16 %v2904, %v2895
    %v3859 = vpack.c.b16 %v2905, %v2896
    %v3860 = vpack.c.b16 %v2906, %v2897
    %v3861 = vpack.c.b16 %v2907, %v2898
    %v3862 = vpack.c.b16 %v2908, %v2899
    %v3863 = vpack.c.b16 %v2909, %v2900
    %v3864 = vpack.c.b16 %v2910, %v2901
    %v3865 = vpack.c.b16 %v2920, %v2911
    %v3866 = vpack.c.b16 %v2921, %v2912
    %v3867 = vpack.c.b16 %v2922, %v2913
    %v3868 = vpack.c.b16 %v2923, %v2914
    %v3869 = vpack.c.b16 %v2924, %v2915
    %v3870 = vpack.c.b16 %v2925, %v2916
    %v3871 = vpack.c.b16 %v2926, %v2917
    %v3872 = vpack.c.b16 %v2927, %v2918
    %v3873 = vpack.c.b16 %v2928, %v2919
    %v3874 = vpack.c.b16 %v2938, %v2929
    %v3875 = vpack.c.b16 %v2939, %v2930
    %v3876 = vpack.c.b16 %v2940, %v2931
    %v3877 = vpack.c.b16 %v2941, %v2932
    %v3878 = vpack.c.b16 %v2942, %v2933
    %v3879 = vpack.c.b16 %v2943, %v2934
    %v3880 = vpack.c.b16 %v2944, %v2935
    %v3881 = vpack.c.b16 %v2945, %v2936
    %v3882 = vpack.c.b16 %v2946, %v2937
    %v3883 = vpack.c.b16 %v2956, %v2947
    %v3884 = vpack.c.b16 %v2957, %v2948
    %v3885 = vpack.c.b16 %v2958, %v2949
    %v3886 = vpack.c.b16 %v2959, %v2950
    %v3887 = vpack.c.b16 %v2960, %v2951
    %v3888 = vpack.c.b16 %v2961, %v2952
    %v3889 = vpack.c.b16 %v2962, %v2953
    %v3890 = vpack.c.b16 %v2963, %v2954
    %v3891 = vpack.c.b16 %v2964, %v2955
    %v3892 = vpack.c.b16 %v2974, %v2965
    %v3893 = vpack.c.b16 %v2975, %v2966
    %v3894 = vpack.c.b16 %v2976, %v2967
    %v3895 = vpack.c.b16 %v2977, %v2968
    %v3896 = vpack.c.b16 %v2978, %v2969
    %v3897 = vpack.c.b16 %v2979, %v2970
    %v3898 = vpack.c.b16 %v2980, %v2971
    %v3899 = vpack.c.b16 %v2981, %v2972
    %v3900 = vpack.c.b16 %v2982, %v2973
    %v3901 = vpack.c.b16 %v2992, %v2983
    %v3902 = vpack.c.b16 %v2993, %v2984
    %v3903 = vpack.c.b16 %v2994, %v2985
    %v3904 = vpack.c.b16 %v2995, %v2986
    %v3905 = vpack.c.b16 %v2996, %v2987
    %v3906 = vpack.c.b16 %v2997, %v2988
    %v3907 = vpack.c.b16 %v2998, %v2989
    %v3908 = vpack.c.b16 %v2999, %v2990
    %v3909 = vpack.c.b16 %v3000, %v2991
    %v3910 = vpack.c.b16 %v3010, %v3001
    %v3911 = vpack.c.b16 %v3011, %v3002
    %v3912 = vpack.c.b16 %v3012, %v3003
    %v3913 = vpack.c.b16 %v3013, %v3004
    %v3914 = vpack.c.b16 %v3014, %v3005
    %v3915 = vpack.c.b16 %v3015, %v3006
    %v3916 = vpack.c.b16 %v3016, %v3007
    %v3917 = vpack.c.b16 %v3017, %v3008
    %v3918 = vpack.c.b16 %v3018, %v3009
    %v3919 = vpack.c.b16 %v3028, %v3019
    %v3920 = vpack.c.b16 %v3029, %v3020
    %v3921 = vpack.c.b16 %v3030, %v3021
    %v3922 = vpack.c.b16 %v3031, %v3022
    %v3923 = vpack.c.b16 %v3032, %v3023
    %v3924 = vpack.c.b16 %v3033, %v3024
    %v3925 = vpack.c.b16 %v3034, %v3025
    %v3926 = vpack.c.b16 %v3035, %v3026
    %v3927 = vpack.c.b16 %v3036, %v3027
    %v3928 = vpack.c.b16 %v3046, %v3037
    %v3929 = vpack.c.b16 %v3047, %v3038
    %v3930 = vpack.c.b16 %v3048, %v3039
    %v3931 = vpack.c.b16 %v3049, %v3040
    %v3932 = vpack.c.b16 %v3050, %v3041
    %v3933 = vpack.c.b16 %v3051, %v3042
    %v3934 = vpack.c.b16 %v3052, %v3043
    %v3935 = vpack.c.b16 %v3053, %v3044
    %v3936 = vpack.c.b16 %v3054, %v3045
    %v3937 = vpack.c.b16 %v3064, %v3055
    %v3938 = vpack.c.b16 %v3065, %v3056
    %v3939 = vpack.c.b16 %v3066, %v3057
    %v3940 = vpack.c.b16 %v3067, %v3058
    %v3941 = vpack.c.b16 %v3068, %v3059
    %v3942 = vpack.c.b16 %v3069, %v3060
    %v3943 = vpack.c.b16 %v3070, %v3061
    %v3944 = vpack.c.b16 %v3071, %v3062
    %v3945 = vpack.c.b16 %v3072, %v3063
    %v3946 = vpack.c.b16 %v3082, %v3073
    %v3947 = vpack.c.b16 %v3083, %v3074
    %v3948 = vpack.c.b16 %v3084, %v3075
    %v3949 = vpack.c.b16 %v3085, %v3076
    %v3950 = vpack.c.b16 %v3086, %v3077
    %v3951 = vpack.c.b16 %v3087, %v3078
    %v3952 = vpack.c.b16 %v3088, %v3079
    %v3953 = vpack.c.b16 %v3089, %v3080
    %v3954 = vpack.c.b16 %v3090, %v3081
    %v3955 = vpack.c.b16 %v3100, %v3091
    %v3956 = vpack.c.b16 %v3101, %v3092
    %v3957 = vpack.c.b16 %v3102, %v3093
    %v3958 = vpack.c.b16 %v3103, %v3094
    %v3959 = vpack.c.b16 %v3104, %v3095
    %v3960 = vpack.c.b16 %v3105, %v3096
    %v3961 = vpack.c.b16 %v3106, %v3097
    %v3962 = vpack.c.b16 %v3107, %v3098
    %v3963 = vpack.c.b16 %v3108, %v3099
    %v3964 = vpack.c.b16 %v3118, %v3109
    %v3965 = vpack.c.b16 %v3119, %v3110
    %v3966 = vpack.c.b16 %v3120, %v3111
    %v3967 = vpack.c.b16 %v3121, %v3112
    %v3968 = vpack.c.b16 %v3122, %v3113
    %v3969 = vpack.c.b16 %v3123, %v3114
    %v3970 = vpack.c.b16 %v3124, %v3115
    %v3971 = vpack.c.b16 %v3125, %v3116
    %v3972 = vpack.c.b16 %v3126, %v3117
    %v3973 = vpack.c.b16 %v3136, %v3127
    %v3974 = vpack.c.b16 %v3137, %v3128
    %v3975 = vpack.c.b16 %v3138, %v3129
    %v3976 = vpack.c.b16 %v3139, %v3130
    %v3977 = vpack.c.b16 %v3140, %v3131
    %v3978 = vpack.c.b16 %v3141, %v3132
    %v3979 = vpack.c.b16 %v3142, %v3133
    %v3980 = vpack.c.b16 %v3143, %v3134
    %v3981 = vpack.c.b16 %v3144, %v3135
    %v3982 = vpack.c.b16 %v3154, %v3145
    %v3983 = vpack.c.b16 %v3155, %v3146
    %v3984 = vpack.c.b16 %v3156, %v3147
    %v3985 = vpack.c.b16 %v3157, %v3148
    %v3986 = vpack.c.b16 %v3158, %v3149
    %v3987 = vpack.c.b16 %v3159, %v3150
    %v3988 = vpack.c.b16 %v3160, %v3151
    %v3989 = vpack.c.b16 %v3161, %v3152
    %v3990 = vpack.c.b16 %v3162, %v3153
    %v3991 = vpack.c.b16 %v3172, %v3163
    %v3992 = vpack.c.b16 %v3173, %v3164
    %v3993 = vpack.c.b16 %v3174, %v3165
    %v3994 = vpack.c.b16 %v3175, %v3166
    %v3995 = vpack.c.b16 %v3176, %v3167
    %v3996 = vpack.c.b16 %v3177, %v3168
    %v3997 = vpack.c.b16 %v3178, %v3169
    %v3998 = vpack.c.b16 %v3179, %v3170
    %v3999 = vpack.c.b16 %v3180, %v3171
    %v4000 = vpack.c.b16 %v3190, %v3181
    %v4001 = vpack.c.b16 %v3191, %v3182
    %v4002 = vpack.c.b16 %v3192, %v3183
    %v4003 = vpack.c.b16 %v3193, %v3184
    %v4004 = vpack.c.b16 %v3194, %v3185
    %v4005 = vpack.c.b16 %v3195, %v3186
    %v4006 = vpack.c.b16 %v3196, %v3187
    %v4007 = vpack.c.b16 %v3197, %v3188
    %v4008 = vpack.c.b16 %v3198, %v3189
    %v4009 = vpack.c.b16 %v3208, %v3199
    %v4010 = vpack.c.b16 %v3209, %v3200
    %v4011 = vpack.c.b16 %v3210, %v3201
    %v4012 = vpack.c.b16 %v3211, %v3202
    %v4013 = vpack.c.b16 %v3212, %v3203
    %v4014 = vpack.c.b16 %v3213, %v3204
    %v4015 = vpack.c.b16 %v3214, %v3205
    %v4016 = vpack.c.b16 %v3215, %v3206
    %v4017 = vpack.c.b16 %v3216, %v3207
    %v4018 = vpack.c.b16 %v3226, %v3217
    %v4019 = vpack.c.b16 %v3227, %v3218
    %v4020 = vpack.c.b16 %v3228, %v3219
    %v4021 = vpack.c.b16 %v3229, %v3220
    %v4022 = vpack.c.b16 %v3230, %v3221
    %v4023 = vpack.c.b16 %v3231, %v3222
    %v4024 = vpack.c.b16 %v3232, %v3223
    %v4025 = vpack.c.b16 %v3233, %v3224
    %v4026 = vpack.c.b16 %v3234, %v3225
    %v4027 = vpack.c.b16 %v3244, %v3235
    %v4028 = vpack.c.b16 %v3245, %v3236
    %v4029 = vpack.c.b16 %v3246, %v3237
    %v4030 = vpack.c.b16 %v3247, %v3238
    %v4031 = vpack.c.b16 %v3248, %v3239
    %v4032 = vpack.c.b16 %v3249, %v3240
    %v4033 = vpack.c.b16 %v3250, %v3241
    %v4034 = vpack.c.b16 %v3251, %v3242
    %v4035 = vpack.c.b16 %v3252, %v3243
    %v4036 = vpack.c.b16 %v3262, %v3253
    %v4037 = vpack.c.b16 %v3263, %v3254
    %v4038 = vpack.c.b16 %v3264, %v3255
    %v4039 = vpack.c.b16 %v3265, %v3256
    %v4040 = vpack.c.b16 %v3266, %v3257
    %v4041 = vpack.c.b16 %v3267, %v3258
    %v4042 = vpack.c.b16 %v3268, %v3259
    %v4043 = vpack.c.b16 %v3269, %v3260
    %v4044 = vpack.c.b16 %v3270, %v3261
    %v4045 = vpack.c.b16 %v3280, %v3271
    %v4046 = vpack.c.b16 %v3281, %v3272
    %v4047 = vpack.c.b16 %v3282, %v3273
    %v4048 = vpack.c.b16 %v3283, %v3274
    %v4049 = vpack.c.b16 %v3284, %v3275
    %v4050 = vpack.c.b16 %v3285, %v3276
    %v4051 = vpack.c.b16 %v3286, %v3277
    %v4052 = vpack.c.b16 %v3287, %v3278
    %v4053 = vpack.c.b16 %v3288, %v3279
    %v4054 = vpack.c.b16 %v3298, %v3289
    %v4055 = vpack.c.b16 %v3299, %v3290
    %v4056 = vpack.c.b16 %v3300, %v3291
    %v4057 = vpack.c.b16 %v3301, %v3292
    %v4058 = vpack.c.b16 %v3302, %v3293
    %v4059 = vpack.c.b16 %v3303, %v3294
    %v4060 = vpack.c.b16 %v3304, %v3295
    %v4061 = vpack.c.b16 %v3305, %v3296
    %v4062 = vpack.c.b16 %v3306, %v3297
    %v4063 = vpack.c.b16 %v3316, %v3307
    %v4064 = vpack.c.b16 %v3317, %v3308
    %v4065 = vpack.c.b16 %v3318, %v3309
    %v4066 = vpack.c.b16 %v3319, %v3310
    %v4067 = vpack.c.b16 %v3320, %v3311
    %v4068 = vpack.c.b16 %v3321, %v3312
    %v4069 = vpack.c.b16 %v3322, %v3313
    %v4070 = vpack.c.b16 %v3323, %v3314
    %v4071 = vpack.c.b16 %v3324, %v3315
    %v4072 = vpack.c.b16 %v3334, %v3325
    %v4073 = vpack.c.b16 %v3335, %v3326
    %v4074 = vpack.c.b16 %v3336, %v3327
    %v4075 = vpack.c.b16 %v3337, %v3328
    %v4076 = vpack.c.b16 %v3338, %v3329
    %v4077 = vpack.c.b16 %v3339, %v3330
    %v4078 = vpack.c.b16 %v3340, %v3331
    %v4079 = vpack.c.b16 %v3341, %v3332
    %v4080 = vpack.c.b16 %v3342, %v3333
    %v4081 = vpack.c.b16 %v3352, %v3343
    %v4082 = vpack.c.b16 %v3353, %v3344
    %v4083 = vpack.c.b16 %v3354, %v3345
    %v4084 = vpack.c.b16 %v3355, %v3346
    %v4085 = vpack.c.b16 %v3356, %v3347
    %v4086 = vpack.c.b16 %v3357, %v3348
    %v4087 = vpack.c.b16 %v3358, %v3349
    %v4088 = vpack.c.b16 %v3359, %v3350
    %v4089 = vpack.c.b16 %v3360, %v3351
    %v4090 = vpack.c.b16 %v3370, %v3361
    %v4091 = vpack.c.b16 %v3371, %v3362
    %v4092 = vpack.c.b16 %v3372, %v3363
    %v4093 = vpack.c.b16 %v3373, %v3364
    %v4094 = vpack.c.b16 %v3374, %v3365
    %v4095 = vpack.c.b16 %v3375, %v3366
    %v4096 = vpack.c.b16 %v3376, %v3367
    %v4097 = vpack.c.b16 %v3377, %v3368
    %v4098 = vpack.c.b16 %v3378, %v3369
    %v4099 = vpack.c.b16 %v3388, %v3379
    %v4100 = vpack.c.b16 %v3389, %v3380
    %v4101 = vpack.c.b16 %v3390, %v3381
    %v4102 = vpack.c.b16 %v3391, %v3382
    %v4103 = vpack.c.b16 %v3392, %v3383
    %v4104 = vpack.c.b16 %v3393, %v3384
    %v4105 = vpack.c.b16 %v3394, %v3385
    %v4106 = vpack.c.b16 %v3395, %v3386
    %v4107 = vpack.c.b16 %v3396, %v3387
    %v4108 = vpack.c.b16 %v3406, %v3397
    %v4109 = vpack.c.b16 %v3407, %v3398
    %v4110 = vpack.c.b16 %v3408, %v3399
    %v4111 = vpack.c.b16 %v3409, %v3400
    %v4112 = vpack.c.b16 %v3410, %v3401
    %v4113 = vpack.c.b16 %v3411, %v3402
    %v4114 = vpack.c.b16 %v3412, %v3403
    %v4115 = vpack.c.b16 %v3413, %v3404
    %v4116 = vpack.c.b16 %v3414, %v3405
    %v4117 = vpack.c.b16 %v3424, %v3415
    %v4118 = vpack.c.b16 %v3425, %v3416
    %v4119 = vpack.c.b16 %v3426, %v3417
    %v4120 = vpack.c.b16 %v3427, %v3418
    %v4121 = vpack.c.b16 %v3428, %v3419
    %v4122 = vpack.c.b16 %v3429, %v3420
    %v4123 = vpack.c.b16 %v3430, %v3421
    %v4124 = vpack.c.b16 %v3431, %v3422
    %v4125 = vpack.c.b16 %v3432, %v3423
    %v4126 = vpack.c.b16 %v3442, %v3433
    %v4127 = vpack.c.b16 %v3443, %v3434
    %v4128 = vpack.c.b16 %v3444, %v3435
    %v4129 = vpack.c.b16 %v3445, %v3436
    %v4130 = vpack.c.b16 %v3446, %v3437
    %v4131 = vpack.c.b16 %v3447, %v3438
    %v4132 = vpack.c.b16 %v3448, %v3439
    %v4133 = vpack.c.b16 %v3449, %v3440
    %v4134 = vpack.c.b16 %v3450, %v3441
    %v4135 = vpack.c.b16 %v3460, %v3451
    %v4136 = vpack.c.b16 %v3461, %v3452
    %v4137 = vpack.c.b16 %v3462, %v3453
    %v4138 = vpack.c.b16 %v3463, %v3454
    %v4139 = vpack.c.b16 %v3464, %v3455
    %v4140 = vpack.c.b16 %v3465, %v3456
    %v4141 = vpack.c.b16 %v3466, %v3457
    %v4142 = vpack.c.b16 %v3467, %v3458
    %v4143 = vpack.c.b16 %v3468, %v3459
    %v4144 = vpack.c.b16 %v3478, %v3469
    %v4145 = vpack.c.b16 %v3479, %v3470
    %v4146 = vpack.c.b16 %v3480, %v3471
    %v4147 = vpack.c.b16 %v3481, %v3472
    %v4148 = vpack.c.b16 %v3482, %v3473
    %v4149 = vpack.c.b16 %v3483, %v3474
    %v4150 = vpack.c.b16 %v3484, %v3475
    %v4151 = vpack.c.b16 %v3485, %v3476
    %v4152 = vpack.c.b16 %v3486, %v3477
    %v4153 = vpack.c.b16 %v3496, %v3487
    %v4154 = vpack.c.b16 %v3497, %v3488
    %v4155 = vpack.c.b16 %v3498, %v3489
    %v4156 = vpack.c.b16 %v3499, %v3490
    %v4157 = vpack.c.b16 %v3500, %v3491
    %v4158 = vpack.c.b16 %v3501, %v3492
    %v4159 = vpack.c.b16 %v3502, %v3493
    %v4160 = vpack.c.b16 %v3503, %v3494
    %v4161 = vpack.c.b16 %v3504, %v3495
    %v4162 = vpack.c.b16 %v3514, %v3505
    %v4163 = vpack.c.b16 %v3515, %v3506
    %v4164 = vpack.c.b16 %v3516, %v3507
    %v4165 = vpack.c.b16 %v3517, %v3508
    %v4166 = vpack.c.b16 %v3518, %v3509
    %v4167 = vpack.c.b16 %v3519, %v3510
    %v4168 = vpack.c.b16 %v3520, %v3511
    %v4169 = vpack.c.b16 %v3521, %v3512
    %v4170 = vpack.c.b16 %v3522, %v3513
    %4819 = vmatprep.subr.bf16.mxu0 %v3524
    %4820 = vmatpush1.bf16.msra.mxu0 %v3523
    %4821 = vmatprep.subr.bf16.mxu0 %v3533
    %4822 = vmatpush1.bf16.msra.mxu0 %v3532
    %4823 = vmatprep.subr.bf16.mxu0 %v3542
    %4824 = vmatpush1.bf16.msra.mxu0 %v3541
    %4825 = vmatprep.subr.bf16.mxu0 %v3551
    %4826 = vmatpush1.bf16.msra.mxu0 %v3550
    %4827 = vmatprep.subr.bf16.mxu0 %v3560
    %4828 = vmatpush1.bf16.msra.mxu0 %v3559
    %4829 = vmatprep.subr.bf16.mxu0 %v3569
    %4830 = vmatpush1.bf16.msra.mxu0 %v3568
    %4831 = vmatprep.subr.bf16.mxu0 %v3578
    %4832 = vmatpush1.bf16.msra.mxu0 %v3577
    %4833 = vmatprep.subr.bf16.mxu0 %v3587
    %4834 = vmatpush1.bf16.msra.mxu0 %v3586
    %4835 = vmatprep.subr.bf16.mxu0 %v3596
    %4836 = vmatpush1.bf16.msra.mxu0 %v3595
    %4837 = vmatprep.subr.bf16.mxu0 %v3605
    %4838 = vmatpush1.bf16.msra.mxu0 %v3604
    %4839 = vmatprep.subr.bf16.mxu0 %v3614
    %4840 = vmatpush1.bf16.msra.mxu0 %v3613
    %4841 = vmatprep.subr.bf16.mxu0 %v3623
    %4842 = vmatpush1.bf16.msra.mxu0 %v3622
    %4843 = vmatprep.subr.bf16.mxu0 %v3632
    %4844 = vmatpush1.bf16.msra.mxu0 %v3631
    %4845 = vmatprep.subr.bf16.mxu0 %v3641
    %4846 = vmatpush1.bf16.msra.mxu0 %v3640
    %4847 = vmatprep.subr.bf16.mxu0 %v3650
    %4848 = vmatpush1.bf16.msra.mxu0 %v3649
    %4849 = vmatprep.subr.bf16.mxu0 %v3659
    %4850 = vmatpush1.bf16.msra.mxu0 %v3658
    %4851 = vmatprep.mubr.bf16.mxu0 %v730
    %4852 = vmatmul.mubr.bf16.gmra.mrb[0].mxu0 %v729
    %v4853 = vpop.f32.mrb[0].mxu0
    %v4854 = vadd.f32 %v1465, %v4853
    %v4855 = vpop.f32.mrb[0].mxu0
    %v4856 = vadd.f32 %v1469, %v4855
    %v4857 = vpop.f32.mrb[0].mxu0
    %v4858 = vpop.f32.mrb[0].mxu0
    %4859 = vdwg.mxu0
    %4860 = vmatprep.subr.bf16.mxu0 %v3668
    %4861 = vmatpush1.bf16.msra.mxu0 %v3667
    %4862 = vmatprep.subr.bf16.mxu0 %v3677
    %4863 = vmatpush1.bf16.msra.mxu0 %v3676
    %4864 = vmatprep.subr.bf16.mxu0 %v3686
    %4865 = vmatpush1.bf16.msra.mxu0 %v3685
    %4866 = vmatprep.subr.bf16.mxu0 %v3695
    %4867 = vmatpush1.bf16.msra.mxu0 %v3694
    %4868 = vmatprep.subr.bf16.mxu0 %v3704
    %4869 = vmatpush1.bf16.msra.mxu0 %v3703
    %4870 = vmatprep.subr.bf16.mxu0 %v3713
    %4871 = vmatpush1.bf16.msra.mxu0 %v3712
    %4872 = vmatprep.subr.bf16.mxu0 %v3722
    %4873 = vmatpush1.bf16.msra.mxu0 %v3721
    %4874 = vmatprep.subr.bf16.mxu0 %v3731
    %4875 = vmatpush1.bf16.msra.mxu0 %v3730
    %4876 = vmatprep.subr.bf16.mxu0 %v3740
    %4877 = vmatpush1.bf16.msra.mxu0 %v3739
    %4878 = vmatprep.subr.bf16.mxu0 %v3749
    %4879 = vmatpush1.bf16.msra.mxu0 %v3748
    %4880 = vmatprep.subr.bf16.mxu0 %v3758
    %4881 = vmatpush1.bf16.msra.mxu0 %v3757
    %4882 = vmatprep.subr.bf16.mxu0 %v3767
    %4883 = vmatpush1.bf16.msra.mxu0 %v3766
    %4884 = vmatprep.subr.bf16.mxu0 %v3776
    %4885 = vmatpush1.bf16.msra.mxu0 %v3775
    %4886 = vmatprep.subr.bf16.mxu0 %v3785
    %4887 = vmatpush1.bf16.msra.mxu0 %v3784
    %4888 = vmatprep.subr.bf16.mxu0 %v3794
    %4889 = vmatpush1.bf16.msra.mxu0 %v3793
    %4890 = vmatprep.subr.bf16.mxu0 %v3803
    %4891 = vmatpush1.bf16.msra.mxu0 %v3802
    %4892 = vmatprep.mubr.bf16.mxu0 %v732
    %4893 = vmatmul.mubr.bf16.gmra.mrb[0].mxu0 %v731
    %v4894 = vpop.f32.mrb[0].mxu0
    %v4895 = vadd.f32 %v4854, %v4894
    %v4896 = vpop.f32.mrb[0].mxu0
    %v4897 = vadd.f32 %v4856, %v4896
    %v4898 = vpop.f32.mrb[0].mxu0
    %v4899 = vpop.f32.mrb[0].mxu0
    %4900 = vdwg.mxu0
    %4901 = vmatprep.subr.bf16.mxu0 %v3812
    %4902 = vmatpush1.bf16.msra.mxu0 %v3811
    %4903 = vmatprep.subr.bf16.mxu0 %v3821
    %4904 = vmatpush1.bf16.msra.mxu0 %v3820
    %4905 = vmatprep.subr.bf16.mxu0 %v3830
    %4906 = vmatpush1.bf16.msra.mxu0 %v3829
    %4907 = vmatprep.subr.bf16.mxu0 %v3839
    %4908 = vmatpush1.bf16.msra.mxu0 %v3838
    %4909 = vmatprep.subr.bf16.mxu0 %v3848
    %4910 = vmatpush1.bf16.msra.mxu0 %v3847
    %4911 = vmatprep.subr.bf16.mxu0 %v3857
    %4912 = vmatpush1.bf16.msra.mxu0 %v3856
    %4913 = vmatprep.subr.bf16.mxu0 %v3866
    %4914 = vmatpush1.bf16.msra.mxu0 %v3865
    %4915 = vmatprep.subr.bf16.mxu0 %v3875
    %4916 = vmatpush1.bf16.msra.mxu0 %v3874
    %4917 = vmatprep.subr.bf16.mxu0 %v3884
    %4918 = vmatpush1.bf16.msra.mxu0 %v3883
    %4919 = vmatprep.subr.bf16.mxu0 %v3893
    %4920 = vmatpush1.bf16.msra.mxu0 %v3892
    %4921 = vmatprep.subr.bf16.mxu0 %v3902
    %4922 = vmatpush1.bf16.msra.mxu0 %v3901
    %4923 = vmatprep.subr.bf16.mxu0 %v3911
    %4924 = vmatpush1.bf16.msra.mxu0 %v3910
    %4925 = vmatprep.subr.bf16.mxu0 %v3920
    %4926 = vmatpush1.bf16.msra.mxu0 %v3919
    %4927 = vmatprep.subr.bf16.mxu0 %v3929
    %4928 = vmatpush1.bf16.msra.mxu0 %v3928
    %4929 = vmatprep.subr.bf16.mxu0 %v3938
    %4930 = vmatpush1.bf16.msra.mxu0 %v3937
    %4931 = vmatprep.subr.bf16.mxu0 %v3947
    %4932 = vmatpush1.bf16.msra.mxu0 %v3946
    %4933 = vmatprep.mubr.bf16.mxu0 %v734
    %4934 = vmatmul.mubr.bf16.gmra.mrb[0].mxu0 %v733
    %v4935 = vpop.f32.mrb[0].mxu0
    %v4936 = vadd.f32 %v4895, %v4935
    %v4937 = vpop.f32.mrb[0].mxu0
    %v4938 = vadd.f32 %v4897, %v4937
    %v4939 = vpop.f32.mrb[0].mxu0
    %v4940 = vpop.f32.mrb[0].mxu0
    %4941 = vdwg.mxu0
    %4942 = vmatprep.subr.bf16.mxu0 %v3956
    %4943 = vmatpush1.bf16.msra.mxu0 %v3955
    %4944 = vmatprep.subr.bf16.mxu0 %v3965
    %4945 = vmatpush1.bf16.msra.mxu0 %v3964
    %4946 = vmatprep.subr.bf16.mxu0 %v3974
    %4947 = vmatpush1.bf16.msra.mxu0 %v3973
    %4948 = vmatprep.subr.bf16.mxu0 %v3983
    %4949 = vmatpush1.bf16.msra.mxu0 %v3982
    %4950 = vmatprep.subr.bf16.mxu0 %v3992
    %4951 = vmatpush1.bf16.msra.mxu0 %v3991
    %4952 = vmatprep.subr.bf16.mxu0 %v4001
    %4953 = vmatpush1.bf16.msra.mxu0 %v4000
    %4954 = vmatprep.subr.bf16.mxu0 %v4010
    %4955 = vmatpush1.bf16.msra.mxu0 %v4009
    %4956 = vmatprep.subr.bf16.mxu0 %v4019
    %4957 = vmatpush1.bf16.msra.mxu0 %v4018
    %4958 = vmatprep.subr.bf16.mxu0 %v4028
    %4959 = vmatpush1.bf16.msra.mxu0 %v4027
    %4960 = vmatprep.subr.bf16.mxu0 %v4037
    %4961 = vmatpush1.bf16.msra.mxu0 %v4036
    %4962 = vmatprep.subr.bf16.mxu0 %v4046
    %4963 = vmatpush1.bf16.msra.mxu0 %v4045
    %4964 = vmatprep.subr.bf16.mxu0 %v4055
    %4965 = vmatpush1.bf16.msra.mxu0 %v4054
    %4966 = vmatprep.subr.bf16.mxu0 %v4064
    %4967 = vmatpush1.bf16.msra.mxu0 %v4063
    %4968 = vmatprep.subr.bf16.mxu0 %v4073
    %4969 = vmatpush1.bf16.msra.mxu0 %v4072
    %4970 = vmatprep.subr.bf16.mxu0 %v4082
    %4971 = vmatpush1.bf16.msra.mxu0 %v4081
    %4972 = vmatprep.subr.bf16.mxu0 %v4091
    %4973 = vmatpush1.bf16.msra.mxu0 %v4090
    %4974 = vmatprep.mubr.bf16.mxu0 %v736
    %4975 = vmatmul.mubr.bf16.gmra.mrb[0].mxu0 %v735
    %v4976 = vpop.f32.mrb[0].mxu0
    %v4977 = vadd.f32 %v4936, %v4976
    %v4978 = vpop.f32.mrb[0].mxu0
    %v4979 = vadd.f32 %v4938, %v4978
    %v4980 = vpop.f32.mrb[0].mxu0
    %v4981 = vpop.f32.mrb[0].mxu0
    %4982 = vdwg.mxu0
    %4983 = vmatprep.subr.bf16.mxu0 %v4100
    %4984 = vmatpush1.bf16.msra.mxu0 %v4099
    %4985 = vmatprep.subr.bf16.mxu0 %v4109
    %4986 = vmatpush1.bf16.msra.mxu0 %v4108
    %4987 = vmatprep.subr.bf16.mxu0 %v4118
    %4988 = vmatpush1.bf16.msra.mxu0 %v4117
    %4989 = vmatprep.subr.bf16.mxu0 %v4127
    %4990 = vmatpush1.bf16.msra.mxu0 %v4126
    %4991 = vmatprep.subr.bf16.mxu0 %v4136
    %4992 = vmatpush1.bf16.msra.mxu0 %v4135
    %4993 = vmatprep.subr.bf16.mxu0 %v4145
    %4994 = vmatpush1.bf16.msra.mxu0 %v4144
    %4995 = vmatprep.subr.bf16.mxu0 %v4154
    %4996 = vmatpush1.bf16.msra.mxu0 %v4153
    %4997 = vmatprep.subr.bf16.mxu0 %v4163
    %4998 = vmatpush1.bf16.msra.mxu0 %v4162
    %4999 = vmatprep.subr.bf16.mxu0 0
    %5000 = vmatpush1.bf16.msra.mxu0 0
    %5001 = vmatprep.subr.bf16.mxu0 0
    %5002 = vmatpush1.bf16.msra.mxu0 0
    %5003 = vmatprep.subr.bf16.mxu0 0
    %5004 = vmatpush1.bf16.msra.mxu0 0
    %5005 = vmatprep.subr.bf16.mxu0 0
    %5006 = vmatpush1.bf16.msra.mxu0 0
    %5007 = vmatprep.subr.bf16.mxu0 0
    %5008 = vmatpush1.bf16.msra.mxu0 0
    %5009 = vmatprep.subr.bf16.mxu0 0
    %5010 = vmatpush1.bf16.msra.mxu0 0
    %5011 = vmatprep.subr.bf16.mxu0 0
    %5012 = vmatpush1.bf16.msra.mxu0 0
    %5013 = vmatprep.subr.bf16.mxu0 0
    %5014 = vmatpush1.bf16.msra.mxu0 0
    %5015 = vmatprep.mubr.bf16.mxu0 0
    %5016 = vmatmul.mubr.bf16.gmra.mrb[0].mxu0 %v737
    %v5017 = vpop.f32.mrb[0].mxu0
    %v5018 = vadd.f32 %v4977, %v5017
    %v5019 = vpop.f32.mrb[0].mxu0
    %v5020 = vadd.f32 %v4979, %v5019
    %v5021 = vpop.f32.mrb[0].mxu0
    %v5022 = vpop.f32.mrb[0].mxu0
    %5023 = vdwg.mxu0
    %5024 = vmatprep.subr.bf16.mxu0 %v3526
    %5025 = vmatpush1.bf16.msra.mxu0 %v3525
    %5026 = vmatprep.subr.bf16.mxu0 %v3535
    %5027 = vmatpush1.bf16.msra.mxu0 %v3534
    %5028 = vmatprep.subr.bf16.mxu0 %v3544
    %5029 = vmatpush1.bf16.msra.mxu0 %v3543
    %5030 = vmatprep.subr.bf16.mxu0 %v3553
    %5031 = vmatpush1.bf16.msra.mxu0 %v3552
    %5032 = vmatprep.subr.bf16.mxu0 %v3562
    %5033 = vmatpush1.bf16.msra.mxu0 %v3561
    %5034 = vmatprep.subr.bf16.mxu0 %v3571
    %5035 = vmatpush1.bf16.msra.mxu0 %v3570
    %5036 = vmatprep.subr.bf16.mxu0 %v3580
    %5037 = vmatpush1.bf16.msra.mxu0 %v3579
    %5038 = vmatprep.subr.bf16.mxu0 %v3589
    %5039 = vmatpush1.bf16.msra.mxu0 %v3588
    %5040 = vmatprep.subr.bf16.mxu0 %v3598
    %5041 = vmatpush1.bf16.msra.mxu0 %v3597
    %5042 = vmatprep.subr.bf16.mxu0 %v3607
    %5043 = vmatpush1.bf16.msra.mxu0 %v3606
    %5044 = vmatprep.subr.bf16.mxu0 %v3616
    %5045 = vmatpush1.bf16.msra.mxu0 %v3615
    %5046 = vmatprep.subr.bf16.mxu0 %v3625
    %5047 = vmatpush1.bf16.msra.mxu0 %v3624
    %5048 = vmatprep.subr.bf16.mxu0 %v3634
    %5049 = vmatpush1.bf16.msra.mxu0 %v3633
    %5050 = vmatprep.subr.bf16.mxu0 %v3643
    %5051 = vmatpush1.bf16.msra.mxu0 %v3642
    %5052 = vmatprep.subr.bf16.mxu0 %v3652
    %5053 = vmatpush1.bf16.msra.mxu0 %v3651
    %5054 = vmatprep.subr.bf16.mxu0 %v3661
    %5055 = vmatpush1.bf16.msra.mxu0 %v3660
    %5056 = vmatprep.mubr.bf16.mxu0 %v730
    %5057 = vmatmul.mubr.bf16.gmra.mrb[0].mxu0 %v729
    %v5058 = vpop.f32.mrb[0].mxu0
    %v5059 = vadd.f32 %v1473, %v5058
    %v5060 = vpop.f32.mrb[0].mxu0
    %v5061 = vadd.f32 %v1477, %v5060
    %v5062 = vpop.f32.mrb[0].mxu0
    %v5063 = vpop.f32.mrb[0].mxu0
    %5064 = vdwg.mxu0
    %5065 = vmatprep.subr.bf16.mxu0 %v3670
    %5066 = vmatpush1.bf16.msra.mxu0 %v3669
    %5067 = vmatprep.subr.bf16.mxu0 %v3679
    %5068 = vmatpush1.bf16.msra.mxu0 %v3678
    %5069 = vmatprep.subr.bf16.mxu0 %v3688
    %5070 = vmatpush1.bf16.msra.mxu0 %v3687
    %5071 = vmatprep.subr.bf16.mxu0 %v3697
    %5072 = vmatpush1.bf16.msra.mxu0 %v3696
    %5073 = vmatprep.subr.bf16.mxu0 %v3706
    %5074 = vmatpush1.bf16.msra.mxu0 %v3705
    %5075 = vmatprep.subr.bf16.mxu0 %v3715
    %5076 = vmatpush1.bf16.msra.mxu0 %v3714
    %5077 = vmatprep.subr.bf16.mxu0 %v3724
    %5078 = vmatpush1.bf16.msra.mxu0 %v3723
    %5079 = vmatprep.subr.bf16.mxu0 %v3733
    %5080 = vmatpush1.bf16.msra.mxu0 %v3732
    %5081 = vmatprep.subr.bf16.mxu0 %v3742
    %5082 = vmatpush1.bf16.msra.mxu0 %v3741
    %5083 = vmatprep.subr.bf16.mxu0 %v3751
    %5084 = vmatpush1.bf16.msra.mxu0 %v3750
    %5085 = vmatprep.subr.bf16.mxu0 %v3760
    %5086 = vmatpush1.bf16.msra.mxu0 %v3759
    %5087 = vmatprep.subr.bf16.mxu0 %v3769
    %5088 = vmatpush1.bf16.msra.mxu0 %v3768
    %5089 = vmatprep.subr.bf16.mxu0 %v3778
    %5090 = vmatpush1.bf16.msra.mxu0 %v3777
    %5091 = vmatprep.subr.bf16.mxu0 %v3787
    %5092 = vmatpush1.bf16.msra.mxu0 %v3786
    %5093 = vmatprep.subr.bf16.mxu0 %v3796
    %5094 = vmatpush1.bf16.msra.mxu0 %v3795
    %5095 = vmatprep.subr.bf16.mxu0 %v3805
    %5096 = vmatpush1.bf16.msra.mxu0 %v3804
    %5097 = vmatprep.mubr.bf16.mxu0 %v732
    %5098 = vmatmul.mubr.bf16.gmra.mrb[0].mxu0 %v731
    %v5099 = vpop.f32.mrb[0].mxu0
    %v5100 = vadd.f32 %v5059, %v5099
    %v5101 = vpop.f32.mrb[0].mxu0
    %v5102 = vadd.f32 %v5061, %v5101
    %v5103 = vpop.f32.mrb[0].mxu0
    %v5104 = vpop.f32.mrb[0].mxu0
    %5105 = vdwg.mxu0
    %5106 = vmatprep.subr.bf16.mxu0 %v3814
    %5107 = vmatpush1.bf16.msra.mxu0 %v3813
    %5108 = vmatprep.subr.bf16.mxu0 %v3823
    %5109 = vmatpush1.bf16.msra.mxu0 %v3822
    %5110 = vmatprep.subr.bf16.mxu0 %v3832
    %5111 = vmatpush1.bf16.msra.mxu0 %v3831
    %5112 = vmatprep.subr.bf16.mxu0 %v3841
    %5113 = vmatpush1.bf16.msra.mxu0 %v3840
    %5114 = vmatprep.subr.bf16.mxu0 %v3850
    %5115 = vmatpush1.bf16.msra.mxu0 %v3849
    %5116 = vmatprep.subr.bf16.mxu0 %v3859
    %5117 = vmatpush1.bf16.msra.mxu0 %v3858
    %5118 = vmatprep.subr.bf16.mxu0 %v3868
    %5119 = vmatpush1.bf16.msra.mxu0 %v3867
    %5120 = vmatprep.subr.bf16.mxu0 %v3877
    %5121 = vmatpush1.bf16.msra.mxu0 %v3876
    %5122 = vmatprep.subr.bf16.mxu0 %v3886
    %5123 = vmatpush1.bf16.msra.mxu0 %v3885
    %5124 = vmatprep.subr.bf16.mxu0 %v3895
    %5125 = vmatpush1.bf16.msra.mxu0 %v3894
    %5126 = vmatprep.subr.bf16.mxu0 %v3904
    %5127 = vmatpush1.bf16.msra.mxu0 %v3903
    %5128 = vmatprep.subr.bf16.mxu0 %v3913
    %5129 = vmatpush1.bf16.msra.mxu0 %v3912
    %5130 = vmatprep.subr.bf16.mxu0 %v3922
    %5131 = vmatpush1.bf16.msra.mxu0 %v3921
    %5132 = vmatprep.subr.bf16.mxu0 %v3931
    %5133 = vmatpush1.bf16.msra.mxu0 %v3930
    %5134 = vmatprep.subr.bf16.mxu0 %v3940
    %5135 = vmatpush1.bf16.msra.mxu0 %v3939
    %5136 = vmatprep.subr.bf16.mxu0 %v3949
    %5137 = vmatpush1.bf16.msra.mxu0 %v3948
    %5138 = vmatprep.mubr.bf16.mxu0 %v734
    %5139 = vmatmul.mubr.bf16.gmra.mrb[0].mxu0 %v733
    %v5140 = vpop.f32.mrb[0].mxu0
    %v5141 = vadd.f32 %v5100, %v5140
    %v5142 = vpop.f32.mrb[0].mxu0
    %v5143 = vadd.f32 %v5102, %v5142
    %v5144 = vpop.f32.mrb[0].mxu0
    %v5145 = vpop.f32.mrb[0].mxu0
    %5146 = vdwg.mxu0
    %5147 = vmatprep.subr.bf16.mxu0 %v3958
    %5148 = vmatpush1.bf16.msra.mxu0 %v3957
    %5149 = vmatprep.subr.bf16.mxu0 %v3967
    %5150 = vmatpush1.bf16.msra.mxu0 %v3966
    %5151 = vmatprep.subr.bf16.mxu0 %v3976
    %5152 = vmatpush1.bf16.msra.mxu0 %v3975
    %5153 = vmatprep.subr.bf16.mxu0 %v3985
    %5154 = vmatpush1.bf16.msra.mxu0 %v3984
    %5155 = vmatprep.subr.bf16.mxu0 %v3994
    %5156 = vmatpush1.bf16.msra.mxu0 %v3993
    %5157 = vmatprep.subr.bf16.mxu0 %v4003
    %5158 = vmatpush1.bf16.msra.mxu0 %v4002
    %5159 = vmatprep.subr.bf16.mxu0 %v4012
    %5160 = vmatpush1.bf16.msra.mxu0 %v4011
    %5161 = vmatprep.subr.bf16.mxu0 %v4021
    %5162 = vmatpush1.bf16.msra.mxu0 %v4020
    %5163 = vmatprep.subr.bf16.mxu0 %v4030
    %5164 = vmatpush1.bf16.msra.mxu0 %v4029
    %5165 = vmatprep.subr.bf16.mxu0 %v4039
    %5166 = vmatpush1.bf16.msra.mxu0 %v4038
    %5167 = vmatprep.subr.bf16.mxu0 %v4048
    %5168 = vmatpush1.bf16.msra.mxu0 %v4047
    %5169 = vmatprep.subr.bf16.mxu0 %v4057
    %5170 = vmatpush1.bf16.msra.mxu0 %v4056
    %5171 = vmatprep.subr.bf16.mxu0 %v4066
    %5172 = vmatpush1.bf16.msra.mxu0 %v4065
    %5173 = vmatprep.subr.bf16.mxu0 %v4075
    %5174 = vmatpush1.bf16.msra.mxu0 %v4074
    %5175 = vmatprep.subr.bf16.mxu0 %v4084
    %5176 = vmatpush1.bf16.msra.mxu0 %v4083
    %5177 = vmatprep.subr.bf16.mxu0 %v4093
    %5178 = vmatpush1.bf16.msra.mxu0 %v4092
    %5179 = vmatprep.mubr.bf16.mxu0 %v736
    %5180 = vmatmul.mubr.bf16.gmra.mrb[0].mxu0 %v735
    %v5181 = vpop.f32.mrb[0].mxu0
    %v5182 = vadd.f32 %v5141, %v5181
    %v5183 = vpop.f32.mrb[0].mxu0
    %v5184 = vadd.f32 %v5143, %v5183
    %v5185 = vpop.f32.mrb[0].mxu0
    %v5186 = vpop.f32.mrb[0].mxu0
    %5187 = vdwg.mxu0
    %5188 = vmatprep.subr.bf16.mxu0 %v4102
    %5189 = vmatpush1.bf16.msra.mxu0 %v4101
    %5190 = vmatprep.subr.bf16.mxu0 %v4111
    %5191 = vmatpush1.bf16.msra.mxu0 %v4110
    %5192 = vmatprep.subr.bf16.mxu0 %v4120
    %5193 = vmatpush1.bf16.msra.mxu0 %v4119
    %5194 = vmatprep.subr.bf16.mxu0 %v4129
    %5195 = vmatpush1.bf16.msra.mxu0 %v4128
    %5196 = vmatprep.subr.bf16.mxu0 %v4138
    %5197 = vmatpush1.bf16.msra.mxu0 %v4137
    %5198 = vmatprep.subr.bf16.mxu0 %v4147
    %5199 = vmatpush1.bf16.msra.mxu0 %v4146
    %5200 = vmatprep.subr.bf16.mxu0 %v4156
    %5201 = vmatpush1.bf16.msra.mxu0 %v4155
    %5202 = vmatprep.subr.bf16.mxu0 %v4165
    %5203 = vmatpush1.bf16.msra.mxu0 %v4164
    %5204 = vmatprep.subr.bf16.mxu0 0
    %5205 = vmatpush1.bf16.msra.mxu0 0
    %5206 = vmatprep.subr.bf16.mxu0 0
    %5207 = vmatpush1.bf16.msra.mxu0 0
    %5208 = vmatprep.subr.bf16.mxu0 0
    %5209 = vmatpush1.bf16.msra.mxu0 0
    %5210 = vmatprep.subr.bf16.mxu0 0
    %5211 = vmatpush1.bf16.msra.mxu0 0
    %5212 = vmatprep.subr.bf16.mxu0 0
    %5213 = vmatpush1.bf16.msra.mxu0 0
    %5214 = vmatprep.subr.bf16.mxu0 0
    %5215 = vmatpush1.bf16.msra.mxu0 0
    %5216 = vmatprep.subr.bf16.mxu0 0
    %5217 = vmatpush1.bf16.msra.mxu0 0
    %5218 = vmatprep.subr.bf16.mxu0 0
    %5219 = vmatpush1.bf16.msra.mxu0 0
    %5220 = vmatprep.mubr.bf16.mxu0 0
    %5221 = vmatmul.mubr.bf16.gmra.mrb[0].mxu0 %v737
    %v5222 = vpop.f32.mrb[0].mxu0
    %v5223 = vadd.f32 %v5182, %v5222
    %v5224 = vpop.f32.mrb[0].mxu0
    %v5225 = vadd.f32 %v5184, %v5224
    %v5226 = vpop.f32.mrb[0].mxu0
    %v5227 = vpop.f32.mrb[0].mxu0
    %5228 = vdwg.mxu0
    %5229 = vmatprep.subr.bf16.mxu0 %v3528
    %5230 = vmatpush1.bf16.msra.mxu0 %v3527
    %5231 = vmatprep.subr.bf16.mxu0 %v3537
    %5232 = vmatpush1.bf16.msra.mxu0 %v3536
    %5233 = vmatprep.subr.bf16.mxu0 %v3546
    %5234 = vmatpush1.bf16.msra.mxu0 %v3545
    %5235 = vmatprep.subr.bf16.mxu0 %v3555
    %5236 = vmatpush1.bf16.msra.mxu0 %v3554
    %5237 = vmatprep.subr.bf16.mxu0 %v3564
    %5238 = vmatpush1.bf16.msra.mxu0 %v3563
    %5239 = vmatprep.subr.bf16.mxu0 %v3573
    %5240 = vmatpush1.bf16.msra.mxu0 %v3572
    %5241 = vmatprep.subr.bf16.mxu0 %v3582
    %5242 = vmatpush1.bf16.msra.mxu0 %v3581
    %5243 = vmatprep.subr.bf16.mxu0 %v3591
    %5244 = vmatpush1.bf16.msra.mxu0 %v3590
    %5245 = vmatprep.subr.bf16.mxu0 %v3600
    %5246 = vmatpush1.bf16.msra.mxu0 %v3599
    %5247 = vmatprep.subr.bf16.mxu0 %v3609
    %5248 = vmatpush1.bf16.msra.mxu0 %v3608
    %5249 = vmatprep.subr.bf16.mxu0 %v3618
    %5250 = vmatpush1.bf16.msra.mxu0 %v3617
    %5251 = vmatprep.subr.bf16.mxu0 %v3627
    %5252 = vmatpush1.bf16.msra.mxu0 %v3626
    %5253 = vmatprep.subr.bf16.mxu0 %v3636
    %5254 = vmatpush1.bf16.msra.mxu0 %v3635
    %5255 = vmatprep.subr.bf16.mxu0 %v3645
    %5256 = vmatpush1.bf16.msra.mxu0 %v3644
    %5257 = vmatprep.subr.bf16.mxu0 %v3654
    %5258 = vmatpush1.bf16.msra.mxu0 %v3653
    %5259 = vmatprep.subr.bf16.mxu0 %v3663
    %5260 = vmatpush1.bf16.msra.mxu0 %v3662
    %5261 = vmatprep.mubr.bf16.mxu0 %v730
    %5262 = vmatmul.mubr.bf16.gmra.mrb[0].mxu0 %v729
    %v5263 = vpop.f32.mrb[0].mxu0
    %v5264 = vadd.f32 %v1481, %v5263
    %v5265 = vpop.f32.mrb[0].mxu0
    %v5266 = vadd.f32 %v1485, %v5265
    %v5267 = vpop.f32.mrb[0].mxu0
    %v5268 = vpop.f32.mrb[0].mxu0
    %5269 = vdwg.mxu0
    %5270 = vmatprep.subr.bf16.mxu0 %v3672
    %5271 = vmatpush1.bf16.msra.mxu0 %v3671
    %5272 = vmatprep.subr.bf16.mxu0 %v3681
    %5273 = vmatpush1.bf16.msra.mxu0 %v3680
    %5274 = vmatprep.subr.bf16.mxu0 %v3690
    %5275 = vmatpush1.bf16.msra.mxu0 %v3689
    %5276 = vmatprep.subr.bf16.mxu0 %v3699
    %5277 = vmatpush1.bf16.msra.mxu0 %v3698
    %5278 = vmatprep.subr.bf16.mxu0 %v3708
    %5279 = vmatpush1.bf16.msra.mxu0 %v3707
    %5280 = vmatprep.subr.bf16.mxu0 %v3717
    %5281 = vmatpush1.bf16.msra.mxu0 %v3716
    %5282 = vmatprep.subr.bf16.mxu0 %v3726
    %5283 = vmatpush1.bf16.msra.mxu0 %v3725
    %5284 = vmatprep.subr.bf16.mxu0 %v3735
    %5285 = vmatpush1.bf16.msra.mxu0 %v3734
    %5286 = vmatprep.subr.bf16.mxu0 %v3744
    %5287 = vmatpush1.bf16.msra.mxu0 %v3743
    %5288 = vmatprep.subr.bf16.mxu0 %v3753
    %5289 = vmatpush1.bf16.msra.mxu0 %v3752
    %5290 = vmatprep.subr.bf16.mxu0 %v3762
    %5291 = vmatpush1.bf16.msra.mxu0 %v3761
    %5292 = vmatprep.subr.bf16.mxu0 %v3771
    %5293 = vmatpush1.bf16.msra.mxu0 %v3770
    %5294 = vmatprep.subr.bf16.mxu0 %v3780
    %5295 = vmatpush1.bf16.msra.mxu0 %v3779
    %5296 = vmatprep.subr.bf16.mxu0 %v3789
    %5297 = vmatpush1.bf16.msra.mxu0 %v3788
    %5298 = vmatprep.subr.bf16.mxu0 %v3798
    %5299 = vmatpush1.bf16.msra.mxu0 %v3797
    %5300 = vmatprep.subr.bf16.mxu0 %v3807
    %5301 = vmatpush1.bf16.msra.mxu0 %v3806
    %5302 = vmatprep.mubr.bf16.mxu0 %v732
    %5303 = vmatmul.mubr.bf16.gmra.mrb[0].mxu0 %v731
    %v5304 = vpop.f32.mrb[0].mxu0
    %v5305 = vadd.f32 %v5264, %v5304
    %v5306 = vpop.f32.mrb[0].mxu0
    %v5307 = vadd.f32 %v5266, %v5306
    %v5308 = vpop.f32.mrb[0].mxu0
    %v5309 = vpop.f32.mrb[0].mxu0
    %5310 = vdwg.mxu0
    %5311 = vmatprep.subr.bf16.mxu0 %v3816
    %5312 = vmatpush1.bf16.msra.mxu0 %v3815
    %5313 = vmatprep.subr.bf16.mxu0 %v3825
    %5314 = vmatpush1.bf16.msra.mxu0 %v3824
    %5315 = vmatprep.subr.bf16.mxu0 %v3834
    %5316 = vmatpush1.bf16.msra.mxu0 %v3833
    %5317 = vmatprep.subr.bf16.mxu0 %v3843
    %5318 = vmatpush1.bf16.msra.mxu0 %v3842
    %5319 = vmatprep.subr.bf16.mxu0 %v3852
    %5320 = vmatpush1.bf16.msra.mxu0 %v3851
    %5321 = vmatprep.subr.bf16.mxu0 %v3861
    %5322 = vmatpush1.bf16.msra.mxu0 %v3860
    %5323 = vmatprep.subr.bf16.mxu0 %v3870
    %5324 = vmatpush1.bf16.msra.mxu0 %v3869
    %5325 = vmatprep.subr.bf16.mxu0 %v3879
    %5326 = vmatpush1.bf16.msra.mxu0 %v3878
    %5327 = vmatprep.subr.bf16.mxu0 %v3888
    %5328 = vmatpush1.bf16.msra.mxu0 %v3887
    %5329 = vmatprep.subr.bf16.mxu0 %v3897
    %5330 = vmatpush1.bf16.msra.mxu0 %v3896
    %5331 = vmatprep.subr.bf16.mxu0 %v3906
    %5332 = vmatpush1.bf16.msra.mxu0 %v3905
    %5333 = vmatprep.subr.bf16.mxu0 %v3915
    %5334 = vmatpush1.bf16.msra.mxu0 %v3914
    %5335 = vmatprep.subr.bf16.mxu0 %v3924
    %5336 = vmatpush1.bf16.msra.mxu0 %v3923
    %5337 = vmatprep.subr.bf16.mxu0 %v3933
    %5338 = vmatpush1.bf16.msra.mxu0 %v3932
    %5339 = vmatprep.subr.bf16.mxu0 %v3942
    %5340 = vmatpush1.bf16.msra.mxu0 %v3941
    %5341 = vmatprep.subr.bf16.mxu0 %v3951
    %5342 = vmatpush1.bf16.msra.mxu0 %v3950
    %5343 = vmatprep.mubr.bf16.mxu0 %v734
    %5344 = vmatmul.mubr.bf16.gmra.mrb[0].mxu0 %v733
    %v5345 = vpop.f32.mrb[0].mxu0
    %v5346 = vadd.f32 %v5305, %v5345
    %v5347 = vpop.f32.mrb[0].mxu0
    %v5348 = vadd.f32 %v5307, %v5347
    %v5349 = vpop.f32.mrb[0].mxu0
    %v5350 = vpop.f32.mrb[0].mxu0
    %5351 = vdwg.mxu0
    %5352 = vmatprep.subr.bf16.mxu0 %v3960
    %5353 = vmatpush1.bf16.msra.mxu0 %v3959
    %5354 = vmatprep.subr.bf16.mxu0 %v3969
    %5355 = vmatpush1.bf16.msra.mxu0 %v3968
    %5356 = vmatprep.subr.bf16.mxu0 %v3978
    %5357 = vmatpush1.bf16.msra.mxu0 %v3977
    %5358 = vmatprep.subr.bf16.mxu0 %v3987
    %5359 = vmatpush1.bf16.msra.mxu0 %v3986
    %5360 = vmatprep.subr.bf16.mxu0 %v3996
    %5361 = vmatpush1.bf16.msra.mxu0 %v3995
    %5362 = vmatprep.subr.bf16.mxu0 %v4005
    %5363 = vmatpush1.bf16.msra.mxu0 %v4004
    %5364 = vmatprep.subr.bf16.mxu0 %v4014
    %5365 = vmatpush1.bf16.msra.mxu0 %v4013
    %5366 = vmatprep.subr.bf16.mxu0 %v4023
    %5367 = vmatpush1.bf16.msra.mxu0 %v4022
    %5368 = vmatprep.subr.bf16.mxu0 %v4032
    %5369 = vmatpush1.bf16.msra.mxu0 %v4031
    %5370 = vmatprep.subr.bf16.mxu0 %v4041
    %5371 = vmatpush1.bf16.msra.mxu0 %v4040
    %5372 = vmatprep.subr.bf16.mxu0 %v4050
    %5373 = vmatpush1.bf16.msra.mxu0 %v4049
    %5374 = vmatprep.subr.bf16.mxu0 %v4059
    %5375 = vmatpush1.bf16.msra.mxu0 %v4058
    %5376 = vmatprep.subr.bf16.mxu0 %v4068
    %5377 = vmatpush1.bf16.msra.mxu0 %v4067
    %5378 = vmatprep.subr.bf16.mxu0 %v4077
    %5379 = vmatpush1.bf16.msra.mxu0 %v4076
    %5380 = vmatprep.subr.bf16.mxu0 %v4086
    %5381 = vmatpush1.bf16.msra.mxu0 %v4085
    %5382 = vmatprep.subr.bf16.mxu0 %v4095
    %5383 = vmatpush1.bf16.msra.mxu0 %v4094
    %5384 = vmatprep.mubr.bf16.mxu0 %v736
    %5385 = vmatmul.mubr.bf16.gmra.mrb[0].mxu0 %v735
    %v5386 = vpop.f32.mrb[0].mxu0
    %v5387 = vadd.f32 %v5346, %v5386
    %v5388 = vpop.f32.mrb[0].mxu0
    %v5389 = vadd.f32 %v5348, %v5388
    %v5390 = vpop.f32.mrb[0].mxu0
    %v5391 = vpop.f32.mrb[0].mxu0
    %5392 = vdwg.mxu0
    %5393 = vmatprep.subr.bf16.mxu0 %v4104
    %5394 = vmatpush1.bf16.msra.mxu0 %v4103
    %5395 = vmatprep.subr.bf16.mxu0 %v4113
    %5396 = vmatpush1.bf16.msra.mxu0 %v4112
    %5397 = vmatprep.subr.bf16.mxu0 %v4122
    %5398 = vmatpush1.bf16.msra.mxu0 %v4121
    %5399 = vmatprep.subr.bf16.mxu0 %v4131
    %5400 = vmatpush1.bf16.msra.mxu0 %v4130
    %5401 = vmatprep.subr.bf16.mxu0 %v4140
    %5402 = vmatpush1.bf16.msra.mxu0 %v4139
    %5403 = vmatprep.subr.bf16.mxu0 %v4149
    %5404 = vmatpush1.bf16.msra.mxu0 %v4148
    %5405 = vmatprep.subr.bf16.mxu0 %v4158
    %5406 = vmatpush1.bf16.msra.mxu0 %v4157
    %5407 = vmatprep.subr.bf16.mxu0 %v4167
    %5408 = vmatpush1.bf16.msra.mxu0 %v4166
    %5409 = vmatprep.subr.bf16.mxu0 0
    %5410 = vmatpush1.bf16.msra.mxu0 0
    %5411 = vmatprep.subr.bf16.mxu0 0
    %5412 = vmatpush1.bf16.msra.mxu0 0
    %5413 = vmatprep.subr.bf16.mxu0 0
    %5414 = vmatpush1.bf16.msra.mxu0 0
    %5415 = vmatprep.subr.bf16.mxu0 0
    %5416 = vmatpush1.bf16.msra.mxu0 0
    %5417 = vmatprep.subr.bf16.mxu0 0
    %5418 = vmatpush1.bf16.msra.mxu0 0
    %5419 = vmatprep.subr.bf16.mxu0 0
    %5420 = vmatpush1.bf16.msra.mxu0 0
    %5421 = vmatprep.subr.bf16.mxu0 0
    %5422 = vmatpush1.bf16.msra.mxu0 0
    %5423 = vmatprep.subr.bf16.mxu0 0
    %5424 = vmatpush1.bf16.msra.mxu0 0
    %5425 = vmatprep.mubr.bf16.mxu0 0
    %5426 = vmatmul.mubr.bf16.gmra.mrb[0].mxu0 %v737
    %v5427 = vpop.f32.mrb[0].mxu0
    %v5428 = vadd.f32 %v5387, %v5427
    %v5429 = vpop.f32.mrb[0].mxu0
    %v5430 = vadd.f32 %v5389, %v5429
    %v5431 = vpop.f32.mrb[0].mxu0
    %v5432 = vpop.f32.mrb[0].mxu0
    %5433 = vdwg.mxu0
    %5434 = vmatprep.subr.bf16.mxu0 %v3530
    %5435 = vmatpush1.bf16.msra.mxu0 %v3529
    %5436 = vmatprep.subr.bf16.mxu0 %v3539
    %5437 = vmatpush1.bf16.msra.mxu0 %v3538
    %5438 = vmatprep.subr.bf16.mxu0 %v3548
    %5439 = vmatpush1.bf16.msra.mxu0 %v3547
    %5440 = vmatprep.subr.bf16.mxu0 %v3557
    %5441 = vmatpush1.bf16.msra.mxu0 %v3556
    %5442 = vmatprep.subr.bf16.mxu0 %v3566
    %5443 = vmatpush1.bf16.msra.mxu0 %v3565
    %5444 = vmatprep.subr.bf16.mxu0 %v3575
    %5445 = vmatpush1.bf16.msra.mxu0 %v3574
    %5446 = vmatprep.subr.bf16.mxu0 %v3584
    %5447 = vmatpush1.bf16.msra.mxu0 %v3583
    %5448 = vmatprep.subr.bf16.mxu0 %v3593
    %5449 = vmatpush1.bf16.msra.mxu0 %v3592
    %5450 = vmatprep.subr.bf16.mxu0 %v3602
    %5451 = vmatpush1.bf16.msra.mxu0 %v3601
    %5452 = vmatprep.subr.bf16.mxu0 %v3611
    %5453 = vmatpush1.bf16.msra.mxu0 %v3610
    %5454 = vmatprep.subr.bf16.mxu0 %v3620
    %5455 = vmatpush1.bf16.msra.mxu0 %v3619
    %5456 = vmatprep.subr.bf16.mxu0 %v3629
    %5457 = vmatpush1.bf16.msra.mxu0 %v3628
    %5458 = vmatprep.subr.bf16.mxu0 %v3638
    %5459 = vmatpush1.bf16.msra.mxu0 %v3637
    %5460 = vmatprep.subr.bf16.mxu0 %v3647
    %5461 = vmatpush1.bf16.msra.mxu0 %v3646
    %5462 = vmatprep.subr.bf16.mxu0 %v3656
    %5463 = vmatpush1.bf16.msra.mxu0 %v3655
    %5464 = vmatprep.subr.bf16.mxu0 %v3665
    %5465 = vmatpush1.bf16.msra.mxu0 %v3664
    %5466 = vmatprep.mubr.bf16.mxu0 %v730
    %5467 = vmatmul.mubr.bf16.gmra.mrb[0].mxu0 %v729
    %v5468 = vpop.f32.mrb[0].mxu0
    %v5469 = vadd.f32 %v1489, %v5468
    %v5470 = vpop.f32.mrb[0].mxu0
    %v5471 = vadd.f32 %v1493, %v5470
    %v5472 = vpop.f32.mrb[0].mxu0
    %v5473 = vpop.f32.mrb[0].mxu0
    %5474 = vdwg.mxu0
    %5475 = vmatprep.subr.bf16.mxu0 %v3674
    %5476 = vmatpush1.bf16.msra.mxu0 %v3673
    %5477 = vmatprep.subr.bf16.mxu0 %v3683
    %5478 = vmatpush1.bf16.msra.mxu0 %v3682
    %5479 = vmatprep.subr.bf16.mxu0 %v3692
    %5480 = vmatpush1.bf16.msra.mxu0 %v3691
    %5481 = vmatprep.subr.bf16.mxu0 %v3701
    %5482 = vmatpush1.bf16.msra.mxu0 %v3700
    %5483 = vmatprep.subr.bf16.mxu0 %v3710
    %5484 = vmatpush1.bf16.msra.mxu0 %v3709
    %5485 = vmatprep.subr.bf16.mxu0 %v3719
    %5486 = vmatpush1.bf16.msra.mxu0 %v3718
    %5487 = vmatprep.subr.bf16.mxu0 %v3728
    %5488 = vmatpush1.bf16.msra.mxu0 %v3727
    %5489 = vmatprep.subr.bf16.mxu0 %v3737
    %5490 = vmatpush1.bf16.msra.mxu0 %v3736
    %5491 = vmatprep.subr.bf16.mxu0 %v3746
    %5492 = vmatpush1.bf16.msra.mxu0 %v3745
    %5493 = vmatprep.subr.bf16.mxu0 %v3755
    %5494 = vmatpush1.bf16.msra.mxu0 %v3754
    %5495 = vmatprep.subr.bf16.mxu0 %v3764
    %5496 = vmatpush1.bf16.msra.mxu0 %v3763
    %5497 = vmatprep.subr.bf16.mxu0 %v3773
    %5498 = vmatpush1.bf16.msra.mxu0 %v3772
    %5499 = vmatprep.subr.bf16.mxu0 %v3782
    %5500 = vmatpush1.bf16.msra.mxu0 %v3781
    %5501 = vmatprep.subr.bf16.mxu0 %v3791
    %5502 = vmatpush1.bf16.msra.mxu0 %v3790
    %5503 = vmatprep.subr.bf16.mxu0 %v3800
    %5504 = vmatpush1.bf16.msra.mxu0 %v3799
    %5505 = vmatprep.subr.bf16.mxu0 %v3809
    %5506 = vmatpush1.bf16.msra.mxu0 %v3808
    %5507 = vmatprep.mubr.bf16.mxu0 %v732
    %5508 = vmatmul.mubr.bf16.gmra.mrb[0].mxu0 %v731
    %v5509 = vpop.f32.mrb[0].mxu0
    %v5510 = vadd.f32 %v5469, %v5509
    %v5511 = vpop.f32.mrb[0].mxu0
    %v5512 = vadd.f32 %v5471, %v5511
    %v5513 = vpop.f32.mrb[0].mxu0
    %v5514 = vpop.f32.mrb[0].mxu0
    %5515 = vdwg.mxu0
    %5516 = vmatprep.subr.bf16.mxu0 %v3818
    %5517 = vmatpush1.bf16.msra.mxu0 %v3817
    %5518 = vmatprep.subr.bf16.mxu0 %v3827
    %5519 = vmatpush1.bf16.msra.mxu0 %v3826
    %5520 = vmatprep.subr.bf16.mxu0 %v3836
    %5521 = vmatpush1.bf16.msra.mxu0 %v3835
    %5522 = vmatprep.subr.bf16.mxu0 %v3845
    %5523 = vmatpush1.bf16.msra.mxu0 %v3844
    %5524 = vmatprep.subr.bf16.mxu0 %v3854
    %5525 = vmatpush1.bf16.msra.mxu0 %v3853
    %5526 = vmatprep.subr.bf16.mxu0 %v3863
    %5527 = vmatpush1.bf16.msra.mxu0 %v3862
    %5528 = vmatprep.subr.bf16.mxu0 %v3872
    %5529 = vmatpush1.bf16.msra.mxu0 %v3871
    %5530 = vmatprep.subr.bf16.mxu0 %v3881
    %5531 = vmatpush1.bf16.msra.mxu0 %v3880
    %5532 = vmatprep.subr.bf16.mxu0 %v3890
    %5533 = vmatpush1.bf16.msra.mxu0 %v3889
    %5534 = vmatprep.subr.bf16.mxu0 %v3899
    %5535 = vmatpush1.bf16.msra.mxu0 %v3898
    %5536 = vmatprep.subr.bf16.mxu0 %v3908
    %5537 = vmatpush1.bf16.msra.mxu0 %v3907
    %5538 = vmatprep.subr.bf16.mxu0 %v3917
    %5539 = vmatpush1.bf16.msra.mxu0 %v3916
    %5540 = vmatprep.subr.bf16.mxu0 %v3926
    %5541 = vmatpush1.bf16.msra.mxu0 %v3925
    %5542 = vmatprep.subr.bf16.mxu0 %v3935
    %5543 = vmatpush1.bf16.msra.mxu0 %v3934
    %5544 = vmatprep.subr.bf16.mxu0 %v3944
    %5545 = vmatpush1.bf16.msra.mxu0 %v3943
    %5546 = vmatprep.subr.bf16.mxu0 %v3953
    %5547 = vmatpush1.bf16.msra.mxu0 %v3952
    %5548 = vmatprep.mubr.bf16.mxu0 %v734
    %5549 = vmatmul.mubr.bf16.gmra.mrb[0].mxu0 %v733
    %v5550 = vpop.f32.mrb[0].mxu0
    %v5551 = vadd.f32 %v5510, %v5550
    %v5552 = vpop.f32.mrb[0].mxu0
    %v5553 = vadd.f32 %v5512, %v5552
    %v5554 = vpop.f32.mrb[0].mxu0
    %v5555 = vpop.f32.mrb[0].mxu0
    %5556 = vdwg.mxu0
    %5557 = vmatprep.subr.bf16.mxu0 %v3962
    %5558 = vmatpush1.bf16.msra.mxu0 %v3961
    %5559 = vmatprep.subr.bf16.mxu0 %v3971
    %5560 = vmatpush1.bf16.msra.mxu0 %v3970
    %5561 = vmatprep.subr.bf16.mxu0 %v3980
    %5562 = vmatpush1.bf16.msra.mxu0 %v3979
    %5563 = vmatprep.subr.bf16.mxu0 %v3989
    %5564 = vmatpush1.bf16.msra.mxu0 %v3988
    %5565 = vmatprep.subr.bf16.mxu0 %v3998
    %5566 = vmatpush1.bf16.msra.mxu0 %v3997
    %5567 = vmatprep.subr.bf16.mxu0 %v4007
    %5568 = vmatpush1.bf16.msra.mxu0 %v4006
    %5569 = vmatprep.subr.bf16.mxu0 %v4016
    %5570 = vmatpush1.bf16.msra.mxu0 %v4015
    %5571 = vmatprep.subr.bf16.mxu0 %v4025
    %5572 = vmatpush1.bf16.msra.mxu0 %v4024
    %5573 = vmatprep.subr.bf16.mxu0 %v4034
    %5574 = vmatpush1.bf16.msra.mxu0 %v4033
    %5575 = vmatprep.subr.bf16.mxu0 %v4043
    %5576 = vmatpush1.bf16.msra.mxu0 %v4042
    %5577 = vmatprep.subr.bf16.mxu0 %v4052
    %5578 = vmatpush1.bf16.msra.mxu0 %v4051
    %5579 = vmatprep.subr.bf16.mxu0 %v4061
    %5580 = vmatpush1.bf16.msra.mxu0 %v4060
    %5581 = vmatprep.subr.bf16.mxu0 %v4070
    %5582 = vmatpush1.bf16.msra.mxu0 %v4069
    %5583 = vmatprep.subr.bf16.mxu0 %v4079
    %5584 = vmatpush1.bf16.msra.mxu0 %v4078
    %5585 = vmatprep.subr.bf16.mxu0 %v4088
    %5586 = vmatpush1.bf16.msra.mxu0 %v4087
    %5587 = vmatprep.subr.bf16.mxu0 %v4097
    %5588 = vmatpush1.bf16.msra.mxu0 %v4096
    %5589 = vmatprep.mubr.bf16.mxu0 %v736
    %5590 = vmatmul.mubr.bf16.gmra.mrb[0].mxu0 %v735
    %v5591 = vpop.f32.mrb[0].mxu0
    %v5592 = vadd.f32 %v5551, %v5591
    %v5593 = vpop.f32.mrb[0].mxu0
    %v5594 = vadd.f32 %v5553, %v5593
    %v5595 = vpop.f32.mrb[0].mxu0
    %v5596 = vpop.f32.mrb[0].mxu0
    %5597 = vdwg.mxu0
    %5598 = vmatprep.subr.bf16.mxu0 %v4106
    %5599 = vmatpush1.bf16.msra.mxu0 %v4105
    %5600 = vmatprep.subr.bf16.mxu0 %v4115
    %5601 = vmatpush1.bf16.msra.mxu0 %v4114
    %5602 = vmatprep.subr.bf16.mxu0 %v4124
    %5603 = vmatpush1.bf16.msra.mxu0 %v4123
    %5604 = vmatprep.subr.bf16.mxu0 %v4133
    %5605 = vmatpush1.bf16.msra.mxu0 %v4132
    %5606 = vmatprep.subr.bf16.mxu0 %v4142
    %5607 = vmatpush1.bf16.msra.mxu0 %v4141
    %5608 = vmatprep.subr.bf16.mxu0 %v4151
    %5609 = vmatpush1.bf16.msra.mxu0 %v4150
    %5610 = vmatprep.subr.bf16.mxu0 %v4160
    %5611 = vmatpush1.bf16.msra.mxu0 %v4159
    %5612 = vmatprep.subr.bf16.mxu0 %v4169
    %5613 = vmatpush1.bf16.msra.mxu0 %v4168
    %5614 = vmatprep.subr.bf16.mxu0 0
    %5615 = vmatpush1.bf16.msra.mxu0 0
    %5616 = vmatprep.subr.bf16.mxu0 0
    %5617 = vmatpush1.bf16.msra.mxu0 0
    %5618 = vmatprep.subr.bf16.mxu0 0
    %5619 = vmatpush1.bf16.msra.mxu0 0
    %5620 = vmatprep.subr.bf16.mxu0 0
    %5621 = vmatpush1.bf16.msra.mxu0 0
    %5622 = vmatprep.subr.bf16.mxu0 0
    %5623 = vmatpush1.bf16.msra.mxu0 0
    %5624 = vmatprep.subr.bf16.mxu0 0
    %5625 = vmatpush1.bf16.msra.mxu0 0
    %5626 = vmatprep.subr.bf16.mxu0 0
    %5627 = vmatpush1.bf16.msra.mxu0 0
    %5628 = vmatprep.subr.bf16.mxu0 0
    %5629 = vmatpush1.bf16.msra.mxu0 0
    %5630 = vmatprep.mubr.bf16.mxu0 0
    %5631 = vmatmul.mubr.bf16.gmra.mrb[0].mxu0 %v737
    %v5632 = vpop.f32.mrb[0].mxu0
    %v5633 = vadd.f32 %v5592, %v5632
    %v5634 = vpop.f32.mrb[0].mxu0
    %v5635 = vadd.f32 %v5594, %v5634
    %v5636 = vpop.f32.mrb[0].mxu0
    %v5637 = vpop.f32.mrb[0].mxu0
    %5638 = vdwg.mxu0
    %5639 = vmatprep.subr.bf16.mxu0 0
    %5640 = vmatpush1.bf16.msra.mxu0 %v3531
    %5641 = vmatprep.subr.bf16.mxu0 0
    %5642 = vmatpush1.bf16.msra.mxu0 %v3540
    %5643 = vmatprep.subr.bf16.mxu0 0
    %5644 = vmatpush1.bf16.msra.mxu0 %v3549
    %5645 = vmatprep.subr.bf16.mxu0 0
    %5646 = vmatpush1.bf16.msra.mxu0 %v3558
    %5647 = vmatprep.subr.bf16.mxu0 0
    %5648 = vmatpush1.bf16.msra.mxu0 %v3567
    %5649 = vmatprep.subr.bf16.mxu0 0
    %5650 = vmatpush1.bf16.msra.mxu0 %v3576
    %5651 = vmatprep.subr.bf16.mxu0 0
    %5652 = vmatpush1.bf16.msra.mxu0 %v3585
    %5653 = vmatprep.subr.bf16.mxu0 0
    %5654 = vmatpush1.bf16.msra.mxu0 %v3594
    %5655 = vmatprep.subr.bf16.mxu0 0
    %5656 = vmatpush1.bf16.msra.mxu0 %v3603
    %5657 = vmatprep.subr.bf16.mxu0 0
    %5658 = vmatpush1.bf16.msra.mxu0 %v3612
    %5659 = vmatprep.subr.bf16.mxu0 0
    %5660 = vmatpush1.bf16.msra.mxu0 %v3621
    %5661 = vmatprep.subr.bf16.mxu0 0
    %5662 = vmatpush1.bf16.msra.mxu0 %v3630
    %5663 = vmatprep.subr.bf16.mxu0 0
    %5664 = vmatpush1.bf16.msra.mxu0 %v3639
    %5665 = vmatprep.subr.bf16.mxu0 0
    %5666 = vmatpush1.bf16.msra.mxu0 %v3648
    %5667 = vmatprep.subr.bf16.mxu0 0
    %5668 = vmatpush1.bf16.msra.mxu0 %v3657
    %5669 = vmatprep.subr.bf16.mxu0 0
    %5670 = vmatpush1.bf16.msra.mxu0 %v3666
    %5671 = vmatprep.mubr.bf16.mxu0 %v730
    %5672 = vmatmul.mubr.bf16.gmra.mrb[0].mxu0 %v729
    %v5673 = vpop.f32.mrb[0].mxu0
    %v5674 = vadd.f32 %v1497, %v5673
    %v5675 = vpop.f32.mrb[0].mxu0
    %v5676 = vpop.f32.mrb[0].mxu0
    %v5677 = vpop.f32.mrb[0].mxu0
    %5678 = vdwg.mxu0
    %5679 = vmatprep.subr.bf16.mxu0 0
    %5680 = vmatpush1.bf16.msra.mxu0 %v3675
    %5681 = vmatprep.subr.bf16.mxu0 0
    %5682 = vmatpush1.bf16.msra.mxu0 %v3684
    %5683 = vmatprep.subr.bf16.mxu0 0
    %5684 = vmatpush1.bf16.msra.mxu0 %v3693
    %5685 = vmatprep.subr.bf16.mxu0 0
    %5686 = vmatpush1.bf16.msra.mxu0 %v3702
    %5687 = vmatprep.subr.bf16.mxu0 0
    %5688 = vmatpush1.bf16.msra.mxu0 %v3711
    %5689 = vmatprep.subr.bf16.mxu0 0
    %5690 = vmatpush1.bf16.msra.mxu0 %v3720
    %5691 = vmatprep.subr.bf16.mxu0 0
    %5692 = vmatpush1.bf16.msra.mxu0 %v3729
    %5693 = vmatprep.subr.bf16.mxu0 0
    %5694 = vmatpush1.bf16.msra.mxu0 %v3738
    %5695 = vmatprep.subr.bf16.mxu0 0
    %5696 = vmatpush1.bf16.msra.mxu0 %v3747
    %5697 = vmatprep.subr.bf16.mxu0 0
    %5698 = vmatpush1.bf16.msra.mxu0 %v3756
    %5699 = vmatprep.subr.bf16.mxu0 0
    %5700 = vmatpush1.bf16.msra.mxu0 %v3765
    %5701 = vmatprep.subr.bf16.mxu0 0
    %5702 = vmatpush1.bf16.msra.mxu0 %v3774
    %5703 = vmatprep.subr.bf16.mxu0 0
    %5704 = vmatpush1.bf16.msra.mxu0 %v3783
    %5705 = vmatprep.subr.bf16.mxu0 0
    %5706 = vmatpush1.bf16.msra.mxu0 %v3792
    %5707 = vmatprep.subr.bf16.mxu0 0
    %5708 = vmatpush1.bf16.msra.mxu0 %v3801
    %5709 = vmatprep.subr.bf16.mxu0 0
    %5710 = vmatpush1.bf16.msra.mxu0 %v3810
    %5711 = vmatprep.mubr.bf16.mxu0 %v732
    %5712 = vmatmul.mubr.bf16.gmra.mrb[0].mxu0 %v731
    %v5713 = vpop.f32.mrb[0].mxu0
    %v5714 = vadd.f32 %v5674, %v5713
    %v5715 = vpop.f32.mrb[0].mxu0
    %v5716 = vpop.f32.mrb[0].mxu0
    %v5717 = vpop.f32.mrb[0].mxu0
    %5718 = vdwg.mxu0
    %5719 = vmatprep.subr.bf16.mxu0 0
    %5720 = vmatpush1.bf16.msra.mxu0 %v3819
    %5721 = vmatprep.subr.bf16.mxu0 0
    %5722 = vmatpush1.bf16.msra.mxu0 %v3828
    %5723 = vmatprep.subr.bf16.mxu0 0
    %5724 = vmatpush1.bf16.msra.mxu0 %v3837
    %5725 = vmatprep.subr.bf16.mxu0 0
    %5726 = vmatpush1.bf16.msra.mxu0 %v3846
    %5727 = vmatprep.subr.bf16.mxu0 0
    %5728 = vmatpush1.bf16.msra.mxu0 %v3855
    %5729 = vmatprep.subr.bf16.mxu0 0
    %5730 = vmatpush1.bf16.msra.mxu0 %v3864
    %5731 = vmatprep.subr.bf16.mxu0 0
    %5732 = vmatpush1.bf16.msra.mxu0 %v3873
    %5733 = vmatprep.subr.bf16.mxu0 0
    %5734 = vmatpush1.bf16.msra.mxu0 %v3882
    %5735 = vmatprep.subr.bf16.mxu0 0
    %5736 = vmatpush1.bf16.msra.mxu0 %v3891
    %5737 = vmatprep.subr.bf16.mxu0 0
    %5738 = vmatpush1.bf16.msra.mxu0 %v3900
    %5739 = vmatprep.subr.bf16.mxu0 0
    %5740 = vmatpush1.bf16.msra.mxu0 %v3909
    %5741 = vmatprep.subr.bf16.mxu0 0
    %5742 = vmatpush1.bf16.msra.mxu0 %v3918
    %5743 = vmatprep.subr.bf16.mxu0 0
    %5744 = vmatpush1.bf16.msra.mxu0 %v3927
    %5745 = vmatprep.subr.bf16.mxu0 0
    %5746 = vmatpush1.bf16.msra.mxu0 %v3936
    %5747 = vmatprep.subr.bf16.mxu0 0
    %5748 = vmatpush1.bf16.msra.mxu0 %v3945
    %5749 = vmatprep.subr.bf16.mxu0 0
    %5750 = vmatpush1.bf16.msra.mxu0 %v3954
    %5751 = vmatprep.mubr.bf16.mxu0 %v734
    %5752 = vmatmul.mubr.bf16.gmra.mrb[0].mxu0 %v733
    %v5753 = vpop.f32.mrb[0].mxu0
    %v5754 = vadd.f32 %v5714, %v5753
    %v5755 = vpop.f32.mrb[0].mxu0
    %v5756 = vpop.f32.mrb[0].mxu0
    %v5757 = vpop.f32.mrb[0].mxu0
    %5758 = vdwg.mxu0
    %5759 = vmatprep.subr.bf16.mxu0 0
    %5760 = vmatpush1.bf16.msra.mxu0 %v3963
    %5761 = vmatprep.subr.bf16.mxu0 0
    %5762 = vmatpush1.bf16.msra.mxu0 %v3972
    %5763 = vmatprep.subr.bf16.mxu0 0
    %5764 = vmatpush1.bf16.msra.mxu0 %v3981
    %5765 = vmatprep.subr.bf16.mxu0 0
    %5766 = vmatpush1.bf16.msra.mxu0 %v3990
    %5767 = vmatprep.subr.bf16.mxu0 0
    %5768 = vmatpush1.bf16.msra.mxu0 %v3999
    %5769 = vmatprep.subr.bf16.mxu0 0
    %5770 = vmatpush1.bf16.msra.mxu0 %v4008
    %5771 = vmatprep.subr.bf16.mxu0 0
    %5772 = vmatpush1.bf16.msra.mxu0 %v4017
    %5773 = vmatprep.subr.bf16.mxu0 0
    %5774 = vmatpush1.bf16.msra.mxu0 %v4026
    %5775 = vmatprep.subr.bf16.mxu0 0
    %5776 = vmatpush1.bf16.msra.mxu0 %v4035
    %5777 = vmatprep.subr.bf16.mxu0 0
    %5778 = vmatpush1.bf16.msra.mxu0 %v4044
    %5779 = vmatprep.subr.bf16.mxu0 0
    %5780 = vmatpush1.bf16.msra.mxu0 %v4053
    %5781 = vmatprep.subr.bf16.mxu0 0
    %5782 = vmatpush1.bf16.msra.mxu0 %v4062
    %5783 = vmatprep.subr.bf16.mxu0 0
    %5784 = vmatpush1.bf16.msra.mxu0 %v4071
    %5785 = vmatprep.subr.bf16.mxu0 0
    %5786 = vmatpush1.bf16.msra.mxu0 %v4080
    %5787 = vmatprep.subr.bf16.mxu0 0
    %5788 = vmatpush1.bf16.msra.mxu0 %v4089
    %5789 = vmatprep.subr.bf16.mxu0 0
    %5790 = vmatpush1.bf16.msra.mxu0 %v4098
    %5791 = vmatprep.mubr.bf16.mxu0 %v736
    %5792 = vmatmul.mubr.bf16.gmra.mrb[0].mxu0 %v735
    %v5793 = vpop.f32.mrb[0].mxu0
    %v5794 = vadd.f32 %v5754, %v5793
    %v5795 = vpop.f32.mrb[0].mxu0
    %v5796 = vpop.f32.mrb[0].mxu0
    %v5797 = vpop.f32.mrb[0].mxu0
    %5798 = vdwg.mxu0
    %5799 = vmatprep.subr.bf16.mxu0 0
    %5800 = vmatpush1.bf16.msra.mxu0 %v4107
    %5801 = vmatprep.subr.bf16.mxu0 0
    %5802 = vmatpush1.bf16.msra.mxu0 %v4116
    %5803 = vmatprep.subr.bf16.mxu0 0
    %5804 = vmatpush1.bf16.msra.mxu0 %v4125
    %5805 = vmatprep.subr.bf16.mxu0 0
    %5806 = vmatpush1.bf16.msra.mxu0 %v4134
    %5807 = vmatprep.subr.bf16.mxu0 0
    %5808 = vmatpush1.bf16.msra.mxu0 %v4143
    %5809 = vmatprep.subr.bf16.mxu0 0
    %5810 = vmatpush1.bf16.msra.mxu0 %v4152
    %5811 = vmatprep.subr.bf16.mxu0 0
    %5812 = vmatpush1.bf16.msra.mxu0 %v4161
    %5813 = vmatprep.subr.bf16.mxu0 0
    %5814 = vmatpush1.bf16.msra.mxu0 %v4170
    %5815 = vmatprep.subr.bf16.mxu0 0
    %5816 = vmatpush1.bf16.msra.mxu0 0
    %5817 = vmatprep.subr.bf16.mxu0 0
    %5818 = vmatpush1.bf16.msra.mxu0 0
    %5819 = vmatprep.subr.bf16.mxu0 0
    %5820 = vmatpush1.bf16.msra.mxu0 0
    %5821 = vmatprep.subr.bf16.mxu0 0
    %5822 = vmatpush1.bf16.msra.mxu0 0
    %5823 = vmatprep.subr.bf16.mxu0 0
    %5824 = vmatpush1.bf16.msra.mxu0 0
    %5825 = vmatprep.subr.bf16.mxu0 0
    %5826 = vmatpush1.bf16.msra.mxu0 0
    %5827 = vmatprep.subr.bf16.mxu0 0
    %5828 = vmatpush1.bf16.msra.mxu0 0
    %5829 = vmatprep.subr.bf16.mxu0 0
    %5830 = vmatpush1.bf16.msra.mxu0 0
    %5831 = vmatprep.mubr.bf16.mxu0 0
    %5832 = vmatmul.mubr.bf16.gmra.mrb[0].mxu0 %v737
    %v5833 = vpop.f32.mrb[0].mxu0
    %v5834 = vadd.f32 %v5794, %v5833
    %v5835 = vpop.f32.mrb[0].mxu0
    %v5836 = vpop.f32.mrb[0].mxu0
    %v5837 = vpop.f32.mrb[0].mxu0
    %5838 = vdwg.mxu0
    %v5839 = vmul.f32 %v5018, 0.5
    %v5840 = vmul.f32 %v5020, 0.5
    %v5841 = vmul.f32 %v5223, 0.5
    %v5842 = vmul.f32 %v5225, 0.5
    %v5843 = vmul.f32 %v5428, 0.5
    %v5844 = vmul.f32 %v5430, 0.5
    %v5845 = vmul.f32 %v5633, 0.5
    %v5846 = vmul.f32 %v5635, 0.5
    %v5847 = vmul.f32 %v5834, 0.5
    %v5848 = vmul.f32 %v5018, 0.70710677
    %v5849 = vmul.f32 %v5020, 0.70710677
    %v5850 = vmul.f32 %v5223, 0.70710677
    %v5851 = vmul.f32 %v5225, 0.70710677
    %v5852 = vmul.f32 %v5428, 0.70710677
    %v5853 = vmul.f32 %v5430, 0.70710677
    %v5854 = vmul.f32 %v5633, 0.70710677
    %v5855 = vmul.f32 %v5635, 0.70710677
    %v5856 = vmul.f32 %v5834, 0.70710677
    %vm5857 = vcmp.ge.f32.partialorder %v5848, 0.0
    %vm5858 = vcmp.ge.f32.partialorder %v5849, 0.0
    %vm5859 = vcmp.ge.f32.partialorder %v5850, 0.0
    %vm5860 = vcmp.ge.f32.partialorder %v5851, 0.0
    %vm5861 = vcmp.ge.f32.partialorder %v5852, 0.0
    %vm5862 = vcmp.ge.f32.partialorder %v5853, 0.0
    %vm5863 = vcmp.ge.f32.partialorder %v5854, 0.0
    %vm5864 = vcmp.ge.f32.partialorder %v5855, 0.0
    %vm5865 = vcmp.ge.f32.partialorder %v5856, 0.0
    %v5866 = vsel %vm5857, 1.0, -1.0
    %v5867 = vsel %vm5858, 1.0, -1.0
    %v5868 = vsel %vm5859, 1.0, -1.0
    %v5869 = vsel %vm5860, 1.0, -1.0
    %v5870 = vsel %vm5861, 1.0, -1.0
    %v5871 = vsel %vm5862, 1.0, -1.0
    %v5872 = vsel %vm5863, 1.0, -1.0
    %v5873 = vsel %vm5864, 1.0, -1.0
    %v5874 = vsel %vm5865, 1.0, -1.0
    %v5875 = vand.u32 2147483647, %v5848
    %v5876 = vand.u32 2147483647, %v5849
    %v5877 = vand.u32 2147483647, %v5850
    %v5878 = vand.u32 2147483647, %v5851
    %v5879 = vand.u32 2147483647, %v5852
    %v5880 = vand.u32 2147483647, %v5853
    %v5881 = vand.u32 2147483647, %v5854
    %v5882 = vand.u32 2147483647, %v5855
    %v5883 = vand.u32 2147483647, %v5856
    %v5884 = vmul.f32 %v5875, 0.3275911
    %v5885 = vmul.f32 %v5876, 0.3275911
    %v5886 = vmul.f32 %v5877, 0.3275911
    %v5887 = vmul.f32 %v5878, 0.3275911
    %v5888 = vmul.f32 %v5879, 0.3275911
    %v5889 = vmul.f32 %v5880, 0.3275911
    %v5890 = vmul.f32 %v5881, 0.3275911
    %v5891 = vmul.f32 %v5882, 0.3275911
    %v5892 = vmul.f32 %v5883, 0.3275911
    %v5893 = vadd.f32 %v5884, 1.0
    %v5894 = vadd.f32 %v5885, 1.0
    %v5895 = vadd.f32 %v5886, 1.0
    %v5896 = vadd.f32 %v5887, 1.0
    %v5897 = vadd.f32 %v5888, 1.0
    %v5898 = vadd.f32 %v5889, 1.0
    %v5899 = vadd.f32 %v5890, 1.0
    %v5900 = vadd.f32 %v5891, 1.0
    %v5901 = vadd.f32 %v5892, 1.0
    %v5902 = vrcp.pop %v5893
    %v5903 = vmul.f32 1.0, %v5902
    %v5904 = vrcp.pop %v5894
    %v5905 = vmul.f32 1.0, %v5904
    %v5906 = vrcp.pop %v5895
    %v5907 = vmul.f32 1.0, %v5906
    %v5908 = vrcp.pop %v5896
    %v5909 = vmul.f32 1.0, %v5908
    %v5910 = vrcp.pop %v5897
    %v5911 = vmul.f32 1.0, %v5910
    %v5912 = vrcp.pop %v5898
    %v5913 = vmul.f32 1.0, %v5912
    %v5914 = vrcp.pop %v5899
    %v5915 = vmul.f32 1.0, %v5914
    %v5916 = vrcp.pop %v5900
    %v5917 = vmul.f32 1.0, %v5916
    %v5918 = vrcp.pop %v5901
    %v5919 = vmul.f32 1.0, %v5918
    %v5920 = vmul.f32 %v5903, 1.0614054
    %v5921 = vmul.f32 %v5905, 1.0614054
    %v5922 = vmul.f32 %v5907, 1.0614054
    %v5923 = vmul.f32 %v5909, 1.0614054
    %v5924 = vmul.f32 %v5911, 1.0614054
    %v5925 = vmul.f32 %v5913, 1.0614054
    %v5926 = vmul.f32 %v5915, 1.0614054
    %v5927 = vmul.f32 %v5917, 1.0614054
    %v5928 = vmul.f32 %v5919, 1.0614054
    %v5929 = vadd.f32 %v5920, -1.4531521
    %v5930 = vadd.f32 %v5921, -1.4531521
    %v5931 = vadd.f32 %v5922, -1.4531521
    %v5932 = vadd.f32 %v5923, -1.4531521
    %v5933 = vadd.f32 %v5924, -1.4531521
    %v5934 = vadd.f32 %v5925, -1.4531521
    %v5935 = vadd.f32 %v5926, -1.4531521
    %v5936 = vadd.f32 %v5927, -1.4531521
    %v5937 = vadd.f32 %v5928, -1.4531521
    %v5938 = vmul.f32 %v5929, %v5903
    %v5939 = vmul.f32 %v5930, %v5905
    %v5940 = vmul.f32 %v5931, %v5907
    %v5941 = vmul.f32 %v5932, %v5909
    %v5942 = vmul.f32 %v5933, %v5911
    %v5943 = vmul.f32 %v5934, %v5913
    %v5944 = vmul.f32 %v5935, %v5915
    %v5945 = vmul.f32 %v5936, %v5917
    %v5946 = vmul.f32 %v5937, %v5919
    %v5947 = vadd.f32 %v5938, 1.4214138
    %v5948 = vadd.f32 %v5939, 1.4214138
    %v5949 = vadd.f32 %v5940, 1.4214138
    %v5950 = vadd.f32 %v5941, 1.4214138
    %v5951 = vadd.f32 %v5942, 1.4214138
    %v5952 = vadd.f32 %v5943, 1.4214138
    %v5953 = vadd.f32 %v5944, 1.4214138
    %v5954 = vadd.f32 %v5945, 1.4214138
    %v5955 = vadd.f32 %v5946, 1.4214138
    %v5956 = vmul.f32 %v5947, %v5903
    %v5957 = vmul.f32 %v5948, %v5905
    %v5958 = vmul.f32 %v5949, %v5907
    %v5959 = vmul.f32 %v5950, %v5909
    %v5960 = vmul.f32 %v5951, %v5911
    %v5961 = vmul.f32 %v5952, %v5913
    %v5962 = vmul.f32 %v5953, %v5915
    %v5963 = vmul.f32 %v5954, %v5917
    %v5964 = vmul.f32 %v5955, %v5919
    %v5965 = vadd.f32 %v5956, -0.28449672
    %v5966 = vadd.f32 %v5957, -0.28449672
    %v5967 = vadd.f32 %v5958, -0.28449672
    %v5968 = vadd.f32 %v5959, -0.28449672
    %v5969 = vadd.f32 %v5960, -0.28449672
    %v5970 = vadd.f32 %v5961, -0.28449672
    %v5971 = vadd.f32 %v5962, -0.28449672
    %v5972 = vadd.f32 %v5963, -0.28449672
    %v5973 = vadd.f32 %v5964, -0.28449672
    %v5974 = vmul.f32 %v5965, %v5903
    %v5975 = vmul.f32 %v5966, %v5905
    %v5976 = vmul.f32 %v5967, %v5907
    %v5977 = vmul.f32 %v5968, %v5909
    %v5978 = vmul.f32 %v5969, %v5911
    %v5979 = vmul.f32 %v5970, %v5913
    %v5980 = vmul.f32 %v5971, %v5915
    %v5981 = vmul.f32 %v5972, %v5917
    %v5982 = vmul.f32 %v5973, %v5919
    %v5983 = vadd.f32 %v5974, 0.2548296
    %v5984 = vadd.f32 %v5975, 0.2548296
    %v5985 = vadd.f32 %v5976, 0.2548296
    %v5986 = vadd.f32 %v5977, 0.2548296
    %v5987 = vadd.f32 %v5978, 0.2548296
    %v5988 = vadd.f32 %v5979, 0.2548296
    %v5989 = vadd.f32 %v5980, 0.2548296
    %v5990 = vadd.f32 %v5981, 0.2548296
    %v5991 = vadd.f32 %v5982, 0.2548296
    %v5992 = vmul.f32 %v5983, %v5903
    %v5993 = vmul.f32 %v5984, %v5905
    %v5994 = vmul.f32 %v5985, %v5907
    %v5995 = vmul.f32 %v5986, %v5909
    %v5996 = vmul.f32 %v5987, %v5911
    %v5997 = vmul.f32 %v5988, %v5913
    %v5998 = vmul.f32 %v5989, %v5915
    %v5999 = vmul.f32 %v5990, %v5917
    %v6000 = vmul.f32 %v5991, %v5919
    %v6001 = vsub.f32 0.0, %v5875
    %v6002 = vsub.f32 0.0, %v5876
    %v6003 = vsub.f32 0.0, %v5877
    %v6004 = vsub.f32 0.0, %v5878
    %v6005 = vsub.f32 0.0, %v5879
    %v6006 = vsub.f32 0.0, %v5880
    %v6007 = vsub.f32 0.0, %v5881
    %v6008 = vsub.f32 0.0, %v5882
    %v6009 = vsub.f32 0.0, %v5883
    %v6010 = vmul.f32 %v6001, %v5875
    %v6011 = vmul.f32 %v6002, %v5876
    %v6012 = vmul.f32 %v6003, %v5877
    %v6013 = vmul.f32 %v6004, %v5878
    %v6014 = vmul.f32 %v6005, %v5879
    %v6015 = vmul.f32 %v6006, %v5880
    %v6016 = vmul.f32 %v6007, %v5881
    %v6017 = vmul.f32 %v6008, %v5882
    %v6018 = vmul.f32 %v6009, %v5883
    %v6019 = vmul.f32 %v6010, 1.442695
    %v6020 = vpow.pop %v6019
    %v6021 = vmul.f32 %v6011, 1.442695
    %v6022 = vpow.pop %v6021
    %v6023 = vmul.f32 %v6012, 1.442695
    %v6024 = vpow.pop %v6023
    %v6025 = vmul.f32 %v6013, 1.442695
    %v6026 = vpow.pop %v6025
    %v6027 = vmul.f32 %v6014, 1.442695
    %v6028 = vpow.pop %v6027
    %v6029 = vmul.f32 %v6015, 1.442695
    %v6030 = vpow.pop %v6029
    %v6031 = vmul.f32 %v6016, 1.442695
    %v6032 = vpow.pop %v6031
    %v6033 = vmul.f32 %v6017, 1.442695
    %v6034 = vpow.pop %v6033
    %v6035 = vmul.f32 %v6018, 1.442695
    %v6036 = vpow.pop %v6035
    %v6037 = vmul.f32 %v5992, %v6020
    %v6038 = vmul.f32 %v5993, %v6022
    %v6039 = vmul.f32 %v5994, %v6024
    %v6040 = vmul.f32 %v5995, %v6026
    %v6041 = vmul.f32 %v5996, %v6028
    %v6042 = vmul.f32 %v5997, %v6030
    %v6043 = vmul.f32 %v5998, %v6032
    %v6044 = vmul.f32 %v5999, %v6034
    %v6045 = vmul.f32 %v6000, %v6036
    %v6046 = vsub.f32 1.0, %v6037
    %v6047 = vsub.f32 1.0, %v6038
    %v6048 = vsub.f32 1.0, %v6039
    %v6049 = vsub.f32 1.0, %v6040
    %v6050 = vsub.f32 1.0, %v6041
    %v6051 = vsub.f32 1.0, %v6042
    %v6052 = vsub.f32 1.0, %v6043
    %v6053 = vsub.f32 1.0, %v6044
    %v6054 = vsub.f32 1.0, %v6045
    %v6055 = vmul.f32 %v5866, %v6046
    %v6056 = vmul.f32 %v5867, %v6047
    %v6057 = vmul.f32 %v5868, %v6048
    %v6058 = vmul.f32 %v5869, %v6049
    %v6059 = vmul.f32 %v5870, %v6050
    %v6060 = vmul.f32 %v5871, %v6051
    %v6061 = vmul.f32 %v5872, %v6052
    %v6062 = vmul.f32 %v5873, %v6053
    %v6063 = vmul.f32 %v5874, %v6054
    %v6064 = vadd.f32 %v6055, 1.0
    %v6065 = vadd.f32 %v6056, 1.0
    %v6066 = vadd.f32 %v6057, 1.0
    %v6067 = vadd.f32 %v6058, 1.0
    %v6068 = vadd.f32 %v6059, 1.0
    %v6069 = vadd.f32 %v6060, 1.0
    %v6070 = vadd.f32 %v6061, 1.0
    %v6071 = vadd.f32 %v6062, 1.0
    %v6072 = vadd.f32 %v6063, 1.0
    %v6073 = vmul.f32 %v5839, %v6064
    %v6074 = vmul.f32 %v5840, %v6065
    %v6075 = vmul.f32 %v5841, %v6066
    %v6076 = vmul.f32 %v5842, %v6067
    %v6077 = vmul.f32 %v5843, %v6068
    %v6078 = vmul.f32 %v5844, %v6069
    %v6079 = vmul.f32 %v5845, %v6070
    %v6080 = vmul.f32 %v5846, %v6071
    %v6081 = vmul.f32 %v5847, %v6072
    %v6082 = vpack.c.bf16 %v6073, %v6073
    %v6083 = vpack.c.bf16 %v6074, %v6074
    %v6084 = vpack.c.bf16 %v6075, %v6075
    %v6085 = vpack.c.bf16 %v6076, %v6076
    %v6086 = vpack.c.bf16 %v6077, %v6077
    %v6087 = vpack.c.bf16 %v6078, %v6078
    %v6088 = vpack.c.bf16 %v6079, %v6079
    %v6089 = vpack.c.bf16 %v6080, %v6080
    %v6090 = vpack.c.bf16 %v6081, %v6081
    %v6091 = vld [vmem:[#allocation11] sm:$0xf]
    %v6092 = vld [vmem:[#allocation11 + $0x4] sm:$0xf]
    %v6093 = vld [vmem:[#allocation11 + $0x8] sm:$0xf]
    %v6094 = vld [vmem:[#allocation11 + $0xc] sm:$0xf]
    %v6095 = vld [vmem:[#allocation11 + $0x10] sm:$0xf]
    %v6096 = vld [vmem:[#allocation11 + $0x14] sm:$0xf]
    %v6097 = vld [vmem:[#allocation11 + $0x18] sm:$0xf]
    %v6098 = vld [vmem:[#allocation11 + $0x1c] sm:$0xf]
    %v6099 = vld [vmem:[#allocation11 + $0x20] sm:$0xf]
    %v6100 = vld [vmem:[#allocation11 + $0x24] sm:$0xf]
    %v6101 = vld [vmem:[#allocation11 + $0x28] sm:$0xf]
    %v6102 = vld [vmem:[#allocation11 + $0x2c] sm:$0xf]
    %v6103 = vld [vmem:[#allocation11 + $0x30] sm:$0xf]
    %v6104 = vld [vmem:[#allocation11 + $0x34] sm:$0xf]
    %v6105 = vld [vmem:[#allocation11 + $0x38] sm:$0xf]
    %v6106 = vld [vmem:[#allocation11 + $0x3c] sm:$0xf]
    %v6107 = vld [vmem:[#allocation11 + $0x40] sm:$0xf]
    %v6108 = vld [vmem:[#allocation11 + $0x44] sm:$0xf]
    %v6109 = vld [vmem:[#allocation11 + $0x48] sm:$0xf]
    %v6110 = vld [vmem:[#allocation11 + $0x4c] sm:$0xf]
    %v6111 = vld [vmem:[#allocation11 + $0x50] sm:$0xf]
    %v6112 = vld [vmem:[#allocation11 + $0x54] sm:$0xf]
    %v6113 = vld [vmem:[#allocation11 + $0x58] sm:$0xf]
    %v6114 = vld [vmem:[#allocation11 + $0x5c] sm:$0xf]
    %v6115 = vld [vmem:[#allocation11 + $0x60] sm:$0xf]
    %v6116 = vld [vmem:[#allocation11 + $0x64] sm:$0xf]
    %v6117 = vld [vmem:[#allocation11 + $0x68] sm:$0xf]
    %v6118 = vld [vmem:[#allocation11 + $0x6c] sm:$0xf]
    %v6119 = vld [vmem:[#allocation11 + $0x70] sm:$0xf]
    %v6120 = vld [vmem:[#allocation11 + $0x74] sm:$0xf]
    %v6121 = vld [vmem:[#allocation11 + $0x78] sm:$0xf]
    %v6122 = vld [vmem:[#allocation11 + $0x7c] sm:$0xf]
    %v6123 = vld [vmem:[#allocation11 + $0x80] sm:$0xf]
    %v6124 = vld [vmem:[#allocation11 + $0x84] sm:$0xf]
    %v6125 = vld [vmem:[#allocation11 + $0x88] sm:$0xf]
    %v6126 = vld [vmem:[#allocation11 + $0x8c] sm:$0xf]
    %v6127 = vld [vmem:[#allocation11 + $0x90] sm:$0xf]
    %v6128 = vld [vmem:[#allocation11 + $0x94] sm:$0xf]
    %v6129 = vld [vmem:[#allocation11 + $0x98] sm:$0xf]
    %v6130 = vld [vmem:[#allocation11 + $0x9c] sm:$0xf]
    %v6131 = vld [vmem:[#allocation11 + $0xa0] sm:$0xf]
    %v6132 = vld [vmem:[#allocation11 + $0xa4] sm:$0xf]
    %v6133 = vld [vmem:[#allocation11 + $0xa8] sm:$0xf]
    %v6134 = vld [vmem:[#allocation11 + $0xac] sm:$0xf]
    %v6135 = vld [vmem:[#allocation11 + $0xb0] sm:$0xf]
    %v6136 = vld [vmem:[#allocation11 + $0xb4] sm:$0xf]
    %v6137 = vld [vmem:[#allocation11 + $0xb8] sm:$0xf]
    %v6138 = vld [vmem:[#allocation11 + $0xbc] sm:$0xf]
    %v6139 = vld [vmem:[#allocation11 + $0xc0] sm:$0xf]
    %v6140 = vld [vmem:[#allocation11 + $0xc4] sm:$0xf]
    %v6141 = vld [vmem:[#allocation11 + $0xc8] sm:$0xf]
    %v6142 = vld [vmem:[#allocation11 + $0xcc] sm:$0xf]
    %v6143 = vld [vmem:[#allocation11 + $0xd0] sm:$0xf]
    %v6144 = vld [vmem:[#allocation11 + $0xd4] sm:$0xf]
    %v6145 = vld [vmem:[#allocation11 + $0xd8] sm:$0xf]
    %v6146 = vld [vmem:[#allocation11 + $0xdc] sm:$0xf]
    %v6147 = vld [vmem:[#allocation11 + $0xe0] sm:$0xf]
    %v6148 = vld [vmem:[#allocation11 + $0xe4] sm:$0xf]
    %v6149 = vld [vmem:[#allocation11 + $0xe8] sm:$0xf]
    %v6150 = vld [vmem:[#allocation11 + $0xec] sm:$0xf]
    %v6151 = vld [vmem:[#allocation11 + $0xf0] sm:$0xf]
    %v6152 = vld [vmem:[#allocation11 + $0xf4] sm:$0xf]
    %v6153 = vld [vmem:[#allocation11 + $0xf8] sm:$0xf]
    %v6154 = vld [vmem:[#allocation11 + $0xfc] sm:$0xf]
    %v6155 = vld [vmem:[#allocation11 + $0x100] sm:$0xf]
    %v6156 = vld [vmem:[#allocation11 + $0x104] sm:$0xf]
    %v6157 = vld [vmem:[#allocation11 + $0x108] sm:$0xf]
    %v6158 = vld [vmem:[#allocation11 + $0x10c] sm:$0xf]
    %v6159 = vld [vmem:[#allocation11 + $0x110] sm:$0xf]
    %v6160 = vld [vmem:[#allocation11 + $0x114] sm:$0xf]
    %v6161 = vld [vmem:[#allocation11 + $0x118] sm:$0xf]
    %v6162 = vld [vmem:[#allocation11 + $0x11c] sm:$0xf]
    %v6163 = vld [vmem:[#allocation11 + $0x120] sm:$0xf]
    %v6164 = vld [vmem:[#allocation11 + $0x124] sm:$0xf]
    %v6165 = vld [vmem:[#allocation11 + $0x128] sm:$0xf]
    %v6166 = vld [vmem:[#allocation11 + $0x12c] sm:$0xf]
    %v6167 = vld [vmem:[#allocation11 + $0x130] sm:$0xf]
    %v6168 = vld [vmem:[#allocation11 + $0x134] sm:$0xf]
    %v6169 = vld [vmem:[#allocation11 + $0x138] sm:$0xf]
    %v6170 = vld [vmem:[#allocation11 + $0x13c] sm:$0xf]
    %v6171 = vld [vmem:[#allocation11 + $0x140] sm:$0xf]
    %v6172 = vld [vmem:[#allocation11 + $0x144] sm:$0xf]
    %v6173 = vld [vmem:[#allocation11 + $0x148] sm:$0xf]
    %v6174 = vld [vmem:[#allocation11 + $0x14c] sm:$0xf]
    %v6175 = vld [vmem:[#allocation11 + $0x150] sm:$0xf]
    %v6176 = vld [vmem:[#allocation11 + $0x154] sm:$0xf]
    %v6177 = vld [vmem:[#allocation11 + $0x158] sm:$0xf]
    %v6178 = vld [vmem:[#allocation11 + $0x15c] sm:$0xf]
    %v6179 = vld [vmem:[#allocation11 + $0x160] sm:$0xf]
    %v6180 = vld [vmem:[#allocation11 + $0x164] sm:$0xf]
    %v6181 = vld [vmem:[#allocation11 + $0x168] sm:$0xf]
    %v6182 = vld [vmem:[#allocation11 + $0x16c] sm:$0xf]
    %v6183 = vld [vmem:[#allocation11 + $0x170] sm:$0xf]
    %v6184 = vld [vmem:[#allocation11 + $0x174] sm:$0xf]
    %v6185 = vld [vmem:[#allocation11 + $0x178] sm:$0xf]
    %v6186 = vld [vmem:[#allocation11 + $0x17c] sm:$0xf]
    %v6187 = vld [vmem:[#allocation11 + $0x180] sm:$0xf]
    %v6188 = vld [vmem:[#allocation11 + $0x184] sm:$0xf]
    %v6189 = vld [vmem:[#allocation11 + $0x188] sm:$0xf]
    %v6190 = vld [vmem:[#allocation11 + $0x18c] sm:$0xf]
    %v6191 = vld [vmem:[#allocation11 + $0x190] sm:$0xf]
    %v6192 = vld [vmem:[#allocation11 + $0x194] sm:$0xf]
    %v6193 = vld [vmem:[#allocation11 + $0x198] sm:$0xf]
    %v6194 = vld [vmem:[#allocation11 + $0x19c] sm:$0xf]
    %v6195 = vld [vmem:[#allocation11 + $0x1a0] sm:$0xf]
    %v6196 = vld [vmem:[#allocation11 + $0x1a4] sm:$0xf]
    %v6197 = vld [vmem:[#allocation11 + $0x1a8] sm:$0xf]
    %v6198 = vld [vmem:[#allocation11 + $0x1ac] sm:$0xf]
    %v6199 = vld [vmem:[#allocation11 + $0x1b0] sm:$0xf]
    %v6200 = vld [vmem:[#allocation11 + $0x1b4] sm:$0xf]
    %v6201 = vld [vmem:[#allocation11 + $0x1b8] sm:$0xf]
    %v6202 = vld [vmem:[#allocation11 + $0x1bc] sm:$0xf]
    %v6203 = vld [vmem:[#allocation11 + $0x1c0] sm:$0xf]
    %v6204 = vld [vmem:[#allocation11 + $0x1c4] sm:$0xf]
    %v6205 = vld [vmem:[#allocation11 + $0x1c8] sm:$0xf]
    %v6206 = vld [vmem:[#allocation11 + $0x1cc] sm:$0xf]
    %v6207 = vld [vmem:[#allocation11 + $0x1d0] sm:$0xf]
    %v6208 = vld [vmem:[#allocation11 + $0x1d4] sm:$0xf]
    %v6209 = vld [vmem:[#allocation11 + $0x1d8] sm:$0xf]
    %v6210 = vld [vmem:[#allocation11 + $0x1dc] sm:$0xf]
    %v6211 = vld [vmem:[#allocation11 + $0x1e0] sm:$0xf]
    %v6212 = vld [vmem:[#allocation11 + $0x1e4] sm:$0xf]
    %v6213 = vld [vmem:[#allocation11 + $0x1e8] sm:$0xf]
    %v6214 = vld [vmem:[#allocation11 + $0x1ec] sm:$0xf]
    %v6215 = vld [vmem:[#allocation11 + $0x1f0] sm:$0xf]
    %v6216 = vld [vmem:[#allocation11 + $0x1f4] sm:$0xf]
    %v6217 = vld [vmem:[#allocation11 + $0x1f8] sm:$0xf]
    %v6218 = vld [vmem:[#allocation11 + $0x1fc] sm:$0xf]
    %v6219 = vld [vmem:[#allocation11 + $0x200] sm:$0xf]
    %v6220 = vld [vmem:[#allocation11 + $0x204] sm:$0xf]
    %v6221 = vld [vmem:[#allocation11 + $0x208] sm:$0xf]
    %v6222 = vld [vmem:[#allocation11 + $0x20c] sm:$0xf]
    %v6223 = vld [vmem:[#allocation11 + $0x210] sm:$0xf]
    %v6224 = vld [vmem:[#allocation11 + $0x214] sm:$0xf]
    %v6225 = vld [vmem:[#allocation11 + $0x218] sm:$0xf]
    %v6226 = vld [vmem:[#allocation11 + $0x21c] sm:$0xf]
    %v6227 = vld [vmem:[#allocation11 + $0x220] sm:$0xf]
    %v6228 = vld [vmem:[#allocation11 + $0x224] sm:$0xf]
    %v6229 = vld [vmem:[#allocation11 + $0x228] sm:$0xf]
    %v6230 = vld [vmem:[#allocation11 + $0x22c] sm:$0xf]
    %v6231 = vld [vmem:[#allocation11 + $0x230] sm:$0xf]
    %v6232 = vld [vmem:[#allocation11 + $0x234] sm:$0xf]
    %v6233 = vld [vmem:[#allocation11 + $0x238] sm:$0xf]
    %v6234 = vld [vmem:[#allocation11 + $0x23c] sm:$0xf]
    %v6235 = vld [vmem:[#allocation13] sm:$0x1]
    %v6237 = vlaneseq
    %v6238 = vshrl.u32 %v6237, 7
    %v6239 = vsub.s32 0, %v6238
    %v6240 = vrot.slane %v6235, %v6239
    %v6386 = vunpack.c.l.b16 %v6091
    %v6387 = vunpack.c.l.b16 %v6092
    %v6388 = vunpack.c.l.b16 %v6093
    %v6389 = vunpack.c.l.b16 %v6094
    %v6390 = vunpack.c.l.b16 %v6095
    %v6391 = vunpack.c.l.b16 %v6096
    %v6392 = vunpack.c.l.b16 %v6097
    %v6393 = vunpack.c.l.b16 %v6098
    %v6394 = vunpack.c.l.b16 %v6099
    %v6395 = vunpack.c.l.b16 %v6100
    %v6396 = vunpack.c.l.b16 %v6101
    %v6397 = vunpack.c.l.b16 %v6102
    %v6398 = vunpack.c.l.b16 %v6103
    %v6399 = vunpack.c.l.b16 %v6104
    %v6400 = vunpack.c.l.b16 %v6105
    %v6401 = vunpack.c.l.b16 %v6106
    %v6402 = vunpack.c.l.b16 %v6107
    %v6403 = vunpack.c.l.b16 %v6108
    %v6404 = vunpack.c.l.b16 %v6109
    %v6405 = vunpack.c.l.b16 %v6110
    %v6406 = vunpack.c.l.b16 %v6111
    %v6407 = vunpack.c.l.b16 %v6112
    %v6408 = vunpack.c.l.b16 %v6113
    %v6409 = vunpack.c.l.b16 %v6114
    %v6410 = vunpack.c.l.b16 %v6115
    %v6411 = vunpack.c.l.b16 %v6116
    %v6412 = vunpack.c.l.b16 %v6117
    %v6413 = vunpack.c.l.b16 %v6118
    %v6414 = vunpack.c.l.b16 %v6119
    %v6415 = vunpack.c.l.b16 %v6120
    %v6416 = vunpack.c.l.b16 %v6121
    %v6417 = vunpack.c.l.b16 %v6122
    %v6418 = vunpack.c.l.b16 %v6123
    %v6419 = vunpack.c.l.b16 %v6124
    %v6420 = vunpack.c.l.b16 %v6125
    %v6421 = vunpack.c.l.b16 %v6126
    %v6422 = vunpack.c.l.b16 %v6127
    %v6423 = vunpack.c.l.b16 %v6128
    %v6424 = vunpack.c.l.b16 %v6129
    %v6425 = vunpack.c.l.b16 %v6130
    %v6426 = vunpack.c.l.b16 %v6131
    %v6427 = vunpack.c.l.b16 %v6132
    %v6428 = vunpack.c.l.b16 %v6133
    %v6429 = vunpack.c.l.b16 %v6134
    %v6430 = vunpack.c.l.b16 %v6135
    %v6431 = vunpack.c.l.b16 %v6136
    %v6432 = vunpack.c.l.b16 %v6137
    %v6433 = vunpack.c.l.b16 %v6138
    %v6434 = vunpack.c.l.b16 %v6139
    %v6435 = vunpack.c.l.b16 %v6140
    %v6436 = vunpack.c.l.b16 %v6141
    %v6437 = vunpack.c.l.b16 %v6142
    %v6438 = vunpack.c.l.b16 %v6143
    %v6439 = vunpack.c.l.b16 %v6144
    %v6440 = vunpack.c.l.b16 %v6145
    %v6441 = vunpack.c.l.b16 %v6146
    %v6442 = vunpack.c.l.b16 %v6147
    %v6443 = vunpack.c.l.b16 %v6148
    %v6444 = vunpack.c.l.b16 %v6149
    %v6445 = vunpack.c.l.b16 %v6150
    %v6446 = vunpack.c.l.b16 %v6151
    %v6447 = vunpack.c.l.b16 %v6152
    %v6448 = vunpack.c.l.b16 %v6153
    %v6449 = vunpack.c.l.b16 %v6154
    %v6450 = vunpack.c.l.b16 %v6155
    %v6451 = vunpack.c.l.b16 %v6156
    %v6452 = vunpack.c.l.b16 %v6157
    %v6453 = vunpack.c.l.b16 %v6158
    %v6454 = vunpack.c.l.b16 %v6159
    %v6455 = vunpack.c.l.b16 %v6160
    %v6456 = vunpack.c.l.b16 %v6161
    %v6457 = vunpack.c.l.b16 %v6162
    %v6458 = vunpack.c.l.b16 %v6163
    %v6459 = vunpack.c.l.b16 %v6164
    %v6460 = vunpack.c.l.b16 %v6165
    %v6461 = vunpack.c.l.b16 %v6166
    %v6462 = vunpack.c.l.b16 %v6167
    %v6463 = vunpack.c.l.b16 %v6168
    %v6464 = vunpack.c.l.b16 %v6169
    %v6465 = vunpack.c.l.b16 %v6170
    %v6466 = vunpack.c.l.b16 %v6171
    %v6467 = vunpack.c.l.b16 %v6172
    %v6468 = vunpack.c.l.b16 %v6173
    %v6469 = vunpack.c.l.b16 %v6174
    %v6470 = vunpack.c.l.b16 %v6175
    %v6471 = vunpack.c.l.b16 %v6176
    %v6472 = vunpack.c.l.b16 %v6177
    %v6473 = vunpack.c.l.b16 %v6178
    %v6474 = vunpack.c.l.b16 %v6179
    %v6475 = vunpack.c.l.b16 %v6180
    %v6476 = vunpack.c.l.b16 %v6181
    %v6477 = vunpack.c.l.b16 %v6182
    %v6478 = vunpack.c.l.b16 %v6183
    %v6479 = vunpack.c.l.b16 %v6184
    %v6480 = vunpack.c.l.b16 %v6185
    %v6481 = vunpack.c.l.b16 %v6186
    %v6482 = vunpack.c.l.b16 %v6187
    %v6483 = vunpack.c.l.b16 %v6188
    %v6484 = vunpack.c.l.b16 %v6189
    %v6485 = vunpack.c.l.b16 %v6190
    %v6486 = vunpack.c.l.b16 %v6191
    %v6487 = vunpack.c.l.b16 %v6192
    %v6488 = vunpack.c.l.b16 %v6193
    %v6489 = vunpack.c.l.b16 %v6194
    %v6490 = vunpack.c.l.b16 %v6195
    %v6491 = vunpack.c.l.b16 %v6196
    %v6492 = vunpack.c.l.b16 %v6197
    %v6493 = vunpack.c.l.b16 %v6198
    %v6494 = vunpack.c.l.b16 %v6199
    %v6495 = vunpack.c.l.b16 %v6200
    %v6496 = vunpack.c.l.b16 %v6201
    %v6497 = vunpack.c.l.b16 %v6202
    %v6498 = vunpack.c.l.b16 %v6203
    %v6499 = vunpack.c.l.b16 %v6204
    %v6500 = vunpack.c.l.b16 %v6205
    %v6501 = vunpack.c.l.b16 %v6206
    %v6502 = vunpack.c.l.b16 %v6207
    %v6503 = vunpack.c.l.b16 %v6208
    %v6504 = vunpack.c.l.b16 %v6209
    %v6505 = vunpack.c.l.b16 %v6210
    %v6506 = vunpack.c.l.b16 %v6211
    %v6507 = vunpack.c.l.b16 %v6212
    %v6508 = vunpack.c.l.b16 %v6213
    %v6509 = vunpack.c.l.b16 %v6214
    %v6510 = vunpack.c.l.b16 %v6215
    %v6511 = vunpack.c.l.b16 %v6216
    %v6512 = vunpack.c.l.b16 %v6217
    %v6513 = vunpack.c.l.b16 %v6218
    %v6514 = vunpack.c.l.b16 %v6219
    %v6515 = vunpack.c.l.b16 %v6220
    %v6516 = vunpack.c.l.b16 %v6221
    %v6517 = vunpack.c.l.b16 %v6222
    %v6518 = vunpack.c.l.b16 %v6223
    %v6519 = vunpack.c.l.b16 %v6224
    %v6520 = vunpack.c.l.b16 %v6225
    %v6521 = vunpack.c.l.b16 %v6226
    %v6522 = vunpack.c.l.b16 %v6227
    %v6523 = vunpack.c.l.b16 %v6228
    %v6524 = vunpack.c.l.b16 %v6229
    %v6525 = vunpack.c.l.b16 %v6230
    %v6526 = vunpack.c.l.b16 %v6231
    %v6527 = vunpack.c.l.b16 %v6232
    %v6528 = vunpack.c.l.b16 %v6233
    %v6529 = vunpack.c.l.b16 %v6234
    %v6530 = vpack.c.b16 %v6387, %v6386
    %v6531 = vpack.c.b16 %v6389, %v6388
    %v6532 = vpack.c.b16 %v6391, %v6390
    %v6533 = vpack.c.b16 %v6393, %v6392
    %v6534 = vpack.c.b16 %v6395, %v6394
    %v6535 = vpack.c.b16 %v6397, %v6396
    %v6536 = vpack.c.b16 %v6399, %v6398
    %v6537 = vpack.c.b16 %v6401, %v6400
    %v6538 = vpack.c.b16 %v6403, %v6402
    %v6539 = vpack.c.b16 %v6405, %v6404
    %v6540 = vpack.c.b16 %v6407, %v6406
    %v6541 = vpack.c.b16 %v6409, %v6408
    %v6542 = vpack.c.b16 %v6411, %v6410
    %v6543 = vpack.c.b16 %v6413, %v6412
    %v6544 = vpack.c.b16 %v6415, %v6414
    %v6545 = vpack.c.b16 %v6417, %v6416
    %v6546 = vpack.c.b16 %v6419, %v6418
    %v6547 = vpack.c.b16 %v6421, %v6420
    %v6548 = vpack.c.b16 %v6423, %v6422
    %v6549 = vpack.c.b16 %v6425, %v6424
    %v6550 = vpack.c.b16 %v6427, %v6426
    %v6551 = vpack.c.b16 %v6429, %v6428
    %v6552 = vpack.c.b16 %v6431, %v6430
    %v6553 = vpack.c.b16 %v6433, %v6432
    %v6554 = vpack.c.b16 %v6435, %v6434
    %v6555 = vpack.c.b16 %v6437, %v6436
    %v6556 = vpack.c.b16 %v6439, %v6438
    %v6557 = vpack.c.b16 %v6441, %v6440
    %v6558 = vpack.c.b16 %v6443, %v6442
    %v6559 = vpack.c.b16 %v6445, %v6444
    %v6560 = vpack.c.b16 %v6447, %v6446
    %v6561 = vpack.c.b16 %v6449, %v6448
    %v6562 = vpack.c.b16 %v6451, %v6450
    %v6563 = vpack.c.b16 %v6453, %v6452
    %v6564 = vpack.c.b16 %v6455, %v6454
    %v6565 = vpack.c.b16 %v6457, %v6456
    %v6566 = vpack.c.b16 %v6459, %v6458
    %v6567 = vpack.c.b16 %v6461, %v6460
    %v6568 = vpack.c.b16 %v6463, %v6462
    %v6569 = vpack.c.b16 %v6465, %v6464
    %v6570 = vpack.c.b16 %v6467, %v6466
    %v6571 = vpack.c.b16 %v6469, %v6468
    %v6572 = vpack.c.b16 %v6471, %v6470
    %v6573 = vpack.c.b16 %v6473, %v6472
    %v6574 = vpack.c.b16 %v6475, %v6474
    %v6575 = vpack.c.b16 %v6477, %v6476
    %v6576 = vpack.c.b16 %v6479, %v6478
    %v6577 = vpack.c.b16 %v6481, %v6480
    %v6578 = vpack.c.b16 %v6483, %v6482
    %v6579 = vpack.c.b16 %v6485, %v6484
    %v6580 = vpack.c.b16 %v6487, %v6486
    %v6581 = vpack.c.b16 %v6489, %v6488
    %v6582 = vpack.c.b16 %v6491, %v6490
    %v6583 = vpack.c.b16 %v6493, %v6492
    %v6584 = vpack.c.b16 %v6495, %v6494
    %v6585 = vpack.c.b16 %v6497, %v6496
    %v6586 = vpack.c.b16 %v6499, %v6498
    %v6587 = vpack.c.b16 %v6501, %v6500
    %v6588 = vpack.c.b16 %v6503, %v6502
    %v6589 = vpack.c.b16 %v6505, %v6504
    %v6590 = vpack.c.b16 %v6507, %v6506
    %v6591 = vpack.c.b16 %v6509, %v6508
    %v6592 = vpack.c.b16 %v6511, %v6510
    %v6593 = vpack.c.b16 %v6513, %v6512
    %v6594 = vpack.c.b16 %v6515, %v6514
    %v6595 = vpack.c.b16 %v6517, %v6516
    %v6596 = vpack.c.b16 %v6519, %v6518
    %v6597 = vpack.c.b16 %v6521, %v6520
    %v6598 = vpack.c.b16 %v6523, %v6522
    %v6599 = vpack.c.b16 %v6525, %v6524
    %v6600 = vpack.c.b16 %v6527, %v6526
    %v6601 = vpack.c.b16 %v6529, %v6528
    %6674 = vmatprep.subr.bf16.mxu0 0
    %6675 = vmatpush1.bf16.msra.mxu0 %v6530
    %6676 = vmatprep.subr.bf16.mxu0 0
    %6677 = vmatpush1.bf16.msra.mxu0 %v6531
    %6678 = vmatprep.subr.bf16.mxu0 0
    %6679 = vmatpush1.bf16.msra.mxu0 %v6532
    %6680 = vmatprep.subr.bf16.mxu0 0
    %6681 = vmatpush1.bf16.msra.mxu0 %v6533
    %6682 = vmatprep.subr.bf16.mxu0 0
    %6683 = vmatpush1.bf16.msra.mxu0 %v6534
    %6684 = vmatprep.subr.bf16.mxu0 0
    %6685 = vmatpush1.bf16.msra.mxu0 %v6535
    %6686 = vmatprep.subr.bf16.mxu0 0
    %6687 = vmatpush1.bf16.msra.mxu0 %v6536
    %6688 = vmatprep.subr.bf16.mxu0 0
    %6689 = vmatpush1.bf16.msra.mxu0 %v6537
    %6690 = vmatprep.subr.bf16.mxu0 0
    %6691 = vmatpush1.bf16.msra.mxu0 %v6538
    %6692 = vmatprep.subr.bf16.mxu0 0
    %6693 = vmatpush1.bf16.msra.mxu0 %v6539
    %6694 = vmatprep.subr.bf16.mxu0 0
    %6695 = vmatpush1.bf16.msra.mxu0 %v6540
    %6696 = vmatprep.subr.bf16.mxu0 0
    %6697 = vmatpush1.bf16.msra.mxu0 %v6541
    %6698 = vmatprep.subr.bf16.mxu0 0
    %6699 = vmatpush1.bf16.msra.mxu0 %v6542
    %6700 = vmatprep.subr.bf16.mxu0 0
    %6701 = vmatpush1.bf16.msra.mxu0 %v6543
    %6702 = vmatprep.subr.bf16.mxu0 0
    %6703 = vmatpush1.bf16.msra.mxu0 %v6544
    %6704 = vmatprep.subr.bf16.mxu0 0
    %6705 = vmatpush1.bf16.msra.mxu0 %v6545
    %6706 = vmatprep.mubr.bf16.mxu0 %v6083
    %6707 = vmatmul.mubr.bf16.gmra.mrb[0].mxu0 %v6082
    %v6708 = vpop.f32.mrb[0].mxu0
    %v6709 = vadd.f32 %v6240, %v6708
    %v6710 = vpop.f32.mrb[0].mxu0
    %v6711 = vpop.f32.mrb[0].mxu0
    %v6712 = vpop.f32.mrb[0].mxu0
    %6713 = vdwg.mxu0
    %6714 = vmatprep.subr.bf16.mxu0 0
    %6715 = vmatpush1.bf16.msra.mxu0 %v6546
    %6716 = vmatprep.subr.bf16.mxu0 0
    %6717 = vmatpush1.bf16.msra.mxu0 %v6547
    %6718 = vmatprep.subr.bf16.mxu0 0
    %6719 = vmatpush1.bf16.msra.mxu0 %v6548
    %6720 = vmatprep.subr.bf16.mxu0 0
    %6721 = vmatpush1.bf16.msra.mxu0 %v6549
    %6722 = vmatprep.subr.bf16.mxu0 0
    %6723 = vmatpush1.bf16.msra.mxu0 %v6550
    %6724 = vmatprep.subr.bf16.mxu0 0
    %6725 = vmatpush1.bf16.msra.mxu0 %v6551
    %6726 = vmatprep.subr.bf16.mxu0 0
    %6727 = vmatpush1.bf16.msra.mxu0 %v6552
    %6728 = vmatprep.subr.bf16.mxu0 0
    %6729 = vmatpush1.bf16.msra.mxu0 %v6553
    %6730 = vmatprep.subr.bf16.mxu0 0
    %6731 = vmatpush1.bf16.msra.mxu0 %v6554
    %6732 = vmatprep.subr.bf16.mxu0 0
    %6733 = vmatpush1.bf16.msra.mxu0 %v6555
    %6734 = vmatprep.subr.bf16.mxu0 0
    %6735 = vmatpush1.bf16.msra.mxu0 %v6556
    %6736 = vmatprep.subr.bf16.mxu0 0
    %6737 = vmatpush1.bf16.msra.mxu0 %v6557
    %6738 = vmatprep.subr.bf16.mxu0 0
    %6739 = vmatpush1.bf16.msra.mxu0 %v6558
    %6740 = vmatprep.subr.bf16.mxu0 0
    %6741 = vmatpush1.bf16.msra.mxu0 %v6559
    %6742 = vmatprep.subr.bf16.mxu0 0
    %6743 = vmatpush1.bf16.msra.mxu0 %v6560
    %6744 = vmatprep.subr.bf16.mxu0 0
    %6745 = vmatpush1.bf16.msra.mxu0 %v6561
    %6746 = vmatprep.mubr.bf16.mxu0 %v6085
    %6747 = vmatmul.mubr.bf16.gmra.mrb[0].mxu0 %v6084
    %v6748 = vpop.f32.mrb[0].mxu0
    %v6749 = vadd.f32 %v6709, %v6748
    %v6750 = vpop.f32.mrb[0].mxu0
    %v6751 = vpop.f32.mrb[0].mxu0
    %v6752 = vpop.f32.mrb[0].mxu0
    %6753 = vdwg.mxu0
    %6754 = vmatprep.subr.bf16.mxu0 0
    %6755 = vmatpush1.bf16.msra.mxu0 %v6562
    %6756 = vmatprep.subr.bf16.mxu0 0
    %6757 = vmatpush1.bf16.msra.mxu0 %v6563
    %6758 = vmatprep.subr.bf16.mxu0 0
    %6759 = vmatpush1.bf16.msra.mxu0 %v6564
    %6760 = vmatprep.subr.bf16.mxu0 0
    %6761 = vmatpush1.bf16.msra.mxu0 %v6565
    %6762 = vmatprep.subr.bf16.mxu0 0
    %6763 = vmatpush1.bf16.msra.mxu0 %v6566
    %6764 = vmatprep.subr.bf16.mxu0 0
    %6765 = vmatpush1.bf16.msra.mxu0 %v6567
    %6766 = vmatprep.subr.bf16.mxu0 0
    %6767 = vmatpush1.bf16.msra.mxu0 %v6568
    %6768 = vmatprep.subr.bf16.mxu0 0
    %6769 = vmatpush1.bf16.msra.mxu0 %v6569
    %6770 = vmatprep.subr.bf16.mxu0 0
    %6771 = vmatpush1.bf16.msra.mxu0 %v6570
    %6772 = vmatprep.subr.bf16.mxu0 0
    %6773 = vmatpush1.bf16.msra.mxu0 %v6571
    %6774 = vmatprep.subr.bf16.mxu0 0
    %6775 = vmatpush1.bf16.msra.mxu0 %v6572
    %6776 = vmatprep.subr.bf16.mxu0 0
    %6777 = vmatpush1.bf16.msra.mxu0 %v6573
    %6778 = vmatprep.subr.bf16.mxu0 0
    %6779 = vmatpush1.bf16.msra.mxu0 %v6574
    %6780 = vmatprep.subr.bf16.mxu0 0
    %6781 = vmatpush1.bf16.msra.mxu0 %v6575
    %6782 = vmatprep.subr.bf16.mxu0 0
    %6783 = vmatpush1.bf16.msra.mxu0 %v6576
    %6784 = vmatprep.subr.bf16.mxu0 0
    %6785 = vmatpush1.bf16.msra.mxu0 %v6577
    %6786 = vmatprep.mubr.bf16.mxu0 %v6087
    %6787 = vmatmul.mubr.bf16.gmra.mrb[0].mxu0 %v6086
    %v6788 = vpop.f32.mrb[0].mxu0
    %v6789 = vadd.f32 %v6749, %v6788
    %v6790 = vpop.f32.mrb[0].mxu0
    %v6791 = vpop.f32.mrb[0].mxu0
    %v6792 = vpop.f32.mrb[0].mxu0
    %6793 = vdwg.mxu0
    %6794 = vmatprep.subr.bf16.mxu0 0
    %6795 = vmatpush1.bf16.msra.mxu0 %v6578
    %6796 = vmatprep.subr.bf16.mxu0 0
    %6797 = vmatpush1.bf16.msra.mxu0 %v6579
    %6798 = vmatprep.subr.bf16.mxu0 0
    %6799 = vmatpush1.bf16.msra.mxu0 %v6580
    %6800 = vmatprep.subr.bf16.mxu0 0
    %6801 = vmatpush1.bf16.msra.mxu0 %v6581
    %6802 = vmatprep.subr.bf16.mxu0 0
    %6803 = vmatpush1.bf16.msra.mxu0 %v6582
    %6804 = vmatprep.subr.bf16.mxu0 0
    %6805 = vmatpush1.bf16.msra.mxu0 %v6583
    %6806 = vmatprep.subr.bf16.mxu0 0
    %6807 = vmatpush1.bf16.msra.mxu0 %v6584
    %6808 = vmatprep.subr.bf16.mxu0 0
    %6809 = vmatpush1.bf16.msra.mxu0 %v6585
    %6810 = vmatprep.subr.bf16.mxu0 0
    %6811 = vmatpush1.bf16.msra.mxu0 %v6586
    %6812 = vmatprep.subr.bf16.mxu0 0
    %6813 = vmatpush1.bf16.msra.mxu0 %v6587
    %6814 = vmatprep.subr.bf16.mxu0 0
    %6815 = vmatpush1.bf16.msra.mxu0 %v6588
    %6816 = vmatprep.subr.bf16.mxu0 0
    %6817 = vmatpush1.bf16.msra.mxu0 %v6589
    %6818 = vmatprep.subr.bf16.mxu0 0
    %6819 = vmatpush1.bf16.msra.mxu0 %v6590
    %6820 = vmatprep.subr.bf16.mxu0 0
    %6821 = vmatpush1.bf16.msra.mxu0 %v6591
    %6822 = vmatprep.subr.bf16.mxu0 0
    %6823 = vmatpush1.bf16.msra.mxu0 %v6592
    %6824 = vmatprep.subr.bf16.mxu0 0
    %6825 = vmatpush1.bf16.msra.mxu0 %v6593
    %6826 = vmatprep.mubr.bf16.mxu0 %v6089
    %6827 = vmatmul.mubr.bf16.gmra.mrb[0].mxu0 %v6088
    %v6828 = vpop.f32.mrb[0].mxu0
    %v6829 = vadd.f32 %v6789, %v6828
    %v6830 = vpop.f32.mrb[0].mxu0
    %v6831 = vpop.f32.mrb[0].mxu0
    %v6832 = vpop.f32.mrb[0].mxu0
    %6833 = vdwg.mxu0
    %6834 = vmatprep.subr.bf16.mxu0 0
    %6835 = vmatpush1.bf16.msra.mxu0 %v6594
    %6836 = vmatprep.subr.bf16.mxu0 0
    %6837 = vmatpush1.bf16.msra.mxu0 %v6595
    %6838 = vmatprep.subr.bf16.mxu0 0
    %6839 = vmatpush1.bf16.msra.mxu0 %v6596
    %6840 = vmatprep.subr.bf16.mxu0 0
    %6841 = vmatpush1.bf16.msra.mxu0 %v6597
    %6842 = vmatprep.subr.bf16.mxu0 0
    %6843 = vmatpush1.bf16.msra.mxu0 %v6598
    %6844 = vmatprep.subr.bf16.mxu0 0
    %6845 = vmatpush1.bf16.msra.mxu0 %v6599
    %6846 = vmatprep.subr.bf16.mxu0 0
    %6847 = vmatpush1.bf16.msra.mxu0 %v6600
    %6848 = vmatprep.subr.bf16.mxu0 0
    %6849 = vmatpush1.bf16.msra.mxu0 %v6601
    %6850 = vmatprep.subr.bf16.mxu0 0
    %6851 = vmatpush1.bf16.msra.mxu0 0
    %6852 = vmatprep.subr.bf16.mxu0 0
    %6853 = vmatpush1.bf16.msra.mxu0 0
    %6854 = vmatprep.subr.bf16.mxu0 0
    %6855 = vmatpush1.bf16.msra.mxu0 0
    %6856 = vmatprep.subr.bf16.mxu0 0
    %6857 = vmatpush1.bf16.msra.mxu0 0
    %6858 = vmatprep.subr.bf16.mxu0 0
    %6859 = vmatpush1.bf16.msra.mxu0 0
    %6860 = vmatprep.subr.bf16.mxu0 0
    %6861 = vmatpush1.bf16.msra.mxu0 0
    %6862 = vmatprep.subr.bf16.mxu0 0
    %6863 = vmatpush1.bf16.msra.mxu0 0
    %6864 = vmatprep.subr.bf16.mxu0 0
    %6865 = vmatpush1.bf16.msra.mxu0 0
    %6866 = vmatprep.mubr.bf16.mxu0 0
    %6867 = vmatmul.mubr.bf16.gmra.mrb[0].mxu0 %v6090
    %v6868 = vpop.f32.mrb[0].mxu0
    %v6869 = vadd.f32 %v6829, %v6868
    %v6870 = vpop.f32.mrb[0].mxu0
    %v6871 = vpop.f32.mrb[0].mxu0
    %v6872 = vpop.f32.mrb[0].mxu0
    %6873 = vdwg.mxu0
    %6874 = vst [vmem:[#allocation14] sm:$0xff] %v6869
    // Predicated region
    $region58: #{gpt_qdrl_forward.5} parent=1 // pred_check
      _
    $region59: #{gpt_qdrl_forward.5} parent=1 // pred_check_branch
      %6876 = sbr.rel (0) target = $region61
    $region60: #{gpt_qdrl_forward.5} parent=1 // pred_region
      %s6878 = ssub.s32 128, 128
      %6879 = vsyncadd [#allocation4], %s6878
      %s6881 = sshll.u32 [#allocation14], 4
      %s6882 = int_to_ptr.vmem [resolvable:$true] %s6881
      %6884 = dma.vmem_to_hbm [thread:$0]  %s6882, 128, %s7, [#allocation4]
    $region61: #{gpt_qdrl_forward.5} parent=1 // pred_fallthru
      _
    // Predicated region
    $region62: #{gpt_qdrl_forward.5} parent=1 // pred_check
      _
    $region63: #{gpt_qdrl_forward.5} parent=1 // pred_check_branch
      %6886 = sbr.rel (0) target = $region65
    $region64: #{gpt_qdrl_forward.5} parent=1 // pred_region
      %6887 = dma.done [#allocation4], 128
    $region65: #{gpt_qdrl_forward.5} parent=1 // pred_fallthru
      _
    %6888 = vsyncpa [#allocation3], 1
    %6889 = vsyncpa [#allocation6], 1
    %6890 = vsyncpa [#allocation9], 1
    %6891 = vsyncpa [#allocation12], 1
    %6892 = vsyncpa [#allocation4], 1

</llo_original>
